<compile_context>
chip_gen: v7x
topology: tpu7x:2x2x1
jax: 0.10.0
libtpu: 0.0.40
codegen_flags: <defaults>
</compile_context>

<pallas_src>
import functools

import jax
import jax.numpy as jnp
from jax.experimental import pallas as pl
from jax.experimental.pallas import tpu as pltpu

LATENT = 100
LATENT_PAD = 128          # latent zero-padded to one full lane tile
OUT = 784                 # 28*28 image
BN_EPS = 1e-5
LRELU_SLOPE = 0.2
NUM_PHASES = 4            # one phase per BatchNorm barrier + final layer


def _leaky_relu(x):
    # max(x, a*x) == LeakyReLU(a) for 0 < a < 1.
    return jnp.maximum(x, LRELU_SLOPE * x)


def _finalize_bn(ssum, ssq, g_ref, be_ref, sscale, sshift, dim, batch):
    """Turn accumulated sum / sum-of-squares into BN scale/shift (f32)."""
    inv_n = 1.0 / float(batch)
    mean = ssum[:, :dim] * inv_n
    mean_sq = ssq[:, :dim] * inv_n
    var = jnp.maximum(mean_sq - mean * mean, 0.0)   # guard f32 cancellation
    scale = g_ref[...] * jax.lax.rsqrt(var + BN_EPS)
    sscale[:, :dim] = scale
    sshift[:, :dim] = be_ref[...] - mean * scale


def generator_kernel(
    z_ref,
    w1_ref, b1_ref,
    w2_ref, g2_ref, be2_ref,
    w3_ref, g3_ref, be3_ref,
    w4_ref, g4_ref, be4_ref,
    w5_ref, b5_ref,
    out_ref,
    act_a, act_b, ssum, ssq, sscale, sshift,
    *, tm, batch,
):
    p = pl.program_id(0)                  # phase (sequential barrier axis)
    t = pl.program_id(1)                  # batch tile
    row = pl.multiple_of(t * tm, tm)
    is_t0 = t == 0

    # ----- phase 0: z -> h1 -> pre-BN2, accumulate layer-2 stats -----------
    @pl.when(jnp.logical_and(p == 0, is_t0))
    def _():
        ssum[...] = jnp.zeros_like(ssum)
        ssq[...] = jnp.zeros_like(ssq)

    @pl.when(p == 0)
    def _():
        z = z_ref[...]                                        # (tm,128) bf16
        h1 = _leaky_relu(
            jnp.dot(z, w1_ref[...], preferred_element_type=jnp.float32)
            + b1_ref[...])
        a2 = jnp.dot(h1.astype(jnp.bfloat16), w2_ref[...],
                     preferred_element_type=jnp.float32)      # (tm,256)
        act_a[pl.ds(row, tm), :256] = a2
        ssum[:, :256] += jnp.sum(a2, axis=0, keepdims=True)
        ssq[:, :256] += jnp.sum(a2 * a2, axis=0, keepdims=True)

    # ----- phase 1: BN2+lrelu -> pre-BN3, accumulate layer-3 stats ---------
    @pl.when(jnp.logical_and(p == 1, is_t0))
    def _():
        _finalize_bn(ssum, ssq, g2_ref, be2_ref, sscale, sshift, 256, batch)
        ssum[...] = jnp.zeros_like(ssum)
        ssq[...] = jnp.zeros_like(ssq)

    @pl.when(p == 1)
    def _():
        a2 = act_a[pl.ds(row, tm), :256]
        h2 = _leaky_relu(a2 * sscale[:, :256] + sshift[:, :256])
        a3 = jnp.dot(h2.astype(jnp.bfloat16), w3_ref[...],
                     preferred_element_type=jnp.float32)      # (tm,512)
        act_b[pl.ds(row, tm), :] = a3
        ssum[:, :512] += jnp.sum(a3, axis=0, keepdims=True)
        ssq[:, :512] += jnp.sum(a3 * a3, axis=0, keepdims=True)

    # ----- phase 2: BN3+lrelu -> pre-BN4, accumulate layer-4 stats ---------
    @pl.when(jnp.logical_and(p == 2, is_t0))
    def _():
        _finalize_bn(ssum, ssq, g3_ref, be3_ref, sscale, sshift, 512, batch)
        ssum[...] = jnp.zeros_like(ssum)
        ssq[...] = jnp.zeros_like(ssq)

    @pl.when(p == 2)
    def _():
        a3 = act_b[pl.ds(row, tm), :]
        h3 = _leaky_relu(a3 * sscale[:, :512] + sshift[:, :512])
        a4 = jnp.dot(h3.astype(jnp.bfloat16), w4_ref[...],
                     preferred_element_type=jnp.float32)      # (tm,1024)
        act_a[pl.ds(row, tm), :] = a4                         # reuse act_a
        ssum[...] += jnp.sum(a4, axis=0, keepdims=True)
        ssq[...] += jnp.sum(a4 * a4, axis=0, keepdims=True)

    # ----- phase 3: BN4+lrelu -> Linear(1024,784) -> tanh ------------------
    @pl.when(jnp.logical_and(p == 3, is_t0))
    def _():
        _finalize_bn(ssum, ssq, g4_ref, be4_ref, sscale, sshift, 1024, batch)

    @pl.when(p == 3)
    def _():
        a4 = act_a[pl.ds(row, tm), :]
        h4 = _leaky_relu(a4 * sscale[...] + sshift[...])
        o = jnp.dot(h4.astype(jnp.bfloat16), w5_ref[...],
                    preferred_element_type=jnp.float32) + b5_ref[...]
        out_ref[...] = jnp.tanh(o).astype(out_ref.dtype)


def init_params(key):
    """Synthetic PyTorch-style (uniform +-1/sqrt(fan_in)) parameters, stored
    kernel-ready: weights are (in, out) bf16 (W1 zero-padded 100->128 rows),
    biases / BN affine are f32.  b2/b3/b4 are not passed to the kernel:
    training-mode BatchNorm subtracts the batch mean, so they cancel exactly.
    """
    dims = [LATENT, 128, 256, 512, 1024, OUT]
    keys = jax.random.split(key, 10)
    ws, bs = [], []
    for i in range(5):
        fan_in, fan_out = dims[i], dims[i + 1]
        bound = float(fan_in) ** -0.5
        w = jax.random.uniform(keys[2 * i], (fan_in, fan_out),
                               jnp.float32, -bound, bound)
        b = jax.random.uniform(keys[2 * i + 1], (1, fan_out),
                               jnp.float32, -bound, bound)
        ws.append(w)
        bs.append(b)
    w1 = jnp.pad(ws[0], ((0, LATENT_PAD - LATENT), (0, 0)))
    params = {
        "w1": w1.astype(jnp.bfloat16), "b1": bs[0],
        "w2": ws[1].astype(jnp.bfloat16),
        "w3": ws[2].astype(jnp.bfloat16),
        "w4": ws[3].astype(jnp.bfloat16),
        "w5": ws[4].astype(jnp.bfloat16), "b5": bs[4],
    }
    bn_params = {}
    for name, d in (("2", 256), ("3", 512), ("4", 1024)):
        bn_params["g" + name] = jnp.ones((1, d), jnp.float32)
        bn_params["be" + name] = jnp.zeros((1, d), jnp.float32)
    return params, bn_params


def _pick_tile(b):
    # Prefer big MXU-filling tiles; fall back to a single tile for odd/tiny B
    # (a padded last tile would corrupt BatchNorm batch statistics).
    for cand in (1024, 512, 256, 128, 64, 32, 16, 8):
        if b % cand == 0:
            return cand
    return b


@jax.jit
def generator_forward(z, params, bn_params):
    B = z.shape[0]
    TM = _pick_tile(B)
    nt = B // TM

    w1, b1 = params["w1"], params["b1"]
    w2, w3, w4 = params["w2"], params["w3"], params["w4"]
    w5, b5 = params["w5"], params["b5"]
    g2, be2 = bn_params["g2"], bn_params["be2"]
    g3, be3 = bn_params["g3"], bn_params["be3"]
    g4, be4 = bn_params["g4"], bn_params["be4"]

    # Zero-pad latent 100 -> 128 lanes; MXU inputs in bf16, f32 accumulation.
    z_pad = jnp.pad(z, ((0, 0), (0, LATENT_PAD - LATENT))).astype(jnp.bfloat16)

    inputs = (z_pad, w1, b1, w2, g2, be2, w3, g3, be3, w4, g4, be4, w5, b5)

    def _resident(arr):
        # Full-array block, constant index map: DMA'd once, stays in VMEM.
        return pl.BlockSpec(arr.shape, lambda p, t: (0, 0))

    z_spec = pl.BlockSpec(
        (TM, LATENT_PAD), lambda p, t: (jnp.where(p == 0, t, 0), 0))
    out_spec = pl.BlockSpec(
        (TM, OUT), lambda p, t: (jnp.where(p == NUM_PHASES - 1, t, 0), 0))
    in_specs = [z_spec] + [_resident(a) for a in inputs[1:]]

    scratch_shapes = [
        pltpu.VMEM((B, 1024), jnp.float32),   # act_a: pre-BN2 / pre-BN4
        pltpu.VMEM((B, 512), jnp.float32),    # act_b: pre-BN3
        pltpu.VMEM((1, 1024), jnp.float32),   # ssum   (per-feature sum)
        pltpu.VMEM((1, 1024), jnp.float32),   # ssq    (per-feature sum x^2)
        pltpu.VMEM((1, 1024), jnp.float32),   # sscale (BN scale)
        pltpu.VMEM((1, 1024), jnp.float32),   # sshift (BN shift)
    ]

    param_bytes = sum(int(a.size) * a.dtype.itemsize for a in inputs[1:])
    scratch_bytes = (B * 1024 + B * 512 + 4 * 1024) * 4
    io_bytes = 2 * TM * LATENT_PAD * 2 + 2 * TM * OUT * 4
    vmem_limit = 2 * param_bytes + scratch_bytes + io_bytes + (8 << 20)
    vmem_limit = int(min(max(vmem_limit, 16 << 20), 96 << 20))

    flops = 2 * B * (LATENT_PAD * 128 + 128 * 256 + 256 * 512
                     + 512 * 1024 + 1024 * OUT)
    transcendentals = B * OUT + 3 * 1024
    bytes_accessed = param_bytes + B * LATENT_PAD * 2 + B * OUT * 4

    kernel = functools.partial(generator_kernel, tm=TM, batch=B)

    return pl.pallas_call(
        kernel,
        out_shape=jax.ShapeDtypeStruct((B, OUT), jnp.float32),
        grid_spec=pltpu.PrefetchScalarGridSpec(
            num_scalar_prefetch=0,
            grid=(NUM_PHASES, nt),
            in_specs=in_specs,
            out_specs=out_spec,
            scratch_shapes=scratch_shapes,
        ),
        compiler_params=pltpu.CompilerParams(
            # Both axes sequential: BN stats accumulate into shared scratch.
            dimension_semantics=("arbitrary", "arbitrary"),
            vmem_limit_bytes=vmem_limit,
        ),
        cost_estimate=pl.CostEstimate(
            flops=flops,
            transcendentals=transcendentals,
            bytes_accessed=bytes_accessed,
        ),
    )(*inputs)


if __name__ == "__main__":
    key = jax.random.PRNGKey(0)
    pkey, zkey = jax.random.split(key)
    params, bn_params = init_params(pkey)

    B = 8  # >= 2 so training-mode BatchNorm batch stats are well defined
    z = jax.random.normal(zkey, (B, LATENT), jnp.float32)

    img = generator_forward(z, params, bn_params)
    jax.block_until_ready(img)

    assert img.shape == (B, OUT), img.shape
    assert img.dtype == jnp.float32
    assert bool(jnp.all(jnp.isfinite(img)))
    assert bool(jnp.all(jnp.abs(img) <= 1.0 + 1e-6))   # tanh range
    print("KERNEL_OK")
</pallas_src>

<mosaic_0001>
module attributes {stable_mosaic.version = 11 : i64} {
  func.func @generator_kernel(%arg0: i32, %arg1: i32, %arg2: memref<8x128xbf16, #tpu.memory_space<vmem>>, %arg3: memref<128x128xbf16, #tpu.memory_space<vmem>>, %arg4: memref<1x128xf32, #tpu.memory_space<vmem>>, %arg5: memref<128x256xbf16, #tpu.memory_space<vmem>>, %arg6: memref<1x256xf32, #tpu.memory_space<vmem>>, %arg7: memref<1x256xf32, #tpu.memory_space<vmem>>, %arg8: memref<256x512xbf16, #tpu.memory_space<vmem>>, %arg9: memref<1x512xf32, #tpu.memory_space<vmem>>, %arg10: memref<1x512xf32, #tpu.memory_space<vmem>>, %arg11: memref<512x1024xbf16, #tpu.memory_space<vmem>>, %arg12: memref<1x1024xf32, #tpu.memory_space<vmem>>, %arg13: memref<1x1024xf32, #tpu.memory_space<vmem>>, %arg14: memref<1024x784xbf16, #tpu.memory_space<vmem>>, %arg15: memref<1x784xf32, #tpu.memory_space<vmem>>, %arg16: memref<8x784xf32, #tpu.memory_space<vmem>>, %arg17: memref<8x1024xf32, #tpu.memory_space<vmem>>, %arg18: memref<8x512xf32, #tpu.memory_space<vmem>>, %arg19: memref<1x1024xf32, #tpu.memory_space<vmem>>, %arg20: memref<1x1024xf32, #tpu.memory_space<vmem>>, %arg21: memref<1x1024xf32, #tpu.memory_space<vmem>>, %arg22: memref<1x1024xf32, #tpu.memory_space<vmem>>) attributes {dimension_semantics = [#tpu.dimension_semantics<arbitrary>, #tpu.dimension_semantics<arbitrary>], iteration_bounds = array<i64: 4, 1>, scalar_prefetch = 0 : i64, scratch_operands = 6 : i64, tpu.core_type = #tpu.core_type<tc>, window_params = [{transform_indices = @transform_0, window_bounds = array<i64: 8, 128>}, {pipeline_mode = #tpu.pipeline_mode<synchronous>, transform_indices = @transform_1, window_bounds = array<i64: 128, 128>}, {pipeline_mode = #tpu.pipeline_mode<synchronous>, transform_indices = @transform_2, window_bounds = array<i64: 1, 128>}, {pipeline_mode = #tpu.pipeline_mode<synchronous>, transform_indices = @transform_3, window_bounds = array<i64: 128, 256>}, {pipeline_mode = #tpu.pipeline_mode<synchronous>, transform_indices = @transform_4, window_bounds = array<i64: 1, 256>}, {pipeline_mode = #tpu.pipeline_mode<synchronous>, transform_indices = @transform_5, window_bounds = array<i64: 1, 256>}, {pipeline_mode = #tpu.pipeline_mode<synchronous>, transform_indices = @transform_6, window_bounds = array<i64: 256, 512>}, {pipeline_mode = #tpu.pipeline_mode<synchronous>, transform_indices = @transform_7, window_bounds = array<i64: 1, 512>}, {pipeline_mode = #tpu.pipeline_mode<synchronous>, transform_indices = @transform_8, window_bounds = array<i64: 1, 512>}, {pipeline_mode = #tpu.pipeline_mode<synchronous>, transform_indices = @transform_9, window_bounds = array<i64: 512, 1024>}, {pipeline_mode = #tpu.pipeline_mode<synchronous>, transform_indices = @transform_10, window_bounds = array<i64: 1, 1024>}, {pipeline_mode = #tpu.pipeline_mode<synchronous>, transform_indices = @transform_11, window_bounds = array<i64: 1, 1024>}, {pipeline_mode = #tpu.pipeline_mode<synchronous>, transform_indices = @transform_12, window_bounds = array<i64: 1024, 784>}, {pipeline_mode = #tpu.pipeline_mode<synchronous>, transform_indices = @transform_13, window_bounds = array<i64: 1, 784>}, {transform_indices = @transform_14, window_bounds = array<i64: 8, 784>}]} {
    %c8_i32 = arith.constant 8 : i32
    %0 = arith.muli %arg1, %c8_i32 : i32
    %1 = tpu.assume_multiple %0, 8 : i32
    %c0_i32 = arith.constant 0 : i32
    %2 = arith.cmpi eq, %arg1, %c0_i32 : i32
    %c0_i32_0 = arith.constant 0 : i32
    %3 = arith.cmpi eq, %arg0, %c0_i32_0 : i32
    %4 = arith.andi %3, %2 : i1
    %5 = arith.extui %4 : i1 to i32
    %c0_i32_1 = arith.constant 0 : i32
    %6 = arith.cmpi ne, %5, %c0_i32_1 : i32
    scf.if %6 {
      %cst = arith.constant 0.000000e+00 : f32
      %31 = vector.broadcast %cst : f32 to vector<1x1024xf32>
      %c0 = arith.constant 0 : index
      %c0_13 = arith.constant 0 : index
      %32 = vector.load %arg19[%c0, %c0_13] : memref<1x1024xf32, #tpu.memory_space<vmem>>, vector<1x1024xf32>
      tpu.vector_store %arg19[%c0, %c0_13], %31 {strides = array<i32>} : memref<1x1024xf32, #tpu.memory_space<vmem>>, vector<1x1024xf32>,
      %cst_14 = arith.constant 0.000000e+00 : f32
      %33 = vector.broadcast %cst_14 : f32 to vector<1x1024xf32>
      %c0_15 = arith.constant 0 : index
      %c0_16 = arith.constant 0 : index
      %34 = vector.load %arg20[%c0_15, %c0_16] : memref<1x1024xf32, #tpu.memory_space<vmem>>, vector<1x1024xf32>
      tpu.vector_store %arg20[%c0_15, %c0_16], %33 {strides = array<i32>} : memref<1x1024xf32, #tpu.memory_space<vmem>>, vector<1x1024xf32>,
    } else {
    }
    %c0_i32_2 = arith.constant 0 : i32
    %7 = arith.cmpi eq, %arg0, %c0_i32_2 : i32
    %8 = arith.extui %7 : i1 to i32
    %c0_i32_3 = arith.constant 0 : i32
    %9 = arith.cmpi ne, %8, %c0_i32_3 : i32
    scf.if %9 {
      %c0 = arith.constant 0 : index
      %c0_13 = arith.constant 0 : index
      %31 = vector.load %arg2[%c0, %c0_13] : memref<8x128xbf16, #tpu.memory_space<vmem>>, vector<8x128xbf16>
      %c0_14 = arith.constant 0 : index
      %c0_15 = arith.constant 0 : index
      %32 = vector.load %arg3[%c0_14, %c0_15] : memref<128x128xbf16, #tpu.memory_space<vmem>>, vector<128x128xbf16>
      %cst = arith.constant dense<0.000000e+00> : vector<8x128xf32>
      %33 = tpu.matmul %31, %32, %cst {dimension_numbers = #tpu.dot_dimension_numbers<[1], [0], [0], [1], [0, 0, 1, 1], [], []>} : vector<8x128xbf16>, vector<128x128xbf16>, vector<8x128xf32> -> vector<8x128xf32>
      %c0_16 = arith.constant 0 : index
      %c0_17 = arith.constant 0 : index
      %34 = vector.load %arg4[%c0_16, %c0_17] : memref<1x128xf32, #tpu.memory_space<vmem>>, vector<1x128xf32>
      %35 = vector.broadcast %34 : vector<1x128xf32> to vector<8x128xf32>
      %36 = arith.addf %33, %35 : vector<8x128xf32>
      %cst_18 = arith.constant 2.000000e-01 : f32
      %37 = vector.broadcast %cst_18 : f32 to vector<8x128xf32>
      %38 = arith.mulf %37, %36 : vector<8x128xf32>
      %39 = arith.maximumf %36, %38 : vector<8x128xf32>
      %40 = arith.truncf %39 : vector<8x128xf32> to vector<8x128xbf16>
      %c0_19 = arith.constant 0 : index
      %c0_20 = arith.constant 0 : index
      %41 = vector.load %arg5[%c0_19, %c0_20] : memref<128x256xbf16, #tpu.memory_space<vmem>>, vector<128x256xbf16>
      %cst_21 = arith.constant dense<0.000000e+00> : vector<8x256xf32>
      %42 = tpu.matmul %40, %41, %cst_21 {dimension_numbers = #tpu.dot_dimension_numbers<[1], [0], [0], [1], [0, 0, 1, 1], [], []>} : vector<8x128xbf16>, vector<128x256xbf16>, vector<8x256xf32> -> vector<8x256xf32>
      %43 = arith.index_cast %1 : i32 to index
      %c0_22 = arith.constant 0 : index
      %44 = vector.load %arg17[%43, %c0_22] : memref<8x1024xf32, #tpu.memory_space<vmem>>, vector<8x256xf32>
      tpu.vector_store %arg17[%43, %c0_22], %42 {strides = array<i32>} : memref<8x1024xf32, #tpu.memory_space<vmem>>, vector<8x256xf32>,
      %c0_23 = arith.constant 0 : index
      %c0_24 = arith.constant 0 : index
      %45 = vector.load %arg19[%c0_23, %c0_24] : memref<1x1024xf32, #tpu.memory_space<vmem>>, vector<1x256xf32>
      %cst_25 = arith.constant dense<0.000000e+00> : vector<256xf32>
      %46 = vector.multi_reduction <add>, %42, %cst_25 [0] : vector<8x256xf32> to vector<256xf32>
      %47 = vector.shape_cast %46 : vector<256xf32> to vector<1x256xf32>
      %48 = arith.addf %45, %47 : vector<1x256xf32>
      %c0_26 = arith.constant 0 : index
      %c0_27 = arith.constant 0 : index
      %49 = vector.load %arg19[%c0_26, %c0_27] : memref<1x1024xf32, #tpu.memory_space<vmem>>, vector<1x256xf32>
      tpu.vector_store %arg19[%c0_26, %c0_27], %48 {strides = array<i32>} : memref<1x1024xf32, #tpu.memory_space<vmem>>, vector<1x256xf32>,
      %c0_28 = arith.constant 0 : index
      %c0_29 = arith.constant 0 : index
      %50 = vector.load %arg20[%c0_28, %c0_29] : memref<1x1024xf32, #tpu.memory_space<vmem>>, vector<1x256xf32>
      %51 = arith.mulf %42, %42 : vector<8x256xf32>
      %cst_30 = arith.constant dense<0.000000e+00> : vector<256xf32>
      %52 = vector.multi_reduction <add>, %51, %cst_30 [0] : vector<8x256xf32> to vector<256xf32>
      %53 = vector.shape_cast %52 : vector<256xf32> to vector<1x256xf32>
      %54 = arith.addf %50, %53 : vector<1x256xf32>
      %c0_31 = arith.constant 0 : index
      %c0_32 = arith.constant 0 : index
      %55 = vector.load %arg20[%c0_31, %c0_32] : memref<1x1024xf32, #tpu.memory_space<vmem>>, vector<1x256xf32>
      tpu.vector_store %arg20[%c0_31, %c0_32], %54 {strides = array<i32>} : memref<1x1024xf32, #tpu.memory_space<vmem>>, vector<1x256xf32>,
    } else {
    }
    %c1_i32 = arith.constant 1 : i32
    %10 = arith.cmpi eq, %arg0, %c1_i32 : i32
    %11 = arith.andi %10, %2 : i1
    %12 = arith.extui %11 : i1 to i32
    %c0_i32_4 = arith.constant 0 : i32
    %13 = arith.cmpi ne, %12, %c0_i32_4 : i32
    scf.if %13 {
      %c0 = arith.constant 0 : index
      %c0_13 = arith.constant 0 : index
      %31 = vector.load %arg19[%c0, %c0_13] : memref<1x1024xf32, #tpu.memory_space<vmem>>, vector<1x256xf32>
      %cst = arith.constant 1.250000e-01 : f32
      %32 = vector.broadcast %cst : f32 to vector<1x256xf32>
      %33 = arith.mulf %31, %32 : vector<1x256xf32>
      %c0_14 = arith.constant 0 : index
      %c0_15 = arith.constant 0 : index
      %34 = vector.load %arg20[%c0_14, %c0_15] : memref<1x1024xf32, #tpu.memory_space<vmem>>, vector<1x256xf32>
      %cst_16 = arith.constant 1.250000e-01 : f32
      %35 = vector.broadcast %cst_16 : f32 to vector<1x256xf32>
      %36 = arith.mulf %34, %35 : vector<1x256xf32>
      %37 = arith.mulf %33, %33 : vector<1x256xf32>
      %38 = arith.subf %36, %37 : vector<1x256xf32>
      %cst_17 = arith.constant 0.000000e+00 : f32
      %39 = vector.broadcast %cst_17 : f32 to vector<1x256xf32>
      %40 = arith.maximumf %38, %39 : vector<1x256xf32>
      %c0_18 = arith.constant 0 : index
      %c0_19 = arith.constant 0 : index
      %41 = vector.load %arg6[%c0_18, %c0_19] : memref<1x256xf32, #tpu.memory_space<vmem>>, vector<1x256xf32>
      %cst_20 = arith.constant 9.99999974E-6 : f32
      %42 = vector.broadcast %cst_20 : f32 to vector<1x256xf32>
      %43 = arith.addf %40, %42 : vector<1x256xf32>
      %44 = math.rsqrt %43 : vector<1x256xf32>
      %45 = arith.mulf %41, %44 : vector<1x256xf32>
      %c0_21 = arith.constant 0 : index
      %c0_22 = arith.constant 0 : index
      %46 = vector.load %arg21[%c0_21, %c0_22] : memref<1x1024xf32, #tpu.memory_space<vmem>>, vector<1x256xf32>
      tpu.vector_store %arg21[%c0_21, %c0_22], %45 {strides = array<i32>} : memref<1x1024xf32, #tpu.memory_space<vmem>>, vector<1x256xf32>,
      %c0_23 = arith.constant 0 : index
      %c0_24 = arith.constant 0 : index
      %47 = vector.load %arg7[%c0_23, %c0_24] : memref<1x256xf32, #tpu.memory_space<vmem>>, vector<1x256xf32>
      %48 = arith.mulf %33, %45 : vector<1x256xf32>
      %49 = arith.subf %47, %48 : vector<1x256xf32>
      %c0_25 = arith.constant 0 : index
      %c0_26 = arith.constant 0 : index
      %50 = vector.load %arg22[%c0_25, %c0_26] : memref<1x1024xf32, #tpu.memory_space<vmem>>, vector<1x256xf32>
      tpu.vector_store %arg22[%c0_25, %c0_26], %49 {strides = array<i32>} : memref<1x1024xf32, #tpu.memory_space<vmem>>, vector<1x256xf32>,
      %cst_27 = arith.constant 0.000000e+00 : f32
      %51 = vector.broadcast %cst_27 : f32 to vector<1x1024xf32>
      %c0_28 = arith.constant 0 : index
      %c0_29 = arith.constant 0 : index
      %52 = vector.load %arg19[%c0_28, %c0_29] : memref<1x1024xf32, #tpu.memory_space<vmem>>, vector<1x1024xf32>
      tpu.vector_store %arg19[%c0_28, %c0_29], %51 {strides = array<i32>} : memref<1x1024xf32, #tpu.memory_space<vmem>>, vector<1x1024xf32>,
      %cst_30 = arith.constant 0.000000e+00 : f32
      %53 = vector.broadcast %cst_30 : f32 to vector<1x1024xf32>
      %c0_31 = arith.constant 0 : index
      %c0_32 = arith.constant 0 : index
      %54 = vector.load %arg20[%c0_31, %c0_32] : memref<1x1024xf32, #tpu.memory_space<vmem>>, vector<1x1024xf32>
      tpu.vector_store %arg20[%c0_31, %c0_32], %53 {strides = array<i32>} : memref<1x1024xf32, #tpu.memory_space<vmem>>, vector<1x1024xf32>,
    } else {
    }
    %c1_i32_5 = arith.constant 1 : i32
    %14 = arith.cmpi eq, %arg0, %c1_i32_5 : i32
    %15 = arith.extui %14 : i1 to i32
    %c0_i32_6 = arith.constant 0 : i32
    %16 = arith.cmpi ne, %15, %c0_i32_6 : i32
    scf.if %16 {
      %31 = arith.index_cast %1 : i32 to index
      %c0 = arith.constant 0 : index
      %32 = vector.load %arg17[%31, %c0] : memref<8x1024xf32, #tpu.memory_space<vmem>>, vector<8x256xf32>
      %c0_13 = arith.constant 0 : index
      %c0_14 = arith.constant 0 : index
      %33 = vector.load %arg21[%c0_13, %c0_14] : memref<1x1024xf32, #tpu.memory_space<vmem>>, vector<1x256xf32>
      %34 = vector.broadcast %33 : vector<1x256xf32> to vector<8x256xf32>
      %35 = arith.mulf %32, %34 : vector<8x256xf32>
      %c0_15 = arith.constant 0 : index
      %c0_16 = arith.constant 0 : index
      %36 = vector.load %arg22[%c0_15, %c0_16] : memref<1x1024xf32, #tpu.memory_space<vmem>>, vector<1x256xf32>
      %37 = vector.broadcast %36 : vector<1x256xf32> to vector<8x256xf32>
      %38 = arith.addf %35, %37 : vector<8x256xf32>
      %cst = arith.constant 2.000000e-01 : f32
      %39 = vector.broadcast %cst : f32 to vector<8x256xf32>
      %40 = arith.mulf %39, %38 : vector<8x256xf32>
      %41 = arith.maximumf %38, %40 : vector<8x256xf32>
      %42 = arith.truncf %41 : vector<8x256xf32> to vector<8x256xbf16>
      %c0_17 = arith.constant 0 : index
      %c0_18 = arith.constant 0 : index
      %43 = vector.load %arg8[%c0_17, %c0_18] : memref<256x512xbf16, #tpu.memory_space<vmem>>, vector<256x512xbf16>
      %cst_19 = arith.constant dense<0.000000e+00> : vector<8x512xf32>
      %44 = tpu.matmul %42, %43, %cst_19 {dimension_numbers = #tpu.dot_dimension_numbers<[1], [0], [0], [1], [0, 0, 1, 1], [], []>} : vector<8x256xbf16>, vector<256x512xbf16>, vector<8x512xf32> -> vector<8x512xf32>
      %45 = arith.index_cast %1 : i32 to index
      %c0_20 = arith.constant 0 : index
      %46 = vector.load %arg18[%45, %c0_20] : memref<8x512xf32, #tpu.memory_space<vmem>>, vector<8x512xf32>
      tpu.vector_store %arg18[%45, %c0_20], %44 {strides = array<i32>} : memref<8x512xf32, #tpu.memory_space<vmem>>, vector<8x512xf32>,
      %c0_21 = arith.constant 0 : index
      %c0_22 = arith.constant 0 : index
      %47 = vector.load %arg19[%c0_21, %c0_22] : memref<1x1024xf32, #tpu.memory_space<vmem>>, vector<1x512xf32>
      %cst_23 = arith.constant dense<0.000000e+00> : vector<512xf32>
      %48 = vector.multi_reduction <add>, %44, %cst_23 [0] : vector<8x512xf32> to vector<512xf32>
      %49 = vector.shape_cast %48 : vector<512xf32> to vector<1x512xf32>
      %50 = arith.addf %47, %49 : vector<1x512xf32>
      %c0_24 = arith.constant 0 : index
      %c0_25 = arith.constant 0 : index
      %51 = vector.load %arg19[%c0_24, %c0_25] : memref<1x1024xf32, #tpu.memory_space<vmem>>, vector<1x512xf32>
      tpu.vector_store %arg19[%c0_24, %c0_25], %50 {strides = array<i32>} : memref<1x1024xf32, #tpu.memory_space<vmem>>, vector<1x512xf32>,
      %c0_26 = arith.constant 0 : index
      %c0_27 = arith.constant 0 : index
      %52 = vector.load %arg20[%c0_26, %c0_27] : memref<1x1024xf32, #tpu.memory_space<vmem>>, vector<1x512xf32>
      %53 = arith.mulf %44, %44 : vector<8x512xf32>
      %cst_28 = arith.constant dense<0.000000e+00> : vector<512xf32>
      %54 = vector.multi_reduction <add>, %53, %cst_28 [0] : vector<8x512xf32> to vector<512xf32>
      %55 = vector.shape_cast %54 : vector<512xf32> to vector<1x512xf32>
      %56 = arith.addf %52, %55 : vector<1x512xf32>
      %c0_29 = arith.constant 0 : index
      %c0_30 = arith.constant 0 : index
      %57 = vector.load %arg20[%c0_29, %c0_30] : memref<1x1024xf32, #tpu.memory_space<vmem>>, vector<1x512xf32>
      tpu.vector_store %arg20[%c0_29, %c0_30], %56 {strides = array<i32>} : memref<1x1024xf32, #tpu.memory_space<vmem>>, vector<1x512xf32>,
    } else {
    }
    %c2_i32 = arith.constant 2 : i32
    %17 = arith.cmpi eq, %arg0, %c2_i32 : i32
    %18 = arith.andi %17, %2 : i1
    %19 = arith.extui %18 : i1 to i32
    %c0_i32_7 = arith.constant 0 : i32
    %20 = arith.cmpi ne, %19, %c0_i32_7 : i32
    scf.if %20 {
      %c0 = arith.constant 0 : index
      %c0_13 = arith.constant 0 : index
      %31 = vector.load %arg19[%c0, %c0_13] : memref<1x1024xf32, #tpu.memory_space<vmem>>, vector<1x512xf32>
      %cst = arith.constant 1.250000e-01 : f32
      %32 = vector.broadcast %cst : f32 to vector<1x512xf32>
      %33 = arith.mulf %31, %32 : vector<1x512xf32>
      %c0_14 = arith.constant 0 : index
      %c0_15 = arith.constant 0 : index
      %34 = vector.load %arg20[%c0_14, %c0_15] : memref<1x1024xf32, #tpu.memory_space<vmem>>, vector<1x512xf32>
      %cst_16 = arith.constant 1.250000e-01 : f32
      %35 = vector.broadcast %cst_16 : f32 to vector<1x512xf32>
      %36 = arith.mulf %34, %35 : vector<1x512xf32>
      %37 = arith.mulf %33, %33 : vector<1x512xf32>
      %38 = arith.subf %36, %37 : vector<1x512xf32>
      %cst_17 = arith.constant 0.000000e+00 : f32
      %39 = vector.broadcast %cst_17 : f32 to vector<1x512xf32>
      %40 = arith.maximumf %38, %39 : vector<1x512xf32>
      %c0_18 = arith.constant 0 : index
      %c0_19 = arith.constant 0 : index
      %41 = vector.load %arg9[%c0_18, %c0_19] : memref<1x512xf32, #tpu.memory_space<vmem>>, vector<1x512xf32>
      %cst_20 = arith.constant 9.99999974E-6 : f32
      %42 = vector.broadcast %cst_20 : f32 to vector<1x512xf32>
      %43 = arith.addf %40, %42 : vector<1x512xf32>
      %44 = math.rsqrt %43 : vector<1x512xf32>
      %45 = arith.mulf %41, %44 : vector<1x512xf32>
      %c0_21 = arith.constant 0 : index
      %c0_22 = arith.constant 0 : index
      %46 = vector.load %arg21[%c0_21, %c0_22] : memref<1x1024xf32, #tpu.memory_space<vmem>>, vector<1x512xf32>
      tpu.vector_store %arg21[%c0_21, %c0_22], %45 {strides = array<i32>} : memref<1x1024xf32, #tpu.memory_space<vmem>>, vector<1x512xf32>,
      %c0_23 = arith.constant 0 : index
      %c0_24 = arith.constant 0 : index
      %47 = vector.load %arg10[%c0_23, %c0_24] : memref<1x512xf32, #tpu.memory_space<vmem>>, vector<1x512xf32>
      %48 = arith.mulf %33, %45 : vector<1x512xf32>
      %49 = arith.subf %47, %48 : vector<1x512xf32>
      %c0_25 = arith.constant 0 : index
      %c0_26 = arith.constant 0 : index
      %50 = vector.load %arg22[%c0_25, %c0_26] : memref<1x1024xf32, #tpu.memory_space<vmem>>, vector<1x512xf32>
      tpu.vector_store %arg22[%c0_25, %c0_26], %49 {strides = array<i32>} : memref<1x1024xf32, #tpu.memory_space<vmem>>, vector<1x512xf32>,
      %cst_27 = arith.constant 0.000000e+00 : f32
      %51 = vector.broadcast %cst_27 : f32 to vector<1x1024xf32>
      %c0_28 = arith.constant 0 : index
      %c0_29 = arith.constant 0 : index
      %52 = vector.load %arg19[%c0_28, %c0_29] : memref<1x1024xf32, #tpu.memory_space<vmem>>, vector<1x1024xf32>
      tpu.vector_store %arg19[%c0_28, %c0_29], %51 {strides = array<i32>} : memref<1x1024xf32, #tpu.memory_space<vmem>>, vector<1x1024xf32>,
      %cst_30 = arith.constant 0.000000e+00 : f32
      %53 = vector.broadcast %cst_30 : f32 to vector<1x1024xf32>
      %c0_31 = arith.constant 0 : index
      %c0_32 = arith.constant 0 : index
      %54 = vector.load %arg20[%c0_31, %c0_32] : memref<1x1024xf32, #tpu.memory_space<vmem>>, vector<1x1024xf32>
      tpu.vector_store %arg20[%c0_31, %c0_32], %53 {strides = array<i32>} : memref<1x1024xf32, #tpu.memory_space<vmem>>, vector<1x1024xf32>,
    } else {
    }
    %c2_i32_8 = arith.constant 2 : i32
    %21 = arith.cmpi eq, %arg0, %c2_i32_8 : i32
    %22 = arith.extui %21 : i1 to i32
    %c0_i32_9 = arith.constant 0 : i32
    %23 = arith.cmpi ne, %22, %c0_i32_9 : i32
    scf.if %23 {
      %31 = arith.index_cast %1 : i32 to index
      %c0 = arith.constant 0 : index
      %32 = vector.load %arg18[%31, %c0] : memref<8x512xf32, #tpu.memory_space<vmem>>, vector<8x512xf32>
      %c0_13 = arith.constant 0 : index
      %c0_14 = arith.constant 0 : index
      %33 = vector.load %arg21[%c0_13, %c0_14] : memref<1x1024xf32, #tpu.memory_space<vmem>>, vector<1x512xf32>
      %34 = vector.broadcast %33 : vector<1x512xf32> to vector<8x512xf32>
      %35 = arith.mulf %32, %34 : vector<8x512xf32>
      %c0_15 = arith.constant 0 : index
      %c0_16 = arith.constant 0 : index
      %36 = vector.load %arg22[%c0_15, %c0_16] : memref<1x1024xf32, #tpu.memory_space<vmem>>, vector<1x512xf32>
      %37 = vector.broadcast %36 : vector<1x512xf32> to vector<8x512xf32>
      %38 = arith.addf %35, %37 : vector<8x512xf32>
      %cst = arith.constant 2.000000e-01 : f32
      %39 = vector.broadcast %cst : f32 to vector<8x512xf32>
      %40 = arith.mulf %39, %38 : vector<8x512xf32>
      %41 = arith.maximumf %38, %40 : vector<8x512xf32>
      %42 = arith.truncf %41 : vector<8x512xf32> to vector<8x512xbf16>
      %c0_17 = arith.constant 0 : index
      %c0_18 = arith.constant 0 : index
      %43 = vector.load %arg11[%c0_17, %c0_18] : memref<512x1024xbf16, #tpu.memory_space<vmem>>, vector<512x1024xbf16>
      %cst_19 = arith.constant dense<0.000000e+00> : vector<8x1024xf32>
      %44 = tpu.matmul %42, %43, %cst_19 {dimension_numbers = #tpu.dot_dimension_numbers<[1], [0], [0], [1], [0, 0, 1, 1], [], []>} : vector<8x512xbf16>, vector<512x1024xbf16>, vector<8x1024xf32> -> vector<8x1024xf32>
      %45 = arith.index_cast %1 : i32 to index
      %c0_20 = arith.constant 0 : index
      %46 = vector.load %arg17[%45, %c0_20] : memref<8x1024xf32, #tpu.memory_space<vmem>>, vector<8x1024xf32>
      tpu.vector_store %arg17[%45, %c0_20], %44 {strides = array<i32>} : memref<8x1024xf32, #tpu.memory_space<vmem>>, vector<8x1024xf32>,
      %c0_21 = arith.constant 0 : index
      %c0_22 = arith.constant 0 : index
      %47 = vector.load %arg19[%c0_21, %c0_22] : memref<1x1024xf32, #tpu.memory_space<vmem>>, vector<1x1024xf32>
      %cst_23 = arith.constant dense<0.000000e+00> : vector<1024xf32>
      %48 = vector.multi_reduction <add>, %44, %cst_23 [0] : vector<8x1024xf32> to vector<1024xf32>
      %49 = vector.shape_cast %48 : vector<1024xf32> to vector<1x1024xf32>
      %50 = arith.addf %47, %49 : vector<1x1024xf32>
      %c0_24 = arith.constant 0 : index
      %c0_25 = arith.constant 0 : index
      %51 = vector.load %arg19[%c0_24, %c0_25] : memref<1x1024xf32, #tpu.memory_space<vmem>>, vector<1x1024xf32>
      tpu.vector_store %arg19[%c0_24, %c0_25], %50 {strides = array<i32>} : memref<1x1024xf32, #tpu.memory_space<vmem>>, vector<1x1024xf32>,
      %c0_26 = arith.constant 0 : index
      %c0_27 = arith.constant 0 : index
      %52 = vector.load %arg20[%c0_26, %c0_27] : memref<1x1024xf32, #tpu.memory_space<vmem>>, vector<1x1024xf32>
      %53 = arith.mulf %44, %44 : vector<8x1024xf32>
      %cst_28 = arith.constant dense<0.000000e+00> : vector<1024xf32>
      %54 = vector.multi_reduction <add>, %53, %cst_28 [0] : vector<8x1024xf32> to vector<1024xf32>
      %55 = vector.shape_cast %54 : vector<1024xf32> to vector<1x1024xf32>
      %56 = arith.addf %52, %55 : vector<1x1024xf32>
      %c0_29 = arith.constant 0 : index
      %c0_30 = arith.constant 0 : index
      %57 = vector.load %arg20[%c0_29, %c0_30] : memref<1x1024xf32, #tpu.memory_space<vmem>>, vector<1x1024xf32>
      tpu.vector_store %arg20[%c0_29, %c0_30], %56 {strides = array<i32>} : memref<1x1024xf32, #tpu.memory_space<vmem>>, vector<1x1024xf32>,
    } else {
    }
    %c3_i32 = arith.constant 3 : i32
    %24 = arith.cmpi eq, %arg0, %c3_i32 : i32
    %25 = arith.andi %24, %2 : i1
    %26 = arith.extui %25 : i1 to i32
    %c0_i32_10 = arith.constant 0 : i32
    %27 = arith.cmpi ne, %26, %c0_i32_10 : i32
    scf.if %27 {
      %c0 = arith.constant 0 : index
      %c0_13 = arith.constant 0 : index
      %31 = vector.load %arg19[%c0, %c0_13] : memref<1x1024xf32, #tpu.memory_space<vmem>>, vector<1x1024xf32>
      %cst = arith.constant 1.250000e-01 : f32
      %32 = vector.broadcast %cst : f32 to vector<1x1024xf32>
      %33 = arith.mulf %31, %32 : vector<1x1024xf32>
      %c0_14 = arith.constant 0 : index
      %c0_15 = arith.constant 0 : index
      %34 = vector.load %arg20[%c0_14, %c0_15] : memref<1x1024xf32, #tpu.memory_space<vmem>>, vector<1x1024xf32>
      %cst_16 = arith.constant 1.250000e-01 : f32
      %35 = vector.broadcast %cst_16 : f32 to vector<1x1024xf32>
      %36 = arith.mulf %34, %35 : vector<1x1024xf32>
      %37 = arith.mulf %33, %33 : vector<1x1024xf32>
      %38 = arith.subf %36, %37 : vector<1x1024xf32>
      %cst_17 = arith.constant 0.000000e+00 : f32
      %39 = vector.broadcast %cst_17 : f32 to vector<1x1024xf32>
      %40 = arith.maximumf %38, %39 : vector<1x1024xf32>
      %c0_18 = arith.constant 0 : index
      %c0_19 = arith.constant 0 : index
      %41 = vector.load %arg12[%c0_18, %c0_19] : memref<1x1024xf32, #tpu.memory_space<vmem>>, vector<1x1024xf32>
      %cst_20 = arith.constant 9.99999974E-6 : f32
      %42 = vector.broadcast %cst_20 : f32 to vector<1x1024xf32>
      %43 = arith.addf %40, %42 : vector<1x1024xf32>
      %44 = math.rsqrt %43 : vector<1x1024xf32>
      %45 = arith.mulf %41, %44 : vector<1x1024xf32>
      %c0_21 = arith.constant 0 : index
      %c0_22 = arith.constant 0 : index
      %46 = vector.load %arg21[%c0_21, %c0_22] : memref<1x1024xf32, #tpu.memory_space<vmem>>, vector<1x1024xf32>
      tpu.vector_store %arg21[%c0_21, %c0_22], %45 {strides = array<i32>} : memref<1x1024xf32, #tpu.memory_space<vmem>>, vector<1x1024xf32>,
      %c0_23 = arith.constant 0 : index
      %c0_24 = arith.constant 0 : index
      %47 = vector.load %arg13[%c0_23, %c0_24] : memref<1x1024xf32, #tpu.memory_space<vmem>>, vector<1x1024xf32>
      %48 = arith.mulf %33, %45 : vector<1x1024xf32>
      %49 = arith.subf %47, %48 : vector<1x1024xf32>
      %c0_25 = arith.constant 0 : index
      %c0_26 = arith.constant 0 : index
      %50 = vector.load %arg22[%c0_25, %c0_26] : memref<1x1024xf32, #tpu.memory_space<vmem>>, vector<1x1024xf32>
      tpu.vector_store %arg22[%c0_25, %c0_26], %49 {strides = array<i32>} : memref<1x1024xf32, #tpu.memory_space<vmem>>, vector<1x1024xf32>,
    } else {
    }
    %c3_i32_11 = arith.constant 3 : i32
    %28 = arith.cmpi eq, %arg0, %c3_i32_11 : i32
    %29 = arith.extui %28 : i1 to i32
    %c0_i32_12 = arith.constant 0 : i32
    %30 = arith.cmpi ne, %29, %c0_i32_12 : i32
    scf.if %30 {
      %31 = arith.index_cast %1 : i32 to index
      %c0 = arith.constant 0 : index
      %32 = vector.load %arg17[%31, %c0] : memref<8x1024xf32, #tpu.memory_space<vmem>>, vector<8x1024xf32>
      %c0_13 = arith.constant 0 : index
      %c0_14 = arith.constant 0 : index
      %33 = vector.load %arg21[%c0_13, %c0_14] : memref<1x1024xf32, #tpu.memory_space<vmem>>, vector<1x1024xf32>
      %34 = vector.broadcast %33 : vector<1x1024xf32> to vector<8x1024xf32>
      %35 = arith.mulf %32, %34 : vector<8x1024xf32>
      %c0_15 = arith.constant 0 : index
      %c0_16 = arith.constant 0 : index
      %36 = vector.load %arg22[%c0_15, %c0_16] : memref<1x1024xf32, #tpu.memory_space<vmem>>, vector<1x1024xf32>
      %37 = vector.broadcast %36 : vector<1x1024xf32> to vector<8x1024xf32>
      %38 = arith.addf %35, %37 : vector<8x1024xf32>
      %cst = arith.constant 2.000000e-01 : f32
      %39 = vector.broadcast %cst : f32 to vector<8x1024xf32>
      %40 = arith.mulf %39, %38 : vector<8x1024xf32>
      %41 = arith.maximumf %38, %40 : vector<8x1024xf32>
      %42 = arith.truncf %41 : vector<8x1024xf32> to vector<8x1024xbf16>
      %c0_17 = arith.constant 0 : index
      %c0_18 = arith.constant 0 : index
      %43 = vector.load %arg14[%c0_17, %c0_18] : memref<1024x784xbf16, #tpu.memory_space<vmem>>, vector<1024x784xbf16>
      %cst_19 = arith.constant dense<0.000000e+00> : vector<8x784xf32>
      %44 = tpu.matmul %42, %43, %cst_19 {dimension_numbers = #tpu.dot_dimension_numbers<[1], [0], [0], [1], [0, 0, 1, 1], [], []>} : vector<8x1024xbf16>, vector<1024x784xbf16>, vector<8x784xf32> -> vector<8x784xf32>
      %c0_20 = arith.constant 0 : index
      %c0_21 = arith.constant 0 : index
      %45 = vector.load %arg15[%c0_20, %c0_21] : memref<1x784xf32, #tpu.memory_space<vmem>>, vector<1x784xf32>
      %46 = vector.broadcast %45 : vector<1x784xf32> to vector<8x784xf32>
      %47 = arith.addf %44, %46 : vector<8x784xf32>
      %48 = math.tanh %47 : vector<8x784xf32>
      %c0_22 = arith.constant 0 : index
      %c0_23 = arith.constant 0 : index
      %49 = vector.load %arg16[%c0_22, %c0_23] : memref<8x784xf32, #tpu.memory_space<vmem>>, vector<8x784xf32>
      tpu.vector_store %arg16[%c0_22, %c0_23], %48 {strides = array<i32>} : memref<8x784xf32, #tpu.memory_space<vmem>>, vector<8x784xf32>,
    } else {
    }
    return
  }
  func.func @transform_0(%arg0: i32, %arg1: i32) -> (i32, i32) {
    %c0_i32 = arith.constant 0 : i32
    %0 = arith.cmpi eq, %arg0, %c0_i32 : i32
    %c0_i32_0 = arith.constant 0 : i32
    %1 = arith.select %0, %arg1, %c0_i32_0 : i32
    %c0_i32_1 = arith.constant 0 : i32
    %c0_i32_2 = arith.constant 0 : i32
    return %1, %c0_i32_1 : i32, i32
  }
  func.func @transform_1(%arg0: i32, %arg1: i32) -> (i32, i32) {
    %c0_i32 = arith.constant 0 : i32
    %c0_i32_0 = arith.constant 0 : i32
    %c0_i32_1 = arith.constant 0 : i32
    return %c0_i32, %c0_i32_0 : i32, i32
  }
  func.func @transform_2(%arg0: i32, %arg1: i32) -> (i32, i32) {
    %c0_i32 = arith.constant 0 : i32
    %c0_i32_0 = arith.constant 0 : i32
    %c0_i32_1 = arith.constant 0 : i32
    return %c0_i32, %c0_i32_0 : i32, i32
  }
  func.func @transform_3(%arg0: i32, %arg1: i32) -> (i32, i32) {
    %c0_i32 = arith.constant 0 : i32
    %c0_i32_0 = arith.constant 0 : i32
    %c0_i32_1 = arith.constant 0 : i32
    return %c0_i32, %c0_i32_0 : i32, i32
  }
  func.func @transform_4(%arg0: i32, %arg1: i32) -> (i32, i32) {
    %c0_i32 = arith.constant 0 : i32
    %c0_i32_0 = arith.constant 0 : i32
    %c0_i32_1 = arith.constant 0 : i32
    return %c0_i32, %c0_i32_0 : i32, i32
  }
  func.func @transform_5(%arg0: i32, %arg1: i32) -> (i32, i32) {
    %c0_i32 = arith.constant 0 : i32
    %c0_i32_0 = arith.constant 0 : i32
    %c0_i32_1 = arith.constant 0 : i32
    return %c0_i32, %c0_i32_0 : i32, i32
  }
  func.func @transform_6(%arg0: i32, %arg1: i32) -> (i32, i32) {
    %c0_i32 = arith.constant 0 : i32
    %c0_i32_0 = arith.constant 0 : i32
    %c0_i32_1 = arith.constant 0 : i32
    return %c0_i32, %c0_i32_0 : i32, i32
  }
  func.func @transform_7(%arg0: i32, %arg1: i32) -> (i32, i32) {
    %c0_i32 = arith.constant 0 : i32
    %c0_i32_0 = arith.constant 0 : i32
    %c0_i32_1 = arith.constant 0 : i32
    return %c0_i32, %c0_i32_0 : i32, i32
  }
  func.func @transform_8(%arg0: i32, %arg1: i32) -> (i32, i32) {
    %c0_i32 = arith.constant 0 : i32
    %c0_i32_0 = arith.constant 0 : i32
    %c0_i32_1 = arith.constant 0 : i32
    return %c0_i32, %c0_i32_0 : i32, i32
  }
  func.func @transform_9(%arg0: i32, %arg1: i32) -> (i32, i32) {
    %c0_i32 = arith.constant 0 : i32
    %c0_i32_0 = arith.constant 0 : i32
    %c0_i32_1 = arith.constant 0 : i32
    return %c0_i32, %c0_i32_0 : i32, i32
  }
  func.func @transform_10(%arg0: i32, %arg1: i32) -> (i32, i32) {
    %c0_i32 = arith.constant 0 : i32
    %c0_i32_0 = arith.constant 0 : i32
    %c0_i32_1 = arith.constant 0 : i32
    return %c0_i32, %c0_i32_0 : i32, i32
  }
  func.func @transform_11(%arg0: i32, %arg1: i32) -> (i32, i32) {
    %c0_i32 = arith.constant 0 : i32
    %c0_i32_0 = arith.constant 0 : i32
    %c0_i32_1 = arith.constant 0 : i32
    return %c0_i32, %c0_i32_0 : i32, i32
  }
  func.func @transform_12(%arg0: i32, %arg1: i32) -> (i32, i32) {
    %c0_i32 = arith.constant 0 : i32
    %c0_i32_0 = arith.constant 0 : i32
    %c0_i32_1 = arith.constant 0 : i32
    return %c0_i32, %c0_i32_0 : i32, i32
  }
  func.func @transform_13(%arg0: i32, %arg1: i32) -> (i32, i32) {
    %c0_i32 = arith.constant 0 : i32
    %c0_i32_0 = arith.constant 0 : i32
    %c0_i32_1 = arith.constant 0 : i32
    return %c0_i32, %c0_i32_0 : i32, i32
  }
  func.func @transform_14(%arg0: i32, %arg1: i32) -> (i32, i32) {
    %c3_i32 = arith.constant 3 : i32
    %0 = arith.cmpi eq, %arg0, %c3_i32 : i32
    %c0_i32 = arith.constant 0 : i32
    %1 = arith.select %0, %arg1, %c0_i32 : i32
    %c0_i32_0 = arith.constant 0 : i32
    %c0_i32_1 = arith.constant 0 : i32
    return %1, %c0_i32_0 : i32, i32
  }
}

</mosaic_0001>

<llo_original>
// kernel: generator_forward.1
$region0: #{generator_forward.1}
  #allocation0 [shape = 'u32[]', space=smem, size = 0x4, offset = 0x4, fixed_abs, tag = 'smem constant byte address 0x4 - core index']
  #allocation1 [shape = 'u32[144,128]{1,0:T(1,128)}', space=vmem, size = 0x12000, scoped, tag = 'internal scratch']
  #allocation2 [shape = 'f32[8,1024]{1,0:T(8,128)}', space=vmem, size = 0x8000, scoped, tag = 'scratch operand']
  #allocation3 [shape = 'f32[8,512]{1,0:T(8,128)}', space=vmem, size = 0x4000, scoped, tag = 'scratch operand']
  #allocation4 [shape = 'f32[1,1024]{1,0:T(1,128)}', space=vmem, size = 0x1000, scoped, tag = 'scratch operand']
  #allocation5 [shape = 'f32[1,1024]{1,0:T(1,128)}', space=vmem, size = 0x1000, scoped, tag = 'scratch operand']
  #allocation6 [shape = 'f32[1,1024]{1,0:T(1,128)}', space=vmem, size = 0x1000, scoped, tag = 'scratch operand']
  #allocation7 [shape = 'f32[1,1024]{1,0:T(1,128)}', space=vmem, size = 0x1000, scoped, tag = 'scratch operand']
  %s0 = inlined_call_operand.vmem [shape: bf16[8,128], index: 0, kind: input, shape index: {}]
  %s1 = inlined_call_operand.vmem [shape: bf16[128,128], index: 1, kind: input, shape index: {}]
  %s2 = inlined_call_operand.vmem [shape: f32[1,128], index: 2, kind: input, shape index: {}]
  %s3 = inlined_call_operand.vmem [shape: bf16[128,256], index: 3, kind: input, shape index: {}]
  %s4 = inlined_call_operand.vmem [shape: f32[1,256], index: 4, kind: input, shape index: {}]
  %s5 = inlined_call_operand.vmem [shape: f32[1,256], index: 5, kind: input, shape index: {}]
  %s6 = inlined_call_operand.vmem [shape: bf16[256,512], index: 6, kind: input, shape index: {}]
  %s7 = inlined_call_operand.vmem [shape: f32[1,512], index: 7, kind: input, shape index: {}]
  %s8 = inlined_call_operand.vmem [shape: f32[1,512], index: 8, kind: input, shape index: {}]
  %s9 = inlined_call_operand.vmem [shape: bf16[512,1024], index: 9, kind: input, shape index: {}]
  %s10 = inlined_call_operand.vmem [shape: f32[1,1024], index: 10, kind: input, shape index: {}]
  %s11 = inlined_call_operand.vmem [shape: f32[1,1024], index: 11, kind: input, shape index: {}]
  %s12 = inlined_call_operand.vmem [shape: bf16[1024,784], index: 12, kind: input, shape index: {}]
  %s13 = inlined_call_operand.vmem [shape: f32[1,784], index: 13, kind: input, shape index: {}]
  %s14 = inlined_call_operand.hbm [shape: f32[8,784], index: 14, kind: output, shape index: {}]
  %s15 = sld [smem:[#allocation0]]
  $region121: #{generator_forward.1} parent=0
    _
  %s17 = ssub.s32 1, %s15
  %s18 = scalar_select 0, %s17, %s15
  $region1: #{generator_forward.1} parent=0
    #allocation8 [shape = 'u8[57344]{0}', space=vmem, size = 0xe000, scoped, tag = 'output window, operand 0']
    #allocation9 [shape = 's32[2]{0}', space=sflag, size = 0x8, scoped, tag = 'scoped memory for generator_forward.1']
    %19 = vsyncpa [#allocation9], 0
    %s20 = scalar_lea.sflag [#allocation9], 1
    %21 = vsyncpa %s20, 0
    loop: start=0, step=1, limit=6
    $region2: #{generator_forward.1} parent=1 // loop_pre_header
      _
    $region3: #{generator_forward.1} parent=1 // loop_header
      %s23 = sphi 0, %s27
      %p24 = scmp.ge.s32.totalorder %s23, 6
      %s30 = sphi 0, %s42
      %s31 = sphi 0, %s38
      %s32 = sphi 0, %s30
      %s33 = sphi 0, %s31
      %s34 = sphi 0, %s32
      %s35 = sphi 0, %s33
      %s49 = sphi 0, %s51
      %s52 = sphi 0, %s49
      %s53 = sphi 0, %s52
      %s69 = sphi 0, %s53
      %s73 = sphi 0, %s73
      %s75 = sphi 0, %s73
      %s76 = sphi 0, %s75
      %s90 = sphi 0, %s76
      %s94 = sphi 0, %s94
      %s96 = sphi 0, %s94
      %s97 = sphi 0, %s96
      %s111 = sphi 0, %s97
      %s115 = sphi 0, %s115
      %s117 = sphi 0, %s115
      %s118 = sphi 0, %s117
      %s132 = sphi 0, %s118
      %s136 = sphi 0, %s136
      %s138 = sphi 0, %s136
      %s139 = sphi 0, %s138
      %s153 = sphi 0, %s139
      %s157 = sphi 0, %s157
      %s159 = sphi 0, %s157
      %s160 = sphi 0, %s159
      %s174 = sphi 0, %s160
      %s178 = sphi 0, %s178
      %s180 = sphi 0, %s178
      %s181 = sphi 0, %s180
      %s195 = sphi 0, %s181
      %s199 = sphi 0, %s199
      %s201 = sphi 0, %s199
      %s202 = sphi 0, %s201
      %s216 = sphi 0, %s202
      %s220 = sphi 0, %s220
      %s222 = sphi 0, %s220
      %s223 = sphi 0, %s222
      %s237 = sphi 0, %s223
      %s241 = sphi 0, %s241
      %s243 = sphi 0, %s241
      %s244 = sphi 0, %s243
      %s258 = sphi 0, %s244
      %s262 = sphi 0, %s262
      %s264 = sphi 0, %s262
      %s265 = sphi 0, %s264
      %s279 = sphi 0, %s265
      %s283 = sphi 0, %s283
      %s285 = sphi 0, %s283
      %s286 = sphi 0, %s285
      %s300 = sphi 0, %s286
      %s304 = sphi 0, %s304
      %s306 = sphi 0, %s304
      %s307 = sphi 0, %s306
      %s321 = sphi 0, %s307
      %s325 = sphi 0, %s325
      %s327 = sphi 0, %s325
      %s328 = sphi 0, %s327
      %s342 = sphi 0, %s328
      %s352 = sphi 0, %s354
      %s355 = sphi 0, %s352
      %s356 = sphi 0, %s355
      %s372 = sphi 0, %s356
    $region4: #{generator_forward.1} parent=1 // loop_header_branch
      %26 = sbr.rel (%p24) target = $region8
    $region5: #{generator_forward.1} parent=1 // loop_body
      %s28 = ssub.s32 %s23, 1
      %s29 = ssub.s32 %s23, 2
      %s36 = sadd.s32 1, %s31
      %p37 = scmp.ge.s32.totalorder %s36, 1
      %s38 = scalar_select %p37, 0, %s36
      %s39 = sadd.s32 1, %s30
      %s40 = scalar_select %p37, %s39, %s30
      %p41 = scmp.ge.s32.totalorder %s40, 4
      %s42 = scalar_select %p41, 0, %s40
      %p43 = scmp.eq.s32.totalorder %s30, 0
      %s44 = scalar_select %p43, %s31, 0
      %p45 = scmp.eq.s32.totalorder %s42, 0
      %s46 = scalar_select %p45, %s38, 0
      %s47 = ssub.s32 %s44, %s46
      %p48 = scmp.eq.s32.totalorder %s47, 0
      %s50 = sadd.s32 %s49, 1
      %s51 = scalar_select %p48, %s49, %s50
      %p54 = pneg %p48
      %p55 = scmp.eq.s32.totalorder %s23, 3
      %p56 = por %p54, %p55
      %p57 = scmp.ne.s32.totalorder %s49, %s52
      %p58 = scmp.eq.s32.totalorder %s23, 0
      %p59 = por %p57, %p58
      %p60 = scmp.ne.s32.totalorder %s49, %s52
      %p61 = scmp.eq.s32.totalorder %s28, 3
      %p62 = por %p60, %p61
      %p63 = scmp.ne.s32.totalorder %s52, %s53
      %p64 = scmp.eq.s32.totalorder %s28, 0
      %p65 = por %p63, %p64
      %p66 = scmp.ne.s32.totalorder %s52, %s53
      %p67 = scmp.eq.s32.totalorder %s29, 3
      %p68 = por %p66, %p67
      %p70 = scmp.ne.s32.totalorder %s53, %s69
      %p71 = scmp.eq.s32.totalorder %s29, 0
      %p72 = por %p70, %p71
      %s74 = sadd.s32 %s73, 1
      %p77 = scmp.eq.s32.totalorder %s23, 3
      %p78 = scmp.ne.s32.totalorder %s73, %s75
      %p79 = scmp.eq.s32.totalorder %s23, 0
      %p80 = por %p78, %p79
      %p81 = scmp.ne.s32.totalorder %s73, %s75
      %p82 = scmp.eq.s32.totalorder %s28, 3
      %p83 = por %p81, %p82
      %p84 = scmp.ne.s32.totalorder %s75, %s76
      %p85 = scmp.eq.s32.totalorder %s28, 0
      %p86 = por %p84, %p85
      %p87 = scmp.ne.s32.totalorder %s75, %s76
      %p88 = scmp.eq.s32.totalorder %s29, 3
      %p89 = por %p87, %p88
      %p91 = scmp.ne.s32.totalorder %s76, %s90
      %p92 = scmp.eq.s32.totalorder %s29, 0
      %p93 = por %p91, %p92
      %s95 = sadd.s32 %s94, 1
      %p98 = scmp.eq.s32.totalorder %s23, 3
      %p99 = scmp.ne.s32.totalorder %s94, %s96
      %p100 = scmp.eq.s32.totalorder %s23, 0
      %p101 = por %p99, %p100
      %p102 = scmp.ne.s32.totalorder %s94, %s96
      %p103 = scmp.eq.s32.totalorder %s28, 3
      %p104 = por %p102, %p103
      %p105 = scmp.ne.s32.totalorder %s96, %s97
      %p106 = scmp.eq.s32.totalorder %s28, 0
      %p107 = por %p105, %p106
      %p108 = scmp.ne.s32.totalorder %s96, %s97
      %p109 = scmp.eq.s32.totalorder %s29, 3
      %p110 = por %p108, %p109
      %p112 = scmp.ne.s32.totalorder %s97, %s111
      %p113 = scmp.eq.s32.totalorder %s29, 0
      %p114 = por %p112, %p113
      %s116 = sadd.s32 %s115, 1
      %p119 = scmp.eq.s32.totalorder %s23, 3
      %p120 = scmp.ne.s32.totalorder %s115, %s117
      %p121 = scmp.eq.s32.totalorder %s23, 0
      %p122 = por %p120, %p121
      %p123 = scmp.ne.s32.totalorder %s115, %s117
      %p124 = scmp.eq.s32.totalorder %s28, 3
      %p125 = por %p123, %p124
      %p126 = scmp.ne.s32.totalorder %s117, %s118
      %p127 = scmp.eq.s32.totalorder %s28, 0
      %p128 = por %p126, %p127
      %p129 = scmp.ne.s32.totalorder %s117, %s118
      %p130 = scmp.eq.s32.totalorder %s29, 3
      %p131 = por %p129, %p130
      %p133 = scmp.ne.s32.totalorder %s118, %s132
      %p134 = scmp.eq.s32.totalorder %s29, 0
      %p135 = por %p133, %p134
      %s137 = sadd.s32 %s136, 1
      %p140 = scmp.eq.s32.totalorder %s23, 3
      %p141 = scmp.ne.s32.totalorder %s136, %s138
      %p142 = scmp.eq.s32.totalorder %s23, 0
      %p143 = por %p141, %p142
      %p144 = scmp.ne.s32.totalorder %s136, %s138
      %p145 = scmp.eq.s32.totalorder %s28, 3
      %p146 = por %p144, %p145
      %p147 = scmp.ne.s32.totalorder %s138, %s139
      %p148 = scmp.eq.s32.totalorder %s28, 0
      %p149 = por %p147, %p148
      %p150 = scmp.ne.s32.totalorder %s138, %s139
      %p151 = scmp.eq.s32.totalorder %s29, 3
      %p152 = por %p150, %p151
      %p154 = scmp.ne.s32.totalorder %s139, %s153
      %p155 = scmp.eq.s32.totalorder %s29, 0
      %p156 = por %p154, %p155
      %s158 = sadd.s32 %s157, 1
      %p161 = scmp.eq.s32.totalorder %s23, 3
      %p162 = scmp.ne.s32.totalorder %s157, %s159
      %p163 = scmp.eq.s32.totalorder %s23, 0
      %p164 = por %p162, %p163
      %p165 = scmp.ne.s32.totalorder %s157, %s159
      %p166 = scmp.eq.s32.totalorder %s28, 3
      %p167 = por %p165, %p166
      %p168 = scmp.ne.s32.totalorder %s159, %s160
      %p169 = scmp.eq.s32.totalorder %s28, 0
      %p170 = por %p168, %p169
      %p171 = scmp.ne.s32.totalorder %s159, %s160
      %p172 = scmp.eq.s32.totalorder %s29, 3
      %p173 = por %p171, %p172
      %p175 = scmp.ne.s32.totalorder %s160, %s174
      %p176 = scmp.eq.s32.totalorder %s29, 0
      %p177 = por %p175, %p176
      %s179 = sadd.s32 %s178, 1
      %p182 = scmp.eq.s32.totalorder %s23, 3
      %p183 = scmp.ne.s32.totalorder %s178, %s180
      %p184 = scmp.eq.s32.totalorder %s23, 0
      %p185 = por %p183, %p184
      %p186 = scmp.ne.s32.totalorder %s178, %s180
      %p187 = scmp.eq.s32.totalorder %s28, 3
      %p188 = por %p186, %p187
      %p189 = scmp.ne.s32.totalorder %s180, %s181
      %p190 = scmp.eq.s32.totalorder %s28, 0
      %p191 = por %p189, %p190
      %p192 = scmp.ne.s32.totalorder %s180, %s181
      %p193 = scmp.eq.s32.totalorder %s29, 3
      %p194 = por %p192, %p193
      %p196 = scmp.ne.s32.totalorder %s181, %s195
      %p197 = scmp.eq.s32.totalorder %s29, 0
      %p198 = por %p196, %p197
      %s200 = sadd.s32 %s199, 1
      %p203 = scmp.eq.s32.totalorder %s23, 3
      %p204 = scmp.ne.s32.totalorder %s199, %s201
      %p205 = scmp.eq.s32.totalorder %s23, 0
      %p206 = por %p204, %p205
      %p207 = scmp.ne.s32.totalorder %s199, %s201
      %p208 = scmp.eq.s32.totalorder %s28, 3
      %p209 = por %p207, %p208
      %p210 = scmp.ne.s32.totalorder %s201, %s202
      %p211 = scmp.eq.s32.totalorder %s28, 0
      %p212 = por %p210, %p211
      %p213 = scmp.ne.s32.totalorder %s201, %s202
      %p214 = scmp.eq.s32.totalorder %s29, 3
      %p215 = por %p213, %p214
      %p217 = scmp.ne.s32.totalorder %s202, %s216
      %p218 = scmp.eq.s32.totalorder %s29, 0
      %p219 = por %p217, %p218
      %s221 = sadd.s32 %s220, 1
      %p224 = scmp.eq.s32.totalorder %s23, 3
      %p225 = scmp.ne.s32.totalorder %s220, %s222
      %p226 = scmp.eq.s32.totalorder %s23, 0
      %p227 = por %p225, %p226
      %p228 = scmp.ne.s32.totalorder %s220, %s222
      %p229 = scmp.eq.s32.totalorder %s28, 3
      %p230 = por %p228, %p229
      %p231 = scmp.ne.s32.totalorder %s222, %s223
      %p232 = scmp.eq.s32.totalorder %s28, 0
      %p233 = por %p231, %p232
      %p234 = scmp.ne.s32.totalorder %s222, %s223
      %p235 = scmp.eq.s32.totalorder %s29, 3
      %p236 = por %p234, %p235
      %p238 = scmp.ne.s32.totalorder %s223, %s237
      %p239 = scmp.eq.s32.totalorder %s29, 0
      %p240 = por %p238, %p239
      %s242 = sadd.s32 %s241, 1
      %p245 = scmp.eq.s32.totalorder %s23, 3
      %p246 = scmp.ne.s32.totalorder %s241, %s243
      %p247 = scmp.eq.s32.totalorder %s23, 0
      %p248 = por %p246, %p247
      %p249 = scmp.ne.s32.totalorder %s241, %s243
      %p250 = scmp.eq.s32.totalorder %s28, 3
      %p251 = por %p249, %p250
      %p252 = scmp.ne.s32.totalorder %s243, %s244
      %p253 = scmp.eq.s32.totalorder %s28, 0
      %p254 = por %p252, %p253
      %p255 = scmp.ne.s32.totalorder %s243, %s244
      %p256 = scmp.eq.s32.totalorder %s29, 3
      %p257 = por %p255, %p256
      %p259 = scmp.ne.s32.totalorder %s244, %s258
      %p260 = scmp.eq.s32.totalorder %s29, 0
      %p261 = por %p259, %p260
      %s263 = sadd.s32 %s262, 1
      %p266 = scmp.eq.s32.totalorder %s23, 3
      %p267 = scmp.ne.s32.totalorder %s262, %s264
      %p268 = scmp.eq.s32.totalorder %s23, 0
      %p269 = por %p267, %p268
      %p270 = scmp.ne.s32.totalorder %s262, %s264
      %p271 = scmp.eq.s32.totalorder %s28, 3
      %p272 = por %p270, %p271
      %p273 = scmp.ne.s32.totalorder %s264, %s265
      %p274 = scmp.eq.s32.totalorder %s28, 0
      %p275 = por %p273, %p274
      %p276 = scmp.ne.s32.totalorder %s264, %s265
      %p277 = scmp.eq.s32.totalorder %s29, 3
      %p278 = por %p276, %p277
      %p280 = scmp.ne.s32.totalorder %s265, %s279
      %p281 = scmp.eq.s32.totalorder %s29, 0
      %p282 = por %p280, %p281
      %s284 = sadd.s32 %s283, 1
      %p287 = scmp.eq.s32.totalorder %s23, 3
      %p288 = scmp.ne.s32.totalorder %s283, %s285
      %p289 = scmp.eq.s32.totalorder %s23, 0
      %p290 = por %p288, %p289
      %p291 = scmp.ne.s32.totalorder %s283, %s285
      %p292 = scmp.eq.s32.totalorder %s28, 3
      %p293 = por %p291, %p292
      %p294 = scmp.ne.s32.totalorder %s285, %s286
      %p295 = scmp.eq.s32.totalorder %s28, 0
      %p296 = por %p294, %p295
      %p297 = scmp.ne.s32.totalorder %s285, %s286
      %p298 = scmp.eq.s32.totalorder %s29, 3
      %p299 = por %p297, %p298
      %p301 = scmp.ne.s32.totalorder %s286, %s300
      %p302 = scmp.eq.s32.totalorder %s29, 0
      %p303 = por %p301, %p302
      %s305 = sadd.s32 %s304, 1
      %p308 = scmp.eq.s32.totalorder %s23, 3
      %p309 = scmp.ne.s32.totalorder %s304, %s306
      %p310 = scmp.eq.s32.totalorder %s23, 0
      %p311 = por %p309, %p310
      %p312 = scmp.ne.s32.totalorder %s304, %s306
      %p313 = scmp.eq.s32.totalorder %s28, 3
      %p314 = por %p312, %p313
      %p315 = scmp.ne.s32.totalorder %s306, %s307
      %p316 = scmp.eq.s32.totalorder %s28, 0
      %p317 = por %p315, %p316
      %p318 = scmp.ne.s32.totalorder %s306, %s307
      %p319 = scmp.eq.s32.totalorder %s29, 3
      %p320 = por %p318, %p319
      %p322 = scmp.ne.s32.totalorder %s307, %s321
      %p323 = scmp.eq.s32.totalorder %s29, 0
      %p324 = por %p322, %p323
      %s326 = sadd.s32 %s325, 1
      %p329 = scmp.eq.s32.totalorder %s23, 3
      %p330 = scmp.ne.s32.totalorder %s325, %s327
      %p331 = scmp.eq.s32.totalorder %s23, 0
      %p332 = por %p330, %p331
      %p333 = scmp.ne.s32.totalorder %s325, %s327
      %p334 = scmp.eq.s32.totalorder %s28, 3
      %p335 = por %p333, %p334
      %p336 = scmp.ne.s32.totalorder %s327, %s328
      %p337 = scmp.eq.s32.totalorder %s28, 0
      %p338 = por %p336, %p337
      %p339 = scmp.ne.s32.totalorder %s327, %s328
      %p340 = scmp.eq.s32.totalorder %s29, 3
      %p341 = por %p339, %p340
      %p343 = scmp.ne.s32.totalorder %s328, %s342
      %p344 = scmp.eq.s32.totalorder %s29, 0
      %p345 = por %p343, %p344
      %p346 = scmp.eq.s32.totalorder %s30, 3
      %s347 = scalar_select %p346, %s31, 0
      %p348 = scmp.eq.s32.totalorder %s42, 3
      %s349 = scalar_select %p348, %s38, 0
      %s350 = ssub.s32 %s347, %s349
      %p351 = scmp.eq.s32.totalorder %s350, 0
      %s353 = sadd.s32 %s352, 1
      %s354 = scalar_select %p351, %s352, %s353
      %p357 = pneg %p351
      %p358 = scmp.eq.s32.totalorder %s23, 3
      %p359 = por %p357, %p358
      %p360 = scmp.ne.s32.totalorder %s352, %s355
      %p361 = scmp.eq.s32.totalorder %s23, 0
      %p362 = por %p360, %p361
      %p363 = scmp.ne.s32.totalorder %s352, %s355
      %p364 = scmp.eq.s32.totalorder %s28, 3
      %p365 = por %p363, %p364
      %p366 = scmp.ne.s32.totalorder %s355, %s356
      %p367 = scmp.eq.s32.totalorder %s28, 0
      %p368 = por %p366, %p367
      %p369 = scmp.ne.s32.totalorder %s355, %s356
      %p370 = scmp.eq.s32.totalorder %s29, 3
      %p371 = por %p369, %p370
      %p373 = scmp.ne.s32.totalorder %s356, %s372
      %p374 = scmp.eq.s32.totalorder %s29, 0
      %p375 = por %p373, %p374
      %p376 = scmp.le.s32.totalorder 1, %s23
      %p377 = scmp.lt.s32.totalorder %s23, 5
      %p378 = pnand %p376, %p377
      %p379 = pneg %p378
      // Predicated region
      $region9: #{generator_forward.1} parent=5 // pred_check
        _
      $region10: #{generator_forward.1} parent=5 // pred_check_branch
        %381 = sbr.rel (%p378) target = $region12
      $region11: #{generator_forward.1} parent=5 // pred_region
        %s382 = ssub.s32 %s23, 1
        // Predicated region
        $region13: #{generator_forward.1} parent=11 // pred_check
          %p383 = pneg %p86
        $region14: #{generator_forward.1} parent=11 // pred_check_branch
          %385 = sbr.rel (%p383) target = $region16
        $region15: #{generator_forward.1} parent=11 // pred_region
          _
        $region16: #{generator_forward.1} parent=11 // pred_fallthru
          _
        // Predicated region
        $region17: #{generator_forward.1} parent=11 // pred_check
          %p386 = pneg %p107
        $region18: #{generator_forward.1} parent=11 // pred_check_branch
          %388 = sbr.rel (%p386) target = $region20
        $region19: #{generator_forward.1} parent=11 // pred_region
          _
        $region20: #{generator_forward.1} parent=11 // pred_fallthru
          _
        // Predicated region
        $region21: #{generator_forward.1} parent=11 // pred_check
          %p389 = pneg %p128
        $region22: #{generator_forward.1} parent=11 // pred_check_branch
          %391 = sbr.rel (%p389) target = $region24
        $region23: #{generator_forward.1} parent=11 // pred_region
          _
        $region24: #{generator_forward.1} parent=11 // pred_fallthru
          _
        // Predicated region
        $region25: #{generator_forward.1} parent=11 // pred_check
          %p392 = pneg %p149
        $region26: #{generator_forward.1} parent=11 // pred_check_branch
          %394 = sbr.rel (%p392) target = $region28
        $region27: #{generator_forward.1} parent=11 // pred_region
          _
        $region28: #{generator_forward.1} parent=11 // pred_fallthru
          _
        // Predicated region
        $region29: #{generator_forward.1} parent=11 // pred_check
          %p395 = pneg %p170
        $region30: #{generator_forward.1} parent=11 // pred_check_branch
          %397 = sbr.rel (%p395) target = $region32
        $region31: #{generator_forward.1} parent=11 // pred_region
          _
        $region32: #{generator_forward.1} parent=11 // pred_fallthru
          _
        // Predicated region
        $region33: #{generator_forward.1} parent=11 // pred_check
          %p398 = pneg %p191
        $region34: #{generator_forward.1} parent=11 // pred_check_branch
          %400 = sbr.rel (%p398) target = $region36
        $region35: #{generator_forward.1} parent=11 // pred_region
          _
        $region36: #{generator_forward.1} parent=11 // pred_fallthru
          _
        // Predicated region
        $region37: #{generator_forward.1} parent=11 // pred_check
          %p401 = pneg %p212
        $region38: #{generator_forward.1} parent=11 // pred_check_branch
          %403 = sbr.rel (%p401) target = $region40
        $region39: #{generator_forward.1} parent=11 // pred_region
          _
        $region40: #{generator_forward.1} parent=11 // pred_fallthru
          _
        // Predicated region
        $region41: #{generator_forward.1} parent=11 // pred_check
          %p404 = pneg %p233
        $region42: #{generator_forward.1} parent=11 // pred_check_branch
          %406 = sbr.rel (%p404) target = $region44
        $region43: #{generator_forward.1} parent=11 // pred_region
          _
        $region44: #{generator_forward.1} parent=11 // pred_fallthru
          _
        // Predicated region
        $region45: #{generator_forward.1} parent=11 // pred_check
          %p407 = pneg %p254
        $region46: #{generator_forward.1} parent=11 // pred_check_branch
          %409 = sbr.rel (%p407) target = $region48
        $region47: #{generator_forward.1} parent=11 // pred_region
          _
        $region48: #{generator_forward.1} parent=11 // pred_fallthru
          _
        // Predicated region
        $region49: #{generator_forward.1} parent=11 // pred_check
          %p410 = pneg %p275
        $region50: #{generator_forward.1} parent=11 // pred_check_branch
          %412 = sbr.rel (%p410) target = $region52
        $region51: #{generator_forward.1} parent=11 // pred_region
          _
        $region52: #{generator_forward.1} parent=11 // pred_fallthru
          _
        // Predicated region
        $region53: #{generator_forward.1} parent=11 // pred_check
          %p413 = pneg %p296
        $region54: #{generator_forward.1} parent=11 // pred_check_branch
          %415 = sbr.rel (%p413) target = $region56
        $region55: #{generator_forward.1} parent=11 // pred_region
          _
        $region56: #{generator_forward.1} parent=11 // pred_fallthru
          _
        // Predicated region
        $region57: #{generator_forward.1} parent=11 // pred_check
          %p416 = pneg %p317
        $region58: #{generator_forward.1} parent=11 // pred_check_branch
          %418 = sbr.rel (%p416) target = $region60
        $region59: #{generator_forward.1} parent=11 // pred_region
          _
        $region60: #{generator_forward.1} parent=11 // pred_fallthru
          _
        // Predicated region
        $region61: #{generator_forward.1} parent=11 // pred_check
          %p419 = pneg %p338
        $region62: #{generator_forward.1} parent=11 // pred_check_branch
          %421 = sbr.rel (%p419) target = $region64
        $region63: #{generator_forward.1} parent=11 // pred_region
          _
        $region64: #{generator_forward.1} parent=11 // pred_fallthru
          _
      $region12: #{generator_forward.1} parent=5 // pred_fallthru
        _
      %p422 = scmp.lt.s32.totalorder %s23, 4
      // Predicated region
      $region65: #{generator_forward.1} parent=5 // pred_check
        %p423 = pneg %p422
      $region66: #{generator_forward.1} parent=5 // pred_check_branch
        %425 = sbr.rel (%p423) target = $region68
      $region67: #{generator_forward.1} parent=5 // pred_region
        // Predicated region
        $region69: #{generator_forward.1} parent=67 // pred_check
          %p426 = pneg %p59
        $region70: #{generator_forward.1} parent=67 // pred_check_branch
          %428 = sbr.rel (%p426) target = $region72
        $region71: #{generator_forward.1} parent=67 // pred_region
          %p429 = scmp.eq.s32.totalorder %s30, 0
          %s430 = scalar_select %p429, %s31, 0
          %p431 = scmp.lt.s32.totalorder %s430, 0
          %s432 = scalar_select %p431, %s430, 0
          %s433 = smul.addr %s432, 4
          %s434 = scalar_lea.vmem %s0, %s433
          %p435 = scmp.eq.s32.totalorder %s30, 0
          %s436 = scalar_select %p435, %s31, 0
        $region72: #{generator_forward.1} parent=67 // pred_fallthru
          _
      $region68: #{generator_forward.1} parent=5 // pred_fallthru
        _
      %p437 = scmp.le.s32.totalorder 1, %s23
      %p438 = scmp.lt.s32.totalorder %s23, 5
      %p439 = pnand %p437, %p438
      %p440 = pneg %p439
      // Predicated region
      $region73: #{generator_forward.1} parent=5 // pred_check
        _
      $region74: #{generator_forward.1} parent=5 // pred_check_branch
        %442 = sbr.rel (%p439) target = $region76
      $region75: #{generator_forward.1} parent=5 // pred_region
        %s443 = ssub.s32 %s23, 1
        %p444 = scmp.eq.s32.totalorder %s32, 0
        %s445 = scalar_select %p444, %s33, 0
        %p446 = scmp.lt.s32.totalorder %s445, 0
        %s447 = scalar_select %p446, %s445, 0
        %s448 = smul.addr %s447, 4
        %s449 = scalar_lea.vmem %s0, %s448
        %p450 = pneg %p65
        %p451 = pneg %p62
        %p452 = pneg %p86
        %p453 = pneg %p83
        %p454 = pneg %p107
        %p455 = pneg %p104
        %p456 = pneg %p128
        %p457 = pneg %p125
        %p458 = pneg %p149
        %p459 = pneg %p146
        %p460 = pneg %p170
        %p461 = pneg %p167
        %p462 = pneg %p191
        %p463 = pneg %p188
        %p464 = pneg %p212
        %p465 = pneg %p209
        %p466 = pneg %p233
        %p467 = pneg %p230
        %p468 = pneg %p254
        %p469 = pneg %p251
        %p470 = pneg %p275
        %p471 = pneg %p272
        %p472 = pneg %p296
        %p473 = pneg %p293
        %p474 = pneg %p317
        %p475 = pneg %p314
        %p476 = pneg %p338
        %p477 = pneg %p335
        %p478 = pneg %p368
        %p479 = pneg %p365
        %s480 = sand.u32 %s355, 1
        %s481 = scalar_lea.sflag [#allocation9], %s480
        %s482 = sand.u32 %s355, 1
        %s483 = smul.addr %s482, 56
        %s484 = scalar_lea.vmem [#allocation8], %s483
        %p485 = scmp.eq.s32.totalorder %s32, 0
        %s486 = scalar_select %p485, %s33, 0
        %p487 = scmp.lt.s32.totalorder %s486, 0
        %s488 = scalar_select %p487, %s486, 0
        %s489 = smul.addr %s488, 4
        %s490 = scalar_lea.vmem %s0, %s489
        %p491 = scmp.eq.s32.totalorder %s32, 0
        %s492 = scalar_select %p491, %s33, 0
        %p493 = scmp.eq.s32.totalorder %s32, 3
        %s494 = scalar_select %p493, %s33, 0
        %s496 = smul.u32 %s33, 8
        %p497 = scmp.eq.s32.totalorder %s33, 0
        %p498 = scmp.eq.s32.totalorder %s32, 0
        %p499 = pnand %p498, %p497
        %p500 = pneg %p499
        // Predicated region
        $region77: #{generator_forward.1} parent=75 // pred_check
          _
        $region78: #{generator_forward.1} parent=75 // pred_check_branch
          %502 = sbr.rel (%p499) target = $region80
        $region79: #{generator_forward.1} parent=75 // pred_region
          %503 = vst [vmem:[#allocation4] sm:$0xff] 0.0
          %504 = vst [vmem:[#allocation5] sm:$0xff] 0.0
        $region80: #{generator_forward.1} parent=75 // pred_fallthru
          _
        // Predicated region
        $region81: #{generator_forward.1} parent=75 // pred_check
          %p505 = pneg %p498
        $region82: #{generator_forward.1} parent=75 // pred_check_branch
          %507 = sbr.rel (%p505) target = $region84
        $region83: #{generator_forward.1} parent=75 // pred_region
          %v508 = vld [vmem:[%s490] sm:$0xf]
          %v509 = vld [vmem:[%s1] sm:$0xf]
          %v510 = vld [vmem:[%s1 + $0x4] sm:$0xf]
          %v511 = vld [vmem:[%s1 + $0x8] sm:$0xf]
          %v512 = vld [vmem:[%s1 + $0xc] sm:$0xf]
          %v513 = vld [vmem:[%s1 + $0x10] sm:$0xf]
          %v514 = vld [vmem:[%s1 + $0x14] sm:$0xf]
          %v515 = vld [vmem:[%s1 + $0x18] sm:$0xf]
          %v516 = vld [vmem:[%s1 + $0x1c] sm:$0xf]
          %v517 = vld [vmem:[%s1 + $0x20] sm:$0xf]
          %v518 = vld [vmem:[%s1 + $0x24] sm:$0xf]
          %v519 = vld [vmem:[%s1 + $0x28] sm:$0xf]
          %v520 = vld [vmem:[%s1 + $0x2c] sm:$0xf]
          %v521 = vld [vmem:[%s1 + $0x30] sm:$0xf]
          %v522 = vld [vmem:[%s1 + $0x34] sm:$0xf]
          %v523 = vld [vmem:[%s1 + $0x38] sm:$0xf]
          %v524 = vld [vmem:[%s1 + $0x3c] sm:$0xf]
          %v525 = vld [vmem:[%s2] sm:$0x1]
          %v527 = vlaneseq
          %v528 = vshrl.u32 %v527, 7
          %v529 = vsub.s32 0, %v528
          %v530 = vrot.slane %v525, %v529
          %v548 = vunpack.c.l.b16 %v509
          %v549 = vunpack.c.l.b16 %v510
          %v550 = vunpack.c.l.b16 %v511
          %v551 = vunpack.c.l.b16 %v512
          %v552 = vunpack.c.l.b16 %v513
          %v553 = vunpack.c.l.b16 %v514
          %v554 = vunpack.c.l.b16 %v515
          %v555 = vunpack.c.l.b16 %v516
          %v556 = vunpack.c.l.b16 %v517
          %v557 = vunpack.c.l.b16 %v518
          %v558 = vunpack.c.l.b16 %v519
          %v559 = vunpack.c.l.b16 %v520
          %v560 = vunpack.c.l.b16 %v521
          %v561 = vunpack.c.l.b16 %v522
          %v562 = vunpack.c.l.b16 %v523
          %v563 = vunpack.c.l.b16 %v524
          %v564 = vpack.c.b16 %v549, %v548
          %v565 = vpack.c.b16 %v551, %v550
          %v566 = vpack.c.b16 %v553, %v552
          %v567 = vpack.c.b16 %v555, %v554
          %v568 = vpack.c.b16 %v557, %v556
          %v569 = vpack.c.b16 %v559, %v558
          %v570 = vpack.c.b16 %v561, %v560
          %v571 = vpack.c.b16 %v563, %v562
          %580 = vmatprep.subr.bf16.mxu0 0
          %581 = vmatpush1.bf16.msra.mxu0 %v564
          %582 = vmatprep.subr.bf16.mxu0 0
          %583 = vmatpush1.bf16.msra.mxu0 %v565
          %584 = vmatprep.subr.bf16.mxu0 0
          %585 = vmatpush1.bf16.msra.mxu0 %v566
          %586 = vmatprep.subr.bf16.mxu0 0
          %587 = vmatpush1.bf16.msra.mxu0 %v567
          %588 = vmatprep.subr.bf16.mxu0 0
          %589 = vmatpush1.bf16.msra.mxu0 %v568
          %590 = vmatprep.subr.bf16.mxu0 0
          %591 = vmatpush1.bf16.msra.mxu0 %v569
          %592 = vmatprep.subr.bf16.mxu0 0
          %593 = vmatpush1.bf16.msra.mxu0 %v570
          %594 = vmatprep.subr.bf16.mxu0 0
          %595 = vmatpush1.bf16.msra.mxu0 %v571
          %596 = vmatprep.subr.bf16.mxu0 0
          %597 = vmatpush1.bf16.msra.mxu0 0
          %598 = vmatprep.subr.bf16.mxu0 0
          %599 = vmatpush1.bf16.msra.mxu0 0
          %600 = vmatprep.subr.bf16.mxu0 0
          %601 = vmatpush1.bf16.msra.mxu0 0
          %602 = vmatprep.subr.bf16.mxu0 0
          %603 = vmatpush1.bf16.msra.mxu0 0
          %604 = vmatprep.subr.bf16.mxu0 0
          %605 = vmatpush1.bf16.msra.mxu0 0
          %606 = vmatprep.subr.bf16.mxu0 0
          %607 = vmatpush1.bf16.msra.mxu0 0
          %608 = vmatprep.subr.bf16.mxu0 0
          %609 = vmatpush1.bf16.msra.mxu0 0
          %610 = vmatprep.subr.bf16.mxu0 0
          %611 = vmatpush1.bf16.msra.mxu0 0
          %612 = vmatprep.mubr.bf16.mxu0 0
          %613 = vmatmul.mubr.bf16.gmra.mrb[0].mxu0 %v508
          %v614 = vpop.f32.mrb[0].mxu0
          %v615 = vadd.f32 %v530, %v614
          %v616 = vpop.f32.mrb[0].mxu0
          %v617 = vpop.f32.mrb[0].mxu0
          %v618 = vpop.f32.mrb[0].mxu0
          %619 = vdwg.mxu0
          %v620 = vmul.f32 %v615, 0.2
          %v621 = vmax.f32 %v615, %v620
          %v622 = vpack.c.bf16 %v621, %v621
          %v623 = vld [vmem:[%s3] sm:$0xff]
          %v624 = vld [vmem:[%s3 + $0x8] sm:$0xff]
          %v625 = vld [vmem:[%s3 + $0x10] sm:$0xff]
          %v626 = vld [vmem:[%s3 + $0x18] sm:$0xff]
          %v627 = vld [vmem:[%s3 + $0x20] sm:$0xff]
          %v628 = vld [vmem:[%s3 + $0x28] sm:$0xff]
          %v629 = vld [vmem:[%s3 + $0x30] sm:$0xff]
          %v630 = vld [vmem:[%s3 + $0x38] sm:$0xff]
          %v631 = vld [vmem:[%s3 + $0x40] sm:$0xff]
          %v632 = vld [vmem:[%s3 + $0x48] sm:$0xff]
          %v633 = vld [vmem:[%s3 + $0x50] sm:$0xff]
          %v634 = vld [vmem:[%s3 + $0x58] sm:$0xff]
          %v635 = vld [vmem:[%s3 + $0x60] sm:$0xff]
          %v636 = vld [vmem:[%s3 + $0x68] sm:$0xff]
          %v637 = vld [vmem:[%s3 + $0x70] sm:$0xff]
          %v638 = vld [vmem:[%s3 + $0x78] sm:$0xff]
          %v655 = vunpack.c.l.b16 %v623
          %v656 = vunpack.c.h.b16 %v623
          %v657 = vunpack.c.l.b16 %v624
          %v658 = vunpack.c.h.b16 %v624
          %v659 = vunpack.c.l.b16 %v625
          %v660 = vunpack.c.h.b16 %v625
          %v661 = vunpack.c.l.b16 %v626
          %v662 = vunpack.c.h.b16 %v626
          %v663 = vunpack.c.l.b16 %v627
          %v664 = vunpack.c.h.b16 %v627
          %v665 = vunpack.c.l.b16 %v628
          %v666 = vunpack.c.h.b16 %v628
          %v667 = vunpack.c.l.b16 %v629
          %v668 = vunpack.c.h.b16 %v629
          %v669 = vunpack.c.l.b16 %v630
          %v670 = vunpack.c.h.b16 %v630
          %v671 = vunpack.c.l.b16 %v631
          %v672 = vunpack.c.h.b16 %v631
          %v673 = vunpack.c.l.b16 %v632
          %v674 = vunpack.c.h.b16 %v632
          %v675 = vunpack.c.l.b16 %v633
          %v676 = vunpack.c.h.b16 %v633
          %v677 = vunpack.c.l.b16 %v634
          %v678 = vunpack.c.h.b16 %v634
          %v679 = vunpack.c.l.b16 %v635
          %v680 = vunpack.c.h.b16 %v635
          %v681 = vunpack.c.l.b16 %v636
          %v682 = vunpack.c.h.b16 %v636
          %v683 = vunpack.c.l.b16 %v637
          %v684 = vunpack.c.h.b16 %v637
          %v685 = vunpack.c.l.b16 %v638
          %v686 = vunpack.c.h.b16 %v638
          %v687 = vpack.c.b16 %v657, %v655
          %v688 = vpack.c.b16 %v658, %v656
          %v689 = vpack.c.b16 %v661, %v659
          %v690 = vpack.c.b16 %v662, %v660
          %v691 = vpack.c.b16 %v665, %v663
          %v692 = vpack.c.b16 %v666, %v664
          %v693 = vpack.c.b16 %v669, %v667
          %v694 = vpack.c.b16 %v670, %v668
          %v695 = vpack.c.b16 %v673, %v671
          %v696 = vpack.c.b16 %v674, %v672
          %v697 = vpack.c.b16 %v677, %v675
          %v698 = vpack.c.b16 %v678, %v676
          %v699 = vpack.c.b16 %v681, %v679
          %v700 = vpack.c.b16 %v682, %v680
          %v701 = vpack.c.b16 %v685, %v683
          %v702 = vpack.c.b16 %v686, %v684
          %719 = vmatprep.subr.bf16.mxu0 %v688
          %720 = vmatpush1.bf16.msra.mxu0 %v687
          %721 = vmatprep.subr.bf16.mxu0 %v690
          %722 = vmatpush1.bf16.msra.mxu0 %v689
          %723 = vmatprep.subr.bf16.mxu0 %v692
          %724 = vmatpush1.bf16.msra.mxu0 %v691
          %725 = vmatprep.subr.bf16.mxu0 %v694
          %726 = vmatpush1.bf16.msra.mxu0 %v693
          %727 = vmatprep.subr.bf16.mxu0 %v696
          %728 = vmatpush1.bf16.msra.mxu0 %v695
          %729 = vmatprep.subr.bf16.mxu0 %v698
          %730 = vmatpush1.bf16.msra.mxu0 %v697
          %731 = vmatprep.subr.bf16.mxu0 %v700
          %732 = vmatpush1.bf16.msra.mxu0 %v699
          %733 = vmatprep.subr.bf16.mxu0 %v702
          %734 = vmatpush1.bf16.msra.mxu0 %v701
          %735 = vmatprep.subr.bf16.mxu0 0
          %736 = vmatpush1.bf16.msra.mxu0 0
          %737 = vmatprep.subr.bf16.mxu0 0
          %738 = vmatpush1.bf16.msra.mxu0 0
          %739 = vmatprep.subr.bf16.mxu0 0
          %740 = vmatpush1.bf16.msra.mxu0 0
          %741 = vmatprep.subr.bf16.mxu0 0
          %742 = vmatpush1.bf16.msra.mxu0 0
          %743 = vmatprep.subr.bf16.mxu0 0
          %744 = vmatpush1.bf16.msra.mxu0 0
          %745 = vmatprep.subr.bf16.mxu0 0
          %746 = vmatpush1.bf16.msra.mxu0 0
          %747 = vmatprep.subr.bf16.mxu0 0
          %748 = vmatpush1.bf16.msra.mxu0 0
          %749 = vmatprep.subr.bf16.mxu0 0
          %750 = vmatpush1.bf16.msra.mxu0 0
          %751 = vmatprep.mubr.bf16.mxu0 0
          %752 = vmatmul.mubr.bf16.gmra.mrb[0].mxu0 %v622
          %v753 = vpop.f32.mrb[0].mxu0
          %v754 = vadd.f32 0.0, %v753
          %v755 = vpop.f32.mrb[0].mxu0
          %v756 = vadd.f32 0.0, %v755
          %v757 = vpop.f32.mrb[0].mxu0
          %v758 = vpop.f32.mrb[0].mxu0
          %759 = vdwg.mxu0
          %s760 = sshra.s32 %s496, 3
          %s761 = sand.u32 %s496, 7
          %s762 = smul.u32 %s760, 8
          %s763 = smul.addr %s762, 8
          %s764 = scalar_lea.vmem [#allocation2], %s763
          %765 = vst [vmem:[%s764] sm:$0xff] %v754
          %766 = vst [vmem:[%s764 + $0x8] sm:$0xff] %v756
          %v767 = vld [vmem:[#allocation4] sm:$0x3]
          %v768 = vrot.slane %v754, 4
          %v769 = vadd.f32 %v754, %v768
          %v770 = vrot.slane %v769, 2
          %v771 = vadd.f32 %v769, %v770
          %v772 = vrot.slane %v771, 1
          %v773 = vadd.f32 %v771, %v772
          %v774 = vrot.slane %v756, 4
          %v775 = vadd.f32 %v756, %v774
          %v776 = vrot.slane %v775, 2
          %v777 = vadd.f32 %v775, %v776
          %v778 = vrot.slane %v777, 1
          %v779 = vadd.f32 %v777, %v778
          %v782 = vcombine.low %v773, %v779
          %v784 = vunpack.c.l.s4 1966171168
          %v785 = vunpack.c.0.s8 %v784
          %v786 = vlaneseq
          %v787 = vshrl.u32 %v786, 7
          %v788 = vsub.s32 %v785, %v787
          %v789 = vrot.slane %v782, %v788
          %v791 = vunpack.c.l.s4 1966171168
          %v792 = vunpack.c.0.s8 %v791
          %v793 = vlaneseq
          %v794 = vshrl.u32 %v793, 7
          %v795 = vsub.s32 %v792, %v794
          %v796 = vrot.slane %v789, %v795
          %v798 = vadd.f32 %v767, %v796
          %v799 = vlaneseq
          %vm800 = vcmp.ge.s32.totalorder %v799, 0
          %vm801 = vcmp.lt.s32.totalorder %v799, 256
          %vm802 = vmand %vm800, %vm801
          %803 = vst.msk [vmem:[#allocation4] sm:$0x3] %vm802, %v798
          %v804 = vld [vmem:[#allocation5] sm:$0x3]
          %v805 = vmul.f32 %v754, %v754
          %v806 = vmul.f32 %v756, %v756
          %v807 = vrot.slane %v805, 4
          %v808 = vadd.f32 %v805, %v807
          %v809 = vrot.slane %v808, 2
          %v810 = vadd.f32 %v808, %v809
          %v811 = vrot.slane %v810, 1
          %v812 = vadd.f32 %v810, %v811
          %v813 = vrot.slane %v806, 4
          %v814 = vadd.f32 %v806, %v813
          %v815 = vrot.slane %v814, 2
          %v816 = vadd.f32 %v814, %v815
          %v817 = vrot.slane %v816, 1
          %v818 = vadd.f32 %v816, %v817
          %v821 = vcombine.low %v812, %v818
          %v823 = vunpack.c.l.s4 1966171168
          %v824 = vunpack.c.0.s8 %v823
          %v825 = vlaneseq
          %v826 = vshrl.u32 %v825, 7
          %v827 = vsub.s32 %v824, %v826
          %v828 = vrot.slane %v821, %v827
          %v830 = vunpack.c.l.s4 1966171168
          %v831 = vunpack.c.0.s8 %v830
          %v832 = vlaneseq
          %v833 = vshrl.u32 %v832, 7
          %v834 = vsub.s32 %v831, %v833
          %v835 = vrot.slane %v828, %v834
          %v837 = vadd.f32 %v804, %v835
          %838 = vst.msk [vmem:[#allocation5] sm:$0x3] %vm802, %v837
        $region84: #{generator_forward.1} parent=75 // pred_fallthru
          _
        %p839 = scmp.eq.s32.totalorder %s32, 1
        %p840 = pnand %p839, %p497
        %p841 = pneg %p840
        // Predicated region
        $region85: #{generator_forward.1} parent=75 // pred_check
          _
        $region86: #{generator_forward.1} parent=75 // pred_check_branch
          %843 = sbr.rel (%p840) target = $region88
        $region87: #{generator_forward.1} parent=75 // pred_region
          %v844 = vld [vmem:[#allocation4] sm:$0x3]
          %v845 = vmul.f32 %v844, 0.125
          %v846 = vld [vmem:[#allocation5] sm:$0x3]
          %v847 = vmul.f32 %v846, 0.125
          %v848 = vmul.f32 %v845, %v845
          %v849 = vsub.f32 %v847, %v848
          %v850 = vmax.f32 %v849, 0.0
          %v851 = vld [vmem:[%s4] sm:$0x3]
          %v852 = vadd.f32 %v850, 1e-05
          %v853 = vrsqrt.pop %v852
          %v854 = vmul.f32 %v851, %v853
          %v855 = vlaneseq
          %vm856 = vcmp.ge.s32.totalorder %v855, 0
          %vm857 = vcmp.lt.s32.totalorder %v855, 256
          %vm858 = vmand %vm856, %vm857
          %859 = vst.msk [vmem:[#allocation6] sm:$0x3] %vm858, %v854
          %v860 = vld [vmem:[%s5] sm:$0x3]
          %v861 = vmul.f32 %v845, %v854
          %v862 = vsub.f32 %v860, %v861
          %863 = vst.msk [vmem:[#allocation7] sm:$0x3] %vm858, %v862
          %864 = vst [vmem:[#allocation4] sm:$0xff] 0.0
          %865 = vst [vmem:[#allocation5] sm:$0xff] 0.0
        $region88: #{generator_forward.1} parent=75 // pred_fallthru
          _
        // Predicated region
        $region89: #{generator_forward.1} parent=75 // pred_check
          %p866 = pneg %p839
        $region90: #{generator_forward.1} parent=75 // pred_check_branch
          %868 = sbr.rel (%p866) target = $region92
        $region91: #{generator_forward.1} parent=75 // pred_region
          %s869 = sshra.s32 %s496, 3
          %s870 = sand.u32 %s496, 7
          %s871 = smul.u32 %s869, 8
          %s872 = smul.addr %s871, 8
          %s873 = scalar_lea.vmem [#allocation2], %s872
          %v874 = vld [vmem:[%s873] sm:$0xff]
          %v875 = vld [vmem:[%s873 + $0x8] sm:$0xff]
          %v876 = vld [vmem:[#allocation6] sm:$0x3]
          %v878 = vlaneseq
          %v879 = vshrl.u32 %v878, 7
          %v880 = vsub.s32 0, %v879
          %v881 = vrot.slane %v876, %v880
          %v882 = vlaneseq
          %v883 = vshrl.u32 %v882, 7
          %v884 = vsub.s32 1, %v883
          %v885 = vrot.slane %v876, %v884
          %v888 = vmul.f32 %v874, %v881
          %v889 = vmul.f32 %v875, %v885
          %v890 = vld [vmem:[#allocation7] sm:$0x3]
          %v892 = vlaneseq
          %v893 = vshrl.u32 %v892, 7
          %v894 = vsub.s32 0, %v893
          %v895 = vrot.slane %v890, %v894
          %v896 = vlaneseq
          %v897 = vshrl.u32 %v896, 7
          %v898 = vsub.s32 1, %v897
          %v899 = vrot.slane %v890, %v898
          %v902 = vadd.f32 %v888, %v895
          %v903 = vadd.f32 %v889, %v899
          %v904 = vmul.f32 %v902, 0.2
          %v905 = vmul.f32 %v903, 0.2
          %v906 = vmax.f32 %v902, %v904
          %v907 = vmax.f32 %v903, %v905
          %v908 = vpack.c.bf16 %v906, %v906
          %v909 = vpack.c.bf16 %v907, %v907
          %v910 = vld [vmem:[%s6] sm:$0xff]
          %v911 = vld [vmem:[%s6 + $0x8] sm:$0xff]
          %v912 = vld [vmem:[%s6 + $0x10] sm:$0xff]
          %v913 = vld [vmem:[%s6 + $0x18] sm:$0xff]
          %v914 = vld [vmem:[%s6 + $0x20] sm:$0xff]
          %v915 = vld [vmem:[%s6 + $0x28] sm:$0xff]
          %v916 = vld [vmem:[%s6 + $0x30] sm:$0xff]
          %v917 = vld [vmem:[%s6 + $0x38] sm:$0xff]
          %v918 = vld [vmem:[%s6 + $0x40] sm:$0xff]
          %v919 = vld [vmem:[%s6 + $0x48] sm:$0xff]
          %v920 = vld [vmem:[%s6 + $0x50] sm:$0xff]
          %v921 = vld [vmem:[%s6 + $0x58] sm:$0xff]
          %v922 = vld [vmem:[%s6 + $0x60] sm:$0xff]
          %v923 = vld [vmem:[%s6 + $0x68] sm:$0xff]
          %v924 = vld [vmem:[%s6 + $0x70] sm:$0xff]
          %v925 = vld [vmem:[%s6 + $0x78] sm:$0xff]
          %v926 = vld [vmem:[%s6 + $0x80] sm:$0xff]
          %v927 = vld [vmem:[%s6 + $0x88] sm:$0xff]
          %v928 = vld [vmem:[%s6 + $0x90] sm:$0xff]
          %v929 = vld [vmem:[%s6 + $0x98] sm:$0xff]
          %v930 = vld [vmem:[%s6 + $0xa0] sm:$0xff]
          %v931 = vld [vmem:[%s6 + $0xa8] sm:$0xff]
          %v932 = vld [vmem:[%s6 + $0xb0] sm:$0xff]
          %v933 = vld [vmem:[%s6 + $0xb8] sm:$0xff]
          %v934 = vld [vmem:[%s6 + $0xc0] sm:$0xff]
          %v935 = vld [vmem:[%s6 + $0xc8] sm:$0xff]
          %v936 = vld [vmem:[%s6 + $0xd0] sm:$0xff]
          %v937 = vld [vmem:[%s6 + $0xd8] sm:$0xff]
          %v938 = vld [vmem:[%s6 + $0xe0] sm:$0xff]
          %v939 = vld [vmem:[%s6 + $0xe8] sm:$0xff]
          %v940 = vld [vmem:[%s6 + $0xf0] sm:$0xff]
          %v941 = vld [vmem:[%s6 + $0xf8] sm:$0xff]
          %v942 = vld [vmem:[%s6 + $0x100] sm:$0xff]
          %v943 = vld [vmem:[%s6 + $0x108] sm:$0xff]
          %v944 = vld [vmem:[%s6 + $0x110] sm:$0xff]
          %v945 = vld [vmem:[%s6 + $0x118] sm:$0xff]
          %v946 = vld [vmem:[%s6 + $0x120] sm:$0xff]
          %v947 = vld [vmem:[%s6 + $0x128] sm:$0xff]
          %v948 = vld [vmem:[%s6 + $0x130] sm:$0xff]
          %v949 = vld [vmem:[%s6 + $0x138] sm:$0xff]
          %v950 = vld [vmem:[%s6 + $0x140] sm:$0xff]
          %v951 = vld [vmem:[%s6 + $0x148] sm:$0xff]
          %v952 = vld [vmem:[%s6 + $0x150] sm:$0xff]
          %v953 = vld [vmem:[%s6 + $0x158] sm:$0xff]
          %v954 = vld [vmem:[%s6 + $0x160] sm:$0xff]
          %v955 = vld [vmem:[%s6 + $0x168] sm:$0xff]
          %v956 = vld [vmem:[%s6 + $0x170] sm:$0xff]
          %v957 = vld [vmem:[%s6 + $0x178] sm:$0xff]
          %v958 = vld [vmem:[%s6 + $0x180] sm:$0xff]
          %v959 = vld [vmem:[%s6 + $0x188] sm:$0xff]
          %v960 = vld [vmem:[%s6 + $0x190] sm:$0xff]
          %v961 = vld [vmem:[%s6 + $0x198] sm:$0xff]
          %v962 = vld [vmem:[%s6 + $0x1a0] sm:$0xff]
          %v963 = vld [vmem:[%s6 + $0x1a8] sm:$0xff]
          %v964 = vld [vmem:[%s6 + $0x1b0] sm:$0xff]
          %v965 = vld [vmem:[%s6 + $0x1b8] sm:$0xff]
          %v966 = vld [vmem:[%s6 + $0x1c0] sm:$0xff]
          %v967 = vld [vmem:[%s6 + $0x1c8] sm:$0xff]
          %v968 = vld [vmem:[%s6 + $0x1d0] sm:$0xff]
          %v969 = vld [vmem:[%s6 + $0x1d8] sm:$0xff]
          %v970 = vld [vmem:[%s6 + $0x1e0] sm:$0xff]
          %v971 = vld [vmem:[%s6 + $0x1e8] sm:$0xff]
          %v972 = vld [vmem:[%s6 + $0x1f0] sm:$0xff]
          %v973 = vld [vmem:[%s6 + $0x1f8] sm:$0xff]
          %v1038 = vunpack.c.l.b16 %v910
          %v1039 = vunpack.c.h.b16 %v910
          %v1040 = vunpack.c.l.b16 %v911
          %v1041 = vunpack.c.h.b16 %v911
          %v1042 = vunpack.c.l.b16 %v912
          %v1043 = vunpack.c.h.b16 %v912
          %v1044 = vunpack.c.l.b16 %v913
          %v1045 = vunpack.c.h.b16 %v913
          %v1046 = vunpack.c.l.b16 %v914
          %v1047 = vunpack.c.h.b16 %v914
          %v1048 = vunpack.c.l.b16 %v915
          %v1049 = vunpack.c.h.b16 %v915
          %v1050 = vunpack.c.l.b16 %v916
          %v1051 = vunpack.c.h.b16 %v916
          %v1052 = vunpack.c.l.b16 %v917
          %v1053 = vunpack.c.h.b16 %v917
          %v1054 = vunpack.c.l.b16 %v918
          %v1055 = vunpack.c.h.b16 %v918
          %v1056 = vunpack.c.l.b16 %v919
          %v1057 = vunpack.c.h.b16 %v919
          %v1058 = vunpack.c.l.b16 %v920
          %v1059 = vunpack.c.h.b16 %v920
          %v1060 = vunpack.c.l.b16 %v921
          %v1061 = vunpack.c.h.b16 %v921
          %v1062 = vunpack.c.l.b16 %v922
          %v1063 = vunpack.c.h.b16 %v922
          %v1064 = vunpack.c.l.b16 %v923
          %v1065 = vunpack.c.h.b16 %v923
          %v1066 = vunpack.c.l.b16 %v924
          %v1067 = vunpack.c.h.b16 %v924
          %v1068 = vunpack.c.l.b16 %v925
          %v1069 = vunpack.c.h.b16 %v925
          %v1070 = vunpack.c.l.b16 %v926
          %v1071 = vunpack.c.h.b16 %v926
          %v1072 = vunpack.c.l.b16 %v927
          %v1073 = vunpack.c.h.b16 %v927
          %v1074 = vunpack.c.l.b16 %v928
          %v1075 = vunpack.c.h.b16 %v928
          %v1076 = vunpack.c.l.b16 %v929
          %v1077 = vunpack.c.h.b16 %v929
          %v1078 = vunpack.c.l.b16 %v930
          %v1079 = vunpack.c.h.b16 %v930
          %v1080 = vunpack.c.l.b16 %v931
          %v1081 = vunpack.c.h.b16 %v931
          %v1082 = vunpack.c.l.b16 %v932
          %v1083 = vunpack.c.h.b16 %v932
          %v1084 = vunpack.c.l.b16 %v933
          %v1085 = vunpack.c.h.b16 %v933
          %v1086 = vunpack.c.l.b16 %v934
          %v1087 = vunpack.c.h.b16 %v934
          %v1088 = vunpack.c.l.b16 %v935
          %v1089 = vunpack.c.h.b16 %v935
          %v1090 = vunpack.c.l.b16 %v936
          %v1091 = vunpack.c.h.b16 %v936
          %v1092 = vunpack.c.l.b16 %v937
          %v1093 = vunpack.c.h.b16 %v937
          %v1094 = vunpack.c.l.b16 %v938
          %v1095 = vunpack.c.h.b16 %v938
          %v1096 = vunpack.c.l.b16 %v939
          %v1097 = vunpack.c.h.b16 %v939
          %v1098 = vunpack.c.l.b16 %v940
          %v1099 = vunpack.c.h.b16 %v940
          %v1100 = vunpack.c.l.b16 %v941
          %v1101 = vunpack.c.h.b16 %v941
          %v1102 = vunpack.c.l.b16 %v942
          %v1103 = vunpack.c.h.b16 %v942
          %v1104 = vunpack.c.l.b16 %v943
          %v1105 = vunpack.c.h.b16 %v943
          %v1106 = vunpack.c.l.b16 %v944
          %v1107 = vunpack.c.h.b16 %v944
          %v1108 = vunpack.c.l.b16 %v945
          %v1109 = vunpack.c.h.b16 %v945
          %v1110 = vunpack.c.l.b16 %v946
          %v1111 = vunpack.c.h.b16 %v946
          %v1112 = vunpack.c.l.b16 %v947
          %v1113 = vunpack.c.h.b16 %v947
          %v1114 = vunpack.c.l.b16 %v948
          %v1115 = vunpack.c.h.b16 %v948
          %v1116 = vunpack.c.l.b16 %v949
          %v1117 = vunpack.c.h.b16 %v949
          %v1118 = vunpack.c.l.b16 %v950
          %v1119 = vunpack.c.h.b16 %v950
          %v1120 = vunpack.c.l.b16 %v951
          %v1121 = vunpack.c.h.b16 %v951
          %v1122 = vunpack.c.l.b16 %v952
          %v1123 = vunpack.c.h.b16 %v952
          %v1124 = vunpack.c.l.b16 %v953
          %v1125 = vunpack.c.h.b16 %v953
          %v1126 = vunpack.c.l.b16 %v954
          %v1127 = vunpack.c.h.b16 %v954
          %v1128 = vunpack.c.l.b16 %v955
          %v1129 = vunpack.c.h.b16 %v955
          %v1130 = vunpack.c.l.b16 %v956
          %v1131 = vunpack.c.h.b16 %v956
          %v1132 = vunpack.c.l.b16 %v957
          %v1133 = vunpack.c.h.b16 %v957
          %v1134 = vunpack.c.l.b16 %v958
          %v1135 = vunpack.c.h.b16 %v958
          %v1136 = vunpack.c.l.b16 %v959
          %v1137 = vunpack.c.h.b16 %v959
          %v1138 = vunpack.c.l.b16 %v960
          %v1139 = vunpack.c.h.b16 %v960
          %v1140 = vunpack.c.l.b16 %v961
          %v1141 = vunpack.c.h.b16 %v961
          %v1142 = vunpack.c.l.b16 %v962
          %v1143 = vunpack.c.h.b16 %v962
          %v1144 = vunpack.c.l.b16 %v963
          %v1145 = vunpack.c.h.b16 %v963
          %v1146 = vunpack.c.l.b16 %v964
          %v1147 = vunpack.c.h.b16 %v964
          %v1148 = vunpack.c.l.b16 %v965
          %v1149 = vunpack.c.h.b16 %v965
          %v1150 = vunpack.c.l.b16 %v966
          %v1151 = vunpack.c.h.b16 %v966
          %v1152 = vunpack.c.l.b16 %v967
          %v1153 = vunpack.c.h.b16 %v967
          %v1154 = vunpack.c.l.b16 %v968
          %v1155 = vunpack.c.h.b16 %v968
          %v1156 = vunpack.c.l.b16 %v969
          %v1157 = vunpack.c.h.b16 %v969
          %v1158 = vunpack.c.l.b16 %v970
          %v1159 = vunpack.c.h.b16 %v970
          %v1160 = vunpack.c.l.b16 %v971
          %v1161 = vunpack.c.h.b16 %v971
          %v1162 = vunpack.c.l.b16 %v972
          %v1163 = vunpack.c.h.b16 %v972
          %v1164 = vunpack.c.l.b16 %v973
          %v1165 = vunpack.c.h.b16 %v973
          %v1166 = vpack.c.b16 %v1042, %v1038
          %v1167 = vpack.c.b16 %v1043, %v1039
          %v1168 = vpack.c.b16 %v1044, %v1040
          %v1169 = vpack.c.b16 %v1045, %v1041
          %v1170 = vpack.c.b16 %v1050, %v1046
          %v1171 = vpack.c.b16 %v1051, %v1047
          %v1172 = vpack.c.b16 %v1052, %v1048
          %v1173 = vpack.c.b16 %v1053, %v1049
          %v1174 = vpack.c.b16 %v1058, %v1054
          %v1175 = vpack.c.b16 %v1059, %v1055
          %v1176 = vpack.c.b16 %v1060, %v1056
          %v1177 = vpack.c.b16 %v1061, %v1057
          %v1178 = vpack.c.b16 %v1066, %v1062
          %v1179 = vpack.c.b16 %v1067, %v1063
          %v1180 = vpack.c.b16 %v1068, %v1064
          %v1181 = vpack.c.b16 %v1069, %v1065
          %v1182 = vpack.c.b16 %v1074, %v1070
          %v1183 = vpack.c.b16 %v1075, %v1071
          %v1184 = vpack.c.b16 %v1076, %v1072
          %v1185 = vpack.c.b16 %v1077, %v1073
          %v1186 = vpack.c.b16 %v1082, %v1078
          %v1187 = vpack.c.b16 %v1083, %v1079
          %v1188 = vpack.c.b16 %v1084, %v1080
          %v1189 = vpack.c.b16 %v1085, %v1081
          %v1190 = vpack.c.b16 %v1090, %v1086
          %v1191 = vpack.c.b16 %v1091, %v1087
          %v1192 = vpack.c.b16 %v1092, %v1088
          %v1193 = vpack.c.b16 %v1093, %v1089
          %v1194 = vpack.c.b16 %v1098, %v1094
          %v1195 = vpack.c.b16 %v1099, %v1095
          %v1196 = vpack.c.b16 %v1100, %v1096
          %v1197 = vpack.c.b16 %v1101, %v1097
          %v1198 = vpack.c.b16 %v1106, %v1102
          %v1199 = vpack.c.b16 %v1107, %v1103
          %v1200 = vpack.c.b16 %v1108, %v1104
          %v1201 = vpack.c.b16 %v1109, %v1105
          %v1202 = vpack.c.b16 %v1114, %v1110
          %v1203 = vpack.c.b16 %v1115, %v1111
          %v1204 = vpack.c.b16 %v1116, %v1112
          %v1205 = vpack.c.b16 %v1117, %v1113
          %v1206 = vpack.c.b16 %v1122, %v1118
          %v1207 = vpack.c.b16 %v1123, %v1119
          %v1208 = vpack.c.b16 %v1124, %v1120
          %v1209 = vpack.c.b16 %v1125, %v1121
          %v1210 = vpack.c.b16 %v1130, %v1126
          %v1211 = vpack.c.b16 %v1131, %v1127
          %v1212 = vpack.c.b16 %v1132, %v1128
          %v1213 = vpack.c.b16 %v1133, %v1129
          %v1214 = vpack.c.b16 %v1138, %v1134
          %v1215 = vpack.c.b16 %v1139, %v1135
          %v1216 = vpack.c.b16 %v1140, %v1136
          %v1217 = vpack.c.b16 %v1141, %v1137
          %v1218 = vpack.c.b16 %v1146, %v1142
          %v1219 = vpack.c.b16 %v1147, %v1143
          %v1220 = vpack.c.b16 %v1148, %v1144
          %v1221 = vpack.c.b16 %v1149, %v1145
          %v1222 = vpack.c.b16 %v1154, %v1150
          %v1223 = vpack.c.b16 %v1155, %v1151
          %v1224 = vpack.c.b16 %v1156, %v1152
          %v1225 = vpack.c.b16 %v1157, %v1153
          %v1226 = vpack.c.b16 %v1162, %v1158
          %v1227 = vpack.c.b16 %v1163, %v1159
          %v1228 = vpack.c.b16 %v1164, %v1160
          %v1229 = vpack.c.b16 %v1165, %v1161
          %1294 = vmatprep.subr.bf16.mxu0 %v1167
          %1295 = vmatpush1.bf16.msra.mxu0 %v1166
          %1296 = vmatprep.subr.bf16.mxu0 %v1171
          %1297 = vmatpush1.bf16.msra.mxu0 %v1170
          %1298 = vmatprep.subr.bf16.mxu0 %v1175
          %1299 = vmatpush1.bf16.msra.mxu0 %v1174
          %1300 = vmatprep.subr.bf16.mxu0 %v1179
          %1301 = vmatpush1.bf16.msra.mxu0 %v1178
          %1302 = vmatprep.subr.bf16.mxu0 %v1183
          %1303 = vmatpush1.bf16.msra.mxu0 %v1182
          %1304 = vmatprep.subr.bf16.mxu0 %v1187
          %1305 = vmatpush1.bf16.msra.mxu0 %v1186
          %1306 = vmatprep.subr.bf16.mxu0 %v1191
          %1307 = vmatpush1.bf16.msra.mxu0 %v1190
          %1308 = vmatprep.subr.bf16.mxu0 %v1195
          %1309 = vmatpush1.bf16.msra.mxu0 %v1194
          %1310 = vmatprep.subr.bf16.mxu0 %v1199
          %1311 = vmatpush1.bf16.msra.mxu0 %v1198
          %1312 = vmatprep.subr.bf16.mxu0 %v1203
          %1313 = vmatpush1.bf16.msra.mxu0 %v1202
          %1314 = vmatprep.subr.bf16.mxu0 %v1207
          %1315 = vmatpush1.bf16.msra.mxu0 %v1206
          %1316 = vmatprep.subr.bf16.mxu0 %v1211
          %1317 = vmatpush1.bf16.msra.mxu0 %v1210
          %1318 = vmatprep.subr.bf16.mxu0 %v1215
          %1319 = vmatpush1.bf16.msra.mxu0 %v1214
          %1320 = vmatprep.subr.bf16.mxu0 %v1219
          %1321 = vmatpush1.bf16.msra.mxu0 %v1218
          %1322 = vmatprep.subr.bf16.mxu0 %v1223
          %1323 = vmatpush1.bf16.msra.mxu0 %v1222
          %1324 = vmatprep.subr.bf16.mxu0 %v1227
          %1325 = vmatpush1.bf16.msra.mxu0 %v1226
          %1326 = vmatprep.mubr.bf16.mxu0 %v909
          %1327 = vmatmul.mubr.bf16.gmra.mrb[0].mxu0 %v908
          %v1328 = vpop.f32.mrb[0].mxu0
          %v1329 = vadd.f32 0.0, %v1328
          %v1330 = vpop.f32.mrb[0].mxu0
          %v1331 = vadd.f32 0.0, %v1330
          %v1332 = vpop.f32.mrb[0].mxu0
          %v1333 = vpop.f32.mrb[0].mxu0
          %1334 = vdwg.mxu0
          %1335 = vmatprep.subr.bf16.mxu0 %v1169
          %1336 = vmatpush1.bf16.msra.mxu0 %v1168
          %1337 = vmatprep.subr.bf16.mxu0 %v1173
          %1338 = vmatpush1.bf16.msra.mxu0 %v1172
          %1339 = vmatprep.subr.bf16.mxu0 %v1177
          %1340 = vmatpush1.bf16.msra.mxu0 %v1176
          %1341 = vmatprep.subr.bf16.mxu0 %v1181
          %1342 = vmatpush1.bf16.msra.mxu0 %v1180
          %1343 = vmatprep.subr.bf16.mxu0 %v1185
          %1344 = vmatpush1.bf16.msra.mxu0 %v1184
          %1345 = vmatprep.subr.bf16.mxu0 %v1189
          %1346 = vmatpush1.bf16.msra.mxu0 %v1188
          %1347 = vmatprep.subr.bf16.mxu0 %v1193
          %1348 = vmatpush1.bf16.msra.mxu0 %v1192
          %1349 = vmatprep.subr.bf16.mxu0 %v1197
          %1350 = vmatpush1.bf16.msra.mxu0 %v1196
          %1351 = vmatprep.subr.bf16.mxu0 %v1201
          %1352 = vmatpush1.bf16.msra.mxu0 %v1200
          %1353 = vmatprep.subr.bf16.mxu0 %v1205
          %1354 = vmatpush1.bf16.msra.mxu0 %v1204
          %1355 = vmatprep.subr.bf16.mxu0 %v1209
          %1356 = vmatpush1.bf16.msra.mxu0 %v1208
          %1357 = vmatprep.subr.bf16.mxu0 %v1213
          %1358 = vmatpush1.bf16.msra.mxu0 %v1212
          %1359 = vmatprep.subr.bf16.mxu0 %v1217
          %1360 = vmatpush1.bf16.msra.mxu0 %v1216
          %1361 = vmatprep.subr.bf16.mxu0 %v1221
          %1362 = vmatpush1.bf16.msra.mxu0 %v1220
          %1363 = vmatprep.subr.bf16.mxu0 %v1225
          %1364 = vmatpush1.bf16.msra.mxu0 %v1224
          %1365 = vmatprep.subr.bf16.mxu0 %v1229
          %1366 = vmatpush1.bf16.msra.mxu0 %v1228
          %1367 = vmatprep.mubr.bf16.mxu0 %v909
          %1368 = vmatmul.mubr.bf16.gmra.mrb[0].mxu0 %v908
          %v1369 = vpop.f32.mrb[0].mxu0
          %v1370 = vadd.f32 0.0, %v1369
          %v1371 = vpop.f32.mrb[0].mxu0
          %v1372 = vadd.f32 0.0, %v1371
          %v1373 = vpop.f32.mrb[0].mxu0
          %v1374 = vpop.f32.mrb[0].mxu0
          %1375 = vdwg.mxu0
          %s1376 = smul.u32 %s869, 4
          %s1377 = smul.addr %s1376, 8
          %s1378 = scalar_lea.vmem [#allocation3], %s1377
          %1379 = vst [vmem:[%s1378] sm:$0xff] %v1329
          %1380 = vst [vmem:[%s1378 + $0x8] sm:$0xff] %v1331
          %1381 = vst [vmem:[%s1378 + $0x10] sm:$0xff] %v1370
          %1382 = vst [vmem:[%s1378 + $0x18] sm:$0xff] %v1372
          %v1383 = vld [vmem:[#allocation4] sm:$0xf]
          %v1384 = vrot.slane %v1329, 4
          %v1385 = vadd.f32 %v1329, %v1384
          %v1386 = vrot.slane %v1385, 2
          %v1387 = vadd.f32 %v1385, %v1386
          %v1388 = vrot.slane %v1387, 1
          %v1389 = vadd.f32 %v1387, %v1388
          %v1390 = vrot.slane %v1331, 4
          %v1391 = vadd.f32 %v1331, %v1390
          %v1392 = vrot.slane %v1391, 2
          %v1393 = vadd.f32 %v1391, %v1392
          %v1394 = vrot.slane %v1393, 1
          %v1395 = vadd.f32 %v1393, %v1394
          %v1396 = vrot.slane %v1370, 4
          %v1397 = vadd.f32 %v1370, %v1396
          %v1398 = vrot.slane %v1397, 2
          %v1399 = vadd.f32 %v1397, %v1398
          %v1400 = vrot.slane %v1399, 1
          %v1401 = vadd.f32 %v1399, %v1400
          %v1402 = vrot.slane %v1372, 4
          %v1403 = vadd.f32 %v1372, %v1402
          %v1404 = vrot.slane %v1403, 2
          %v1405 = vadd.f32 %v1403, %v1404
          %v1406 = vrot.slane %v1405, 1
          %v1407 = vadd.f32 %v1405, %v1406
          %v1412 = vcombine.low %v1389, %v1395
          %v1413 = vcombine.low %v1401, %v1407
          %v1415 = vunpack.c.l.s4 1966171168
          %v1416 = vunpack.c.0.s8 %v1415
          %v1417 = vlaneseq
          %v1418 = vshrl.u32 %v1417, 7
          %v1419 = vsub.s32 %v1416, %v1418
          %v1420 = vrot.slane %v1412, %v1419
          %v1422 = vunpack.c.l.s4 1966171168
          %v1423 = vunpack.c.0.s8 %v1422
          %v1424 = vlaneseq
          %v1425 = vshrl.u32 %v1424, 7
          %v1426 = vsub.s32 %v1423, %v1425
          %v1427 = vrot.slane %v1413, %v1426
          %v1428 = vcombine.low %v1420, %v1427
          %v1430 = vunpack.c.l.s4 1966171168
          %v1431 = vunpack.c.0.s8 %v1430
          %v1432 = vlaneseq
          %v1433 = vshrl.u32 %v1432, 7
          %v1434 = vsub.s32 %v1431, %v1433
          %v1435 = vrot.slane %v1428, %v1434
          %v1437 = vadd.f32 %v1383, %v1435
          %v1438 = vlaneseq
          %vm1439 = vcmp.ge.s32.totalorder %v1438, 0
          %vm1440 = vcmp.lt.s32.totalorder %v1438, 512
          %vm1441 = vmand %vm1439, %vm1440
          %1442 = vst.msk [vmem:[#allocation4] sm:$0xf] %vm1441, %v1437
          %v1443 = vld [vmem:[#allocation5] sm:$0xf]
          %v1444 = vmul.f32 %v1329, %v1329
          %v1445 = vmul.f32 %v1331, %v1331
          %v1446 = vmul.f32 %v1370, %v1370
          %v1447 = vmul.f32 %v1372, %v1372
          %v1448 = vrot.slane %v1444, 4
          %v1449 = vadd.f32 %v1444, %v1448
          %v1450 = vrot.slane %v1449, 2
          %v1451 = vadd.f32 %v1449, %v1450
          %v1452 = vrot.slane %v1451, 1
          %v1453 = vadd.f32 %v1451, %v1452
          %v1454 = vrot.slane %v1445, 4
          %v1455 = vadd.f32 %v1445, %v1454
          %v1456 = vrot.slane %v1455, 2
          %v1457 = vadd.f32 %v1455, %v1456
          %v1458 = vrot.slane %v1457, 1
          %v1459 = vadd.f32 %v1457, %v1458
          %v1460 = vrot.slane %v1446, 4
          %v1461 = vadd.f32 %v1446, %v1460
          %v1462 = vrot.slane %v1461, 2
          %v1463 = vadd.f32 %v1461, %v1462
          %v1464 = vrot.slane %v1463, 1
          %v1465 = vadd.f32 %v1463, %v1464
          %v1466 = vrot.slane %v1447, 4
          %v1467 = vadd.f32 %v1447, %v1466
          %v1468 = vrot.slane %v1467, 2
          %v1469 = vadd.f32 %v1467, %v1468
          %v1470 = vrot.slane %v1469, 1
          %v1471 = vadd.f32 %v1469, %v1470
          %v1476 = vcombine.low %v1453, %v1459
          %v1477 = vcombine.low %v1465, %v1471
          %v1479 = vunpack.c.l.s4 1966171168
          %v1480 = vunpack.c.0.s8 %v1479
          %v1481 = vlaneseq
          %v1482 = vshrl.u32 %v1481, 7
          %v1483 = vsub.s32 %v1480, %v1482
          %v1484 = vrot.slane %v1476, %v1483
          %v1486 = vunpack.c.l.s4 1966171168
          %v1487 = vunpack.c.0.s8 %v1486
          %v1488 = vlaneseq
          %v1489 = vshrl.u32 %v1488, 7
          %v1490 = vsub.s32 %v1487, %v1489
          %v1491 = vrot.slane %v1477, %v1490
          %v1492 = vcombine.low %v1484, %v1491
          %v1494 = vunpack.c.l.s4 1966171168
          %v1495 = vunpack.c.0.s8 %v1494
          %v1496 = vlaneseq
          %v1497 = vshrl.u32 %v1496, 7
          %v1498 = vsub.s32 %v1495, %v1497
          %v1499 = vrot.slane %v1492, %v1498
          %v1501 = vadd.f32 %v1443, %v1499
          %1502 = vst.msk [vmem:[#allocation5] sm:$0xf] %vm1441, %v1501
        $region92: #{generator_forward.1} parent=75 // pred_fallthru
          _
        %p1503 = scmp.eq.s32.totalorder %s32, 2
        %p1504 = pnand %p1503, %p497
        %p1505 = pneg %p1504
        // Predicated region
        $region93: #{generator_forward.1} parent=75 // pred_check
          _
        $region94: #{generator_forward.1} parent=75 // pred_check_branch
          %1507 = sbr.rel (%p1504) target = $region96
        $region95: #{generator_forward.1} parent=75 // pred_region
          %v1508 = vld [vmem:[#allocation4] sm:$0xf]
          %v1509 = vmul.f32 %v1508, 0.125
          %v1510 = vld [vmem:[#allocation5] sm:$0xf]
          %v1511 = vmul.f32 %v1510, 0.125
          %v1512 = vmul.f32 %v1509, %v1509
          %v1513 = vsub.f32 %v1511, %v1512
          %v1514 = vmax.f32 %v1513, 0.0
          %v1515 = vld [vmem:[%s7] sm:$0xf]
          %v1516 = vadd.f32 %v1514, 1e-05
          %v1517 = vrsqrt.pop %v1516
          %v1518 = vmul.f32 %v1515, %v1517
          %v1519 = vlaneseq
          %vm1520 = vcmp.ge.s32.totalorder %v1519, 0
          %vm1521 = vcmp.lt.s32.totalorder %v1519, 512
          %vm1522 = vmand %vm1520, %vm1521
          %1523 = vst.msk [vmem:[#allocation6] sm:$0xf] %vm1522, %v1518
          %v1524 = vld [vmem:[%s8] sm:$0xf]
          %v1525 = vmul.f32 %v1509, %v1518
          %v1526 = vsub.f32 %v1524, %v1525
          %1527 = vst.msk [vmem:[#allocation7] sm:$0xf] %vm1522, %v1526
          %1528 = vst [vmem:[#allocation4] sm:$0xff] 0.0
          %1529 = vst [vmem:[#allocation5] sm:$0xff] 0.0
        $region96: #{generator_forward.1} parent=75 // pred_fallthru
          _
        // Predicated region
        $region97: #{generator_forward.1} parent=75 // pred_check
          %p1530 = pneg %p1503
        $region98: #{generator_forward.1} parent=75 // pred_check_branch
          %1532 = sbr.rel (%p1530) target = $region100
        $region99: #{generator_forward.1} parent=75 // pred_region
          %s1533 = sshra.s32 %s496, 3
          %s1534 = sand.u32 %s496, 7
          %s1535 = smul.u32 %s1533, 4
          %s1536 = smul.addr %s1535, 8
          %s1537 = scalar_lea.vmem [#allocation3], %s1536
          %v1538 = vld [vmem:[%s1537] sm:$0xff]
          %v1539 = vld [vmem:[%s1537 + $0x8] sm:$0xff]
          %v1540 = vld [vmem:[%s1537 + $0x10] sm:$0xff]
          %v1541 = vld [vmem:[%s1537 + $0x18] sm:$0xff]
          %v1542 = vld [vmem:[#allocation6] sm:$0xf]
          %v1544 = vlaneseq
          %v1545 = vshrl.u32 %v1544, 7
          %v1546 = vsub.s32 0, %v1545
          %v1547 = vrot.slane %v1542, %v1546
          %v1548 = vlaneseq
          %v1549 = vshrl.u32 %v1548, 7
          %v1550 = vsub.s32 1, %v1549
          %v1551 = vrot.slane %v1542, %v1550
          %v1552 = vlaneseq
          %v1553 = vshrl.u32 %v1552, 7
          %v1554 = vsub.s32 2, %v1553
          %v1555 = vrot.slane %v1542, %v1554
          %v1556 = vlaneseq
          %v1557 = vshrl.u32 %v1556, 7
          %v1558 = vsub.s32 3, %v1557
          %v1559 = vrot.slane %v1542, %v1558
          %v1564 = vmul.f32 %v1538, %v1547
          %v1565 = vmul.f32 %v1539, %v1551
          %v1566 = vmul.f32 %v1540, %v1555
          %v1567 = vmul.f32 %v1541, %v1559
          %v1568 = vld [vmem:[#allocation7] sm:$0xf]
          %v1570 = vlaneseq
          %v1571 = vshrl.u32 %v1570, 7
          %v1572 = vsub.s32 0, %v1571
          %v1573 = vrot.slane %v1568, %v1572
          %v1574 = vlaneseq
          %v1575 = vshrl.u32 %v1574, 7
          %v1576 = vsub.s32 1, %v1575
          %v1577 = vrot.slane %v1568, %v1576
          %v1578 = vlaneseq
          %v1579 = vshrl.u32 %v1578, 7
          %v1580 = vsub.s32 2, %v1579
          %v1581 = vrot.slane %v1568, %v1580
          %v1582 = vlaneseq
          %v1583 = vshrl.u32 %v1582, 7
          %v1584 = vsub.s32 3, %v1583
          %v1585 = vrot.slane %v1568, %v1584
          %v1590 = vadd.f32 %v1564, %v1573
          %v1591 = vadd.f32 %v1565, %v1577
          %v1592 = vadd.f32 %v1566, %v1581
          %v1593 = vadd.f32 %v1567, %v1585
          %v1594 = vmul.f32 %v1590, 0.2
          %v1595 = vmul.f32 %v1591, 0.2
          %v1596 = vmul.f32 %v1592, 0.2
          %v1597 = vmul.f32 %v1593, 0.2
          %v1598 = vmax.f32 %v1590, %v1594
          %v1599 = vmax.f32 %v1591, %v1595
          %v1600 = vmax.f32 %v1592, %v1596
          %v1601 = vmax.f32 %v1593, %v1597
          %v1602 = vpack.c.bf16 %v1598, %v1598
          %v1603 = vpack.c.bf16 %v1599, %v1599
          %v1604 = vpack.c.bf16 %v1600, %v1600
          %v1605 = vpack.c.bf16 %v1601, %v1601
          %v1606 = vld [vmem:[%s9] sm:$0xff]
          %v1607 = vld [vmem:[%s9 + $0x8] sm:$0xff]
          %v1608 = vld [vmem:[%s9 + $0x10] sm:$0xff]
          %v1609 = vld [vmem:[%s9 + $0x18] sm:$0xff]
          %v1610 = vld [vmem:[%s9 + $0x20] sm:$0xff]
          %v1611 = vld [vmem:[%s9 + $0x28] sm:$0xff]
          %v1612 = vld [vmem:[%s9 + $0x30] sm:$0xff]
          %v1613 = vld [vmem:[%s9 + $0x38] sm:$0xff]
          %v1614 = vld [vmem:[%s9 + $0x40] sm:$0xff]
          %v1615 = vld [vmem:[%s9 + $0x48] sm:$0xff]
          %v1616 = vld [vmem:[%s9 + $0x50] sm:$0xff]
          %v1617 = vld [vmem:[%s9 + $0x58] sm:$0xff]
          %v1618 = vld [vmem:[%s9 + $0x60] sm:$0xff]
          %v1619 = vld [vmem:[%s9 + $0x68] sm:$0xff]
          %v1620 = vld [vmem:[%s9 + $0x70] sm:$0xff]
          %v1621 = vld [vmem:[%s9 + $0x78] sm:$0xff]
          %v1622 = vld [vmem:[%s9 + $0x80] sm:$0xff]
          %v1623 = vld [vmem:[%s9 + $0x88] sm:$0xff]
          %v1624 = vld [vmem:[%s9 + $0x90] sm:$0xff]
          %v1625 = vld [vmem:[%s9 + $0x98] sm:$0xff]
          %v1626 = vld [vmem:[%s9 + $0xa0] sm:$0xff]
          %v1627 = vld [vmem:[%s9 + $0xa8] sm:$0xff]
          %v1628 = vld [vmem:[%s9 + $0xb0] sm:$0xff]
          %v1629 = vld [vmem:[%s9 + $0xb8] sm:$0xff]
          %v1630 = vld [vmem:[%s9 + $0xc0] sm:$0xff]
          %v1631 = vld [vmem:[%s9 + $0xc8] sm:$0xff]
          %v1632 = vld [vmem:[%s9 + $0xd0] sm:$0xff]
          %v1633 = vld [vmem:[%s9 + $0xd8] sm:$0xff]
          %v1634 = vld [vmem:[%s9 + $0xe0] sm:$0xff]
          %v1635 = vld [vmem:[%s9 + $0xe8] sm:$0xff]
          %v1636 = vld [vmem:[%s9 + $0xf0] sm:$0xff]
          %v1637 = vld [vmem:[%s9 + $0xf8] sm:$0xff]
          %v1638 = vld [vmem:[%s9 + $0x100] sm:$0xff]
          %v1639 = vld [vmem:[%s9 + $0x108] sm:$0xff]
          %v1640 = vld [vmem:[%s9 + $0x110] sm:$0xff]
          %v1641 = vld [vmem:[%s9 + $0x118] sm:$0xff]
          %v1642 = vld [vmem:[%s9 + $0x120] sm:$0xff]
          %v1643 = vld [vmem:[%s9 + $0x128] sm:$0xff]
          %v1644 = vld [vmem:[%s9 + $0x130] sm:$0xff]
          %v1645 = vld [vmem:[%s9 + $0x138] sm:$0xff]
          %v1646 = vld [vmem:[%s9 + $0x140] sm:$0xff]
          %v1647 = vld [vmem:[%s9 + $0x148] sm:$0xff]
          %v1648 = vld [vmem:[%s9 + $0x150] sm:$0xff]
          %v1649 = vld [vmem:[%s9 + $0x158] sm:$0xff]
          %v1650 = vld [vmem:[%s9 + $0x160] sm:$0xff]
          %v1651 = vld [vmem:[%s9 + $0x168] sm:$0xff]
          %v1652 = vld [vmem:[%s9 + $0x170] sm:$0xff]
          %v1653 = vld [vmem:[%s9 + $0x178] sm:$0xff]
          %v1654 = vld [vmem:[%s9 + $0x180] sm:$0xff]
          %v1655 = vld [vmem:[%s9 + $0x188] sm:$0xff]
          %v1656 = vld [vmem:[%s9 + $0x190] sm:$0xff]
          %v1657 = vld [vmem:[%s9 + $0x198] sm:$0xff]
          %v1658 = vld [vmem:[%s9 + $0x1a0] sm:$0xff]
          %v1659 = vld [vmem:[%s9 + $0x1a8] sm:$0xff]
          %v1660 = vld [vmem:[%s9 + $0x1b0] sm:$0xff]
          %v1661 = vld [vmem:[%s9 + $0x1b8] sm:$0xff]
          %v1662 = vld [vmem:[%s9 + $0x1c0] sm:$0xff]
          %v1663 = vld [vmem:[%s9 + $0x1c8] sm:$0xff]
          %v1664 = vld [vmem:[%s9 + $0x1d0] sm:$0xff]
          %v1665 = vld [vmem:[%s9 + $0x1d8] sm:$0xff]
          %v1666 = vld [vmem:[%s9 + $0x1e0] sm:$0xff]
          %v1667 = vld [vmem:[%s9 + $0x1e8] sm:$0xff]
          %v1668 = vld [vmem:[%s9 + $0x1f0] sm:$0xff]
          %v1669 = vld [vmem:[%s9 + $0x1f8] sm:$0xff]
          %v1670 = vld [vmem:[%s9 + $0x200] sm:$0xff]
          %v1671 = vld [vmem:[%s9 + $0x208] sm:$0xff]
          %v1672 = vld [vmem:[%s9 + $0x210] sm:$0xff]
          %v1673 = vld [vmem:[%s9 + $0x218] sm:$0xff]
          %v1674 = vld [vmem:[%s9 + $0x220] sm:$0xff]
          %v1675 = vld [vmem:[%s9 + $0x228] sm:$0xff]
          %v1676 = vld [vmem:[%s9 + $0x230] sm:$0xff]
          %v1677 = vld [vmem:[%s9 + $0x238] sm:$0xff]
          %v1678 = vld [vmem:[%s9 + $0x240] sm:$0xff]
          %v1679 = vld [vmem:[%s9 + $0x248] sm:$0xff]
          %v1680 = vld [vmem:[%s9 + $0x250] sm:$0xff]
          %v1681 = vld [vmem:[%s9 + $0x258] sm:$0xff]
          %v1682 = vld [vmem:[%s9 + $0x260] sm:$0xff]
          %v1683 = vld [vmem:[%s9 + $0x268] sm:$0xff]
          %v1684 = vld [vmem:[%s9 + $0x270] sm:$0xff]
          %v1685 = vld [vmem:[%s9 + $0x278] sm:$0xff]
          %v1686 = vld [vmem:[%s9 + $0x280] sm:$0xff]
          %v1687 = vld [vmem:[%s9 + $0x288] sm:$0xff]
          %v1688 = vld [vmem:[%s9 + $0x290] sm:$0xff]
          %v1689 = vld [vmem:[%s9 + $0x298] sm:$0xff]
          %v1690 = vld [vmem:[%s9 + $0x2a0] sm:$0xff]
          %v1691 = vld [vmem:[%s9 + $0x2a8] sm:$0xff]
          %v1692 = vld [vmem:[%s9 + $0x2b0] sm:$0xff]
          %v1693 = vld [vmem:[%s9 + $0x2b8] sm:$0xff]
          %v1694 = vld [vmem:[%s9 + $0x2c0] sm:$0xff]
          %v1695 = vld [vmem:[%s9 + $0x2c8] sm:$0xff]
          %v1696 = vld [vmem:[%s9 + $0x2d0] sm:$0xff]
          %v1697 = vld [vmem:[%s9 + $0x2d8] sm:$0xff]
          %v1698 = vld [vmem:[%s9 + $0x2e0] sm:$0xff]
          %v1699 = vld [vmem:[%s9 + $0x2e8] sm:$0xff]
          %v1700 = vld [vmem:[%s9 + $0x2f0] sm:$0xff]
          %v1701 = vld [vmem:[%s9 + $0x2f8] sm:$0xff]
          %v1702 = vld [vmem:[%s9 + $0x300] sm:$0xff]
          %v1703 = vld [vmem:[%s9 + $0x308] sm:$0xff]
          %v1704 = vld [vmem:[%s9 + $0x310] sm:$0xff]
          %v1705 = vld [vmem:[%s9 + $0x318] sm:$0xff]
          %v1706 = vld [vmem:[%s9 + $0x320] sm:$0xff]
          %v1707 = vld [vmem:[%s9 + $0x328] sm:$0xff]
          %v1708 = vld [vmem:[%s9 + $0x330] sm:$0xff]
          %v1709 = vld [vmem:[%s9 + $0x338] sm:$0xff]
          %v1710 = vld [vmem:[%s9 + $0x340] sm:$0xff]
          %v1711 = vld [vmem:[%s9 + $0x348] sm:$0xff]
          %v1712 = vld [vmem:[%s9 + $0x350] sm:$0xff]
          %v1713 = vld [vmem:[%s9 + $0x358] sm:$0xff]
          %v1714 = vld [vmem:[%s9 + $0x360] sm:$0xff]
          %v1715 = vld [vmem:[%s9 + $0x368] sm:$0xff]
          %v1716 = vld [vmem:[%s9 + $0x370] sm:$0xff]
          %v1717 = vld [vmem:[%s9 + $0x378] sm:$0xff]
          %v1718 = vld [vmem:[%s9 + $0x380] sm:$0xff]
          %v1719 = vld [vmem:[%s9 + $0x388] sm:$0xff]
          %v1720 = vld [vmem:[%s9 + $0x390] sm:$0xff]
          %v1721 = vld [vmem:[%s9 + $0x398] sm:$0xff]
          %v1722 = vld [vmem:[%s9 + $0x3a0] sm:$0xff]
          %v1723 = vld [vmem:[%s9 + $0x3a8] sm:$0xff]
          %v1724 = vld [vmem:[%s9 + $0x3b0] sm:$0xff]
          %v1725 = vld [vmem:[%s9 + $0x3b8] sm:$0xff]
          %v1726 = vld [vmem:[%s9 + $0x3c0] sm:$0xff]
          %v1727 = vld [vmem:[%s9 + $0x3c8] sm:$0xff]
          %v1728 = vld [vmem:[%s9 + $0x3d0] sm:$0xff]
          %v1729 = vld [vmem:[%s9 + $0x3d8] sm:$0xff]
          %v1730 = vld [vmem:[%s9 + $0x3e0] sm:$0xff]
          %v1731 = vld [vmem:[%s9 + $0x3e8] sm:$0xff]
          %v1732 = vld [vmem:[%s9 + $0x3f0] sm:$0xff]
          %v1733 = vld [vmem:[%s9 + $0x3f8] sm:$0xff]
          %v1734 = vld [vmem:[%s9 + $0x400] sm:$0xff]
          %v1735 = vld [vmem:[%s9 + $0x408] sm:$0xff]
          %v1736 = vld [vmem:[%s9 + $0x410] sm:$0xff]
          %v1737 = vld [vmem:[%s9 + $0x418] sm:$0xff]
          %v1738 = vld [vmem:[%s9 + $0x420] sm:$0xff]
          %v1739 = vld [vmem:[%s9 + $0x428] sm:$0xff]
          %v1740 = vld [vmem:[%s9 + $0x430] sm:$0xff]
          %v1741 = vld [vmem:[%s9 + $0x438] sm:$0xff]
          %v1742 = vld [vmem:[%s9 + $0x440] sm:$0xff]
          %v1743 = vld [vmem:[%s9 + $0x448] sm:$0xff]
          %v1744 = vld [vmem:[%s9 + $0x450] sm:$0xff]
          %v1745 = vld [vmem:[%s9 + $0x458] sm:$0xff]
          %v1746 = vld [vmem:[%s9 + $0x460] sm:$0xff]
          %v1747 = vld [vmem:[%s9 + $0x468] sm:$0xff]
          %v1748 = vld [vmem:[%s9 + $0x470] sm:$0xff]
          %v1749 = vld [vmem:[%s9 + $0x478] sm:$0xff]
          %v1750 = vld [vmem:[%s9 + $0x480] sm:$0xff]
          %v1751 = vld [vmem:[%s9 + $0x488] sm:$0xff]
          %v1752 = vld [vmem:[%s9 + $0x490] sm:$0xff]
          %v1753 = vld [vmem:[%s9 + $0x498] sm:$0xff]
          %v1754 = vld [vmem:[%s9 + $0x4a0] sm:$0xff]
          %v1755 = vld [vmem:[%s9 + $0x4a8] sm:$0xff]
          %v1756 = vld [vmem:[%s9 + $0x4b0] sm:$0xff]
          %v1757 = vld [vmem:[%s9 + $0x4b8] sm:$0xff]
          %v1758 = vld [vmem:[%s9 + $0x4c0] sm:$0xff]
          %v1759 = vld [vmem:[%s9 + $0x4c8] sm:$0xff]
          %v1760 = vld [vmem:[%s9 + $0x4d0] sm:$0xff]
          %v1761 = vld [vmem:[%s9 + $0x4d8] sm:$0xff]
          %v1762 = vld [vmem:[%s9 + $0x4e0] sm:$0xff]
          %v1763 = vld [vmem:[%s9 + $0x4e8] sm:$0xff]
          %v1764 = vld [vmem:[%s9 + $0x4f0] sm:$0xff]
          %v1765 = vld [vmem:[%s9 + $0x4f8] sm:$0xff]
          %v1766 = vld [vmem:[%s9 + $0x500] sm:$0xff]
          %v1767 = vld [vmem:[%s9 + $0x508] sm:$0xff]
          %v1768 = vld [vmem:[%s9 + $0x510] sm:$0xff]
          %v1769 = vld [vmem:[%s9 + $0x518] sm:$0xff]
          %v1770 = vld [vmem:[%s9 + $0x520] sm:$0xff]
          %v1771 = vld [vmem:[%s9 + $0x528] sm:$0xff]
          %v1772 = vld [vmem:[%s9 + $0x530] sm:$0xff]
          %v1773 = vld [vmem:[%s9 + $0x538] sm:$0xff]
          %v1774 = vld [vmem:[%s9 + $0x540] sm:$0xff]
          %v1775 = vld [vmem:[%s9 + $0x548] sm:$0xff]
          %v1776 = vld [vmem:[%s9 + $0x550] sm:$0xff]
          %v1777 = vld [vmem:[%s9 + $0x558] sm:$0xff]
          %v1778 = vld [vmem:[%s9 + $0x560] sm:$0xff]
          %v1779 = vld [vmem:[%s9 + $0x568] sm:$0xff]
          %v1780 = vld [vmem:[%s9 + $0x570] sm:$0xff]
          %v1781 = vld [vmem:[%s9 + $0x578] sm:$0xff]
          %v1782 = vld [vmem:[%s9 + $0x580] sm:$0xff]
          %v1783 = vld [vmem:[%s9 + $0x588] sm:$0xff]
          %v1784 = vld [vmem:[%s9 + $0x590] sm:$0xff]
          %v1785 = vld [vmem:[%s9 + $0x598] sm:$0xff]
          %v1786 = vld [vmem:[%s9 + $0x5a0] sm:$0xff]
          %v1787 = vld [vmem:[%s9 + $0x5a8] sm:$0xff]
          %v1788 = vld [vmem:[%s9 + $0x5b0] sm:$0xff]
          %v1789 = vld [vmem:[%s9 + $0x5b8] sm:$0xff]
          %v1790 = vld [vmem:[%s9 + $0x5c0] sm:$0xff]
          %v1791 = vld [vmem:[%s9 + $0x5c8] sm:$0xff]
          %v1792 = vld [vmem:[%s9 + $0x5d0] sm:$0xff]
          %v1793 = vld [vmem:[%s9 + $0x5d8] sm:$0xff]
          %v1794 = vld [vmem:[%s9 + $0x5e0] sm:$0xff]
          %v1795 = vld [vmem:[%s9 + $0x5e8] sm:$0xff]
          %v1796 = vld [vmem:[%s9 + $0x5f0] sm:$0xff]
          %v1797 = vld [vmem:[%s9 + $0x5f8] sm:$0xff]
          %v1798 = vld [vmem:[%s9 + $0x600] sm:$0xff]
          %v1799 = vld [vmem:[%s9 + $0x608] sm:$0xff]
          %v1800 = vld [vmem:[%s9 + $0x610] sm:$0xff]
          %v1801 = vld [vmem:[%s9 + $0x618] sm:$0xff]
          %v1802 = vld [vmem:[%s9 + $0x620] sm:$0xff]
          %v1803 = vld [vmem:[%s9 + $0x628] sm:$0xff]
          %v1804 = vld [vmem:[%s9 + $0x630] sm:$0xff]
          %v1805 = vld [vmem:[%s9 + $0x638] sm:$0xff]
          %v1806 = vld [vmem:[%s9 + $0x640] sm:$0xff]
          %v1807 = vld [vmem:[%s9 + $0x648] sm:$0xff]
          %v1808 = vld [vmem:[%s9 + $0x650] sm:$0xff]
          %v1809 = vld [vmem:[%s9 + $0x658] sm:$0xff]
          %v1810 = vld [vmem:[%s9 + $0x660] sm:$0xff]
          %v1811 = vld [vmem:[%s9 + $0x668] sm:$0xff]
          %v1812 = vld [vmem:[%s9 + $0x670] sm:$0xff]
          %v1813 = vld [vmem:[%s9 + $0x678] sm:$0xff]
          %v1814 = vld [vmem:[%s9 + $0x680] sm:$0xff]
          %v1815 = vld [vmem:[%s9 + $0x688] sm:$0xff]
          %v1816 = vld [vmem:[%s9 + $0x690] sm:$0xff]
          %v1817 = vld [vmem:[%s9 + $0x698] sm:$0xff]
          %v1818 = vld [vmem:[%s9 + $0x6a0] sm:$0xff]
          %v1819 = vld [vmem:[%s9 + $0x6a8] sm:$0xff]
          %v1820 = vld [vmem:[%s9 + $0x6b0] sm:$0xff]
          %v1821 = vld [vmem:[%s9 + $0x6b8] sm:$0xff]
          %v1822 = vld [vmem:[%s9 + $0x6c0] sm:$0xff]
          %v1823 = vld [vmem:[%s9 + $0x6c8] sm:$0xff]
          %v1824 = vld [vmem:[%s9 + $0x6d0] sm:$0xff]
          %v1825 = vld [vmem:[%s9 + $0x6d8] sm:$0xff]
          %v1826 = vld [vmem:[%s9 + $0x6e0] sm:$0xff]
          %v1827 = vld [vmem:[%s9 + $0x6e8] sm:$0xff]
          %v1828 = vld [vmem:[%s9 + $0x6f0] sm:$0xff]
          %v1829 = vld [vmem:[%s9 + $0x6f8] sm:$0xff]
          %v1830 = vld [vmem:[%s9 + $0x700] sm:$0xff]
          %v1831 = vld [vmem:[%s9 + $0x708] sm:$0xff]
          %v1832 = vld [vmem:[%s9 + $0x710] sm:$0xff]
          %v1833 = vld [vmem:[%s9 + $0x718] sm:$0xff]
          %v1834 = vld [vmem:[%s9 + $0x720] sm:$0xff]
          %v1835 = vld [vmem:[%s9 + $0x728] sm:$0xff]
          %v1836 = vld [vmem:[%s9 + $0x730] sm:$0xff]
          %v1837 = vld [vmem:[%s9 + $0x738] sm:$0xff]
          %v1838 = vld [vmem:[%s9 + $0x740] sm:$0xff]
          %v1839 = vld [vmem:[%s9 + $0x748] sm:$0xff]
          %v1840 = vld [vmem:[%s9 + $0x750] sm:$0xff]
          %v1841 = vld [vmem:[%s9 + $0x758] sm:$0xff]
          %v1842 = vld [vmem:[%s9 + $0x760] sm:$0xff]
          %v1843 = vld [vmem:[%s9 + $0x768] sm:$0xff]
          %v1844 = vld [vmem:[%s9 + $0x770] sm:$0xff]
          %v1845 = vld [vmem:[%s9 + $0x778] sm:$0xff]
          %v1846 = vld [vmem:[%s9 + $0x780] sm:$0xff]
          %v1847 = vld [vmem:[%s9 + $0x788] sm:$0xff]
          %v1848 = vld [vmem:[%s9 + $0x790] sm:$0xff]
          %v1849 = vld [vmem:[%s9 + $0x798] sm:$0xff]
          %v1850 = vld [vmem:[%s9 + $0x7a0] sm:$0xff]
          %v1851 = vld [vmem:[%s9 + $0x7a8] sm:$0xff]
          %v1852 = vld [vmem:[%s9 + $0x7b0] sm:$0xff]
          %v1853 = vld [vmem:[%s9 + $0x7b8] sm:$0xff]
          %v1854 = vld [vmem:[%s9 + $0x7c0] sm:$0xff]
          %v1855 = vld [vmem:[%s9 + $0x7c8] sm:$0xff]
          %v1856 = vld [vmem:[%s9 + $0x7d0] sm:$0xff]
          %v1857 = vld [vmem:[%s9 + $0x7d8] sm:$0xff]
          %v1858 = vld [vmem:[%s9 + $0x7e0] sm:$0xff]
          %v1859 = vld [vmem:[%s9 + $0x7e8] sm:$0xff]
          %v1860 = vld [vmem:[%s9 + $0x7f0] sm:$0xff]
          %v1861 = vld [vmem:[%s9 + $0x7f8] sm:$0xff]
          %v2118 = vunpack.c.l.b16 %v1606
          %v2119 = vunpack.c.h.b16 %v1606
          %v2120 = vunpack.c.l.b16 %v1607
          %v2121 = vunpack.c.h.b16 %v1607
          %v2122 = vunpack.c.l.b16 %v1608
          %v2123 = vunpack.c.h.b16 %v1608
          %v2124 = vunpack.c.l.b16 %v1609
          %v2125 = vunpack.c.h.b16 %v1609
          %v2126 = vunpack.c.l.b16 %v1610
          %v2127 = vunpack.c.h.b16 %v1610
          %v2128 = vunpack.c.l.b16 %v1611
          %v2129 = vunpack.c.h.b16 %v1611
          %v2130 = vunpack.c.l.b16 %v1612
          %v2131 = vunpack.c.h.b16 %v1612
          %v2132 = vunpack.c.l.b16 %v1613
          %v2133 = vunpack.c.h.b16 %v1613
          %v2134 = vunpack.c.l.b16 %v1614
          %v2135 = vunpack.c.h.b16 %v1614
          %v2136 = vunpack.c.l.b16 %v1615
          %v2137 = vunpack.c.h.b16 %v1615
          %v2138 = vunpack.c.l.b16 %v1616
          %v2139 = vunpack.c.h.b16 %v1616
          %v2140 = vunpack.c.l.b16 %v1617
          %v2141 = vunpack.c.h.b16 %v1617
          %v2142 = vunpack.c.l.b16 %v1618
          %v2143 = vunpack.c.h.b16 %v1618
          %v2144 = vunpack.c.l.b16 %v1619
          %v2145 = vunpack.c.h.b16 %v1619
          %v2146 = vunpack.c.l.b16 %v1620
          %v2147 = vunpack.c.h.b16 %v1620
          %v2148 = vunpack.c.l.b16 %v1621
          %v2149 = vunpack.c.h.b16 %v1621
          %v2150 = vunpack.c.l.b16 %v1622
          %v2151 = vunpack.c.h.b16 %v1622
          %v2152 = vunpack.c.l.b16 %v1623
          %v2153 = vunpack.c.h.b16 %v1623
          %v2154 = vunpack.c.l.b16 %v1624
          %v2155 = vunpack.c.h.b16 %v1624
          %v2156 = vunpack.c.l.b16 %v1625
          %v2157 = vunpack.c.h.b16 %v1625
          %v2158 = vunpack.c.l.b16 %v1626
          %v2159 = vunpack.c.h.b16 %v1626
          %v2160 = vunpack.c.l.b16 %v1627
          %v2161 = vunpack.c.h.b16 %v1627
          %v2162 = vunpack.c.l.b16 %v1628
          %v2163 = vunpack.c.h.b16 %v1628
          %v2164 = vunpack.c.l.b16 %v1629
          %v2165 = vunpack.c.h.b16 %v1629
          %v2166 = vunpack.c.l.b16 %v1630
          %v2167 = vunpack.c.h.b16 %v1630
          %v2168 = vunpack.c.l.b16 %v1631
          %v2169 = vunpack.c.h.b16 %v1631
          %v2170 = vunpack.c.l.b16 %v1632
          %v2171 = vunpack.c.h.b16 %v1632
          %v2172 = vunpack.c.l.b16 %v1633
          %v2173 = vunpack.c.h.b16 %v1633
          %v2174 = vunpack.c.l.b16 %v1634
          %v2175 = vunpack.c.h.b16 %v1634
          %v2176 = vunpack.c.l.b16 %v1635
          %v2177 = vunpack.c.h.b16 %v1635
          %v2178 = vunpack.c.l.b16 %v1636
          %v2179 = vunpack.c.h.b16 %v1636
          %v2180 = vunpack.c.l.b16 %v1637
          %v2181 = vunpack.c.h.b16 %v1637
          %v2182 = vunpack.c.l.b16 %v1638
          %v2183 = vunpack.c.h.b16 %v1638
          %v2184 = vunpack.c.l.b16 %v1639
          %v2185 = vunpack.c.h.b16 %v1639
          %v2186 = vunpack.c.l.b16 %v1640
          %v2187 = vunpack.c.h.b16 %v1640
          %v2188 = vunpack.c.l.b16 %v1641
          %v2189 = vunpack.c.h.b16 %v1641
          %v2190 = vunpack.c.l.b16 %v1642
          %v2191 = vunpack.c.h.b16 %v1642
          %v2192 = vunpack.c.l.b16 %v1643
          %v2193 = vunpack.c.h.b16 %v1643
          %v2194 = vunpack.c.l.b16 %v1644
          %v2195 = vunpack.c.h.b16 %v1644
          %v2196 = vunpack.c.l.b16 %v1645
          %v2197 = vunpack.c.h.b16 %v1645
          %v2198 = vunpack.c.l.b16 %v1646
          %v2199 = vunpack.c.h.b16 %v1646
          %v2200 = vunpack.c.l.b16 %v1647
          %v2201 = vunpack.c.h.b16 %v1647
          %v2202 = vunpack.c.l.b16 %v1648
          %v2203 = vunpack.c.h.b16 %v1648
          %v2204 = vunpack.c.l.b16 %v1649
          %v2205 = vunpack.c.h.b16 %v1649
          %v2206 = vunpack.c.l.b16 %v1650
          %v2207 = vunpack.c.h.b16 %v1650
          %v2208 = vunpack.c.l.b16 %v1651
          %v2209 = vunpack.c.h.b16 %v1651
          %v2210 = vunpack.c.l.b16 %v1652
          %v2211 = vunpack.c.h.b16 %v1652
          %v2212 = vunpack.c.l.b16 %v1653
          %v2213 = vunpack.c.h.b16 %v1653
          %v2214 = vunpack.c.l.b16 %v1654
          %v2215 = vunpack.c.h.b16 %v1654
          %v2216 = vunpack.c.l.b16 %v1655
          %v2217 = vunpack.c.h.b16 %v1655
          %v2218 = vunpack.c.l.b16 %v1656
          %v2219 = vunpack.c.h.b16 %v1656
          %v2220 = vunpack.c.l.b16 %v1657
          %v2221 = vunpack.c.h.b16 %v1657
          %v2222 = vunpack.c.l.b16 %v1658
          %v2223 = vunpack.c.h.b16 %v1658
          %v2224 = vunpack.c.l.b16 %v1659
          %v2225 = vunpack.c.h.b16 %v1659
          %v2226 = vunpack.c.l.b16 %v1660
          %v2227 = vunpack.c.h.b16 %v1660
          %v2228 = vunpack.c.l.b16 %v1661
          %v2229 = vunpack.c.h.b16 %v1661
          %v2230 = vunpack.c.l.b16 %v1662
          %v2231 = vunpack.c.h.b16 %v1662
          %v2232 = vunpack.c.l.b16 %v1663
          %v2233 = vunpack.c.h.b16 %v1663
          %v2234 = vunpack.c.l.b16 %v1664
          %v2235 = vunpack.c.h.b16 %v1664
          %v2236 = vunpack.c.l.b16 %v1665
          %v2237 = vunpack.c.h.b16 %v1665
          %v2238 = vunpack.c.l.b16 %v1666
          %v2239 = vunpack.c.h.b16 %v1666
          %v2240 = vunpack.c.l.b16 %v1667
          %v2241 = vunpack.c.h.b16 %v1667
          %v2242 = vunpack.c.l.b16 %v1668
          %v2243 = vunpack.c.h.b16 %v1668
          %v2244 = vunpack.c.l.b16 %v1669
          %v2245 = vunpack.c.h.b16 %v1669
          %v2246 = vunpack.c.l.b16 %v1670
          %v2247 = vunpack.c.h.b16 %v1670
          %v2248 = vunpack.c.l.b16 %v1671
          %v2249 = vunpack.c.h.b16 %v1671
          %v2250 = vunpack.c.l.b16 %v1672
          %v2251 = vunpack.c.h.b16 %v1672
          %v2252 = vunpack.c.l.b16 %v1673
          %v2253 = vunpack.c.h.b16 %v1673
          %v2254 = vunpack.c.l.b16 %v1674
          %v2255 = vunpack.c.h.b16 %v1674
          %v2256 = vunpack.c.l.b16 %v1675
          %v2257 = vunpack.c.h.b16 %v1675
          %v2258 = vunpack.c.l.b16 %v1676
          %v2259 = vunpack.c.h.b16 %v1676
          %v2260 = vunpack.c.l.b16 %v1677
          %v2261 = vunpack.c.h.b16 %v1677
          %v2262 = vunpack.c.l.b16 %v1678
          %v2263 = vunpack.c.h.b16 %v1678
          %v2264 = vunpack.c.l.b16 %v1679
          %v2265 = vunpack.c.h.b16 %v1679
          %v2266 = vunpack.c.l.b16 %v1680
          %v2267 = vunpack.c.h.b16 %v1680
          %v2268 = vunpack.c.l.b16 %v1681
          %v2269 = vunpack.c.h.b16 %v1681
          %v2270 = vunpack.c.l.b16 %v1682
          %v2271 = vunpack.c.h.b16 %v1682
          %v2272 = vunpack.c.l.b16 %v1683
          %v2273 = vunpack.c.h.b16 %v1683
          %v2274 = vunpack.c.l.b16 %v1684
          %v2275 = vunpack.c.h.b16 %v1684
          %v2276 = vunpack.c.l.b16 %v1685
          %v2277 = vunpack.c.h.b16 %v1685
          %v2278 = vunpack.c.l.b16 %v1686
          %v2279 = vunpack.c.h.b16 %v1686
          %v2280 = vunpack.c.l.b16 %v1687
          %v2281 = vunpack.c.h.b16 %v1687
          %v2282 = vunpack.c.l.b16 %v1688
          %v2283 = vunpack.c.h.b16 %v1688
          %v2284 = vunpack.c.l.b16 %v1689
          %v2285 = vunpack.c.h.b16 %v1689
          %v2286 = vunpack.c.l.b16 %v1690
          %v2287 = vunpack.c.h.b16 %v1690
          %v2288 = vunpack.c.l.b16 %v1691
          %v2289 = vunpack.c.h.b16 %v1691
          %v2290 = vunpack.c.l.b16 %v1692
          %v2291 = vunpack.c.h.b16 %v1692
          %v2292 = vunpack.c.l.b16 %v1693
          %v2293 = vunpack.c.h.b16 %v1693
          %v2294 = vunpack.c.l.b16 %v1694
          %v2295 = vunpack.c.h.b16 %v1694
          %v2296 = vunpack.c.l.b16 %v1695
          %v2297 = vunpack.c.h.b16 %v1695
          %v2298 = vunpack.c.l.b16 %v1696
          %v2299 = vunpack.c.h.b16 %v1696
          %v2300 = vunpack.c.l.b16 %v1697
          %v2301 = vunpack.c.h.b16 %v1697
          %v2302 = vunpack.c.l.b16 %v1698
          %v2303 = vunpack.c.h.b16 %v1698
          %v2304 = vunpack.c.l.b16 %v1699
          %v2305 = vunpack.c.h.b16 %v1699
          %v2306 = vunpack.c.l.b16 %v1700
          %v2307 = vunpack.c.h.b16 %v1700
          %v2308 = vunpack.c.l.b16 %v1701
          %v2309 = vunpack.c.h.b16 %v1701
          %v2310 = vunpack.c.l.b16 %v1702
          %v2311 = vunpack.c.h.b16 %v1702
          %v2312 = vunpack.c.l.b16 %v1703
          %v2313 = vunpack.c.h.b16 %v1703
          %v2314 = vunpack.c.l.b16 %v1704
          %v2315 = vunpack.c.h.b16 %v1704
          %v2316 = vunpack.c.l.b16 %v1705
          %v2317 = vunpack.c.h.b16 %v1705
          %v2318 = vunpack.c.l.b16 %v1706
          %v2319 = vunpack.c.h.b16 %v1706
          %v2320 = vunpack.c.l.b16 %v1707
          %v2321 = vunpack.c.h.b16 %v1707
          %v2322 = vunpack.c.l.b16 %v1708
          %v2323 = vunpack.c.h.b16 %v1708
          %v2324 = vunpack.c.l.b16 %v1709
          %v2325 = vunpack.c.h.b16 %v1709
          %v2326 = vunpack.c.l.b16 %v1710
          %v2327 = vunpack.c.h.b16 %v1710
          %v2328 = vunpack.c.l.b16 %v1711
          %v2329 = vunpack.c.h.b16 %v1711
          %v2330 = vunpack.c.l.b16 %v1712
          %v2331 = vunpack.c.h.b16 %v1712
          %v2332 = vunpack.c.l.b16 %v1713
          %v2333 = vunpack.c.h.b16 %v1713
          %v2334 = vunpack.c.l.b16 %v1714
          %v2335 = vunpack.c.h.b16 %v1714
          %v2336 = vunpack.c.l.b16 %v1715
          %v2337 = vunpack.c.h.b16 %v1715
          %v2338 = vunpack.c.l.b16 %v1716
          %v2339 = vunpack.c.h.b16 %v1716
          %v2340 = vunpack.c.l.b16 %v1717
          %v2341 = vunpack.c.h.b16 %v1717
          %v2342 = vunpack.c.l.b16 %v1718
          %v2343 = vunpack.c.h.b16 %v1718
          %v2344 = vunpack.c.l.b16 %v1719
          %v2345 = vunpack.c.h.b16 %v1719
          %v2346 = vunpack.c.l.b16 %v1720
          %v2347 = vunpack.c.h.b16 %v1720
          %v2348 = vunpack.c.l.b16 %v1721
          %v2349 = vunpack.c.h.b16 %v1721
          %v2350 = vunpack.c.l.b16 %v1722
          %v2351 = vunpack.c.h.b16 %v1722
          %v2352 = vunpack.c.l.b16 %v1723
          %v2353 = vunpack.c.h.b16 %v1723
          %v2354 = vunpack.c.l.b16 %v1724
          %v2355 = vunpack.c.h.b16 %v1724
          %v2356 = vunpack.c.l.b16 %v1725
          %v2357 = vunpack.c.h.b16 %v1725
          %v2358 = vunpack.c.l.b16 %v1726
          %v2359 = vunpack.c.h.b16 %v1726
          %v2360 = vunpack.c.l.b16 %v1727
          %v2361 = vunpack.c.h.b16 %v1727
          %v2362 = vunpack.c.l.b16 %v1728
          %v2363 = vunpack.c.h.b16 %v1728
          %v2364 = vunpack.c.l.b16 %v1729
          %v2365 = vunpack.c.h.b16 %v1729
          %v2366 = vunpack.c.l.b16 %v1730
          %v2367 = vunpack.c.h.b16 %v1730
          %v2368 = vunpack.c.l.b16 %v1731
          %v2369 = vunpack.c.h.b16 %v1731
          %v2370 = vunpack.c.l.b16 %v1732
          %v2371 = vunpack.c.h.b16 %v1732
          %v2372 = vunpack.c.l.b16 %v1733
          %v2373 = vunpack.c.h.b16 %v1733
          %v2374 = vunpack.c.l.b16 %v1734
          %v2375 = vunpack.c.h.b16 %v1734
          %v2376 = vunpack.c.l.b16 %v1735
          %v2377 = vunpack.c.h.b16 %v1735
          %v2378 = vunpack.c.l.b16 %v1736
          %v2379 = vunpack.c.h.b16 %v1736
          %v2380 = vunpack.c.l.b16 %v1737
          %v2381 = vunpack.c.h.b16 %v1737
          %v2382 = vunpack.c.l.b16 %v1738
          %v2383 = vunpack.c.h.b16 %v1738
          %v2384 = vunpack.c.l.b16 %v1739
          %v2385 = vunpack.c.h.b16 %v1739
          %v2386 = vunpack.c.l.b16 %v1740
          %v2387 = vunpack.c.h.b16 %v1740
          %v2388 = vunpack.c.l.b16 %v1741
          %v2389 = vunpack.c.h.b16 %v1741
          %v2390 = vunpack.c.l.b16 %v1742
          %v2391 = vunpack.c.h.b16 %v1742
          %v2392 = vunpack.c.l.b16 %v1743
          %v2393 = vunpack.c.h.b16 %v1743
          %v2394 = vunpack.c.l.b16 %v1744
          %v2395 = vunpack.c.h.b16 %v1744
          %v2396 = vunpack.c.l.b16 %v1745
          %v2397 = vunpack.c.h.b16 %v1745
          %v2398 = vunpack.c.l.b16 %v1746
          %v2399 = vunpack.c.h.b16 %v1746
          %v2400 = vunpack.c.l.b16 %v1747
          %v2401 = vunpack.c.h.b16 %v1747
          %v2402 = vunpack.c.l.b16 %v1748
          %v2403 = vunpack.c.h.b16 %v1748
          %v2404 = vunpack.c.l.b16 %v1749
          %v2405 = vunpack.c.h.b16 %v1749
          %v2406 = vunpack.c.l.b16 %v1750
          %v2407 = vunpack.c.h.b16 %v1750
          %v2408 = vunpack.c.l.b16 %v1751
          %v2409 = vunpack.c.h.b16 %v1751
          %v2410 = vunpack.c.l.b16 %v1752
          %v2411 = vunpack.c.h.b16 %v1752
          %v2412 = vunpack.c.l.b16 %v1753
          %v2413 = vunpack.c.h.b16 %v1753
          %v2414 = vunpack.c.l.b16 %v1754
          %v2415 = vunpack.c.h.b16 %v1754
          %v2416 = vunpack.c.l.b16 %v1755
          %v2417 = vunpack.c.h.b16 %v1755
          %v2418 = vunpack.c.l.b16 %v1756
          %v2419 = vunpack.c.h.b16 %v1756
          %v2420 = vunpack.c.l.b16 %v1757
          %v2421 = vunpack.c.h.b16 %v1757
          %v2422 = vunpack.c.l.b16 %v1758
          %v2423 = vunpack.c.h.b16 %v1758
          %v2424 = vunpack.c.l.b16 %v1759
          %v2425 = vunpack.c.h.b16 %v1759
          %v2426 = vunpack.c.l.b16 %v1760
          %v2427 = vunpack.c.h.b16 %v1760
          %v2428 = vunpack.c.l.b16 %v1761
          %v2429 = vunpack.c.h.b16 %v1761
          %v2430 = vunpack.c.l.b16 %v1762
          %v2431 = vunpack.c.h.b16 %v1762
          %v2432 = vunpack.c.l.b16 %v1763
          %v2433 = vunpack.c.h.b16 %v1763
          %v2434 = vunpack.c.l.b16 %v1764
          %v2435 = vunpack.c.h.b16 %v1764
          %v2436 = vunpack.c.l.b16 %v1765
          %v2437 = vunpack.c.h.b16 %v1765
          %v2438 = vunpack.c.l.b16 %v1766
          %v2439 = vunpack.c.h.b16 %v1766
          %v2440 = vunpack.c.l.b16 %v1767
          %v2441 = vunpack.c.h.b16 %v1767
          %v2442 = vunpack.c.l.b16 %v1768
          %v2443 = vunpack.c.h.b16 %v1768
          %v2444 = vunpack.c.l.b16 %v1769
          %v2445 = vunpack.c.h.b16 %v1769
          %v2446 = vunpack.c.l.b16 %v1770
          %v2447 = vunpack.c.h.b16 %v1770
          %v2448 = vunpack.c.l.b16 %v1771
          %v2449 = vunpack.c.h.b16 %v1771
          %v2450 = vunpack.c.l.b16 %v1772
          %v2451 = vunpack.c.h.b16 %v1772
          %v2452 = vunpack.c.l.b16 %v1773
          %v2453 = vunpack.c.h.b16 %v1773
          %v2454 = vunpack.c.l.b16 %v1774
          %v2455 = vunpack.c.h.b16 %v1774
          %v2456 = vunpack.c.l.b16 %v1775
          %v2457 = vunpack.c.h.b16 %v1775
          %v2458 = vunpack.c.l.b16 %v1776
          %v2459 = vunpack.c.h.b16 %v1776
          %v2460 = vunpack.c.l.b16 %v1777
          %v2461 = vunpack.c.h.b16 %v1777
          %v2462 = vunpack.c.l.b16 %v1778
          %v2463 = vunpack.c.h.b16 %v1778
          %v2464 = vunpack.c.l.b16 %v1779
          %v2465 = vunpack.c.h.b16 %v1779
          %v2466 = vunpack.c.l.b16 %v1780
          %v2467 = vunpack.c.h.b16 %v1780
          %v2468 = vunpack.c.l.b16 %v1781
          %v2469 = vunpack.c.h.b16 %v1781
          %v2470 = vunpack.c.l.b16 %v1782
          %v2471 = vunpack.c.h.b16 %v1782
          %v2472 = vunpack.c.l.b16 %v1783
          %v2473 = vunpack.c.h.b16 %v1783
          %v2474 = vunpack.c.l.b16 %v1784
          %v2475 = vunpack.c.h.b16 %v1784
          %v2476 = vunpack.c.l.b16 %v1785
          %v2477 = vunpack.c.h.b16 %v1785
          %v2478 = vunpack.c.l.b16 %v1786
          %v2479 = vunpack.c.h.b16 %v1786
          %v2480 = vunpack.c.l.b16 %v1787
          %v2481 = vunpack.c.h.b16 %v1787
          %v2482 = vunpack.c.l.b16 %v1788
          %v2483 = vunpack.c.h.b16 %v1788
          %v2484 = vunpack.c.l.b16 %v1789
          %v2485 = vunpack.c.h.b16 %v1789
          %v2486 = vunpack.c.l.b16 %v1790
          %v2487 = vunpack.c.h.b16 %v1790
          %v2488 = vunpack.c.l.b16 %v1791
          %v2489 = vunpack.c.h.b16 %v1791
          %v2490 = vunpack.c.l.b16 %v1792
          %v2491 = vunpack.c.h.b16 %v1792
          %v2492 = vunpack.c.l.b16 %v1793
          %v2493 = vunpack.c.h.b16 %v1793
          %v2494 = vunpack.c.l.b16 %v1794
          %v2495 = vunpack.c.h.b16 %v1794
          %v2496 = vunpack.c.l.b16 %v1795
          %v2497 = vunpack.c.h.b16 %v1795
          %v2498 = vunpack.c.l.b16 %v1796
          %v2499 = vunpack.c.h.b16 %v1796
          %v2500 = vunpack.c.l.b16 %v1797
          %v2501 = vunpack.c.h.b16 %v1797
          %v2502 = vunpack.c.l.b16 %v1798
          %v2503 = vunpack.c.h.b16 %v1798
          %v2504 = vunpack.c.l.b16 %v1799
          %v2505 = vunpack.c.h.b16 %v1799
          %v2506 = vunpack.c.l.b16 %v1800
          %v2507 = vunpack.c.h.b16 %v1800
          %v2508 = vunpack.c.l.b16 %v1801
          %v2509 = vunpack.c.h.b16 %v1801
          %v2510 = vunpack.c.l.b16 %v1802
          %v2511 = vunpack.c.h.b16 %v1802
          %v2512 = vunpack.c.l.b16 %v1803
          %v2513 = vunpack.c.h.b16 %v1803
          %v2514 = vunpack.c.l.b16 %v1804
          %v2515 = vunpack.c.h.b16 %v1804
          %v2516 = vunpack.c.l.b16 %v1805
          %v2517 = vunpack.c.h.b16 %v1805
          %v2518 = vunpack.c.l.b16 %v1806
          %v2519 = vunpack.c.h.b16 %v1806
          %v2520 = vunpack.c.l.b16 %v1807
          %v2521 = vunpack.c.h.b16 %v1807
          %v2522 = vunpack.c.l.b16 %v1808
          %v2523 = vunpack.c.h.b16 %v1808
          %v2524 = vunpack.c.l.b16 %v1809
          %v2525 = vunpack.c.h.b16 %v1809
          %v2526 = vunpack.c.l.b16 %v1810
          %v2527 = vunpack.c.h.b16 %v1810
          %v2528 = vunpack.c.l.b16 %v1811
          %v2529 = vunpack.c.h.b16 %v1811
          %v2530 = vunpack.c.l.b16 %v1812
          %v2531 = vunpack.c.h.b16 %v1812
          %v2532 = vunpack.c.l.b16 %v1813
          %v2533 = vunpack.c.h.b16 %v1813
          %v2534 = vunpack.c.l.b16 %v1814
          %v2535 = vunpack.c.h.b16 %v1814
          %v2536 = vunpack.c.l.b16 %v1815
          %v2537 = vunpack.c.h.b16 %v1815
          %v2538 = vunpack.c.l.b16 %v1816
          %v2539 = vunpack.c.h.b16 %v1816
          %v2540 = vunpack.c.l.b16 %v1817
          %v2541 = vunpack.c.h.b16 %v1817
          %v2542 = vunpack.c.l.b16 %v1818
          %v2543 = vunpack.c.h.b16 %v1818
          %v2544 = vunpack.c.l.b16 %v1819
          %v2545 = vunpack.c.h.b16 %v1819
          %v2546 = vunpack.c.l.b16 %v1820
          %v2547 = vunpack.c.h.b16 %v1820
          %v2548 = vunpack.c.l.b16 %v1821
          %v2549 = vunpack.c.h.b16 %v1821
          %v2550 = vunpack.c.l.b16 %v1822
          %v2551 = vunpack.c.h.b16 %v1822
          %v2552 = vunpack.c.l.b16 %v1823
          %v2553 = vunpack.c.h.b16 %v1823
          %v2554 = vunpack.c.l.b16 %v1824
          %v2555 = vunpack.c.h.b16 %v1824
          %v2556 = vunpack.c.l.b16 %v1825
          %v2557 = vunpack.c.h.b16 %v1825
          %v2558 = vunpack.c.l.b16 %v1826
          %v2559 = vunpack.c.h.b16 %v1826
          %v2560 = vunpack.c.l.b16 %v1827
          %v2561 = vunpack.c.h.b16 %v1827
          %v2562 = vunpack.c.l.b16 %v1828
          %v2563 = vunpack.c.h.b16 %v1828
          %v2564 = vunpack.c.l.b16 %v1829
          %v2565 = vunpack.c.h.b16 %v1829
          %v2566 = vunpack.c.l.b16 %v1830
          %v2567 = vunpack.c.h.b16 %v1830
          %v2568 = vunpack.c.l.b16 %v1831
          %v2569 = vunpack.c.h.b16 %v1831
          %v2570 = vunpack.c.l.b16 %v1832
          %v2571 = vunpack.c.h.b16 %v1832
          %v2572 = vunpack.c.l.b16 %v1833
          %v2573 = vunpack.c.h.b16 %v1833
          %v2574 = vunpack.c.l.b16 %v1834
          %v2575 = vunpack.c.h.b16 %v1834
          %v2576 = vunpack.c.l.b16 %v1835
          %v2577 = vunpack.c.h.b16 %v1835
          %v2578 = vunpack.c.l.b16 %v1836
          %v2579 = vunpack.c.h.b16 %v1836
          %v2580 = vunpack.c.l.b16 %v1837
          %v2581 = vunpack.c.h.b16 %v1837
          %v2582 = vunpack.c.l.b16 %v1838
          %v2583 = vunpack.c.h.b16 %v1838
          %v2584 = vunpack.c.l.b16 %v1839
          %v2585 = vunpack.c.h.b16 %v1839
          %v2586 = vunpack.c.l.b16 %v1840
          %v2587 = vunpack.c.h.b16 %v1840
          %v2588 = vunpack.c.l.b16 %v1841
          %v2589 = vunpack.c.h.b16 %v1841
          %v2590 = vunpack.c.l.b16 %v1842
          %v2591 = vunpack.c.h.b16 %v1842
          %v2592 = vunpack.c.l.b16 %v1843
          %v2593 = vunpack.c.h.b16 %v1843
          %v2594 = vunpack.c.l.b16 %v1844
          %v2595 = vunpack.c.h.b16 %v1844
          %v2596 = vunpack.c.l.b16 %v1845
          %v2597 = vunpack.c.h.b16 %v1845
          %v2598 = vunpack.c.l.b16 %v1846
          %v2599 = vunpack.c.h.b16 %v1846
          %v2600 = vunpack.c.l.b16 %v1847
          %v2601 = vunpack.c.h.b16 %v1847
          %v2602 = vunpack.c.l.b16 %v1848
          %v2603 = vunpack.c.h.b16 %v1848
          %v2604 = vunpack.c.l.b16 %v1849
          %v2605 = vunpack.c.h.b16 %v1849
          %v2606 = vunpack.c.l.b16 %v1850
          %v2607 = vunpack.c.h.b16 %v1850
          %v2608 = vunpack.c.l.b16 %v1851
          %v2609 = vunpack.c.h.b16 %v1851
          %v2610 = vunpack.c.l.b16 %v1852
          %v2611 = vunpack.c.h.b16 %v1852
          %v2612 = vunpack.c.l.b16 %v1853
          %v2613 = vunpack.c.h.b16 %v1853
          %v2614 = vunpack.c.l.b16 %v1854
          %v2615 = vunpack.c.h.b16 %v1854
          %v2616 = vunpack.c.l.b16 %v1855
          %v2617 = vunpack.c.h.b16 %v1855
          %v2618 = vunpack.c.l.b16 %v1856
          %v2619 = vunpack.c.h.b16 %v1856
          %v2620 = vunpack.c.l.b16 %v1857
          %v2621 = vunpack.c.h.b16 %v1857
          %v2622 = vunpack.c.l.b16 %v1858
          %v2623 = vunpack.c.h.b16 %v1858
          %v2624 = vunpack.c.l.b16 %v1859
          %v2625 = vunpack.c.h.b16 %v1859
          %v2626 = vunpack.c.l.b16 %v1860
          %v2627 = vunpack.c.h.b16 %v1860
          %v2628 = vunpack.c.l.b16 %v1861
          %v2629 = vunpack.c.h.b16 %v1861
          %v2630 = vpack.c.b16 %v2126, %v2118
          %v2631 = vpack.c.b16 %v2127, %v2119
          %v2632 = vpack.c.b16 %v2128, %v2120
          %v2633 = vpack.c.b16 %v2129, %v2121
          %v2634 = vpack.c.b16 %v2130, %v2122
          %v2635 = vpack.c.b16 %v2131, %v2123
          %v2636 = vpack.c.b16 %v2132, %v2124
          %v2637 = vpack.c.b16 %v2133, %v2125
          %v2638 = vpack.c.b16 %v2142, %v2134
          %v2639 = vpack.c.b16 %v2143, %v2135
          %v2640 = vpack.c.b16 %v2144, %v2136
          %v2641 = vpack.c.b16 %v2145, %v2137
          %v2642 = vpack.c.b16 %v2146, %v2138
          %v2643 = vpack.c.b16 %v2147, %v2139
          %v2644 = vpack.c.b16 %v2148, %v2140
          %v2645 = vpack.c.b16 %v2149, %v2141
          %v2646 = vpack.c.b16 %v2158, %v2150
          %v2647 = vpack.c.b16 %v2159, %v2151
          %v2648 = vpack.c.b16 %v2160, %v2152
          %v2649 = vpack.c.b16 %v2161, %v2153
          %v2650 = vpack.c.b16 %v2162, %v2154
          %v2651 = vpack.c.b16 %v2163, %v2155
          %v2652 = vpack.c.b16 %v2164, %v2156
          %v2653 = vpack.c.b16 %v2165, %v2157
          %v2654 = vpack.c.b16 %v2174, %v2166
          %v2655 = vpack.c.b16 %v2175, %v2167
          %v2656 = vpack.c.b16 %v2176, %v2168
          %v2657 = vpack.c.b16 %v2177, %v2169
          %v2658 = vpack.c.b16 %v2178, %v2170
          %v2659 = vpack.c.b16 %v2179, %v2171
          %v2660 = vpack.c.b16 %v2180, %v2172
          %v2661 = vpack.c.b16 %v2181, %v2173
          %v2662 = vpack.c.b16 %v2190, %v2182
          %v2663 = vpack.c.b16 %v2191, %v2183
          %v2664 = vpack.c.b16 %v2192, %v2184
          %v2665 = vpack.c.b16 %v2193, %v2185
          %v2666 = vpack.c.b16 %v2194, %v2186
          %v2667 = vpack.c.b16 %v2195, %v2187
          %v2668 = vpack.c.b16 %v2196, %v2188
          %v2669 = vpack.c.b16 %v2197, %v2189
          %v2670 = vpack.c.b16 %v2206, %v2198
          %v2671 = vpack.c.b16 %v2207, %v2199
          %v2672 = vpack.c.b16 %v2208, %v2200
          %v2673 = vpack.c.b16 %v2209, %v2201
          %v2674 = vpack.c.b16 %v2210, %v2202
          %v2675 = vpack.c.b16 %v2211, %v2203
          %v2676 = vpack.c.b16 %v2212, %v2204
          %v2677 = vpack.c.b16 %v2213, %v2205
          %v2678 = vpack.c.b16 %v2222, %v2214
          %v2679 = vpack.c.b16 %v2223, %v2215
          %v2680 = vpack.c.b16 %v2224, %v2216
          %v2681 = vpack.c.b16 %v2225, %v2217
          %v2682 = vpack.c.b16 %v2226, %v2218
          %v2683 = vpack.c.b16 %v2227, %v2219
          %v2684 = vpack.c.b16 %v2228, %v2220
          %v2685 = vpack.c.b16 %v2229, %v2221
          %v2686 = vpack.c.b16 %v2238, %v2230
          %v2687 = vpack.c.b16 %v2239, %v2231
          %v2688 = vpack.c.b16 %v2240, %v2232
          %v2689 = vpack.c.b16 %v2241, %v2233
          %v2690 = vpack.c.b16 %v2242, %v2234
          %v2691 = vpack.c.b16 %v2243, %v2235
          %v2692 = vpack.c.b16 %v2244, %v2236
          %v2693 = vpack.c.b16 %v2245, %v2237
          %v2694 = vpack.c.b16 %v2254, %v2246
          %v2695 = vpack.c.b16 %v2255, %v2247
          %v2696 = vpack.c.b16 %v2256, %v2248
          %v2697 = vpack.c.b16 %v2257, %v2249
          %v2698 = vpack.c.b16 %v2258, %v2250
          %v2699 = vpack.c.b16 %v2259, %v2251
          %v2700 = vpack.c.b16 %v2260, %v2252
          %v2701 = vpack.c.b16 %v2261, %v2253
          %v2702 = vpack.c.b16 %v2270, %v2262
          %v2703 = vpack.c.b16 %v2271, %v2263
          %v2704 = vpack.c.b16 %v2272, %v2264
          %v2705 = vpack.c.b16 %v2273, %v2265
          %v2706 = vpack.c.b16 %v2274, %v2266
          %v2707 = vpack.c.b16 %v2275, %v2267
          %v2708 = vpack.c.b16 %v2276, %v2268
          %v2709 = vpack.c.b16 %v2277, %v2269
          %v2710 = vpack.c.b16 %v2286, %v2278
          %v2711 = vpack.c.b16 %v2287, %v2279
          %v2712 = vpack.c.b16 %v2288, %v2280
          %v2713 = vpack.c.b16 %v2289, %v2281
          %v2714 = vpack.c.b16 %v2290, %v2282
          %v2715 = vpack.c.b16 %v2291, %v2283
          %v2716 = vpack.c.b16 %v2292, %v2284
          %v2717 = vpack.c.b16 %v2293, %v2285
          %v2718 = vpack.c.b16 %v2302, %v2294
          %v2719 = vpack.c.b16 %v2303, %v2295
          %v2720 = vpack.c.b16 %v2304, %v2296
          %v2721 = vpack.c.b16 %v2305, %v2297
          %v2722 = vpack.c.b16 %v2306, %v2298
          %v2723 = vpack.c.b16 %v2307, %v2299
          %v2724 = vpack.c.b16 %v2308, %v2300
          %v2725 = vpack.c.b16 %v2309, %v2301
          %v2726 = vpack.c.b16 %v2318, %v2310
          %v2727 = vpack.c.b16 %v2319, %v2311
          %v2728 = vpack.c.b16 %v2320, %v2312
          %v2729 = vpack.c.b16 %v2321, %v2313
          %v2730 = vpack.c.b16 %v2322, %v2314
          %v2731 = vpack.c.b16 %v2323, %v2315
          %v2732 = vpack.c.b16 %v2324, %v2316
          %v2733 = vpack.c.b16 %v2325, %v2317
          %v2734 = vpack.c.b16 %v2334, %v2326
          %v2735 = vpack.c.b16 %v2335, %v2327
          %v2736 = vpack.c.b16 %v2336, %v2328
          %v2737 = vpack.c.b16 %v2337, %v2329
          %v2738 = vpack.c.b16 %v2338, %v2330
          %v2739 = vpack.c.b16 %v2339, %v2331
          %v2740 = vpack.c.b16 %v2340, %v2332
          %v2741 = vpack.c.b16 %v2341, %v2333
          %v2742 = vpack.c.b16 %v2350, %v2342
          %v2743 = vpack.c.b16 %v2351, %v2343
          %v2744 = vpack.c.b16 %v2352, %v2344
          %v2745 = vpack.c.b16 %v2353, %v2345
          %v2746 = vpack.c.b16 %v2354, %v2346
          %v2747 = vpack.c.b16 %v2355, %v2347
          %v2748 = vpack.c.b16 %v2356, %v2348
          %v2749 = vpack.c.b16 %v2357, %v2349
          %v2750 = vpack.c.b16 %v2366, %v2358
          %v2751 = vpack.c.b16 %v2367, %v2359
          %v2752 = vpack.c.b16 %v2368, %v2360
          %v2753 = vpack.c.b16 %v2369, %v2361
          %v2754 = vpack.c.b16 %v2370, %v2362
          %v2755 = vpack.c.b16 %v2371, %v2363
          %v2756 = vpack.c.b16 %v2372, %v2364
          %v2757 = vpack.c.b16 %v2373, %v2365
          %v2758 = vpack.c.b16 %v2382, %v2374
          %v2759 = vpack.c.b16 %v2383, %v2375
          %v2760 = vpack.c.b16 %v2384, %v2376
          %v2761 = vpack.c.b16 %v2385, %v2377
          %v2762 = vpack.c.b16 %v2386, %v2378
          %v2763 = vpack.c.b16 %v2387, %v2379
          %v2764 = vpack.c.b16 %v2388, %v2380
          %v2765 = vpack.c.b16 %v2389, %v2381
          %v2766 = vpack.c.b16 %v2398, %v2390
          %v2767 = vpack.c.b16 %v2399, %v2391
          %v2768 = vpack.c.b16 %v2400, %v2392
          %v2769 = vpack.c.b16 %v2401, %v2393
          %v2770 = vpack.c.b16 %v2402, %v2394
          %v2771 = vpack.c.b16 %v2403, %v2395
          %v2772 = vpack.c.b16 %v2404, %v2396
          %v2773 = vpack.c.b16 %v2405, %v2397
          %v2774 = vpack.c.b16 %v2414, %v2406
          %v2775 = vpack.c.b16 %v2415, %v2407
          %v2776 = vpack.c.b16 %v2416, %v2408
          %v2777 = vpack.c.b16 %v2417, %v2409
          %v2778 = vpack.c.b16 %v2418, %v2410
          %v2779 = vpack.c.b16 %v2419, %v2411
          %v2780 = vpack.c.b16 %v2420, %v2412
          %v2781 = vpack.c.b16 %v2421, %v2413
          %v2782 = vpack.c.b16 %v2430, %v2422
          %v2783 = vpack.c.b16 %v2431, %v2423
          %v2784 = vpack.c.b16 %v2432, %v2424
          %v2785 = vpack.c.b16 %v2433, %v2425
          %v2786 = vpack.c.b16 %v2434, %v2426
          %v2787 = vpack.c.b16 %v2435, %v2427
          %v2788 = vpack.c.b16 %v2436, %v2428
          %v2789 = vpack.c.b16 %v2437, %v2429
          %v2790 = vpack.c.b16 %v2446, %v2438
          %v2791 = vpack.c.b16 %v2447, %v2439
          %v2792 = vpack.c.b16 %v2448, %v2440
          %v2793 = vpack.c.b16 %v2449, %v2441
          %v2794 = vpack.c.b16 %v2450, %v2442
          %v2795 = vpack.c.b16 %v2451, %v2443
          %v2796 = vpack.c.b16 %v2452, %v2444
          %v2797 = vpack.c.b16 %v2453, %v2445
          %v2798 = vpack.c.b16 %v2462, %v2454
          %v2799 = vpack.c.b16 %v2463, %v2455
          %v2800 = vpack.c.b16 %v2464, %v2456
          %v2801 = vpack.c.b16 %v2465, %v2457
          %v2802 = vpack.c.b16 %v2466, %v2458
          %v2803 = vpack.c.b16 %v2467, %v2459
          %v2804 = vpack.c.b16 %v2468, %v2460
          %v2805 = vpack.c.b16 %v2469, %v2461
          %v2806 = vpack.c.b16 %v2478, %v2470
          %v2807 = vpack.c.b16 %v2479, %v2471
          %v2808 = vpack.c.b16 %v2480, %v2472
          %v2809 = vpack.c.b16 %v2481, %v2473
          %v2810 = vpack.c.b16 %v2482, %v2474
          %v2811 = vpack.c.b16 %v2483, %v2475
          %v2812 = vpack.c.b16 %v2484, %v2476
          %v2813 = vpack.c.b16 %v2485, %v2477
          %v2814 = vpack.c.b16 %v2494, %v2486
          %v2815 = vpack.c.b16 %v2495, %v2487
          %v2816 = vpack.c.b16 %v2496, %v2488
          %v2817 = vpack.c.b16 %v2497, %v2489
          %v2818 = vpack.c.b16 %v2498, %v2490
          %v2819 = vpack.c.b16 %v2499, %v2491
          %v2820 = vpack.c.b16 %v2500, %v2492
          %v2821 = vpack.c.b16 %v2501, %v2493
          %v2822 = vpack.c.b16 %v2510, %v2502
          %v2823 = vpack.c.b16 %v2511, %v2503
          %v2824 = vpack.c.b16 %v2512, %v2504
          %v2825 = vpack.c.b16 %v2513, %v2505
          %v2826 = vpack.c.b16 %v2514, %v2506
          %v2827 = vpack.c.b16 %v2515, %v2507
          %v2828 = vpack.c.b16 %v2516, %v2508
          %v2829 = vpack.c.b16 %v2517, %v2509
          %v2830 = vpack.c.b16 %v2526, %v2518
          %v2831 = vpack.c.b16 %v2527, %v2519
          %v2832 = vpack.c.b16 %v2528, %v2520
          %v2833 = vpack.c.b16 %v2529, %v2521
          %v2834 = vpack.c.b16 %v2530, %v2522
          %v2835 = vpack.c.b16 %v2531, %v2523
          %v2836 = vpack.c.b16 %v2532, %v2524
          %v2837 = vpack.c.b16 %v2533, %v2525
          %v2838 = vpack.c.b16 %v2542, %v2534
          %v2839 = vpack.c.b16 %v2543, %v2535
          %v2840 = vpack.c.b16 %v2544, %v2536
          %v2841 = vpack.c.b16 %v2545, %v2537
          %v2842 = vpack.c.b16 %v2546, %v2538
          %v2843 = vpack.c.b16 %v2547, %v2539
          %v2844 = vpack.c.b16 %v2548, %v2540
          %v2845 = vpack.c.b16 %v2549, %v2541
          %v2846 = vpack.c.b16 %v2558, %v2550
          %v2847 = vpack.c.b16 %v2559, %v2551
          %v2848 = vpack.c.b16 %v2560, %v2552
          %v2849 = vpack.c.b16 %v2561, %v2553
          %v2850 = vpack.c.b16 %v2562, %v2554
          %v2851 = vpack.c.b16 %v2563, %v2555
          %v2852 = vpack.c.b16 %v2564, %v2556
          %v2853 = vpack.c.b16 %v2565, %v2557
          %v2854 = vpack.c.b16 %v2574, %v2566
          %v2855 = vpack.c.b16 %v2575, %v2567
          %v2856 = vpack.c.b16 %v2576, %v2568
          %v2857 = vpack.c.b16 %v2577, %v2569
          %v2858 = vpack.c.b16 %v2578, %v2570
          %v2859 = vpack.c.b16 %v2579, %v2571
          %v2860 = vpack.c.b16 %v2580, %v2572
          %v2861 = vpack.c.b16 %v2581, %v2573
          %v2862 = vpack.c.b16 %v2590, %v2582
          %v2863 = vpack.c.b16 %v2591, %v2583
          %v2864 = vpack.c.b16 %v2592, %v2584
          %v2865 = vpack.c.b16 %v2593, %v2585
          %v2866 = vpack.c.b16 %v2594, %v2586
          %v2867 = vpack.c.b16 %v2595, %v2587
          %v2868 = vpack.c.b16 %v2596, %v2588
          %v2869 = vpack.c.b16 %v2597, %v2589
          %v2870 = vpack.c.b16 %v2606, %v2598
          %v2871 = vpack.c.b16 %v2607, %v2599
          %v2872 = vpack.c.b16 %v2608, %v2600
          %v2873 = vpack.c.b16 %v2609, %v2601
          %v2874 = vpack.c.b16 %v2610, %v2602
          %v2875 = vpack.c.b16 %v2611, %v2603
          %v2876 = vpack.c.b16 %v2612, %v2604
          %v2877 = vpack.c.b16 %v2613, %v2605
          %v2878 = vpack.c.b16 %v2622, %v2614
          %v2879 = vpack.c.b16 %v2623, %v2615
          %v2880 = vpack.c.b16 %v2624, %v2616
          %v2881 = vpack.c.b16 %v2625, %v2617
          %v2882 = vpack.c.b16 %v2626, %v2618
          %v2883 = vpack.c.b16 %v2627, %v2619
          %v2884 = vpack.c.b16 %v2628, %v2620
          %v2885 = vpack.c.b16 %v2629, %v2621
          %3142 = vmatprep.subr.bf16.mxu0 %v2631
          %3143 = vmatpush1.bf16.msra.mxu0 %v2630
          %3144 = vmatprep.subr.bf16.mxu0 %v2639
          %3145 = vmatpush1.bf16.msra.mxu0 %v2638
          %3146 = vmatprep.subr.bf16.mxu0 %v2647
          %3147 = vmatpush1.bf16.msra.mxu0 %v2646
          %3148 = vmatprep.subr.bf16.mxu0 %v2655
          %3149 = vmatpush1.bf16.msra.mxu0 %v2654
          %3150 = vmatprep.subr.bf16.mxu0 %v2663
          %3151 = vmatpush1.bf16.msra.mxu0 %v2662
          %3152 = vmatprep.subr.bf16.mxu0 %v2671
          %3153 = vmatpush1.bf16.msra.mxu0 %v2670
          %3154 = vmatprep.subr.bf16.mxu0 %v2679
          %3155 = vmatpush1.bf16.msra.mxu0 %v2678
          %3156 = vmatprep.subr.bf16.mxu0 %v2687
          %3157 = vmatpush1.bf16.msra.mxu0 %v2686
          %3158 = vmatprep.subr.bf16.mxu0 %v2695
          %3159 = vmatpush1.bf16.msra.mxu0 %v2694
          %3160 = vmatprep.subr.bf16.mxu0 %v2703
          %3161 = vmatpush1.bf16.msra.mxu0 %v2702
          %3162 = vmatprep.subr.bf16.mxu0 %v2711
          %3163 = vmatpush1.bf16.msra.mxu0 %v2710
          %3164 = vmatprep.subr.bf16.mxu0 %v2719
          %3165 = vmatpush1.bf16.msra.mxu0 %v2718
          %3166 = vmatprep.subr.bf16.mxu0 %v2727
          %3167 = vmatpush1.bf16.msra.mxu0 %v2726
          %3168 = vmatprep.subr.bf16.mxu0 %v2735
          %3169 = vmatpush1.bf16.msra.mxu0 %v2734
          %3170 = vmatprep.subr.bf16.mxu0 %v2743
          %3171 = vmatpush1.bf16.msra.mxu0 %v2742
          %3172 = vmatprep.subr.bf16.mxu0 %v2751
          %3173 = vmatpush1.bf16.msra.mxu0 %v2750
          %3174 = vmatprep.mubr.bf16.mxu0 %v1603
          %3175 = vmatmul.mubr.bf16.gmra.mrb[0].mxu0 %v1602
          %v3176 = vpop.f32.mrb[0].mxu0
          %v3177 = vadd.f32 0.0, %v3176
          %v3178 = vpop.f32.mrb[0].mxu0
          %v3179 = vadd.f32 0.0, %v3178
          %v3180 = vpop.f32.mrb[0].mxu0
          %v3181 = vpop.f32.mrb[0].mxu0
          %3182 = vdwg.mxu0
          %3183 = vmatprep.subr.bf16.mxu0 %v2759
          %3184 = vmatpush1.bf16.msra.mxu0 %v2758
          %3185 = vmatprep.subr.bf16.mxu0 %v2767
          %3186 = vmatpush1.bf16.msra.mxu0 %v2766
          %3187 = vmatprep.subr.bf16.mxu0 %v2775
          %3188 = vmatpush1.bf16.msra.mxu0 %v2774
          %3189 = vmatprep.subr.bf16.mxu0 %v2783
          %3190 = vmatpush1.bf16.msra.mxu0 %v2782
          %3191 = vmatprep.subr.bf16.mxu0 %v2791
          %3192 = vmatpush1.bf16.msra.mxu0 %v2790
          %3193 = vmatprep.subr.bf16.mxu0 %v2799
          %3194 = vmatpush1.bf16.msra.mxu0 %v2798
          %3195 = vmatprep.subr.bf16.mxu0 %v2807
          %3196 = vmatpush1.bf16.msra.mxu0 %v2806
          %3197 = vmatprep.subr.bf16.mxu0 %v2815
          %3198 = vmatpush1.bf16.msra.mxu0 %v2814
          %3199 = vmatprep.subr.bf16.mxu0 %v2823
          %3200 = vmatpush1.bf16.msra.mxu0 %v2822
          %3201 = vmatprep.subr.bf16.mxu0 %v2831
          %3202 = vmatpush1.bf16.msra.mxu0 %v2830
          %3203 = vmatprep.subr.bf16.mxu0 %v2839
          %3204 = vmatpush1.bf16.msra.mxu0 %v2838
          %3205 = vmatprep.subr.bf16.mxu0 %v2847
          %3206 = vmatpush1.bf16.msra.mxu0 %v2846
          %3207 = vmatprep.subr.bf16.mxu0 %v2855
          %3208 = vmatpush1.bf16.msra.mxu0 %v2854
          %3209 = vmatprep.subr.bf16.mxu0 %v2863
          %3210 = vmatpush1.bf16.msra.mxu0 %v2862
          %3211 = vmatprep.subr.bf16.mxu0 %v2871
          %3212 = vmatpush1.bf16.msra.mxu0 %v2870
          %3213 = vmatprep.subr.bf16.mxu0 %v2879
          %3214 = vmatpush1.bf16.msra.mxu0 %v2878
          %3215 = vmatprep.mubr.bf16.mxu0 %v1605
          %3216 = vmatmul.mubr.bf16.gmra.mrb[0].mxu0 %v1604
          %v3217 = vpop.f32.mrb[0].mxu0
          %v3218 = vadd.f32 %v3177, %v3217
          %v3219 = vpop.f32.mrb[0].mxu0
          %v3220 = vadd.f32 %v3179, %v3219
          %v3221 = vpop.f32.mrb[0].mxu0
          %v3222 = vpop.f32.mrb[0].mxu0
          %3223 = vdwg.mxu0
          %3224 = vmatprep.subr.bf16.mxu0 %v2633
          %3225 = vmatpush1.bf16.msra.mxu0 %v2632
          %3226 = vmatprep.subr.bf16.mxu0 %v2641
          %3227 = vmatpush1.bf16.msra.mxu0 %v2640
          %3228 = vmatprep.subr.bf16.mxu0 %v2649
          %3229 = vmatpush1.bf16.msra.mxu0 %v2648
          %3230 = vmatprep.subr.bf16.mxu0 %v2657
          %3231 = vmatpush1.bf16.msra.mxu0 %v2656
          %3232 = vmatprep.subr.bf16.mxu0 %v2665
          %3233 = vmatpush1.bf16.msra.mxu0 %v2664
          %3234 = vmatprep.subr.bf16.mxu0 %v2673
          %3235 = vmatpush1.bf16.msra.mxu0 %v2672
          %3236 = vmatprep.subr.bf16.mxu0 %v2681
          %3237 = vmatpush1.bf16.msra.mxu0 %v2680
          %3238 = vmatprep.subr.bf16.mxu0 %v2689
          %3239 = vmatpush1.bf16.msra.mxu0 %v2688
          %3240 = vmatprep.subr.bf16.mxu0 %v2697
          %3241 = vmatpush1.bf16.msra.mxu0 %v2696
          %3242 = vmatprep.subr.bf16.mxu0 %v2705
          %3243 = vmatpush1.bf16.msra.mxu0 %v2704
          %3244 = vmatprep.subr.bf16.mxu0 %v2713
          %3245 = vmatpush1.bf16.msra.mxu0 %v2712
          %3246 = vmatprep.subr.bf16.mxu0 %v2721
          %3247 = vmatpush1.bf16.msra.mxu0 %v2720
          %3248 = vmatprep.subr.bf16.mxu0 %v2729
          %3249 = vmatpush1.bf16.msra.mxu0 %v2728
          %3250 = vmatprep.subr.bf16.mxu0 %v2737
          %3251 = vmatpush1.bf16.msra.mxu0 %v2736
          %3252 = vmatprep.subr.bf16.mxu0 %v2745
          %3253 = vmatpush1.bf16.msra.mxu0 %v2744
          %3254 = vmatprep.subr.bf16.mxu0 %v2753
          %3255 = vmatpush1.bf16.msra.mxu0 %v2752
          %3256 = vmatprep.mubr.bf16.mxu0 %v1603
          %3257 = vmatmul.mubr.bf16.gmra.mrb[0].mxu0 %v1602
          %v3258 = vpop.f32.mrb[0].mxu0
          %v3259 = vadd.f32 0.0, %v3258
          %v3260 = vpop.f32.mrb[0].mxu0
          %v3261 = vadd.f32 0.0, %v3260
          %v3262 = vpop.f32.mrb[0].mxu0
          %v3263 = vpop.f32.mrb[0].mxu0
          %3264 = vdwg.mxu0
          %3265 = vmatprep.subr.bf16.mxu0 %v2761
          %3266 = vmatpush1.bf16.msra.mxu0 %v2760
          %3267 = vmatprep.subr.bf16.mxu0 %v2769
          %3268 = vmatpush1.bf16.msra.mxu0 %v2768
          %3269 = vmatprep.subr.bf16.mxu0 %v2777
          %3270 = vmatpush1.bf16.msra.mxu0 %v2776
          %3271 = vmatprep.subr.bf16.mxu0 %v2785
          %3272 = vmatpush1.bf16.msra.mxu0 %v2784
          %3273 = vmatprep.subr.bf16.mxu0 %v2793
          %3274 = vmatpush1.bf16.msra.mxu0 %v2792
          %3275 = vmatprep.subr.bf16.mxu0 %v2801
          %3276 = vmatpush1.bf16.msra.mxu0 %v2800
          %3277 = vmatprep.subr.bf16.mxu0 %v2809
          %3278 = vmatpush1.bf16.msra.mxu0 %v2808
          %3279 = vmatprep.subr.bf16.mxu0 %v2817
          %3280 = vmatpush1.bf16.msra.mxu0 %v2816
          %3281 = vmatprep.subr.bf16.mxu0 %v2825
          %3282 = vmatpush1.bf16.msra.mxu0 %v2824
          %3283 = vmatprep.subr.bf16.mxu0 %v2833
          %3284 = vmatpush1.bf16.msra.mxu0 %v2832
          %3285 = vmatprep.subr.bf16.mxu0 %v2841
          %3286 = vmatpush1.bf16.msra.mxu0 %v2840
          %3287 = vmatprep.subr.bf16.mxu0 %v2849
          %3288 = vmatpush1.bf16.msra.mxu0 %v2848
          %3289 = vmatprep.subr.bf16.mxu0 %v2857
          %3290 = vmatpush1.bf16.msra.mxu0 %v2856
          %3291 = vmatprep.subr.bf16.mxu0 %v2865
          %3292 = vmatpush1.bf16.msra.mxu0 %v2864
          %3293 = vmatprep.subr.bf16.mxu0 %v2873
          %3294 = vmatpush1.bf16.msra.mxu0 %v2872
          %3295 = vmatprep.subr.bf16.mxu0 %v2881
          %3296 = vmatpush1.bf16.msra.mxu0 %v2880
          %3297 = vmatprep.mubr.bf16.mxu0 %v1605
          %3298 = vmatmul.mubr.bf16.gmra.mrb[0].mxu0 %v1604
          %v3299 = vpop.f32.mrb[0].mxu0
          %v3300 = vadd.f32 %v3259, %v3299
          %v3301 = vpop.f32.mrb[0].mxu0
          %v3302 = vadd.f32 %v3261, %v3301
          %v3303 = vpop.f32.mrb[0].mxu0
          %v3304 = vpop.f32.mrb[0].mxu0
          %3305 = vdwg.mxu0
          %3306 = vmatprep.subr.bf16.mxu0 %v2635
          %3307 = vmatpush1.bf16.msra.mxu0 %v2634
          %3308 = vmatprep.subr.bf16.mxu0 %v2643
          %3309 = vmatpush1.bf16.msra.mxu0 %v2642
          %3310 = vmatprep.subr.bf16.mxu0 %v2651
          %3311 = vmatpush1.bf16.msra.mxu0 %v2650
          %3312 = vmatprep.subr.bf16.mxu0 %v2659
          %3313 = vmatpush1.bf16.msra.mxu0 %v2658
          %3314 = vmatprep.subr.bf16.mxu0 %v2667
          %3315 = vmatpush1.bf16.msra.mxu0 %v2666
          %3316 = vmatprep.subr.bf16.mxu0 %v2675
          %3317 = vmatpush1.bf16.msra.mxu0 %v2674
          %3318 = vmatprep.subr.bf16.mxu0 %v2683
          %3319 = vmatpush1.bf16.msra.mxu0 %v2682
          %3320 = vmatprep.subr.bf16.mxu0 %v2691
          %3321 = vmatpush1.bf16.msra.mxu0 %v2690
          %3322 = vmatprep.subr.bf16.mxu0 %v2699
          %3323 = vmatpush1.bf16.msra.mxu0 %v2698
          %3324 = vmatprep.subr.bf16.mxu0 %v2707
          %3325 = vmatpush1.bf16.msra.mxu0 %v2706
          %3326 = vmatprep.subr.bf16.mxu0 %v2715
          %3327 = vmatpush1.bf16.msra.mxu0 %v2714
          %3328 = vmatprep.subr.bf16.mxu0 %v2723
          %3329 = vmatpush1.bf16.msra.mxu0 %v2722
          %3330 = vmatprep.subr.bf16.mxu0 %v2731
          %3331 = vmatpush1.bf16.msra.mxu0 %v2730
          %3332 = vmatprep.subr.bf16.mxu0 %v2739
          %3333 = vmatpush1.bf16.msra.mxu0 %v2738
          %3334 = vmatprep.subr.bf16.mxu0 %v2747
          %3335 = vmatpush1.bf16.msra.mxu0 %v2746
          %3336 = vmatprep.subr.bf16.mxu0 %v2755
          %3337 = vmatpush1.bf16.msra.mxu0 %v2754
          %3338 = vmatprep.mubr.bf16.mxu0 %v1603
          %3339 = vmatmul.mubr.bf16.gmra.mrb[0].mxu0 %v1602
          %v3340 = vpop.f32.mrb[0].mxu0
          %v3341 = vadd.f32 0.0, %v3340
          %v3342 = vpop.f32.mrb[0].mxu0
          %v3343 = vadd.f32 0.0, %v3342
          %v3344 = vpop.f32.mrb[0].mxu0
          %v3345 = vpop.f32.mrb[0].mxu0
          %3346 = vdwg.mxu0
          %3347 = vmatprep.subr.bf16.mxu0 %v2763
          %3348 = vmatpush1.bf16.msra.mxu0 %v2762
          %3349 = vmatprep.subr.bf16.mxu0 %v2771
          %3350 = vmatpush1.bf16.msra.mxu0 %v2770
          %3351 = vmatprep.subr.bf16.mxu0 %v2779
          %3352 = vmatpush1.bf16.msra.mxu0 %v2778
          %3353 = vmatprep.subr.bf16.mxu0 %v2787
          %3354 = vmatpush1.bf16.msra.mxu0 %v2786
          %3355 = vmatprep.subr.bf16.mxu0 %v2795
          %3356 = vmatpush1.bf16.msra.mxu0 %v2794
          %3357 = vmatprep.subr.bf16.mxu0 %v2803
          %3358 = vmatpush1.bf16.msra.mxu0 %v2802
          %3359 = vmatprep.subr.bf16.mxu0 %v2811
          %3360 = vmatpush1.bf16.msra.mxu0 %v2810
          %3361 = vmatprep.subr.bf16.mxu0 %v2819
          %3362 = vmatpush1.bf16.msra.mxu0 %v2818
          %3363 = vmatprep.subr.bf16.mxu0 %v2827
          %3364 = vmatpush1.bf16.msra.mxu0 %v2826
          %3365 = vmatprep.subr.bf16.mxu0 %v2835
          %3366 = vmatpush1.bf16.msra.mxu0 %v2834
          %3367 = vmatprep.subr.bf16.mxu0 %v2843
          %3368 = vmatpush1.bf16.msra.mxu0 %v2842
          %3369 = vmatprep.subr.bf16.mxu0 %v2851
          %3370 = vmatpush1.bf16.msra.mxu0 %v2850
          %3371 = vmatprep.subr.bf16.mxu0 %v2859
          %3372 = vmatpush1.bf16.msra.mxu0 %v2858
          %3373 = vmatprep.subr.bf16.mxu0 %v2867
          %3374 = vmatpush1.bf16.msra.mxu0 %v2866
          %3375 = vmatprep.subr.bf16.mxu0 %v2875
          %3376 = vmatpush1.bf16.msra.mxu0 %v2874
          %3377 = vmatprep.subr.bf16.mxu0 %v2883
          %3378 = vmatpush1.bf16.msra.mxu0 %v2882
          %3379 = vmatprep.mubr.bf16.mxu0 %v1605
          %3380 = vmatmul.mubr.bf16.gmra.mrb[0].mxu0 %v1604
          %v3381 = vpop.f32.mrb[0].mxu0
          %v3382 = vadd.f32 %v3341, %v3381
          %v3383 = vpop.f32.mrb[0].mxu0
          %v3384 = vadd.f32 %v3343, %v3383
          %v3385 = vpop.f32.mrb[0].mxu0
          %v3386 = vpop.f32.mrb[0].mxu0
          %3387 = vdwg.mxu0
          %3388 = vmatprep.subr.bf16.mxu0 %v2637
          %3389 = vmatpush1.bf16.msra.mxu0 %v2636
          %3390 = vmatprep.subr.bf16.mxu0 %v2645
          %3391 = vmatpush1.bf16.msra.mxu0 %v2644
          %3392 = vmatprep.subr.bf16.mxu0 %v2653
          %3393 = vmatpush1.bf16.msra.mxu0 %v2652
          %3394 = vmatprep.subr.bf16.mxu0 %v2661
          %3395 = vmatpush1.bf16.msra.mxu0 %v2660
          %3396 = vmatprep.subr.bf16.mxu0 %v2669
          %3397 = vmatpush1.bf16.msra.mxu0 %v2668
          %3398 = vmatprep.subr.bf16.mxu0 %v2677
          %3399 = vmatpush1.bf16.msra.mxu0 %v2676
          %3400 = vmatprep.subr.bf16.mxu0 %v2685
          %3401 = vmatpush1.bf16.msra.mxu0 %v2684
          %3402 = vmatprep.subr.bf16.mxu0 %v2693
          %3403 = vmatpush1.bf16.msra.mxu0 %v2692
          %3404 = vmatprep.subr.bf16.mxu0 %v2701
          %3405 = vmatpush1.bf16.msra.mxu0 %v2700
          %3406 = vmatprep.subr.bf16.mxu0 %v2709
          %3407 = vmatpush1.bf16.msra.mxu0 %v2708
          %3408 = vmatprep.subr.bf16.mxu0 %v2717
          %3409 = vmatpush1.bf16.msra.mxu0 %v2716
          %3410 = vmatprep.subr.bf16.mxu0 %v2725
          %3411 = vmatpush1.bf16.msra.mxu0 %v2724
          %3412 = vmatprep.subr.bf16.mxu0 %v2733
          %3413 = vmatpush1.bf16.msra.mxu0 %v2732
          %3414 = vmatprep.subr.bf16.mxu0 %v2741
          %3415 = vmatpush1.bf16.msra.mxu0 %v2740
          %3416 = vmatprep.subr.bf16.mxu0 %v2749
          %3417 = vmatpush1.bf16.msra.mxu0 %v2748
          %3418 = vmatprep.subr.bf16.mxu0 %v2757
          %3419 = vmatpush1.bf16.msra.mxu0 %v2756
          %3420 = vmatprep.mubr.bf16.mxu0 %v1603
          %3421 = vmatmul.mubr.bf16.gmra.mrb[0].mxu0 %v1602
          %v3422 = vpop.f32.mrb[0].mxu0
          %v3423 = vadd.f32 0.0, %v3422
          %v3424 = vpop.f32.mrb[0].mxu0
          %v3425 = vadd.f32 0.0, %v3424
          %v3426 = vpop.f32.mrb[0].mxu0
          %v3427 = vpop.f32.mrb[0].mxu0
          %3428 = vdwg.mxu0
          %3429 = vmatprep.subr.bf16.mxu0 %v2765
          %3430 = vmatpush1.bf16.msra.mxu0 %v2764
          %3431 = vmatprep.subr.bf16.mxu0 %v2773
          %3432 = vmatpush1.bf16.msra.mxu0 %v2772
          %3433 = vmatprep.subr.bf16.mxu0 %v2781
          %3434 = vmatpush1.bf16.msra.mxu0 %v2780
          %3435 = vmatprep.subr.bf16.mxu0 %v2789
          %3436 = vmatpush1.bf16.msra.mxu0 %v2788
          %3437 = vmatprep.subr.bf16.mxu0 %v2797
          %3438 = vmatpush1.bf16.msra.mxu0 %v2796
          %3439 = vmatprep.subr.bf16.mxu0 %v2805
          %3440 = vmatpush1.bf16.msra.mxu0 %v2804
          %3441 = vmatprep.subr.bf16.mxu0 %v2813
          %3442 = vmatpush1.bf16.msra.mxu0 %v2812
          %3443 = vmatprep.subr.bf16.mxu0 %v2821
          %3444 = vmatpush1.bf16.msra.mxu0 %v2820
          %3445 = vmatprep.subr.bf16.mxu0 %v2829
          %3446 = vmatpush1.bf16.msra.mxu0 %v2828
          %3447 = vmatprep.subr.bf16.mxu0 %v2837
          %3448 = vmatpush1.bf16.msra.mxu0 %v2836
          %3449 = vmatprep.subr.bf16.mxu0 %v2845
          %3450 = vmatpush1.bf16.msra.mxu0 %v2844
          %3451 = vmatprep.subr.bf16.mxu0 %v2853
          %3452 = vmatpush1.bf16.msra.mxu0 %v2852
          %3453 = vmatprep.subr.bf16.mxu0 %v2861
          %3454 = vmatpush1.bf16.msra.mxu0 %v2860
          %3455 = vmatprep.subr.bf16.mxu0 %v2869
          %3456 = vmatpush1.bf16.msra.mxu0 %v2868
          %3457 = vmatprep.subr.bf16.mxu0 %v2877
          %3458 = vmatpush1.bf16.msra.mxu0 %v2876
          %3459 = vmatprep.subr.bf16.mxu0 %v2885
          %3460 = vmatpush1.bf16.msra.mxu0 %v2884
          %3461 = vmatprep.mubr.bf16.mxu0 %v1605
          %3462 = vmatmul.mubr.bf16.gmra.mrb[0].mxu0 %v1604
          %v3463 = vpop.f32.mrb[0].mxu0
          %v3464 = vadd.f32 %v3423, %v3463
          %v3465 = vpop.f32.mrb[0].mxu0
          %v3466 = vadd.f32 %v3425, %v3465
          %v3467 = vpop.f32.mrb[0].mxu0
          %v3468 = vpop.f32.mrb[0].mxu0
          %3469 = vdwg.mxu0
          %s3470 = smul.u32 %s1533, 8
          %s3471 = smul.addr %s3470, 8
          %s3472 = scalar_lea.vmem [#allocation2], %s3471
          %3473 = vst [vmem:[%s3472] sm:$0xff] %v3218
          %3474 = vst [vmem:[%s3472 + $0x8] sm:$0xff] %v3220
          %3475 = vst [vmem:[%s3472 + $0x10] sm:$0xff] %v3300
          %3476 = vst [vmem:[%s3472 + $0x18] sm:$0xff] %v3302
          %3477 = vst [vmem:[%s3472 + $0x20] sm:$0xff] %v3382
          %3478 = vst [vmem:[%s3472 + $0x28] sm:$0xff] %v3384
          %3479 = vst [vmem:[%s3472 + $0x30] sm:$0xff] %v3464
          %3480 = vst [vmem:[%s3472 + $0x38] sm:$0xff] %v3466
          %v3481 = vld [vmem:[#allocation4] sm:$0xff]
          %v3482 = vrot.slane %v3218, 4
          %v3483 = vadd.f32 %v3218, %v3482
          %v3484 = vrot.slane %v3483, 2
          %v3485 = vadd.f32 %v3483, %v3484
          %v3486 = vrot.slane %v3485, 1
          %v3487 = vadd.f32 %v3485, %v3486
          %v3488 = vrot.slane %v3220, 4
          %v3489 = vadd.f32 %v3220, %v3488
          %v3490 = vrot.slane %v3489, 2
          %v3491 = vadd.f32 %v3489, %v3490
          %v3492 = vrot.slane %v3491, 1
          %v3493 = vadd.f32 %v3491, %v3492
          %v3494 = vrot.slane %v3300, 4
          %v3495 = vadd.f32 %v3300, %v3494
          %v3496 = vrot.slane %v3495, 2
          %v3497 = vadd.f32 %v3495, %v3496
          %v3498 = vrot.slane %v3497, 1
          %v3499 = vadd.f32 %v3497, %v3498
          %v3500 = vrot.slane %v3302, 4
          %v3501 = vadd.f32 %v3302, %v3500
          %v3502 = vrot.slane %v3501, 2
          %v3503 = vadd.f32 %v3501, %v3502
          %v3504 = vrot.slane %v3503, 1
          %v3505 = vadd.f32 %v3503, %v3504
          %v3506 = vrot.slane %v3382, 4
          %v3507 = vadd.f32 %v3382, %v3506
          %v3508 = vrot.slane %v3507, 2
          %v3509 = vadd.f32 %v3507, %v3508
          %v3510 = vrot.slane %v3509, 1
          %v3511 = vadd.f32 %v3509, %v3510
          %v3512 = vrot.slane %v3384, 4
          %v3513 = vadd.f32 %v3384, %v3512
          %v3514 = vrot.slane %v3513, 2
          %v3515 = vadd.f32 %v3513, %v3514
          %v3516 = vrot.slane %v3515, 1
          %v3517 = vadd.f32 %v3515, %v3516
          %v3518 = vrot.slane %v3464, 4
          %v3519 = vadd.f32 %v3464, %v3518
          %v3520 = vrot.slane %v3519, 2
          %v3521 = vadd.f32 %v3519, %v3520
          %v3522 = vrot.slane %v3521, 1
          %v3523 = vadd.f32 %v3521, %v3522
          %v3524 = vrot.slane %v3466, 4
          %v3525 = vadd.f32 %v3466, %v3524
          %v3526 = vrot.slane %v3525, 2
          %v3527 = vadd.f32 %v3525, %v3526
          %v3528 = vrot.slane %v3527, 1
          %v3529 = vadd.f32 %v3527, %v3528
          %v3538 = vcombine.low %v3487, %v3493
          %v3539 = vcombine.low %v3499, %v3505
          %v3540 = vcombine.low %v3511, %v3517
          %v3541 = vcombine.low %v3523, %v3529
          %v3543 = vunpack.c.l.s4 1966171168
          %v3544 = vunpack.c.0.s8 %v3543
          %v3545 = vlaneseq
          %v3546 = vshrl.u32 %v3545, 7
          %v3547 = vsub.s32 %v3544, %v3546
          %v3548 = vrot.slane %v3538, %v3547
          %v3550 = vunpack.c.l.s4 1966171168
          %v3551 = vunpack.c.0.s8 %v3550
          %v3552 = vlaneseq
          %v3553 = vshrl.u32 %v3552, 7
          %v3554 = vsub.s32 %v3551, %v3553
          %v3555 = vrot.slane %v3539, %v3554
          %v3557 = vunpack.c.l.s4 1966171168
          %v3558 = vunpack.c.0.s8 %v3557
          %v3559 = vlaneseq
          %v3560 = vshrl.u32 %v3559, 7
          %v3561 = vsub.s32 %v3558, %v3560
          %v3562 = vrot.slane %v3540, %v3561
          %v3564 = vunpack.c.l.s4 1966171168
          %v3565 = vunpack.c.0.s8 %v3564
          %v3566 = vlaneseq
          %v3567 = vshrl.u32 %v3566, 7
          %v3568 = vsub.s32 %v3565, %v3567
          %v3569 = vrot.slane %v3541, %v3568
          %v3570 = vcombine.low %v3548, %v3555
          %v3571 = vcombine.low %v3562, %v3569
          %v3573 = vunpack.c.l.s4 1966171168
          %v3574 = vunpack.c.0.s8 %v3573
          %v3575 = vlaneseq
          %v3576 = vshrl.u32 %v3575, 7
          %v3577 = vsub.s32 %v3574, %v3576
          %v3578 = vrot.slane %v3570, %v3577
          %v3580 = vunpack.c.l.s4 1966171168
          %v3581 = vunpack.c.0.s8 %v3580
          %v3582 = vlaneseq
          %v3583 = vshrl.u32 %v3582, 7
          %v3584 = vsub.s32 %v3581, %v3583
          %v3585 = vrot.slane %v3571, %v3584
          %v3586 = vcombine.low %v3578, %v3585
          %v3588 = vadd.f32 %v3481, %v3586
          %3589 = vst [vmem:[#allocation4] sm:$0xff] %v3588
          %v3590 = vld [vmem:[#allocation5] sm:$0xff]
          %v3591 = vmul.f32 %v3218, %v3218
          %v3592 = vmul.f32 %v3220, %v3220
          %v3593 = vmul.f32 %v3300, %v3300
          %v3594 = vmul.f32 %v3302, %v3302
          %v3595 = vmul.f32 %v3382, %v3382
          %v3596 = vmul.f32 %v3384, %v3384
          %v3597 = vmul.f32 %v3464, %v3464
          %v3598 = vmul.f32 %v3466, %v3466
          %v3599 = vrot.slane %v3591, 4
          %v3600 = vadd.f32 %v3591, %v3599
          %v3601 = vrot.slane %v3600, 2
          %v3602 = vadd.f32 %v3600, %v3601
          %v3603 = vrot.slane %v3602, 1
          %v3604 = vadd.f32 %v3602, %v3603
          %v3605 = vrot.slane %v3592, 4
          %v3606 = vadd.f32 %v3592, %v3605
          %v3607 = vrot.slane %v3606, 2
          %v3608 = vadd.f32 %v3606, %v3607
          %v3609 = vrot.slane %v3608, 1
          %v3610 = vadd.f32 %v3608, %v3609
          %v3611 = vrot.slane %v3593, 4
          %v3612 = vadd.f32 %v3593, %v3611
          %v3613 = vrot.slane %v3612, 2
          %v3614 = vadd.f32 %v3612, %v3613
          %v3615 = vrot.slane %v3614, 1
          %v3616 = vadd.f32 %v3614, %v3615
          %v3617 = vrot.slane %v3594, 4
          %v3618 = vadd.f32 %v3594, %v3617
          %v3619 = vrot.slane %v3618, 2
          %v3620 = vadd.f32 %v3618, %v3619
          %v3621 = vrot.slane %v3620, 1
          %v3622 = vadd.f32 %v3620, %v3621
          %v3623 = vrot.slane %v3595, 4
          %v3624 = vadd.f32 %v3595, %v3623
          %v3625 = vrot.slane %v3624, 2
          %v3626 = vadd.f32 %v3624, %v3625
          %v3627 = vrot.slane %v3626, 1
          %v3628 = vadd.f32 %v3626, %v3627
          %v3629 = vrot.slane %v3596, 4
          %v3630 = vadd.f32 %v3596, %v3629
          %v3631 = vrot.slane %v3630, 2
          %v3632 = vadd.f32 %v3630, %v3631
          %v3633 = vrot.slane %v3632, 1
          %v3634 = vadd.f32 %v3632, %v3633
          %v3635 = vrot.slane %v3597, 4
          %v3636 = vadd.f32 %v3597, %v3635
          %v3637 = vrot.slane %v3636, 2
          %v3638 = vadd.f32 %v3636, %v3637
          %v3639 = vrot.slane %v3638, 1
          %v3640 = vadd.f32 %v3638, %v3639
          %v3641 = vrot.slane %v3598, 4
          %v3642 = vadd.f32 %v3598, %v3641
          %v3643 = vrot.slane %v3642, 2
          %v3644 = vadd.f32 %v3642, %v3643
          %v3645 = vrot.slane %v3644, 1
          %v3646 = vadd.f32 %v3644, %v3645
          %v3655 = vcombine.low %v3604, %v3610
          %v3656 = vcombine.low %v3616, %v3622
          %v3657 = vcombine.low %v3628, %v3634
          %v3658 = vcombine.low %v3640, %v3646
          %v3660 = vunpack.c.l.s4 1966171168
          %v3661 = vunpack.c.0.s8 %v3660
          %v3662 = vlaneseq
          %v3663 = vshrl.u32 %v3662, 7
          %v3664 = vsub.s32 %v3661, %v3663
          %v3665 = vrot.slane %v3655, %v3664
          %v3667 = vunpack.c.l.s4 1966171168
          %v3668 = vunpack.c.0.s8 %v3667
          %v3669 = vlaneseq
          %v3670 = vshrl.u32 %v3669, 7
          %v3671 = vsub.s32 %v3668, %v3670
          %v3672 = vrot.slane %v3656, %v3671
          %v3674 = vunpack.c.l.s4 1966171168
          %v3675 = vunpack.c.0.s8 %v3674
          %v3676 = vlaneseq
          %v3677 = vshrl.u32 %v3676, 7
          %v3678 = vsub.s32 %v3675, %v3677
          %v3679 = vrot.slane %v3657, %v3678
          %v3681 = vunpack.c.l.s4 1966171168
          %v3682 = vunpack.c.0.s8 %v3681
          %v3683 = vlaneseq
          %v3684 = vshrl.u32 %v3683, 7
          %v3685 = vsub.s32 %v3682, %v3684
          %v3686 = vrot.slane %v3658, %v3685
          %v3687 = vcombine.low %v3665, %v3672
          %v3688 = vcombine.low %v3679, %v3686
          %v3690 = vunpack.c.l.s4 1966171168
          %v3691 = vunpack.c.0.s8 %v3690
          %v3692 = vlaneseq
          %v3693 = vshrl.u32 %v3692, 7
          %v3694 = vsub.s32 %v3691, %v3693
          %v3695 = vrot.slane %v3687, %v3694
          %v3697 = vunpack.c.l.s4 1966171168
          %v3698 = vunpack.c.0.s8 %v3697
          %v3699 = vlaneseq
          %v3700 = vshrl.u32 %v3699, 7
          %v3701 = vsub.s32 %v3698, %v3700
          %v3702 = vrot.slane %v3688, %v3701
          %v3703 = vcombine.low %v3695, %v3702
          %v3705 = vadd.f32 %v3590, %v3703
          %3706 = vst [vmem:[#allocation5] sm:$0xff] %v3705
        $region100: #{generator_forward.1} parent=75 // pred_fallthru
          _
        %p3707 = scmp.eq.s32.totalorder %s32, 3
        %p3708 = pnand %p3707, %p497
        %p3709 = pneg %p3708
        // Predicated region
        $region101: #{generator_forward.1} parent=75 // pred_check
          _
        $region102: #{generator_forward.1} parent=75 // pred_check_branch
          %3711 = sbr.rel (%p3708) target = $region104
        $region103: #{generator_forward.1} parent=75 // pred_region
          %v3712 = vld [vmem:[#allocation4] sm:$0xff]
          %v3713 = vmul.f32 %v3712, 0.125
          %v3714 = vld [vmem:[#allocation5] sm:$0xff]
          %v3715 = vmul.f32 %v3714, 0.125
          %v3716 = vmul.f32 %v3713, %v3713
          %v3717 = vsub.f32 %v3715, %v3716
          %v3718 = vmax.f32 %v3717, 0.0
          %v3719 = vld [vmem:[%s10] sm:$0xff]
          %v3720 = vadd.f32 %v3718, 1e-05
          %v3721 = vrsqrt.pop %v3720
          %v3722 = vmul.f32 %v3719, %v3721
          %3723 = vst [vmem:[#allocation6] sm:$0xff] %v3722
          %v3724 = vld [vmem:[%s11] sm:$0xff]
          %v3725 = vmul.f32 %v3713, %v3722
          %v3726 = vsub.f32 %v3724, %v3725
          %3727 = vst [vmem:[#allocation7] sm:$0xff] %v3726
        $region104: #{generator_forward.1} parent=75 // pred_fallthru
          _
        // Predicated region
        $region105: #{generator_forward.1} parent=75 // pred_check
          %p3728 = pneg %p3707
        $region106: #{generator_forward.1} parent=75 // pred_check_branch
          %3730 = sbr.rel (%p3728) target = $region108
        $region107: #{generator_forward.1} parent=75 // pred_region
          %s3731 = sshra.s32 %s496, 3
          %s3732 = sand.u32 %s496, 7
          %s3733 = smul.u32 %s3731, 8
          %s3734 = smul.addr %s3733, 8
          %s3735 = scalar_lea.vmem [#allocation2], %s3734
          %v3736 = vld [vmem:[%s3735] sm:$0xff]
          %v3737 = vld [vmem:[%s3735 + $0x8] sm:$0xff]
          %v3738 = vld [vmem:[%s3735 + $0x10] sm:$0xff]
          %v3739 = vld [vmem:[%s3735 + $0x18] sm:$0xff]
          %v3740 = vld [vmem:[%s3735 + $0x20] sm:$0xff]
          %v3741 = vld [vmem:[%s3735 + $0x28] sm:$0xff]
          %v3742 = vld [vmem:[%s3735 + $0x30] sm:$0xff]
          %v3743 = vld [vmem:[%s3735 + $0x38] sm:$0xff]
          %v3744 = vld [vmem:[#allocation6] sm:$0xff]
          %v3746 = vlaneseq
          %v3747 = vshrl.u32 %v3746, 7
          %v3748 = vsub.s32 0, %v3747
          %v3749 = vrot.slane %v3744, %v3748
          %v3750 = vlaneseq
          %v3751 = vshrl.u32 %v3750, 7
          %v3752 = vsub.s32 1, %v3751
          %v3753 = vrot.slane %v3744, %v3752
          %v3754 = vlaneseq
          %v3755 = vshrl.u32 %v3754, 7
          %v3756 = vsub.s32 2, %v3755
          %v3757 = vrot.slane %v3744, %v3756
          %v3758 = vlaneseq
          %v3759 = vshrl.u32 %v3758, 7
          %v3760 = vsub.s32 3, %v3759
          %v3761 = vrot.slane %v3744, %v3760
          %v3762 = vlaneseq
          %v3763 = vshrl.u32 %v3762, 7
          %v3764 = vsub.s32 4, %v3763
          %v3765 = vrot.slane %v3744, %v3764
          %v3766 = vlaneseq
          %v3767 = vshrl.u32 %v3766, 7
          %v3768 = vsub.s32 5, %v3767
          %v3769 = vrot.slane %v3744, %v3768
          %v3770 = vlaneseq
          %v3771 = vshrl.u32 %v3770, 7
          %v3772 = vsub.s32 6, %v3771
          %v3773 = vrot.slane %v3744, %v3772
          %v3774 = vlaneseq
          %v3775 = vshrl.u32 %v3774, 7
          %v3776 = vsub.s32 7, %v3775
          %v3777 = vrot.slane %v3744, %v3776
          %v3786 = vmul.f32 %v3736, %v3749
          %v3787 = vmul.f32 %v3737, %v3753
          %v3788 = vmul.f32 %v3738, %v3757
          %v3789 = vmul.f32 %v3739, %v3761
          %v3790 = vmul.f32 %v3740, %v3765
          %v3791 = vmul.f32 %v3741, %v3769
          %v3792 = vmul.f32 %v3742, %v3773
          %v3793 = vmul.f32 %v3743, %v3777
          %v3794 = vld [vmem:[#allocation7] sm:$0xff]
          %v3796 = vlaneseq
          %v3797 = vshrl.u32 %v3796, 7
          %v3798 = vsub.s32 0, %v3797
          %v3799 = vrot.slane %v3794, %v3798
          %v3800 = vlaneseq
          %v3801 = vshrl.u32 %v3800, 7
          %v3802 = vsub.s32 1, %v3801
          %v3803 = vrot.slane %v3794, %v3802
          %v3804 = vlaneseq
          %v3805 = vshrl.u32 %v3804, 7
          %v3806 = vsub.s32 2, %v3805
          %v3807 = vrot.slane %v3794, %v3806
          %v3808 = vlaneseq
          %v3809 = vshrl.u32 %v3808, 7
          %v3810 = vsub.s32 3, %v3809
          %v3811 = vrot.slane %v3794, %v3810
          %v3812 = vlaneseq
          %v3813 = vshrl.u32 %v3812, 7
          %v3814 = vsub.s32 4, %v3813
          %v3815 = vrot.slane %v3794, %v3814
          %v3816 = vlaneseq
          %v3817 = vshrl.u32 %v3816, 7
          %v3818 = vsub.s32 5, %v3817
          %v3819 = vrot.slane %v3794, %v3818
          %v3820 = vlaneseq
          %v3821 = vshrl.u32 %v3820, 7
          %v3822 = vsub.s32 6, %v3821
          %v3823 = vrot.slane %v3794, %v3822
          %v3824 = vlaneseq
          %v3825 = vshrl.u32 %v3824, 7
          %v3826 = vsub.s32 7, %v3825
          %v3827 = vrot.slane %v3794, %v3826
          %v3836 = vadd.f32 %v3786, %v3799
          %v3837 = vadd.f32 %v3787, %v3803
          %v3838 = vadd.f32 %v3788, %v3807
          %v3839 = vadd.f32 %v3789, %v3811
          %v3840 = vadd.f32 %v3790, %v3815
          %v3841 = vadd.f32 %v3791, %v3819
          %v3842 = vadd.f32 %v3792, %v3823
          %v3843 = vadd.f32 %v3793, %v3827
          %v3844 = vmul.f32 %v3836, 0.2
          %v3845 = vmul.f32 %v3837, 0.2
          %v3846 = vmul.f32 %v3838, 0.2
          %v3847 = vmul.f32 %v3839, 0.2
          %v3848 = vmul.f32 %v3840, 0.2
          %v3849 = vmul.f32 %v3841, 0.2
          %v3850 = vmul.f32 %v3842, 0.2
          %v3851 = vmul.f32 %v3843, 0.2
          %v3852 = vmax.f32 %v3836, %v3844
          %v3853 = vmax.f32 %v3837, %v3845
          %v3854 = vmax.f32 %v3838, %v3846
          %v3855 = vmax.f32 %v3839, %v3847
          %v3856 = vmax.f32 %v3840, %v3848
          %v3857 = vmax.f32 %v3841, %v3849
          %v3858 = vmax.f32 %v3842, %v3850
          %v3859 = vmax.f32 %v3843, %v3851
          %v3860 = vpack.c.bf16 %v3852, %v3852
          %v3861 = vpack.c.bf16 %v3853, %v3853
          %v3862 = vpack.c.bf16 %v3854, %v3854
          %v3863 = vpack.c.bf16 %v3855, %v3855
          %v3864 = vpack.c.bf16 %v3856, %v3856
          %v3865 = vpack.c.bf16 %v3857, %v3857
          %v3866 = vpack.c.bf16 %v3858, %v3858
          %v3867 = vpack.c.bf16 %v3859, %v3859
          %v3868 = vld [vmem:[%s12] sm:$0xff]
          %v3869 = vld [vmem:[%s12 + $0x8] sm:$0xff]
          %v3870 = vld [vmem:[%s12 + $0x10] sm:$0xff]
          %v3871 = vld [vmem:[%s12 + $0x18] sm:$0xf]
          %v3872 = vld [vmem:[%s12 + $0x1c] sm:$0xff]
          %v3873 = vld [vmem:[%s12 + $0x24] sm:$0xff]
          %v3874 = vld [vmem:[%s12 + $0x2c] sm:$0xff]
          %v3875 = vld [vmem:[%s12 + $0x34] sm:$0xf]
          %v3876 = vld [vmem:[%s12 + $0x38] sm:$0xff]
          %v3877 = vld [vmem:[%s12 + $0x40] sm:$0xff]
          %v3878 = vld [vmem:[%s12 + $0x48] sm:$0xff]
          %v3879 = vld [vmem:[%s12 + $0x50] sm:$0xf]
          %v3880 = vld [vmem:[%s12 + $0x54] sm:$0xff]
          %v3881 = vld [vmem:[%s12 + $0x5c] sm:$0xff]
          %v3882 = vld [vmem:[%s12 + $0x64] sm:$0xff]
          %v3883 = vld [vmem:[%s12 + $0x6c] sm:$0xf]
          %v3884 = vld [vmem:[%s12 + $0x70] sm:$0xff]
          %v3885 = vld [vmem:[%s12 + $0x78] sm:$0xff]
          %v3886 = vld [vmem:[%s12 + $0x80] sm:$0xff]
          %v3887 = vld [vmem:[%s12 + $0x88] sm:$0xf]
          %v3888 = vld [vmem:[%s12 + $0x8c] sm:$0xff]
          %v3889 = vld [vmem:[%s12 + $0x94] sm:$0xff]
          %v3890 = vld [vmem:[%s12 + $0x9c] sm:$0xff]
          %v3891 = vld [vmem:[%s12 + $0xa4] sm:$0xf]
          %v3892 = vld [vmem:[%s12 + $0xa8] sm:$0xff]
          %v3893 = vld [vmem:[%s12 + $0xb0] sm:$0xff]
          %v3894 = vld [vmem:[%s12 + $0xb8] sm:$0xff]
          %v3895 = vld [vmem:[%s12 + $0xc0] sm:$0xf]
          %v3896 = vld [vmem:[%s12 + $0xc4] sm:$0xff]
          %v3897 = vld [vmem:[%s12 + $0xcc] sm:$0xff]
          %v3898 = vld [vmem:[%s12 + $0xd4] sm:$0xff]
          %v3899 = vld [vmem:[%s12 + $0xdc] sm:$0xf]
          %v3900 = vld [vmem:[%s12 + $0xe0] sm:$0xff]
          %v3901 = vld [vmem:[%s12 + $0xe8] sm:$0xff]
          %v3902 = vld [vmem:[%s12 + $0xf0] sm:$0xff]
          %v3903 = vld [vmem:[%s12 + $0xf8] sm:$0xf]
          %v3904 = vld [vmem:[%s12 + $0xfc] sm:$0xff]
          %v3905 = vld [vmem:[%s12 + $0x104] sm:$0xff]
          %v3906 = vld [vmem:[%s12 + $0x10c] sm:$0xff]
          %v3907 = vld [vmem:[%s12 + $0x114] sm:$0xf]
          %v3908 = vld [vmem:[%s12 + $0x118] sm:$0xff]
          %v3909 = vld [vmem:[%s12 + $0x120] sm:$0xff]
          %v3910 = vld [vmem:[%s12 + $0x128] sm:$0xff]
          %v3911 = vld [vmem:[%s12 + $0x130] sm:$0xf]
          %v3912 = vld [vmem:[%s12 + $0x134] sm:$0xff]
          %v3913 = vld [vmem:[%s12 + $0x13c] sm:$0xff]
          %v3914 = vld [vmem:[%s12 + $0x144] sm:$0xff]
          %v3915 = vld [vmem:[%s12 + $0x14c] sm:$0xf]
          %v3916 = vld [vmem:[%s12 + $0x150] sm:$0xff]
          %v3917 = vld [vmem:[%s12 + $0x158] sm:$0xff]
          %v3918 = vld [vmem:[%s12 + $0x160] sm:$0xff]
          %v3919 = vld [vmem:[%s12 + $0x168] sm:$0xf]
          %v3920 = vld [vmem:[%s12 + $0x16c] sm:$0xff]
          %v3921 = vld [vmem:[%s12 + $0x174] sm:$0xff]
          %v3922 = vld [vmem:[%s12 + $0x17c] sm:$0xff]
          %v3923 = vld [vmem:[%s12 + $0x184] sm:$0xf]
          %v3924 = vld [vmem:[%s12 + $0x188] sm:$0xff]
          %v3925 = vld [vmem:[%s12 + $0x190] sm:$0xff]
          %v3926 = vld [vmem:[%s12 + $0x198] sm:$0xff]
          %v3927 = vld [vmem:[%s12 + $0x1a0] sm:$0xf]
          %v3928 = vld [vmem:[%s12 + $0x1a4] sm:$0xff]
          %v3929 = vld [vmem:[%s12 + $0x1ac] sm:$0xff]
          %v3930 = vld [vmem:[%s12 + $0x1b4] sm:$0xff]
          %v3931 = vld [vmem:[%s12 + $0x1bc] sm:$0xf]
          %v3932 = vld [vmem:[%s12 + $0x1c0] sm:$0xff]
          %v3933 = vld [vmem:[%s12 + $0x1c8] sm:$0xff]
          %v3934 = vld [vmem:[%s12 + $0x1d0] sm:$0xff]
          %v3935 = vld [vmem:[%s12 + $0x1d8] sm:$0xf]
          %v3936 = vld [vmem:[%s12 + $0x1dc] sm:$0xff]
          %v3937 = vld [vmem:[%s12 + $0x1e4] sm:$0xff]
          %v3938 = vld [vmem:[%s12 + $0x1ec] sm:$0xff]
          %v3939 = vld [vmem:[%s12 + $0x1f4] sm:$0xf]
          %v3940 = vld [vmem:[%s12 + $0x1f8] sm:$0xff]
          %v3941 = vld [vmem:[%s12 + $0x200] sm:$0xff]
          %v3942 = vld [vmem:[%s12 + $0x208] sm:$0xff]
          %v3943 = vld [vmem:[%s12 + $0x210] sm:$0xf]
          %v3944 = vld [vmem:[%s12 + $0x214] sm:$0xff]
          %v3945 = vld [vmem:[%s12 + $0x21c] sm:$0xff]
          %v3946 = vld [vmem:[%s12 + $0x224] sm:$0xff]
          %v3947 = vld [vmem:[%s12 + $0x22c] sm:$0xf]
          %v3948 = vld [vmem:[%s12 + $0x230] sm:$0xff]
          %v3949 = vld [vmem:[%s12 + $0x238] sm:$0xff]
          %v3950 = vld [vmem:[%s12 + $0x240] sm:$0xff]
          %v3951 = vld [vmem:[%s12 + $0x248] sm:$0xf]
          %v3952 = vld [vmem:[%s12 + $0x24c] sm:$0xff]
          %v3953 = vld [vmem:[%s12 + $0x254] sm:$0xff]
          %v3954 = vld [vmem:[%s12 + $0x25c] sm:$0xff]
          %v3955 = vld [vmem:[%s12 + $0x264] sm:$0xf]
          %v3956 = vld [vmem:[%s12 + $0x268] sm:$0xff]
          %v3957 = vld [vmem:[%s12 + $0x270] sm:$0xff]
          %v3958 = vld [vmem:[%s12 + $0x278] sm:$0xff]
          %v3959 = vld [vmem:[%s12 + $0x280] sm:$0xf]
          %v3960 = vld [vmem:[%s12 + $0x284] sm:$0xff]
          %v3961 = vld [vmem:[%s12 + $0x28c] sm:$0xff]
          %v3962 = vld [vmem:[%s12 + $0x294] sm:$0xff]
          %v3963 = vld [vmem:[%s12 + $0x29c] sm:$0xf]
          %v3964 = vld [vmem:[%s12 + $0x2a0] sm:$0xff]
          %v3965 = vld [vmem:[%s12 + $0x2a8] sm:$0xff]
          %v3966 = vld [vmem:[%s12 + $0x2b0] sm:$0xff]
          %v3967 = vld [vmem:[%s12 + $0x2b8] sm:$0xf]
          %v3968 = vld [vmem:[%s12 + $0x2bc] sm:$0xff]
          %v3969 = vld [vmem:[%s12 + $0x2c4] sm:$0xff]
          %v3970 = vld [vmem:[%s12 + $0x2cc] sm:$0xff]
          %v3971 = vld [vmem:[%s12 + $0x2d4] sm:$0xf]
          %v3972 = vld [vmem:[%s12 + $0x2d8] sm:$0xff]
          %v3973 = vld [vmem:[%s12 + $0x2e0] sm:$0xff]
          %v3974 = vld [vmem:[%s12 + $0x2e8] sm:$0xff]
          %v3975 = vld [vmem:[%s12 + $0x2f0] sm:$0xf]
          %v3976 = vld [vmem:[%s12 + $0x2f4] sm:$0xff]
          %v3977 = vld [vmem:[%s12 + $0x2fc] sm:$0xff]
          %v3978 = vld [vmem:[%s12 + $0x304] sm:$0xff]
          %v3979 = vld [vmem:[%s12 + $0x30c] sm:$0xf]
          %v3980 = vld [vmem:[%s12 + $0x310] sm:$0xff]
          %v3981 = vld [vmem:[%s12 + $0x318] sm:$0xff]
          %v3982 = vld [vmem:[%s12 + $0x320] sm:$0xff]
          %v3983 = vld [vmem:[%s12 + $0x328] sm:$0xf]
          %v3984 = vld [vmem:[%s12 + $0x32c] sm:$0xff]
          %v3985 = vld [vmem:[%s12 + $0x334] sm:$0xff]
          %v3986 = vld [vmem:[%s12 + $0x33c] sm:$0xff]
          %v3987 = vld [vmem:[%s12 + $0x344] sm:$0xf]
          %v3988 = vld [vmem:[%s12 + $0x348] sm:$0xff]
          %v3989 = vld [vmem:[%s12 + $0x350] sm:$0xff]
          %v3990 = vld [vmem:[%s12 + $0x358] sm:$0xff]
          %v3991 = vld [vmem:[%s12 + $0x360] sm:$0xf]
          %v3992 = vld [vmem:[%s12 + $0x364] sm:$0xff]
          %v3993 = vld [vmem:[%s12 + $0x36c] sm:$0xff]
          %v3994 = vld [vmem:[%s12 + $0x374] sm:$0xff]
          %v3995 = vld [vmem:[%s12 + $0x37c] sm:$0xf]
          %v3996 = vld [vmem:[%s12 + $0x380] sm:$0xff]
          %v3997 = vld [vmem:[%s12 + $0x388] sm:$0xff]
          %v3998 = vld [vmem:[%s12 + $0x390] sm:$0xff]
          %v3999 = vld [vmem:[%s12 + $0x398] sm:$0xf]
          %v4000 = vld [vmem:[%s12 + $0x39c] sm:$0xff]
          %v4001 = vld [vmem:[%s12 + $0x3a4] sm:$0xff]
          %v4002 = vld [vmem:[%s12 + $0x3ac] sm:$0xff]
          %v4003 = vld [vmem:[%s12 + $0x3b4] sm:$0xf]
          %v4004 = vld [vmem:[%s12 + $0x3b8] sm:$0xff]
          %v4005 = vld [vmem:[%s12 + $0x3c0] sm:$0xff]
          %v4006 = vld [vmem:[%s12 + $0x3c8] sm:$0xff]
          %v4007 = vld [vmem:[%s12 + $0x3d0] sm:$0xf]
          %v4008 = vld [vmem:[%s12 + $0x3d4] sm:$0xff]
          %v4009 = vld [vmem:[%s12 + $0x3dc] sm:$0xff]
          %v4010 = vld [vmem:[%s12 + $0x3e4] sm:$0xff]
          %v4011 = vld [vmem:[%s12 + $0x3ec] sm:$0xf]
          %v4012 = vld [vmem:[%s12 + $0x3f0] sm:$0xff]
          %v4013 = vld [vmem:[%s12 + $0x3f8] sm:$0xff]
          %v4014 = vld [vmem:[%s12 + $0x400] sm:$0xff]
          %v4015 = vld [vmem:[%s12 + $0x408] sm:$0xf]
          %v4016 = vld [vmem:[%s12 + $0x40c] sm:$0xff]
          %v4017 = vld [vmem:[%s12 + $0x414] sm:$0xff]
          %v4018 = vld [vmem:[%s12 + $0x41c] sm:$0xff]
          %v4019 = vld [vmem:[%s12 + $0x424] sm:$0xf]
          %v4020 = vld [vmem:[%s12 + $0x428] sm:$0xff]
          %v4021 = vld [vmem:[%s12 + $0x430] sm:$0xff]
          %v4022 = vld [vmem:[%s12 + $0x438] sm:$0xff]
          %v4023 = vld [vmem:[%s12 + $0x440] sm:$0xf]
          %v4024 = vld [vmem:[%s12 + $0x444] sm:$0xff]
          %v4025 = vld [vmem:[%s12 + $0x44c] sm:$0xff]
          %v4026 = vld [vmem:[%s12 + $0x454] sm:$0xff]
          %v4027 = vld [vmem:[%s12 + $0x45c] sm:$0xf]
          %v4028 = vld [vmem:[%s12 + $0x460] sm:$0xff]
          %v4029 = vld [vmem:[%s12 + $0x468] sm:$0xff]
          %v4030 = vld [vmem:[%s12 + $0x470] sm:$0xff]
          %v4031 = vld [vmem:[%s12 + $0x478] sm:$0xf]
          %v4032 = vld [vmem:[%s12 + $0x47c] sm:$0xff]
          %v4033 = vld [vmem:[%s12 + $0x484] sm:$0xff]
          %v4034 = vld [vmem:[%s12 + $0x48c] sm:$0xff]
          %v4035 = vld [vmem:[%s12 + $0x494] sm:$0xf]
          %v4036 = vld [vmem:[%s12 + $0x498] sm:$0xff]
          %v4037 = vld [vmem:[%s12 + $0x4a0] sm:$0xff]
          %v4038 = vld [vmem:[%s12 + $0x4a8] sm:$0xff]
          %v4039 = vld [vmem:[%s12 + $0x4b0] sm:$0xf]
          %v4040 = vld [vmem:[%s12 + $0x4b4] sm:$0xff]
          %v4041 = vld [vmem:[%s12 + $0x4bc] sm:$0xff]
          %v4042 = vld [vmem:[%s12 + $0x4c4] sm:$0xff]
          %v4043 = vld [vmem:[%s12 + $0x4cc] sm:$0xf]
          %v4044 = vld [vmem:[%s12 + $0x4d0] sm:$0xff]
          %v4045 = vld [vmem:[%s12 + $0x4d8] sm:$0xff]
          %v4046 = vld [vmem:[%s12 + $0x4e0] sm:$0xff]
          %v4047 = vld [vmem:[%s12 + $0x4e8] sm:$0xf]
          %v4048 = vld [vmem:[%s12 + $0x4ec] sm:$0xff]
          %v4049 = vld [vmem:[%s12 + $0x4f4] sm:$0xff]
          %v4050 = vld [vmem:[%s12 + $0x4fc] sm:$0xff]
          %v4051 = vld [vmem:[%s12 + $0x504] sm:$0xf]
          %v4052 = vld [vmem:[%s12 + $0x508] sm:$0xff]
          %v4053 = vld [vmem:[%s12 + $0x510] sm:$0xff]
          %v4054 = vld [vmem:[%s12 + $0x518] sm:$0xff]
          %v4055 = vld [vmem:[%s12 + $0x520] sm:$0xf]
          %v4056 = vld [vmem:[%s12 + $0x524] sm:$0xff]
          %v4057 = vld [vmem:[%s12 + $0x52c] sm:$0xff]
          %v4058 = vld [vmem:[%s12 + $0x534] sm:$0xff]
          %v4059 = vld [vmem:[%s12 + $0x53c] sm:$0xf]
          %v4060 = vld [vmem:[%s12 + $0x540] sm:$0xff]
          %v4061 = vld [vmem:[%s12 + $0x548] sm:$0xff]
          %v4062 = vld [vmem:[%s12 + $0x550] sm:$0xff]
          %v4063 = vld [vmem:[%s12 + $0x558] sm:$0xf]
          %v4064 = vld [vmem:[%s12 + $0x55c] sm:$0xff]
          %v4065 = vld [vmem:[%s12 + $0x564] sm:$0xff]
          %v4066 = vld [vmem:[%s12 + $0x56c] sm:$0xff]
          %v4067 = vld [vmem:[%s12 + $0x574] sm:$0xf]
          %v4068 = vld [vmem:[%s12 + $0x578] sm:$0xff]
          %v4069 = vld [vmem:[%s12 + $0x580] sm:$0xff]
          %v4070 = vld [vmem:[%s12 + $0x588] sm:$0xff]
          %v4071 = vld [vmem:[%s12 + $0x590] sm:$0xf]
          %v4072 = vld [vmem:[%s12 + $0x594] sm:$0xff]
          %v4073 = vld [vmem:[%s12 + $0x59c] sm:$0xff]
          %v4074 = vld [vmem:[%s12 + $0x5a4] sm:$0xff]
          %v4075 = vld [vmem:[%s12 + $0x5ac] sm:$0xf]
          %v4076 = vld [vmem:[%s12 + $0x5b0] sm:$0xff]
          %v4077 = vld [vmem:[%s12 + $0x5b8] sm:$0xff]
          %v4078 = vld [vmem:[%s12 + $0x5c0] sm:$0xff]
          %v4079 = vld [vmem:[%s12 + $0x5c8] sm:$0xf]
          %v4080 = vld [vmem:[%s12 + $0x5cc] sm:$0xff]
          %v4081 = vld [vmem:[%s12 + $0x5d4] sm:$0xff]
          %v4082 = vld [vmem:[%s12 + $0x5dc] sm:$0xff]
          %v4083 = vld [vmem:[%s12 + $0x5e4] sm:$0xf]
          %v4084 = vld [vmem:[%s12 + $0x5e8] sm:$0xff]
          %v4085 = vld [vmem:[%s12 + $0x5f0] sm:$0xff]
          %v4086 = vld [vmem:[%s12 + $0x5f8] sm:$0xff]
          %v4087 = vld [vmem:[%s12 + $0x600] sm:$0xf]
          %v4088 = vld [vmem:[%s12 + $0x604] sm:$0xff]
          %v4089 = vld [vmem:[%s12 + $0x60c] sm:$0xff]
          %v4090 = vld [vmem:[%s12 + $0x614] sm:$0xff]
          %v4091 = vld [vmem:[%s12 + $0x61c] sm:$0xf]
          %v4092 = vld [vmem:[%s12 + $0x620] sm:$0xff]
          %v4093 = vld [vmem:[%s12 + $0x628] sm:$0xff]
          %v4094 = vld [vmem:[%s12 + $0x630] sm:$0xff]
          %v4095 = vld [vmem:[%s12 + $0x638] sm:$0xf]
          %v4096 = vld [vmem:[%s12 + $0x63c] sm:$0xff]
          %v4097 = vld [vmem:[%s12 + $0x644] sm:$0xff]
          %v4098 = vld [vmem:[%s12 + $0x64c] sm:$0xff]
          %v4099 = vld [vmem:[%s12 + $0x654] sm:$0xf]
          %v4100 = vld [vmem:[%s12 + $0x658] sm:$0xff]
          %v4101 = vld [vmem:[%s12 + $0x660] sm:$0xff]
          %v4102 = vld [vmem:[%s12 + $0x668] sm:$0xff]
          %v4103 = vld [vmem:[%s12 + $0x670] sm:$0xf]
          %v4104 = vld [vmem:[%s12 + $0x674] sm:$0xff]
          %v4105 = vld [vmem:[%s12 + $0x67c] sm:$0xff]
          %v4106 = vld [vmem:[%s12 + $0x684] sm:$0xff]
          %v4107 = vld [vmem:[%s12 + $0x68c] sm:$0xf]
          %v4108 = vld [vmem:[%s12 + $0x690] sm:$0xff]
          %v4109 = vld [vmem:[%s12 + $0x698] sm:$0xff]
          %v4110 = vld [vmem:[%s12 + $0x6a0] sm:$0xff]
          %v4111 = vld [vmem:[%s12 + $0x6a8] sm:$0xf]
          %v4112 = vld [vmem:[%s12 + $0x6ac] sm:$0xff]
          %v4113 = vld [vmem:[%s12 + $0x6b4] sm:$0xff]
          %v4114 = vld [vmem:[%s12 + $0x6bc] sm:$0xff]
          %v4115 = vld [vmem:[%s12 + $0x6c4] sm:$0xf]
          %v4116 = vld [vmem:[%s12 + $0x6c8] sm:$0xff]
          %v4117 = vld [vmem:[%s12 + $0x6d0] sm:$0xff]
          %v4118 = vld [vmem:[%s12 + $0x6d8] sm:$0xff]
          %v4119 = vld [vmem:[%s12 + $0x6e0] sm:$0xf]
          %v4120 = vld [vmem:[%s12 + $0x6e4] sm:$0xff]
          %v4121 = vld [vmem:[%s12 + $0x6ec] sm:$0xff]
          %v4122 = vld [vmem:[%s12 + $0x6f4] sm:$0xff]
          %v4123 = vld [vmem:[%s12 + $0x6fc] sm:$0xf]
          %v4124 = vld [vmem:[%s12 + $0x700] sm:$0xff]
          %v4125 = vld [vmem:[%s12 + $0x708] sm:$0xff]
          %v4126 = vld [vmem:[%s12 + $0x710] sm:$0xff]
          %v4127 = vld [vmem:[%s12 + $0x718] sm:$0xf]
          %v4128 = vld [vmem:[%s12 + $0x71c] sm:$0xff]
          %v4129 = vld [vmem:[%s12 + $0x724] sm:$0xff]
          %v4130 = vld [vmem:[%s12 + $0x72c] sm:$0xff]
          %v4131 = vld [vmem:[%s12 + $0x734] sm:$0xf]
          %v4132 = vld [vmem:[%s12 + $0x738] sm:$0xff]
          %v4133 = vld [vmem:[%s12 + $0x740] sm:$0xff]
          %v4134 = vld [vmem:[%s12 + $0x748] sm:$0xff]
          %v4135 = vld [vmem:[%s12 + $0x750] sm:$0xf]
          %v4136 = vld [vmem:[%s12 + $0x754] sm:$0xff]
          %v4137 = vld [vmem:[%s12 + $0x75c] sm:$0xff]
          %v4138 = vld [vmem:[%s12 + $0x764] sm:$0xff]
          %v4139 = vld [vmem:[%s12 + $0x76c] sm:$0xf]
          %v4140 = vld [vmem:[%s12 + $0x770] sm:$0xff]
          %v4141 = vld [vmem:[%s12 + $0x778] sm:$0xff]
          %v4142 = vld [vmem:[%s12 + $0x780] sm:$0xff]
          %v4143 = vld [vmem:[%s12 + $0x788] sm:$0xf]
          %v4144 = vld [vmem:[%s12 + $0x78c] sm:$0xff]
          %v4145 = vld [vmem:[%s12 + $0x794] sm:$0xff]
          %v4146 = vld [vmem:[%s12 + $0x79c] sm:$0xff]
          %v4147 = vld [vmem:[%s12 + $0x7a4] sm:$0xf]
          %v4148 = vld [vmem:[%s12 + $0x7a8] sm:$0xff]
          %v4149 = vld [vmem:[%s12 + $0x7b0] sm:$0xff]
          %v4150 = vld [vmem:[%s12 + $0x7b8] sm:$0xff]
          %v4151 = vld [vmem:[%s12 + $0x7c0] sm:$0xf]
          %v4152 = vld [vmem:[%s12 + $0x7c4] sm:$0xff]
          %v4153 = vld [vmem:[%s12 + $0x7cc] sm:$0xff]
          %v4154 = vld [vmem:[%s12 + $0x7d4] sm:$0xff]
          %v4155 = vld [vmem:[%s12 + $0x7dc] sm:$0xf]
          %v4156 = vld [vmem:[%s12 + $0x7e0] sm:$0xff]
          %v4157 = vld [vmem:[%s12 + $0x7e8] sm:$0xff]
          %v4158 = vld [vmem:[%s12 + $0x7f0] sm:$0xff]
          %v4159 = vld [vmem:[%s12 + $0x7f8] sm:$0xf]
          %v4160 = vld [vmem:[%s12 + $0x7fc] sm:$0xff]
          %v4161 = vld [vmem:[%s12 + $0x804] sm:$0xff]
          %v4162 = vld [vmem:[%s12 + $0x80c] sm:$0xff]
          %v4163 = vld [vmem:[%s12 + $0x814] sm:$0xf]
          %v4164 = vld [vmem:[%s12 + $0x818] sm:$0xff]
          %v4165 = vld [vmem:[%s12 + $0x820] sm:$0xff]
          %v4166 = vld [vmem:[%s12 + $0x828] sm:$0xff]
          %v4167 = vld [vmem:[%s12 + $0x830] sm:$0xf]
          %v4168 = vld [vmem:[%s12 + $0x834] sm:$0xff]
          %v4169 = vld [vmem:[%s12 + $0x83c] sm:$0xff]
          %v4170 = vld [vmem:[%s12 + $0x844] sm:$0xff]
          %v4171 = vld [vmem:[%s12 + $0x84c] sm:$0xf]
          %v4172 = vld [vmem:[%s12 + $0x850] sm:$0xff]
          %v4173 = vld [vmem:[%s12 + $0x858] sm:$0xff]
          %v4174 = vld [vmem:[%s12 + $0x860] sm:$0xff]
          %v4175 = vld [vmem:[%s12 + $0x868] sm:$0xf]
          %v4176 = vld [vmem:[%s12 + $0x86c] sm:$0xff]
          %v4177 = vld [vmem:[%s12 + $0x874] sm:$0xff]
          %v4178 = vld [vmem:[%s12 + $0x87c] sm:$0xff]
          %v4179 = vld [vmem:[%s12 + $0x884] sm:$0xf]
          %v4180 = vld [vmem:[%s12 + $0x888] sm:$0xff]
          %v4181 = vld [vmem:[%s12 + $0x890] sm:$0xff]
          %v4182 = vld [vmem:[%s12 + $0x898] sm:$0xff]
          %v4183 = vld [vmem:[%s12 + $0x8a0] sm:$0xf]
          %v4184 = vld [vmem:[%s12 + $0x8a4] sm:$0xff]
          %v4185 = vld [vmem:[%s12 + $0x8ac] sm:$0xff]
          %v4186 = vld [vmem:[%s12 + $0x8b4] sm:$0xff]
          %v4187 = vld [vmem:[%s12 + $0x8bc] sm:$0xf]
          %v4188 = vld [vmem:[%s12 + $0x8c0] sm:$0xff]
          %v4189 = vld [vmem:[%s12 + $0x8c8] sm:$0xff]
          %v4190 = vld [vmem:[%s12 + $0x8d0] sm:$0xff]
          %v4191 = vld [vmem:[%s12 + $0x8d8] sm:$0xf]
          %v4192 = vld [vmem:[%s12 + $0x8dc] sm:$0xff]
          %v4193 = vld [vmem:[%s12 + $0x8e4] sm:$0xff]
          %v4194 = vld [vmem:[%s12 + $0x8ec] sm:$0xff]
          %v4195 = vld [vmem:[%s12 + $0x8f4] sm:$0xf]
          %v4196 = vld [vmem:[%s12 + $0x8f8] sm:$0xff]
          %v4197 = vld [vmem:[%s12 + $0x900] sm:$0xff]
          %v4198 = vld [vmem:[%s12 + $0x908] sm:$0xff]
          %v4199 = vld [vmem:[%s12 + $0x910] sm:$0xf]
          %v4200 = vld [vmem:[%s12 + $0x914] sm:$0xff]
          %v4201 = vld [vmem:[%s12 + $0x91c] sm:$0xff]
          %v4202 = vld [vmem:[%s12 + $0x924] sm:$0xff]
          %v4203 = vld [vmem:[%s12 + $0x92c] sm:$0xf]
          %v4204 = vld [vmem:[%s12 + $0x930] sm:$0xff]
          %v4205 = vld [vmem:[%s12 + $0x938] sm:$0xff]
          %v4206 = vld [vmem:[%s12 + $0x940] sm:$0xff]
          %v4207 = vld [vmem:[%s12 + $0x948] sm:$0xf]
          %v4208 = vld [vmem:[%s12 + $0x94c] sm:$0xff]
          %v4209 = vld [vmem:[%s12 + $0x954] sm:$0xff]
          %v4210 = vld [vmem:[%s12 + $0x95c] sm:$0xff]
          %v4211 = vld [vmem:[%s12 + $0x964] sm:$0xf]
          %v4212 = vld [vmem:[%s12 + $0x968] sm:$0xff]
          %v4213 = vld [vmem:[%s12 + $0x970] sm:$0xff]
          %v4214 = vld [vmem:[%s12 + $0x978] sm:$0xff]
          %v4215 = vld [vmem:[%s12 + $0x980] sm:$0xf]
          %v4216 = vld [vmem:[%s12 + $0x984] sm:$0xff]
          %v4217 = vld [vmem:[%s12 + $0x98c] sm:$0xff]
          %v4218 = vld [vmem:[%s12 + $0x994] sm:$0xff]
          %v4219 = vld [vmem:[%s12 + $0x99c] sm:$0xf]
          %v4220 = vld [vmem:[%s12 + $0x9a0] sm:$0xff]
          %v4221 = vld [vmem:[%s12 + $0x9a8] sm:$0xff]
          %v4222 = vld [vmem:[%s12 + $0x9b0] sm:$0xff]
          %v4223 = vld [vmem:[%s12 + $0x9b8] sm:$0xf]
          %v4224 = vld [vmem:[%s12 + $0x9bc] sm:$0xff]
          %v4225 = vld [vmem:[%s12 + $0x9c4] sm:$0xff]
          %v4226 = vld [vmem:[%s12 + $0x9cc] sm:$0xff]
          %v4227 = vld [vmem:[%s12 + $0x9d4] sm:$0xf]
          %v4228 = vld [vmem:[%s12 + $0x9d8] sm:$0xff]
          %v4229 = vld [vmem:[%s12 + $0x9e0] sm:$0xff]
          %v4230 = vld [vmem:[%s12 + $0x9e8] sm:$0xff]
          %v4231 = vld [vmem:[%s12 + $0x9f0] sm:$0xf]
          %v4232 = vld [vmem:[%s12 + $0x9f4] sm:$0xff]
          %v4233 = vld [vmem:[%s12 + $0x9fc] sm:$0xff]
          %v4234 = vld [vmem:[%s12 + $0xa04] sm:$0xff]
          %v4235 = vld [vmem:[%s12 + $0xa0c] sm:$0xf]
          %v4236 = vld [vmem:[%s12 + $0xa10] sm:$0xff]
          %v4237 = vld [vmem:[%s12 + $0xa18] sm:$0xff]
          %v4238 = vld [vmem:[%s12 + $0xa20] sm:$0xff]
          %v4239 = vld [vmem:[%s12 + $0xa28] sm:$0xf]
          %v4240 = vld [vmem:[%s12 + $0xa2c] sm:$0xff]
          %v4241 = vld [vmem:[%s12 + $0xa34] sm:$0xff]
          %v4242 = vld [vmem:[%s12 + $0xa3c] sm:$0xff]
          %v4243 = vld [vmem:[%s12 + $0xa44] sm:$0xf]
          %v4244 = vld [vmem:[%s12 + $0xa48] sm:$0xff]
          %v4245 = vld [vmem:[%s12 + $0xa50] sm:$0xff]
          %v4246 = vld [vmem:[%s12 + $0xa58] sm:$0xff]
          %v4247 = vld [vmem:[%s12 + $0xa60] sm:$0xf]
          %v4248 = vld [vmem:[%s12 + $0xa64] sm:$0xff]
          %v4249 = vld [vmem:[%s12 + $0xa6c] sm:$0xff]
          %v4250 = vld [vmem:[%s12 + $0xa74] sm:$0xff]
          %v4251 = vld [vmem:[%s12 + $0xa7c] sm:$0xf]
          %v4252 = vld [vmem:[%s12 + $0xa80] sm:$0xff]
          %v4253 = vld [vmem:[%s12 + $0xa88] sm:$0xff]
          %v4254 = vld [vmem:[%s12 + $0xa90] sm:$0xff]
          %v4255 = vld [vmem:[%s12 + $0xa98] sm:$0xf]
          %v4256 = vld [vmem:[%s12 + $0xa9c] sm:$0xff]
          %v4257 = vld [vmem:[%s12 + $0xaa4] sm:$0xff]
          %v4258 = vld [vmem:[%s12 + $0xaac] sm:$0xff]
          %v4259 = vld [vmem:[%s12 + $0xab4] sm:$0xf]
          %v4260 = vld [vmem:[%s12 + $0xab8] sm:$0xff]
          %v4261 = vld [vmem:[%s12 + $0xac0] sm:$0xff]
          %v4262 = vld [vmem:[%s12 + $0xac8] sm:$0xff]
          %v4263 = vld [vmem:[%s12 + $0xad0] sm:$0xf]
          %v4264 = vld [vmem:[%s12 + $0xad4] sm:$0xff]
          %v4265 = vld [vmem:[%s12 + $0xadc] sm:$0xff]
          %v4266 = vld [vmem:[%s12 + $0xae4] sm:$0xff]
          %v4267 = vld [vmem:[%s12 + $0xaec] sm:$0xf]
          %v4268 = vld [vmem:[%s12 + $0xaf0] sm:$0xff]
          %v4269 = vld [vmem:[%s12 + $0xaf8] sm:$0xff]
          %v4270 = vld [vmem:[%s12 + $0xb00] sm:$0xff]
          %v4271 = vld [vmem:[%s12 + $0xb08] sm:$0xf]
          %v4272 = vld [vmem:[%s12 + $0xb0c] sm:$0xff]
          %v4273 = vld [vmem:[%s12 + $0xb14] sm:$0xff]
          %v4274 = vld [vmem:[%s12 + $0xb1c] sm:$0xff]
          %v4275 = vld [vmem:[%s12 + $0xb24] sm:$0xf]
          %v4276 = vld [vmem:[%s12 + $0xb28] sm:$0xff]
          %v4277 = vld [vmem:[%s12 + $0xb30] sm:$0xff]
          %v4278 = vld [vmem:[%s12 + $0xb38] sm:$0xff]
          %v4279 = vld [vmem:[%s12 + $0xb40] sm:$0xf]
          %v4280 = vld [vmem:[%s12 + $0xb44] sm:$0xff]
          %v4281 = vld [vmem:[%s12 + $0xb4c] sm:$0xff]
          %v4282 = vld [vmem:[%s12 + $0xb54] sm:$0xff]
          %v4283 = vld [vmem:[%s12 + $0xb5c] sm:$0xf]
          %v4284 = vld [vmem:[%s12 + $0xb60] sm:$0xff]
          %v4285 = vld [vmem:[%s12 + $0xb68] sm:$0xff]
          %v4286 = vld [vmem:[%s12 + $0xb70] sm:$0xff]
          %v4287 = vld [vmem:[%s12 + $0xb78] sm:$0xf]
          %v4288 = vld [vmem:[%s12 + $0xb7c] sm:$0xff]
          %v4289 = vld [vmem:[%s12 + $0xb84] sm:$0xff]
          %v4290 = vld [vmem:[%s12 + $0xb8c] sm:$0xff]
          %v4291 = vld [vmem:[%s12 + $0xb94] sm:$0xf]
          %v4292 = vld [vmem:[%s12 + $0xb98] sm:$0xff]
          %v4293 = vld [vmem:[%s12 + $0xba0] sm:$0xff]
          %v4294 = vld [vmem:[%s12 + $0xba8] sm:$0xff]
          %v4295 = vld [vmem:[%s12 + $0xbb0] sm:$0xf]
          %v4296 = vld [vmem:[%s12 + $0xbb4] sm:$0xff]
          %v4297 = vld [vmem:[%s12 + $0xbbc] sm:$0xff]
          %v4298 = vld [vmem:[%s12 + $0xbc4] sm:$0xff]
          %v4299 = vld [vmem:[%s12 + $0xbcc] sm:$0xf]
          %v4300 = vld [vmem:[%s12 + $0xbd0] sm:$0xff]
          %v4301 = vld [vmem:[%s12 + $0xbd8] sm:$0xff]
          %v4302 = vld [vmem:[%s12 + $0xbe0] sm:$0xff]
          %v4303 = vld [vmem:[%s12 + $0xbe8] sm:$0xf]
          %v4304 = vld [vmem:[%s12 + $0xbec] sm:$0xff]
          %v4305 = vld [vmem:[%s12 + $0xbf4] sm:$0xff]
          %v4306 = vld [vmem:[%s12 + $0xbfc] sm:$0xff]
          %v4307 = vld [vmem:[%s12 + $0xc04] sm:$0xf]
          %v4308 = vld [vmem:[%s12 + $0xc08] sm:$0xff]
          %v4309 = vld [vmem:[%s12 + $0xc10] sm:$0xff]
          %v4310 = vld [vmem:[%s12 + $0xc18] sm:$0xff]
          %v4311 = vld [vmem:[%s12 + $0xc20] sm:$0xf]
          %v4312 = vld [vmem:[%s12 + $0xc24] sm:$0xff]
          %v4313 = vld [vmem:[%s12 + $0xc2c] sm:$0xff]
          %v4314 = vld [vmem:[%s12 + $0xc34] sm:$0xff]
          %v4315 = vld [vmem:[%s12 + $0xc3c] sm:$0xf]
          %v4316 = vld [vmem:[%s12 + $0xc40] sm:$0xff]
          %v4317 = vld [vmem:[%s12 + $0xc48] sm:$0xff]
          %v4318 = vld [vmem:[%s12 + $0xc50] sm:$0xff]
          %v4319 = vld [vmem:[%s12 + $0xc58] sm:$0xf]
          %v4320 = vld [vmem:[%s12 + $0xc5c] sm:$0xff]
          %v4321 = vld [vmem:[%s12 + $0xc64] sm:$0xff]
          %v4322 = vld [vmem:[%s12 + $0xc6c] sm:$0xff]
          %v4323 = vld [vmem:[%s12 + $0xc74] sm:$0xf]
          %v4324 = vld [vmem:[%s12 + $0xc78] sm:$0xff]
          %v4325 = vld [vmem:[%s12 + $0xc80] sm:$0xff]
          %v4326 = vld [vmem:[%s12 + $0xc88] sm:$0xff]
          %v4327 = vld [vmem:[%s12 + $0xc90] sm:$0xf]
          %v4328 = vld [vmem:[%s12 + $0xc94] sm:$0xff]
          %v4329 = vld [vmem:[%s12 + $0xc9c] sm:$0xff]
          %v4330 = vld [vmem:[%s12 + $0xca4] sm:$0xff]
          %v4331 = vld [vmem:[%s12 + $0xcac] sm:$0xf]
          %v4332 = vld [vmem:[%s12 + $0xcb0] sm:$0xff]
          %v4333 = vld [vmem:[%s12 + $0xcb8] sm:$0xff]
          %v4334 = vld [vmem:[%s12 + $0xcc0] sm:$0xff]
          %v4335 = vld [vmem:[%s12 + $0xcc8] sm:$0xf]
          %v4336 = vld [vmem:[%s12 + $0xccc] sm:$0xff]
          %v4337 = vld [vmem:[%s12 + $0xcd4] sm:$0xff]
          %v4338 = vld [vmem:[%s12 + $0xcdc] sm:$0xff]
          %v4339 = vld [vmem:[%s12 + $0xce4] sm:$0xf]
          %v4340 = vld [vmem:[%s12 + $0xce8] sm:$0xff]
          %v4341 = vld [vmem:[%s12 + $0xcf0] sm:$0xff]
          %v4342 = vld [vmem:[%s12 + $0xcf8] sm:$0xff]
          %v4343 = vld [vmem:[%s12 + $0xd00] sm:$0xf]
          %v4344 = vld [vmem:[%s12 + $0xd04] sm:$0xff]
          %v4345 = vld [vmem:[%s12 + $0xd0c] sm:$0xff]
          %v4346 = vld [vmem:[%s12 + $0xd14] sm:$0xff]
          %v4347 = vld [vmem:[%s12 + $0xd1c] sm:$0xf]
          %v4348 = vld [vmem:[%s12 + $0xd20] sm:$0xff]
          %v4349 = vld [vmem:[%s12 + $0xd28] sm:$0xff]
          %v4350 = vld [vmem:[%s12 + $0xd30] sm:$0xff]
          %v4351 = vld [vmem:[%s12 + $0xd38] sm:$0xf]
          %v4352 = vld [vmem:[%s12 + $0xd3c] sm:$0xff]
          %v4353 = vld [vmem:[%s12 + $0xd44] sm:$0xff]
          %v4354 = vld [vmem:[%s12 + $0xd4c] sm:$0xff]
          %v4355 = vld [vmem:[%s12 + $0xd54] sm:$0xf]
          %v4356 = vld [vmem:[%s12 + $0xd58] sm:$0xff]
          %v4357 = vld [vmem:[%s12 + $0xd60] sm:$0xff]
          %v4358 = vld [vmem:[%s12 + $0xd68] sm:$0xff]
          %v4359 = vld [vmem:[%s12 + $0xd70] sm:$0xf]
          %v4360 = vld [vmem:[%s12 + $0xd74] sm:$0xff]
          %v4361 = vld [vmem:[%s12 + $0xd7c] sm:$0xff]
          %v4362 = vld [vmem:[%s12 + $0xd84] sm:$0xff]
          %v4363 = vld [vmem:[%s12 + $0xd8c] sm:$0xf]
          %v4364 = vld [vmem:[%s12 + $0xd90] sm:$0xff]
          %v4365 = vld [vmem:[%s12 + $0xd98] sm:$0xff]
          %v4366 = vld [vmem:[%s12 + $0xda0] sm:$0xff]
          %v4367 = vld [vmem:[%s12 + $0xda8] sm:$0xf]
          %v4368 = vld [vmem:[%s12 + $0xdac] sm:$0xff]
          %v4369 = vld [vmem:[%s12 + $0xdb4] sm:$0xff]
          %v4370 = vld [vmem:[%s12 + $0xdbc] sm:$0xff]
          %v4371 = vld [vmem:[%s12 + $0xdc4] sm:$0xf]
          %v4372 = vld [vmem:[%s12 + $0xdc8] sm:$0xff]
          %v4373 = vld [vmem:[%s12 + $0xdd0] sm:$0xff]
          %v4374 = vld [vmem:[%s12 + $0xdd8] sm:$0xff]
          %v4375 = vld [vmem:[%s12 + $0xde0] sm:$0xf]
          %v4376 = vld [vmem:[%s12 + $0xde4] sm:$0xff]
          %v4377 = vld [vmem:[%s12 + $0xdec] sm:$0xff]
          %v4378 = vld [vmem:[%s12 + $0xdf4] sm:$0xff]
          %v4379 = vld [vmem:[%s12 + $0xdfc] sm:$0xf]
          %v4380 = vld [vmem:[%s13] sm:$0x7f]
          %v4382 = vlaneseq
          %v4383 = vshrl.u32 %v4382, 7
          %v4384 = vsub.s32 0, %v4383
          %v4385 = vrot.slane %v4380, %v4384
          %v4386 = vlaneseq
          %v4387 = vshrl.u32 %v4386, 7
          %v4388 = vsub.s32 1, %v4387
          %v4389 = vrot.slane %v4380, %v4388
          %v4390 = vlaneseq
          %v4391 = vshrl.u32 %v4390, 7
          %v4392 = vsub.s32 2, %v4391
          %v4393 = vrot.slane %v4380, %v4392
          %v4394 = vlaneseq
          %v4395 = vshrl.u32 %v4394, 7
          %v4396 = vsub.s32 3, %v4395
          %v4397 = vrot.slane %v4380, %v4396
          %v4398 = vlaneseq
          %v4399 = vshrl.u32 %v4398, 7
          %v4400 = vsub.s32 4, %v4399
          %v4401 = vrot.slane %v4380, %v4400
          %v4402 = vlaneseq
          %v4403 = vshrl.u32 %v4402, 7
          %v4404 = vsub.s32 5, %v4403
          %v4405 = vrot.slane %v4380, %v4404
          %v4406 = vlaneseq
          %v4407 = vshrl.u32 %v4406, 7
          %v4408 = vsub.s32 6, %v4407
          %v4409 = vrot.slane %v4380, %v4408
          %v4929 = vunpack.c.l.b16 %v3868
          %v4930 = vunpack.c.h.b16 %v3868
          %v4931 = vunpack.c.l.b16 %v3869
          %v4932 = vunpack.c.h.b16 %v3869
          %v4933 = vunpack.c.l.b16 %v3870
          %v4934 = vunpack.c.h.b16 %v3870
          %v4935 = vunpack.c.l.b16 %v3871
          %v4936 = vunpack.c.l.b16 %v3872
          %v4937 = vunpack.c.h.b16 %v3872
          %v4938 = vunpack.c.l.b16 %v3873
          %v4939 = vunpack.c.h.b16 %v3873
          %v4940 = vunpack.c.l.b16 %v3874
          %v4941 = vunpack.c.h.b16 %v3874
          %v4942 = vunpack.c.l.b16 %v3875
          %v4943 = vunpack.c.l.b16 %v3876
          %v4944 = vunpack.c.h.b16 %v3876
          %v4945 = vunpack.c.l.b16 %v3877
          %v4946 = vunpack.c.h.b16 %v3877
          %v4947 = vunpack.c.l.b16 %v3878
          %v4948 = vunpack.c.h.b16 %v3878
          %v4949 = vunpack.c.l.b16 %v3879
          %v4950 = vunpack.c.l.b16 %v3880
          %v4951 = vunpack.c.h.b16 %v3880
          %v4952 = vunpack.c.l.b16 %v3881
          %v4953 = vunpack.c.h.b16 %v3881
          %v4954 = vunpack.c.l.b16 %v3882
          %v4955 = vunpack.c.h.b16 %v3882
          %v4956 = vunpack.c.l.b16 %v3883
          %v4957 = vunpack.c.l.b16 %v3884
          %v4958 = vunpack.c.h.b16 %v3884
          %v4959 = vunpack.c.l.b16 %v3885
          %v4960 = vunpack.c.h.b16 %v3885
          %v4961 = vunpack.c.l.b16 %v3886
          %v4962 = vunpack.c.h.b16 %v3886
          %v4963 = vunpack.c.l.b16 %v3887
          %v4964 = vunpack.c.l.b16 %v3888
          %v4965 = vunpack.c.h.b16 %v3888
          %v4966 = vunpack.c.l.b16 %v3889
          %v4967 = vunpack.c.h.b16 %v3889
          %v4968 = vunpack.c.l.b16 %v3890
          %v4969 = vunpack.c.h.b16 %v3890
          %v4970 = vunpack.c.l.b16 %v3891
          %v4971 = vunpack.c.l.b16 %v3892
          %v4972 = vunpack.c.h.b16 %v3892
          %v4973 = vunpack.c.l.b16 %v3893
          %v4974 = vunpack.c.h.b16 %v3893
          %v4975 = vunpack.c.l.b16 %v3894
          %v4976 = vunpack.c.h.b16 %v3894
          %v4977 = vunpack.c.l.b16 %v3895
          %v4978 = vunpack.c.l.b16 %v3896
          %v4979 = vunpack.c.h.b16 %v3896
          %v4980 = vunpack.c.l.b16 %v3897
          %v4981 = vunpack.c.h.b16 %v3897
          %v4982 = vunpack.c.l.b16 %v3898
          %v4983 = vunpack.c.h.b16 %v3898
          %v4984 = vunpack.c.l.b16 %v3899
          %v4985 = vunpack.c.l.b16 %v3900
          %v4986 = vunpack.c.h.b16 %v3900
          %v4987 = vunpack.c.l.b16 %v3901
          %v4988 = vunpack.c.h.b16 %v3901
          %v4989 = vunpack.c.l.b16 %v3902
          %v4990 = vunpack.c.h.b16 %v3902
          %v4991 = vunpack.c.l.b16 %v3903
          %v4992 = vunpack.c.l.b16 %v3904
          %v4993 = vunpack.c.h.b16 %v3904
          %v4994 = vunpack.c.l.b16 %v3905
          %v4995 = vunpack.c.h.b16 %v3905
          %v4996 = vunpack.c.l.b16 %v3906
          %v4997 = vunpack.c.h.b16 %v3906
          %v4998 = vunpack.c.l.b16 %v3907
          %v4999 = vunpack.c.l.b16 %v3908
          %v5000 = vunpack.c.h.b16 %v3908
          %v5001 = vunpack.c.l.b16 %v3909
          %v5002 = vunpack.c.h.b16 %v3909
          %v5003 = vunpack.c.l.b16 %v3910
          %v5004 = vunpack.c.h.b16 %v3910
          %v5005 = vunpack.c.l.b16 %v3911
          %v5006 = vunpack.c.l.b16 %v3912
          %v5007 = vunpack.c.h.b16 %v3912
          %v5008 = vunpack.c.l.b16 %v3913
          %v5009 = vunpack.c.h.b16 %v3913
          %v5010 = vunpack.c.l.b16 %v3914
          %v5011 = vunpack.c.h.b16 %v3914
          %v5012 = vunpack.c.l.b16 %v3915
          %v5013 = vunpack.c.l.b16 %v3916
          %v5014 = vunpack.c.h.b16 %v3916
          %v5015 = vunpack.c.l.b16 %v3917
          %v5016 = vunpack.c.h.b16 %v3917
          %v5017 = vunpack.c.l.b16 %v3918
          %v5018 = vunpack.c.h.b16 %v3918
          %v5019 = vunpack.c.l.b16 %v3919
          %v5020 = vunpack.c.l.b16 %v3920
          %v5021 = vunpack.c.h.b16 %v3920
          %v5022 = vunpack.c.l.b16 %v3921
          %v5023 = vunpack.c.h.b16 %v3921
          %v5024 = vunpack.c.l.b16 %v3922
          %v5025 = vunpack.c.h.b16 %v3922
          %v5026 = vunpack.c.l.b16 %v3923
          %v5027 = vunpack.c.l.b16 %v3924
          %v5028 = vunpack.c.h.b16 %v3924
          %v5029 = vunpack.c.l.b16 %v3925
          %v5030 = vunpack.c.h.b16 %v3925
          %v5031 = vunpack.c.l.b16 %v3926
          %v5032 = vunpack.c.h.b16 %v3926
          %v5033 = vunpack.c.l.b16 %v3927
          %v5034 = vunpack.c.l.b16 %v3928
          %v5035 = vunpack.c.h.b16 %v3928
          %v5036 = vunpack.c.l.b16 %v3929
          %v5037 = vunpack.c.h.b16 %v3929
          %v5038 = vunpack.c.l.b16 %v3930
          %v5039 = vunpack.c.h.b16 %v3930
          %v5040 = vunpack.c.l.b16 %v3931
          %v5041 = vunpack.c.l.b16 %v3932
          %v5042 = vunpack.c.h.b16 %v3932
          %v5043 = vunpack.c.l.b16 %v3933
          %v5044 = vunpack.c.h.b16 %v3933
          %v5045 = vunpack.c.l.b16 %v3934
          %v5046 = vunpack.c.h.b16 %v3934
          %v5047 = vunpack.c.l.b16 %v3935
          %v5048 = vunpack.c.l.b16 %v3936
          %v5049 = vunpack.c.h.b16 %v3936
          %v5050 = vunpack.c.l.b16 %v3937
          %v5051 = vunpack.c.h.b16 %v3937
          %v5052 = vunpack.c.l.b16 %v3938
          %v5053 = vunpack.c.h.b16 %v3938
          %v5054 = vunpack.c.l.b16 %v3939
          %v5055 = vunpack.c.l.b16 %v3940
          %v5056 = vunpack.c.h.b16 %v3940
          %v5057 = vunpack.c.l.b16 %v3941
          %v5058 = vunpack.c.h.b16 %v3941
          %v5059 = vunpack.c.l.b16 %v3942
          %v5060 = vunpack.c.h.b16 %v3942
          %v5061 = vunpack.c.l.b16 %v3943
          %v5062 = vunpack.c.l.b16 %v3944
          %v5063 = vunpack.c.h.b16 %v3944
          %v5064 = vunpack.c.l.b16 %v3945
          %v5065 = vunpack.c.h.b16 %v3945
          %v5066 = vunpack.c.l.b16 %v3946
          %v5067 = vunpack.c.h.b16 %v3946
          %v5068 = vunpack.c.l.b16 %v3947
          %v5069 = vunpack.c.l.b16 %v3948
          %v5070 = vunpack.c.h.b16 %v3948
          %v5071 = vunpack.c.l.b16 %v3949
          %v5072 = vunpack.c.h.b16 %v3949
          %v5073 = vunpack.c.l.b16 %v3950
          %v5074 = vunpack.c.h.b16 %v3950
          %v5075 = vunpack.c.l.b16 %v3951
          %v5076 = vunpack.c.l.b16 %v3952
          %v5077 = vunpack.c.h.b16 %v3952
          %v5078 = vunpack.c.l.b16 %v3953
          %v5079 = vunpack.c.h.b16 %v3953
          %v5080 = vunpack.c.l.b16 %v3954
          %v5081 = vunpack.c.h.b16 %v3954
          %v5082 = vunpack.c.l.b16 %v3955
          %v5083 = vunpack.c.l.b16 %v3956
          %v5084 = vunpack.c.h.b16 %v3956
          %v5085 = vunpack.c.l.b16 %v3957
          %v5086 = vunpack.c.h.b16 %v3957
          %v5087 = vunpack.c.l.b16 %v3958
          %v5088 = vunpack.c.h.b16 %v3958
          %v5089 = vunpack.c.l.b16 %v3959
          %v5090 = vunpack.c.l.b16 %v3960
          %v5091 = vunpack.c.h.b16 %v3960
          %v5092 = vunpack.c.l.b16 %v3961
          %v5093 = vunpack.c.h.b16 %v3961
          %v5094 = vunpack.c.l.b16 %v3962
          %v5095 = vunpack.c.h.b16 %v3962
          %v5096 = vunpack.c.l.b16 %v3963
          %v5097 = vunpack.c.l.b16 %v3964
          %v5098 = vunpack.c.h.b16 %v3964
          %v5099 = vunpack.c.l.b16 %v3965
          %v5100 = vunpack.c.h.b16 %v3965
          %v5101 = vunpack.c.l.b16 %v3966
          %v5102 = vunpack.c.h.b16 %v3966
          %v5103 = vunpack.c.l.b16 %v3967
          %v5104 = vunpack.c.l.b16 %v3968
          %v5105 = vunpack.c.h.b16 %v3968
          %v5106 = vunpack.c.l.b16 %v3969
          %v5107 = vunpack.c.h.b16 %v3969
          %v5108 = vunpack.c.l.b16 %v3970
          %v5109 = vunpack.c.h.b16 %v3970
          %v5110 = vunpack.c.l.b16 %v3971
          %v5111 = vunpack.c.l.b16 %v3972
          %v5112 = vunpack.c.h.b16 %v3972
          %v5113 = vunpack.c.l.b16 %v3973
          %v5114 = vunpack.c.h.b16 %v3973
          %v5115 = vunpack.c.l.b16 %v3974
          %v5116 = vunpack.c.h.b16 %v3974
          %v5117 = vunpack.c.l.b16 %v3975
          %v5118 = vunpack.c.l.b16 %v3976
          %v5119 = vunpack.c.h.b16 %v3976
          %v5120 = vunpack.c.l.b16 %v3977
          %v5121 = vunpack.c.h.b16 %v3977
          %v5122 = vunpack.c.l.b16 %v3978
          %v5123 = vunpack.c.h.b16 %v3978
          %v5124 = vunpack.c.l.b16 %v3979
          %v5125 = vunpack.c.l.b16 %v3980
          %v5126 = vunpack.c.h.b16 %v3980
          %v5127 = vunpack.c.l.b16 %v3981
          %v5128 = vunpack.c.h.b16 %v3981
          %v5129 = vunpack.c.l.b16 %v3982
          %v5130 = vunpack.c.h.b16 %v3982
          %v5131 = vunpack.c.l.b16 %v3983
          %v5132 = vunpack.c.l.b16 %v3984
          %v5133 = vunpack.c.h.b16 %v3984
          %v5134 = vunpack.c.l.b16 %v3985
          %v5135 = vunpack.c.h.b16 %v3985
          %v5136 = vunpack.c.l.b16 %v3986
          %v5137 = vunpack.c.h.b16 %v3986
          %v5138 = vunpack.c.l.b16 %v3987
          %v5139 = vunpack.c.l.b16 %v3988
          %v5140 = vunpack.c.h.b16 %v3988
          %v5141 = vunpack.c.l.b16 %v3989
          %v5142 = vunpack.c.h.b16 %v3989
          %v5143 = vunpack.c.l.b16 %v3990
          %v5144 = vunpack.c.h.b16 %v3990
          %v5145 = vunpack.c.l.b16 %v3991
          %v5146 = vunpack.c.l.b16 %v3992
          %v5147 = vunpack.c.h.b16 %v3992
          %v5148 = vunpack.c.l.b16 %v3993
          %v5149 = vunpack.c.h.b16 %v3993
          %v5150 = vunpack.c.l.b16 %v3994
          %v5151 = vunpack.c.h.b16 %v3994
          %v5152 = vunpack.c.l.b16 %v3995
          %v5153 = vunpack.c.l.b16 %v3996
          %v5154 = vunpack.c.h.b16 %v3996
          %v5155 = vunpack.c.l.b16 %v3997
          %v5156 = vunpack.c.h.b16 %v3997
          %v5157 = vunpack.c.l.b16 %v3998
          %v5158 = vunpack.c.h.b16 %v3998
          %v5159 = vunpack.c.l.b16 %v3999
          %v5160 = vunpack.c.l.b16 %v4000
          %v5161 = vunpack.c.h.b16 %v4000
          %v5162 = vunpack.c.l.b16 %v4001
          %v5163 = vunpack.c.h.b16 %v4001
          %v5164 = vunpack.c.l.b16 %v4002
          %v5165 = vunpack.c.h.b16 %v4002
          %v5166 = vunpack.c.l.b16 %v4003
          %v5167 = vunpack.c.l.b16 %v4004
          %v5168 = vunpack.c.h.b16 %v4004
          %v5169 = vunpack.c.l.b16 %v4005
          %v5170 = vunpack.c.h.b16 %v4005
          %v5171 = vunpack.c.l.b16 %v4006
          %v5172 = vunpack.c.h.b16 %v4006
          %v5173 = vunpack.c.l.b16 %v4007
          %v5174 = vunpack.c.l.b16 %v4008
          %v5175 = vunpack.c.h.b16 %v4008
          %v5176 = vunpack.c.l.b16 %v4009
          %v5177 = vunpack.c.h.b16 %v4009
          %v5178 = vunpack.c.l.b16 %v4010
          %v5179 = vunpack.c.h.b16 %v4010
          %v5180 = vunpack.c.l.b16 %v4011
          %v5181 = vunpack.c.l.b16 %v4012
          %v5182 = vunpack.c.h.b16 %v4012
          %v5183 = vunpack.c.l.b16 %v4013
          %v5184 = vunpack.c.h.b16 %v4013
          %v5185 = vunpack.c.l.b16 %v4014
          %v5186 = vunpack.c.h.b16 %v4014
          %v5187 = vunpack.c.l.b16 %v4015
          %v5188 = vunpack.c.l.b16 %v4016
          %v5189 = vunpack.c.h.b16 %v4016
          %v5190 = vunpack.c.l.b16 %v4017
          %v5191 = vunpack.c.h.b16 %v4017
          %v5192 = vunpack.c.l.b16 %v4018
          %v5193 = vunpack.c.h.b16 %v4018
          %v5194 = vunpack.c.l.b16 %v4019
          %v5195 = vunpack.c.l.b16 %v4020
          %v5196 = vunpack.c.h.b16 %v4020
          %v5197 = vunpack.c.l.b16 %v4021
          %v5198 = vunpack.c.h.b16 %v4021
          %v5199 = vunpack.c.l.b16 %v4022
          %v5200 = vunpack.c.h.b16 %v4022
          %v5201 = vunpack.c.l.b16 %v4023
          %v5202 = vunpack.c.l.b16 %v4024
          %v5203 = vunpack.c.h.b16 %v4024
          %v5204 = vunpack.c.l.b16 %v4025
          %v5205 = vunpack.c.h.b16 %v4025
          %v5206 = vunpack.c.l.b16 %v4026
          %v5207 = vunpack.c.h.b16 %v4026
          %v5208 = vunpack.c.l.b16 %v4027
          %v5209 = vunpack.c.l.b16 %v4028
          %v5210 = vunpack.c.h.b16 %v4028
          %v5211 = vunpack.c.l.b16 %v4029
          %v5212 = vunpack.c.h.b16 %v4029
          %v5213 = vunpack.c.l.b16 %v4030
          %v5214 = vunpack.c.h.b16 %v4030
          %v5215 = vunpack.c.l.b16 %v4031
          %v5216 = vunpack.c.l.b16 %v4032
          %v5217 = vunpack.c.h.b16 %v4032
          %v5218 = vunpack.c.l.b16 %v4033
          %v5219 = vunpack.c.h.b16 %v4033
          %v5220 = vunpack.c.l.b16 %v4034
          %v5221 = vunpack.c.h.b16 %v4034
          %v5222 = vunpack.c.l.b16 %v4035
          %v5223 = vunpack.c.l.b16 %v4036
          %v5224 = vunpack.c.h.b16 %v4036
          %v5225 = vunpack.c.l.b16 %v4037
          %v5226 = vunpack.c.h.b16 %v4037
          %v5227 = vunpack.c.l.b16 %v4038
          %v5228 = vunpack.c.h.b16 %v4038
          %v5229 = vunpack.c.l.b16 %v4039
          %v5230 = vunpack.c.l.b16 %v4040
          %v5231 = vunpack.c.h.b16 %v4040
          %v5232 = vunpack.c.l.b16 %v4041
          %v5233 = vunpack.c.h.b16 %v4041
          %v5234 = vunpack.c.l.b16 %v4042
          %v5235 = vunpack.c.h.b16 %v4042
          %v5236 = vunpack.c.l.b16 %v4043
          %v5237 = vunpack.c.l.b16 %v4044
          %v5238 = vunpack.c.h.b16 %v4044
          %v5239 = vunpack.c.l.b16 %v4045
          %v5240 = vunpack.c.h.b16 %v4045
          %v5241 = vunpack.c.l.b16 %v4046
          %v5242 = vunpack.c.h.b16 %v4046
          %v5243 = vunpack.c.l.b16 %v4047
          %v5244 = vunpack.c.l.b16 %v4048
          %v5245 = vunpack.c.h.b16 %v4048
          %v5246 = vunpack.c.l.b16 %v4049
          %v5247 = vunpack.c.h.b16 %v4049
          %v5248 = vunpack.c.l.b16 %v4050
          %v5249 = vunpack.c.h.b16 %v4050
          %v5250 = vunpack.c.l.b16 %v4051
          %v5251 = vunpack.c.l.b16 %v4052
          %v5252 = vunpack.c.h.b16 %v4052
          %v5253 = vunpack.c.l.b16 %v4053
          %v5254 = vunpack.c.h.b16 %v4053
          %v5255 = vunpack.c.l.b16 %v4054
          %v5256 = vunpack.c.h.b16 %v4054
          %v5257 = vunpack.c.l.b16 %v4055
          %v5258 = vunpack.c.l.b16 %v4056
          %v5259 = vunpack.c.h.b16 %v4056
          %v5260 = vunpack.c.l.b16 %v4057
          %v5261 = vunpack.c.h.b16 %v4057
          %v5262 = vunpack.c.l.b16 %v4058
          %v5263 = vunpack.c.h.b16 %v4058
          %v5264 = vunpack.c.l.b16 %v4059
          %v5265 = vunpack.c.l.b16 %v4060
          %v5266 = vunpack.c.h.b16 %v4060
          %v5267 = vunpack.c.l.b16 %v4061
          %v5268 = vunpack.c.h.b16 %v4061
          %v5269 = vunpack.c.l.b16 %v4062
          %v5270 = vunpack.c.h.b16 %v4062
          %v5271 = vunpack.c.l.b16 %v4063
          %v5272 = vunpack.c.l.b16 %v4064
          %v5273 = vunpack.c.h.b16 %v4064
          %v5274 = vunpack.c.l.b16 %v4065
          %v5275 = vunpack.c.h.b16 %v4065
          %v5276 = vunpack.c.l.b16 %v4066
          %v5277 = vunpack.c.h.b16 %v4066
          %v5278 = vunpack.c.l.b16 %v4067
          %v5279 = vunpack.c.l.b16 %v4068
          %v5280 = vunpack.c.h.b16 %v4068
          %v5281 = vunpack.c.l.b16 %v4069
          %v5282 = vunpack.c.h.b16 %v4069
          %v5283 = vunpack.c.l.b16 %v4070
          %v5284 = vunpack.c.h.b16 %v4070
          %v5285 = vunpack.c.l.b16 %v4071
          %v5286 = vunpack.c.l.b16 %v4072
          %v5287 = vunpack.c.h.b16 %v4072
          %v5288 = vunpack.c.l.b16 %v4073
          %v5289 = vunpack.c.h.b16 %v4073
          %v5290 = vunpack.c.l.b16 %v4074
          %v5291 = vunpack.c.h.b16 %v4074
          %v5292 = vunpack.c.l.b16 %v4075
          %v5293 = vunpack.c.l.b16 %v4076
          %v5294 = vunpack.c.h.b16 %v4076
          %v5295 = vunpack.c.l.b16 %v4077
          %v5296 = vunpack.c.h.b16 %v4077
          %v5297 = vunpack.c.l.b16 %v4078
          %v5298 = vunpack.c.h.b16 %v4078
          %v5299 = vunpack.c.l.b16 %v4079
          %v5300 = vunpack.c.l.b16 %v4080
          %v5301 = vunpack.c.h.b16 %v4080
          %v5302 = vunpack.c.l.b16 %v4081
          %v5303 = vunpack.c.h.b16 %v4081
          %v5304 = vunpack.c.l.b16 %v4082
          %v5305 = vunpack.c.h.b16 %v4082
          %v5306 = vunpack.c.l.b16 %v4083
          %v5307 = vunpack.c.l.b16 %v4084
          %v5308 = vunpack.c.h.b16 %v4084
          %v5309 = vunpack.c.l.b16 %v4085
          %v5310 = vunpack.c.h.b16 %v4085
          %v5311 = vunpack.c.l.b16 %v4086
          %v5312 = vunpack.c.h.b16 %v4086
          %v5313 = vunpack.c.l.b16 %v4087
          %v5314 = vunpack.c.l.b16 %v4088
          %v5315 = vunpack.c.h.b16 %v4088
          %v5316 = vunpack.c.l.b16 %v4089
          %v5317 = vunpack.c.h.b16 %v4089
          %v5318 = vunpack.c.l.b16 %v4090
          %v5319 = vunpack.c.h.b16 %v4090
          %v5320 = vunpack.c.l.b16 %v4091
          %v5321 = vunpack.c.l.b16 %v4092
          %v5322 = vunpack.c.h.b16 %v4092
          %v5323 = vunpack.c.l.b16 %v4093
          %v5324 = vunpack.c.h.b16 %v4093
          %v5325 = vunpack.c.l.b16 %v4094
          %v5326 = vunpack.c.h.b16 %v4094
          %v5327 = vunpack.c.l.b16 %v4095
          %v5328 = vunpack.c.l.b16 %v4096
          %v5329 = vunpack.c.h.b16 %v4096
          %v5330 = vunpack.c.l.b16 %v4097
          %v5331 = vunpack.c.h.b16 %v4097
          %v5332 = vunpack.c.l.b16 %v4098
          %v5333 = vunpack.c.h.b16 %v4098
          %v5334 = vunpack.c.l.b16 %v4099
          %v5335 = vunpack.c.l.b16 %v4100
          %v5336 = vunpack.c.h.b16 %v4100
          %v5337 = vunpack.c.l.b16 %v4101
          %v5338 = vunpack.c.h.b16 %v4101
          %v5339 = vunpack.c.l.b16 %v4102
          %v5340 = vunpack.c.h.b16 %v4102
          %v5341 = vunpack.c.l.b16 %v4103
          %v5342 = vunpack.c.l.b16 %v4104
          %v5343 = vunpack.c.h.b16 %v4104
          %v5344 = vunpack.c.l.b16 %v4105
          %v5345 = vunpack.c.h.b16 %v4105
          %v5346 = vunpack.c.l.b16 %v4106
          %v5347 = vunpack.c.h.b16 %v4106
          %v5348 = vunpack.c.l.b16 %v4107
          %v5349 = vunpack.c.l.b16 %v4108
          %v5350 = vunpack.c.h.b16 %v4108
          %v5351 = vunpack.c.l.b16 %v4109
          %v5352 = vunpack.c.h.b16 %v4109
          %v5353 = vunpack.c.l.b16 %v4110
          %v5354 = vunpack.c.h.b16 %v4110
          %v5355 = vunpack.c.l.b16 %v4111
          %v5356 = vunpack.c.l.b16 %v4112
          %v5357 = vunpack.c.h.b16 %v4112
          %v5358 = vunpack.c.l.b16 %v4113
          %v5359 = vunpack.c.h.b16 %v4113
          %v5360 = vunpack.c.l.b16 %v4114
          %v5361 = vunpack.c.h.b16 %v4114
          %v5362 = vunpack.c.l.b16 %v4115
          %v5363 = vunpack.c.l.b16 %v4116
          %v5364 = vunpack.c.h.b16 %v4116
          %v5365 = vunpack.c.l.b16 %v4117
          %v5366 = vunpack.c.h.b16 %v4117
          %v5367 = vunpack.c.l.b16 %v4118
          %v5368 = vunpack.c.h.b16 %v4118
          %v5369 = vunpack.c.l.b16 %v4119
          %v5370 = vunpack.c.l.b16 %v4120
          %v5371 = vunpack.c.h.b16 %v4120
          %v5372 = vunpack.c.l.b16 %v4121
          %v5373 = vunpack.c.h.b16 %v4121
          %v5374 = vunpack.c.l.b16 %v4122
          %v5375 = vunpack.c.h.b16 %v4122
          %v5376 = vunpack.c.l.b16 %v4123
          %v5377 = vunpack.c.l.b16 %v4124
          %v5378 = vunpack.c.h.b16 %v4124
          %v5379 = vunpack.c.l.b16 %v4125
          %v5380 = vunpack.c.h.b16 %v4125
          %v5381 = vunpack.c.l.b16 %v4126
          %v5382 = vunpack.c.h.b16 %v4126
          %v5383 = vunpack.c.l.b16 %v4127
          %v5384 = vunpack.c.l.b16 %v4128
          %v5385 = vunpack.c.h.b16 %v4128
          %v5386 = vunpack.c.l.b16 %v4129
          %v5387 = vunpack.c.h.b16 %v4129
          %v5388 = vunpack.c.l.b16 %v4130
          %v5389 = vunpack.c.h.b16 %v4130
          %v5390 = vunpack.c.l.b16 %v4131
          %v5391 = vunpack.c.l.b16 %v4132
          %v5392 = vunpack.c.h.b16 %v4132
          %v5393 = vunpack.c.l.b16 %v4133
          %v5394 = vunpack.c.h.b16 %v4133
          %v5395 = vunpack.c.l.b16 %v4134
          %v5396 = vunpack.c.h.b16 %v4134
          %v5397 = vunpack.c.l.b16 %v4135
          %v5398 = vunpack.c.l.b16 %v4136
          %v5399 = vunpack.c.h.b16 %v4136
          %v5400 = vunpack.c.l.b16 %v4137
          %v5401 = vunpack.c.h.b16 %v4137
          %v5402 = vunpack.c.l.b16 %v4138
          %v5403 = vunpack.c.h.b16 %v4138
          %v5404 = vunpack.c.l.b16 %v4139
          %v5405 = vunpack.c.l.b16 %v4140
          %v5406 = vunpack.c.h.b16 %v4140
          %v5407 = vunpack.c.l.b16 %v4141
          %v5408 = vunpack.c.h.b16 %v4141
          %v5409 = vunpack.c.l.b16 %v4142
          %v5410 = vunpack.c.h.b16 %v4142
          %v5411 = vunpack.c.l.b16 %v4143
          %v5412 = vunpack.c.l.b16 %v4144
          %v5413 = vunpack.c.h.b16 %v4144
          %v5414 = vunpack.c.l.b16 %v4145
          %v5415 = vunpack.c.h.b16 %v4145
          %v5416 = vunpack.c.l.b16 %v4146
          %v5417 = vunpack.c.h.b16 %v4146
          %v5418 = vunpack.c.l.b16 %v4147
          %v5419 = vunpack.c.l.b16 %v4148
          %v5420 = vunpack.c.h.b16 %v4148
          %v5421 = vunpack.c.l.b16 %v4149
          %v5422 = vunpack.c.h.b16 %v4149
          %v5423 = vunpack.c.l.b16 %v4150
          %v5424 = vunpack.c.h.b16 %v4150
          %v5425 = vunpack.c.l.b16 %v4151
          %v5426 = vunpack.c.l.b16 %v4152
          %v5427 = vunpack.c.h.b16 %v4152
          %v5428 = vunpack.c.l.b16 %v4153
          %v5429 = vunpack.c.h.b16 %v4153
          %v5430 = vunpack.c.l.b16 %v4154
          %v5431 = vunpack.c.h.b16 %v4154
          %v5432 = vunpack.c.l.b16 %v4155
          %v5433 = vunpack.c.l.b16 %v4156
          %v5434 = vunpack.c.h.b16 %v4156
          %v5435 = vunpack.c.l.b16 %v4157
          %v5436 = vunpack.c.h.b16 %v4157
          %v5437 = vunpack.c.l.b16 %v4158
          %v5438 = vunpack.c.h.b16 %v4158
          %v5439 = vunpack.c.l.b16 %v4159
          %v5440 = vunpack.c.l.b16 %v4160
          %v5441 = vunpack.c.h.b16 %v4160
          %v5442 = vunpack.c.l.b16 %v4161
          %v5443 = vunpack.c.h.b16 %v4161
          %v5444 = vunpack.c.l.b16 %v4162
          %v5445 = vunpack.c.h.b16 %v4162
          %v5446 = vunpack.c.l.b16 %v4163
          %v5447 = vunpack.c.l.b16 %v4164
          %v5448 = vunpack.c.h.b16 %v4164
          %v5449 = vunpack.c.l.b16 %v4165
          %v5450 = vunpack.c.h.b16 %v4165
          %v5451 = vunpack.c.l.b16 %v4166
          %v5452 = vunpack.c.h.b16 %v4166
          %v5453 = vunpack.c.l.b16 %v4167
          %v5454 = vunpack.c.l.b16 %v4168
          %v5455 = vunpack.c.h.b16 %v4168
          %v5456 = vunpack.c.l.b16 %v4169
          %v5457 = vunpack.c.h.b16 %v4169
          %v5458 = vunpack.c.l.b16 %v4170
          %v5459 = vunpack.c.h.b16 %v4170
          %v5460 = vunpack.c.l.b16 %v4171
          %v5461 = vunpack.c.l.b16 %v4172
          %v5462 = vunpack.c.h.b16 %v4172
          %v5463 = vunpack.c.l.b16 %v4173
          %v5464 = vunpack.c.h.b16 %v4173
          %v5465 = vunpack.c.l.b16 %v4174
          %v5466 = vunpack.c.h.b16 %v4174
          %v5467 = vunpack.c.l.b16 %v4175
          %v5468 = vunpack.c.l.b16 %v4176
          %v5469 = vunpack.c.h.b16 %v4176
          %v5470 = vunpack.c.l.b16 %v4177
          %v5471 = vunpack.c.h.b16 %v4177
          %v5472 = vunpack.c.l.b16 %v4178
          %v5473 = vunpack.c.h.b16 %v4178
          %v5474 = vunpack.c.l.b16 %v4179
          %v5475 = vunpack.c.l.b16 %v4180
          %v5476 = vunpack.c.h.b16 %v4180
          %v5477 = vunpack.c.l.b16 %v4181
          %v5478 = vunpack.c.h.b16 %v4181
          %v5479 = vunpack.c.l.b16 %v4182
          %v5480 = vunpack.c.h.b16 %v4182
          %v5481 = vunpack.c.l.b16 %v4183
          %v5482 = vunpack.c.l.b16 %v4184
          %v5483 = vunpack.c.h.b16 %v4184
          %v5484 = vunpack.c.l.b16 %v4185
          %v5485 = vunpack.c.h.b16 %v4185
          %v5486 = vunpack.c.l.b16 %v4186
          %v5487 = vunpack.c.h.b16 %v4186
          %v5488 = vunpack.c.l.b16 %v4187
          %v5489 = vunpack.c.l.b16 %v4188
          %v5490 = vunpack.c.h.b16 %v4188
          %v5491 = vunpack.c.l.b16 %v4189
          %v5492 = vunpack.c.h.b16 %v4189
          %v5493 = vunpack.c.l.b16 %v4190
          %v5494 = vunpack.c.h.b16 %v4190
          %v5495 = vunpack.c.l.b16 %v4191
          %v5496 = vunpack.c.l.b16 %v4192
          %v5497 = vunpack.c.h.b16 %v4192
          %v5498 = vunpack.c.l.b16 %v4193
          %v5499 = vunpack.c.h.b16 %v4193
          %v5500 = vunpack.c.l.b16 %v4194
          %v5501 = vunpack.c.h.b16 %v4194
          %v5502 = vunpack.c.l.b16 %v4195
          %v5503 = vunpack.c.l.b16 %v4196
          %v5504 = vunpack.c.h.b16 %v4196
          %v5505 = vunpack.c.l.b16 %v4197
          %v5506 = vunpack.c.h.b16 %v4197
          %v5507 = vunpack.c.l.b16 %v4198
          %v5508 = vunpack.c.h.b16 %v4198
          %v5509 = vunpack.c.l.b16 %v4199
          %v5510 = vunpack.c.l.b16 %v4200
          %v5511 = vunpack.c.h.b16 %v4200
          %v5512 = vunpack.c.l.b16 %v4201
          %v5513 = vunpack.c.h.b16 %v4201
          %v5514 = vunpack.c.l.b16 %v4202
          %v5515 = vunpack.c.h.b16 %v4202
          %v5516 = vunpack.c.l.b16 %v4203
          %v5517 = vunpack.c.l.b16 %v4204
          %v5518 = vunpack.c.h.b16 %v4204
          %v5519 = vunpack.c.l.b16 %v4205
          %v5520 = vunpack.c.h.b16 %v4205
          %v5521 = vunpack.c.l.b16 %v4206
          %v5522 = vunpack.c.h.b16 %v4206
          %v5523 = vunpack.c.l.b16 %v4207
          %v5524 = vunpack.c.l.b16 %v4208
          %v5525 = vunpack.c.h.b16 %v4208
          %v5526 = vunpack.c.l.b16 %v4209
          %v5527 = vunpack.c.h.b16 %v4209
          %v5528 = vunpack.c.l.b16 %v4210
          %v5529 = vunpack.c.h.b16 %v4210
          %v5530 = vunpack.c.l.b16 %v4211
          %v5531 = vunpack.c.l.b16 %v4212
          %v5532 = vunpack.c.h.b16 %v4212
          %v5533 = vunpack.c.l.b16 %v4213
          %v5534 = vunpack.c.h.b16 %v4213
          %v5535 = vunpack.c.l.b16 %v4214
          %v5536 = vunpack.c.h.b16 %v4214
          %v5537 = vunpack.c.l.b16 %v4215
          %v5538 = vunpack.c.l.b16 %v4216
          %v5539 = vunpack.c.h.b16 %v4216
          %v5540 = vunpack.c.l.b16 %v4217
          %v5541 = vunpack.c.h.b16 %v4217
          %v5542 = vunpack.c.l.b16 %v4218
          %v5543 = vunpack.c.h.b16 %v4218
          %v5544 = vunpack.c.l.b16 %v4219
          %v5545 = vunpack.c.l.b16 %v4220
          %v5546 = vunpack.c.h.b16 %v4220
          %v5547 = vunpack.c.l.b16 %v4221
          %v5548 = vunpack.c.h.b16 %v4221
          %v5549 = vunpack.c.l.b16 %v4222
          %v5550 = vunpack.c.h.b16 %v4222
          %v5551 = vunpack.c.l.b16 %v4223
          %v5552 = vunpack.c.l.b16 %v4224
          %v5553 = vunpack.c.h.b16 %v4224
          %v5554 = vunpack.c.l.b16 %v4225
          %v5555 = vunpack.c.h.b16 %v4225
          %v5556 = vunpack.c.l.b16 %v4226
          %v5557 = vunpack.c.h.b16 %v4226
          %v5558 = vunpack.c.l.b16 %v4227
          %v5559 = vunpack.c.l.b16 %v4228
          %v5560 = vunpack.c.h.b16 %v4228
          %v5561 = vunpack.c.l.b16 %v4229
          %v5562 = vunpack.c.h.b16 %v4229
          %v5563 = vunpack.c.l.b16 %v4230
          %v5564 = vunpack.c.h.b16 %v4230
          %v5565 = vunpack.c.l.b16 %v4231
          %v5566 = vunpack.c.l.b16 %v4232
          %v5567 = vunpack.c.h.b16 %v4232
          %v5568 = vunpack.c.l.b16 %v4233
          %v5569 = vunpack.c.h.b16 %v4233
          %v5570 = vunpack.c.l.b16 %v4234
          %v5571 = vunpack.c.h.b16 %v4234
          %v5572 = vunpack.c.l.b16 %v4235
          %v5573 = vunpack.c.l.b16 %v4236
          %v5574 = vunpack.c.h.b16 %v4236
          %v5575 = vunpack.c.l.b16 %v4237
          %v5576 = vunpack.c.h.b16 %v4237
          %v5577 = vunpack.c.l.b16 %v4238
          %v5578 = vunpack.c.h.b16 %v4238
          %v5579 = vunpack.c.l.b16 %v4239
          %v5580 = vunpack.c.l.b16 %v4240
          %v5581 = vunpack.c.h.b16 %v4240
          %v5582 = vunpack.c.l.b16 %v4241
          %v5583 = vunpack.c.h.b16 %v4241
          %v5584 = vunpack.c.l.b16 %v4242
          %v5585 = vunpack.c.h.b16 %v4242
          %v5586 = vunpack.c.l.b16 %v4243
          %v5587 = vunpack.c.l.b16 %v4244
          %v5588 = vunpack.c.h.b16 %v4244
          %v5589 = vunpack.c.l.b16 %v4245
          %v5590 = vunpack.c.h.b16 %v4245
          %v5591 = vunpack.c.l.b16 %v4246
          %v5592 = vunpack.c.h.b16 %v4246
          %v5593 = vunpack.c.l.b16 %v4247
          %v5594 = vunpack.c.l.b16 %v4248
          %v5595 = vunpack.c.h.b16 %v4248
          %v5596 = vunpack.c.l.b16 %v4249
          %v5597 = vunpack.c.h.b16 %v4249
          %v5598 = vunpack.c.l.b16 %v4250
          %v5599 = vunpack.c.h.b16 %v4250
          %v5600 = vunpack.c.l.b16 %v4251
          %v5601 = vunpack.c.l.b16 %v4252
          %v5602 = vunpack.c.h.b16 %v4252
          %v5603 = vunpack.c.l.b16 %v4253
          %v5604 = vunpack.c.h.b16 %v4253
          %v5605 = vunpack.c.l.b16 %v4254
          %v5606 = vunpack.c.h.b16 %v4254
          %v5607 = vunpack.c.l.b16 %v4255
          %v5608 = vunpack.c.l.b16 %v4256
          %v5609 = vunpack.c.h.b16 %v4256
          %v5610 = vunpack.c.l.b16 %v4257
          %v5611 = vunpack.c.h.b16 %v4257
          %v5612 = vunpack.c.l.b16 %v4258
          %v5613 = vunpack.c.h.b16 %v4258
          %v5614 = vunpack.c.l.b16 %v4259
          %v5615 = vunpack.c.l.b16 %v4260
          %v5616 = vunpack.c.h.b16 %v4260
          %v5617 = vunpack.c.l.b16 %v4261
          %v5618 = vunpack.c.h.b16 %v4261
          %v5619 = vunpack.c.l.b16 %v4262
          %v5620 = vunpack.c.h.b16 %v4262
          %v5621 = vunpack.c.l.b16 %v4263
          %v5622 = vunpack.c.l.b16 %v4264
          %v5623 = vunpack.c.h.b16 %v4264
          %v5624 = vunpack.c.l.b16 %v4265
          %v5625 = vunpack.c.h.b16 %v4265
          %v5626 = vunpack.c.l.b16 %v4266
          %v5627 = vunpack.c.h.b16 %v4266
          %v5628 = vunpack.c.l.b16 %v4267
          %v5629 = vunpack.c.l.b16 %v4268
          %v5630 = vunpack.c.h.b16 %v4268
          %v5631 = vunpack.c.l.b16 %v4269
          %v5632 = vunpack.c.h.b16 %v4269
          %v5633 = vunpack.c.l.b16 %v4270
          %v5634 = vunpack.c.h.b16 %v4270
          %v5635 = vunpack.c.l.b16 %v4271
          %v5636 = vunpack.c.l.b16 %v4272
          %v5637 = vunpack.c.h.b16 %v4272
          %v5638 = vunpack.c.l.b16 %v4273
          %v5639 = vunpack.c.h.b16 %v4273
          %v5640 = vunpack.c.l.b16 %v4274
          %v5641 = vunpack.c.h.b16 %v4274
          %v5642 = vunpack.c.l.b16 %v4275
          %v5643 = vunpack.c.l.b16 %v4276
          %v5644 = vunpack.c.h.b16 %v4276
          %v5645 = vunpack.c.l.b16 %v4277
          %v5646 = vunpack.c.h.b16 %v4277
          %v5647 = vunpack.c.l.b16 %v4278
          %v5648 = vunpack.c.h.b16 %v4278
          %v5649 = vunpack.c.l.b16 %v4279
          %v5650 = vunpack.c.l.b16 %v4280
          %v5651 = vunpack.c.h.b16 %v4280
          %v5652 = vunpack.c.l.b16 %v4281
          %v5653 = vunpack.c.h.b16 %v4281
          %v5654 = vunpack.c.l.b16 %v4282
          %v5655 = vunpack.c.h.b16 %v4282
          %v5656 = vunpack.c.l.b16 %v4283
          %v5657 = vunpack.c.l.b16 %v4284
          %v5658 = vunpack.c.h.b16 %v4284
          %v5659 = vunpack.c.l.b16 %v4285
          %v5660 = vunpack.c.h.b16 %v4285
          %v5661 = vunpack.c.l.b16 %v4286
          %v5662 = vunpack.c.h.b16 %v4286
          %v5663 = vunpack.c.l.b16 %v4287
          %v5664 = vunpack.c.l.b16 %v4288
          %v5665 = vunpack.c.h.b16 %v4288
          %v5666 = vunpack.c.l.b16 %v4289
          %v5667 = vunpack.c.h.b16 %v4289
          %v5668 = vunpack.c.l.b16 %v4290
          %v5669 = vunpack.c.h.b16 %v4290
          %v5670 = vunpack.c.l.b16 %v4291
          %v5671 = vunpack.c.l.b16 %v4292
          %v5672 = vunpack.c.h.b16 %v4292
          %v5673 = vunpack.c.l.b16 %v4293
          %v5674 = vunpack.c.h.b16 %v4293
          %v5675 = vunpack.c.l.b16 %v4294
          %v5676 = vunpack.c.h.b16 %v4294
          %v5677 = vunpack.c.l.b16 %v4295
          %v5678 = vunpack.c.l.b16 %v4296
          %v5679 = vunpack.c.h.b16 %v4296
          %v5680 = vunpack.c.l.b16 %v4297
          %v5681 = vunpack.c.h.b16 %v4297
          %v5682 = vunpack.c.l.b16 %v4298
          %v5683 = vunpack.c.h.b16 %v4298
          %v5684 = vunpack.c.l.b16 %v4299
          %v5685 = vunpack.c.l.b16 %v4300
          %v5686 = vunpack.c.h.b16 %v4300
          %v5687 = vunpack.c.l.b16 %v4301
          %v5688 = vunpack.c.h.b16 %v4301
          %v5689 = vunpack.c.l.b16 %v4302
          %v5690 = vunpack.c.h.b16 %v4302
          %v5691 = vunpack.c.l.b16 %v4303
          %v5692 = vunpack.c.l.b16 %v4304
          %v5693 = vunpack.c.h.b16 %v4304
          %v5694 = vunpack.c.l.b16 %v4305
          %v5695 = vunpack.c.h.b16 %v4305
          %v5696 = vunpack.c.l.b16 %v4306
          %v5697 = vunpack.c.h.b16 %v4306
          %v5698 = vunpack.c.l.b16 %v4307
          %v5699 = vunpack.c.l.b16 %v4308
          %v5700 = vunpack.c.h.b16 %v4308
          %v5701 = vunpack.c.l.b16 %v4309
          %v5702 = vunpack.c.h.b16 %v4309
          %v5703 = vunpack.c.l.b16 %v4310
          %v5704 = vunpack.c.h.b16 %v4310
          %v5705 = vunpack.c.l.b16 %v4311
          %v5706 = vunpack.c.l.b16 %v4312
          %v5707 = vunpack.c.h.b16 %v4312
          %v5708 = vunpack.c.l.b16 %v4313
          %v5709 = vunpack.c.h.b16 %v4313
          %v5710 = vunpack.c.l.b16 %v4314
          %v5711 = vunpack.c.h.b16 %v4314
          %v5712 = vunpack.c.l.b16 %v4315
          %v5713 = vunpack.c.l.b16 %v4316
          %v5714 = vunpack.c.h.b16 %v4316
          %v5715 = vunpack.c.l.b16 %v4317
          %v5716 = vunpack.c.h.b16 %v4317
          %v5717 = vunpack.c.l.b16 %v4318
          %v5718 = vunpack.c.h.b16 %v4318
          %v5719 = vunpack.c.l.b16 %v4319
          %v5720 = vunpack.c.l.b16 %v4320
          %v5721 = vunpack.c.h.b16 %v4320
          %v5722 = vunpack.c.l.b16 %v4321
          %v5723 = vunpack.c.h.b16 %v4321
          %v5724 = vunpack.c.l.b16 %v4322
          %v5725 = vunpack.c.h.b16 %v4322
          %v5726 = vunpack.c.l.b16 %v4323
          %v5727 = vunpack.c.l.b16 %v4324
          %v5728 = vunpack.c.h.b16 %v4324
          %v5729 = vunpack.c.l.b16 %v4325
          %v5730 = vunpack.c.h.b16 %v4325
          %v5731 = vunpack.c.l.b16 %v4326
          %v5732 = vunpack.c.h.b16 %v4326
          %v5733 = vunpack.c.l.b16 %v4327
          %v5734 = vunpack.c.l.b16 %v4328
          %v5735 = vunpack.c.h.b16 %v4328
          %v5736 = vunpack.c.l.b16 %v4329
          %v5737 = vunpack.c.h.b16 %v4329
          %v5738 = vunpack.c.l.b16 %v4330
          %v5739 = vunpack.c.h.b16 %v4330
          %v5740 = vunpack.c.l.b16 %v4331
          %v5741 = vunpack.c.l.b16 %v4332
          %v5742 = vunpack.c.h.b16 %v4332
          %v5743 = vunpack.c.l.b16 %v4333
          %v5744 = vunpack.c.h.b16 %v4333
          %v5745 = vunpack.c.l.b16 %v4334
          %v5746 = vunpack.c.h.b16 %v4334
          %v5747 = vunpack.c.l.b16 %v4335
          %v5748 = vunpack.c.l.b16 %v4336
          %v5749 = vunpack.c.h.b16 %v4336
          %v5750 = vunpack.c.l.b16 %v4337
          %v5751 = vunpack.c.h.b16 %v4337
          %v5752 = vunpack.c.l.b16 %v4338
          %v5753 = vunpack.c.h.b16 %v4338
          %v5754 = vunpack.c.l.b16 %v4339
          %v5755 = vunpack.c.l.b16 %v4340
          %v5756 = vunpack.c.h.b16 %v4340
          %v5757 = vunpack.c.l.b16 %v4341
          %v5758 = vunpack.c.h.b16 %v4341
          %v5759 = vunpack.c.l.b16 %v4342
          %v5760 = vunpack.c.h.b16 %v4342
          %v5761 = vunpack.c.l.b16 %v4343
          %v5762 = vunpack.c.l.b16 %v4344
          %v5763 = vunpack.c.h.b16 %v4344
          %v5764 = vunpack.c.l.b16 %v4345
          %v5765 = vunpack.c.h.b16 %v4345
          %v5766 = vunpack.c.l.b16 %v4346
          %v5767 = vunpack.c.h.b16 %v4346
          %v5768 = vunpack.c.l.b16 %v4347
          %v5769 = vunpack.c.l.b16 %v4348
          %v5770 = vunpack.c.h.b16 %v4348
          %v5771 = vunpack.c.l.b16 %v4349
          %v5772 = vunpack.c.h.b16 %v4349
          %v5773 = vunpack.c.l.b16 %v4350
          %v5774 = vunpack.c.h.b16 %v4350
          %v5775 = vunpack.c.l.b16 %v4351
          %v5776 = vunpack.c.l.b16 %v4352
          %v5777 = vunpack.c.h.b16 %v4352
          %v5778 = vunpack.c.l.b16 %v4353
          %v5779 = vunpack.c.h.b16 %v4353
          %v5780 = vunpack.c.l.b16 %v4354
          %v5781 = vunpack.c.h.b16 %v4354
          %v5782 = vunpack.c.l.b16 %v4355
          %v5783 = vunpack.c.l.b16 %v4356
          %v5784 = vunpack.c.h.b16 %v4356
          %v5785 = vunpack.c.l.b16 %v4357
          %v5786 = vunpack.c.h.b16 %v4357
          %v5787 = vunpack.c.l.b16 %v4358
          %v5788 = vunpack.c.h.b16 %v4358
          %v5789 = vunpack.c.l.b16 %v4359
          %v5790 = vunpack.c.l.b16 %v4360
          %v5791 = vunpack.c.h.b16 %v4360
          %v5792 = vunpack.c.l.b16 %v4361
          %v5793 = vunpack.c.h.b16 %v4361
          %v5794 = vunpack.c.l.b16 %v4362
          %v5795 = vunpack.c.h.b16 %v4362
          %v5796 = vunpack.c.l.b16 %v4363
          %v5797 = vunpack.c.l.b16 %v4364
          %v5798 = vunpack.c.h.b16 %v4364
          %v5799 = vunpack.c.l.b16 %v4365
          %v5800 = vunpack.c.h.b16 %v4365
          %v5801 = vunpack.c.l.b16 %v4366
          %v5802 = vunpack.c.h.b16 %v4366
          %v5803 = vunpack.c.l.b16 %v4367
          %v5804 = vunpack.c.l.b16 %v4368
          %v5805 = vunpack.c.h.b16 %v4368
          %v5806 = vunpack.c.l.b16 %v4369
          %v5807 = vunpack.c.h.b16 %v4369
          %v5808 = vunpack.c.l.b16 %v4370
          %v5809 = vunpack.c.h.b16 %v4370
          %v5810 = vunpack.c.l.b16 %v4371
          %v5811 = vunpack.c.l.b16 %v4372
          %v5812 = vunpack.c.h.b16 %v4372
          %v5813 = vunpack.c.l.b16 %v4373
          %v5814 = vunpack.c.h.b16 %v4373
          %v5815 = vunpack.c.l.b16 %v4374
          %v5816 = vunpack.c.h.b16 %v4374
          %v5817 = vunpack.c.l.b16 %v4375
          %v5818 = vunpack.c.l.b16 %v4376
          %v5819 = vunpack.c.h.b16 %v4376
          %v5820 = vunpack.c.l.b16 %v4377
          %v5821 = vunpack.c.h.b16 %v4377
          %v5822 = vunpack.c.l.b16 %v4378
          %v5823 = vunpack.c.h.b16 %v4378
          %v5824 = vunpack.c.l.b16 %v4379
          %v5825 = vpack.c.b16 %v4936, %v4929
          %v5826 = vpack.c.b16 %v4937, %v4930
          %v5827 = vpack.c.b16 %v4938, %v4931
          %v5828 = vpack.c.b16 %v4939, %v4932
          %v5829 = vpack.c.b16 %v4940, %v4933
          %v5830 = vpack.c.b16 %v4941, %v4934
          %v5831 = vpack.c.b16 %v4942, %v4935
          %v5832 = vpack.c.b16 %v4950, %v4943
          %v5833 = vpack.c.b16 %v4951, %v4944
          %v5834 = vpack.c.b16 %v4952, %v4945
          %v5835 = vpack.c.b16 %v4953, %v4946
          %v5836 = vpack.c.b16 %v4954, %v4947
          %v5837 = vpack.c.b16 %v4955, %v4948
          %v5838 = vpack.c.b16 %v4956, %v4949
          %v5839 = vpack.c.b16 %v4964, %v4957
          %v5840 = vpack.c.b16 %v4965, %v4958
          %v5841 = vpack.c.b16 %v4966, %v4959
          %v5842 = vpack.c.b16 %v4967, %v4960
          %v5843 = vpack.c.b16 %v4968, %v4961
          %v5844 = vpack.c.b16 %v4969, %v4962
          %v5845 = vpack.c.b16 %v4970, %v4963
          %v5846 = vpack.c.b16 %v4978, %v4971
          %v5847 = vpack.c.b16 %v4979, %v4972
          %v5848 = vpack.c.b16 %v4980, %v4973
          %v5849 = vpack.c.b16 %v4981, %v4974
          %v5850 = vpack.c.b16 %v4982, %v4975
          %v5851 = vpack.c.b16 %v4983, %v4976
          %v5852 = vpack.c.b16 %v4984, %v4977
          %v5853 = vpack.c.b16 %v4992, %v4985
          %v5854 = vpack.c.b16 %v4993, %v4986
          %v5855 = vpack.c.b16 %v4994, %v4987
          %v5856 = vpack.c.b16 %v4995, %v4988
          %v5857 = vpack.c.b16 %v4996, %v4989
          %v5858 = vpack.c.b16 %v4997, %v4990
          %v5859 = vpack.c.b16 %v4998, %v4991
          %v5860 = vpack.c.b16 %v5006, %v4999
          %v5861 = vpack.c.b16 %v5007, %v5000
          %v5862 = vpack.c.b16 %v5008, %v5001
          %v5863 = vpack.c.b16 %v5009, %v5002
          %v5864 = vpack.c.b16 %v5010, %v5003
          %v5865 = vpack.c.b16 %v5011, %v5004
          %v5866 = vpack.c.b16 %v5012, %v5005
          %v5867 = vpack.c.b16 %v5020, %v5013
          %v5868 = vpack.c.b16 %v5021, %v5014
          %v5869 = vpack.c.b16 %v5022, %v5015
          %v5870 = vpack.c.b16 %v5023, %v5016
          %v5871 = vpack.c.b16 %v5024, %v5017
          %v5872 = vpack.c.b16 %v5025, %v5018
          %v5873 = vpack.c.b16 %v5026, %v5019
          %v5874 = vpack.c.b16 %v5034, %v5027
          %v5875 = vpack.c.b16 %v5035, %v5028
          %v5876 = vpack.c.b16 %v5036, %v5029
          %v5877 = vpack.c.b16 %v5037, %v5030
          %v5878 = vpack.c.b16 %v5038, %v5031
          %v5879 = vpack.c.b16 %v5039, %v5032
          %v5880 = vpack.c.b16 %v5040, %v5033
          %v5881 = vpack.c.b16 %v5048, %v5041
          %v5882 = vpack.c.b16 %v5049, %v5042
          %v5883 = vpack.c.b16 %v5050, %v5043
          %v5884 = vpack.c.b16 %v5051, %v5044
          %v5885 = vpack.c.b16 %v5052, %v5045
          %v5886 = vpack.c.b16 %v5053, %v5046
          %v5887 = vpack.c.b16 %v5054, %v5047
          %v5888 = vpack.c.b16 %v5062, %v5055
          %v5889 = vpack.c.b16 %v5063, %v5056
          %v5890 = vpack.c.b16 %v5064, %v5057
          %v5891 = vpack.c.b16 %v5065, %v5058
          %v5892 = vpack.c.b16 %v5066, %v5059
          %v5893 = vpack.c.b16 %v5067, %v5060
          %v5894 = vpack.c.b16 %v5068, %v5061
          %v5895 = vpack.c.b16 %v5076, %v5069
          %v5896 = vpack.c.b16 %v5077, %v5070
          %v5897 = vpack.c.b16 %v5078, %v5071
          %v5898 = vpack.c.b16 %v5079, %v5072
          %v5899 = vpack.c.b16 %v5080, %v5073
          %v5900 = vpack.c.b16 %v5081, %v5074
          %v5901 = vpack.c.b16 %v5082, %v5075
          %v5902 = vpack.c.b16 %v5090, %v5083
          %v5903 = vpack.c.b16 %v5091, %v5084
          %v5904 = vpack.c.b16 %v5092, %v5085
          %v5905 = vpack.c.b16 %v5093, %v5086
          %v5906 = vpack.c.b16 %v5094, %v5087
          %v5907 = vpack.c.b16 %v5095, %v5088
          %v5908 = vpack.c.b16 %v5096, %v5089
          %v5909 = vpack.c.b16 %v5104, %v5097
          %v5910 = vpack.c.b16 %v5105, %v5098
          %v5911 = vpack.c.b16 %v5106, %v5099
          %v5912 = vpack.c.b16 %v5107, %v5100
          %v5913 = vpack.c.b16 %v5108, %v5101
          %v5914 = vpack.c.b16 %v5109, %v5102
          %v5915 = vpack.c.b16 %v5110, %v5103
          %v5916 = vpack.c.b16 %v5118, %v5111
          %v5917 = vpack.c.b16 %v5119, %v5112
          %v5918 = vpack.c.b16 %v5120, %v5113
          %v5919 = vpack.c.b16 %v5121, %v5114
          %v5920 = vpack.c.b16 %v5122, %v5115
          %v5921 = vpack.c.b16 %v5123, %v5116
          %v5922 = vpack.c.b16 %v5124, %v5117
          %v5923 = vpack.c.b16 %v5132, %v5125
          %v5924 = vpack.c.b16 %v5133, %v5126
          %v5925 = vpack.c.b16 %v5134, %v5127
          %v5926 = vpack.c.b16 %v5135, %v5128
          %v5927 = vpack.c.b16 %v5136, %v5129
          %v5928 = vpack.c.b16 %v5137, %v5130
          %v5929 = vpack.c.b16 %v5138, %v5131
          %v5930 = vpack.c.b16 %v5146, %v5139
          %v5931 = vpack.c.b16 %v5147, %v5140
          %v5932 = vpack.c.b16 %v5148, %v5141
          %v5933 = vpack.c.b16 %v5149, %v5142
          %v5934 = vpack.c.b16 %v5150, %v5143
          %v5935 = vpack.c.b16 %v5151, %v5144
          %v5936 = vpack.c.b16 %v5152, %v5145
          %v5937 = vpack.c.b16 %v5160, %v5153
          %v5938 = vpack.c.b16 %v5161, %v5154
          %v5939 = vpack.c.b16 %v5162, %v5155
          %v5940 = vpack.c.b16 %v5163, %v5156
          %v5941 = vpack.c.b16 %v5164, %v5157
          %v5942 = vpack.c.b16 %v5165, %v5158
          %v5943 = vpack.c.b16 %v5166, %v5159
          %v5944 = vpack.c.b16 %v5174, %v5167
          %v5945 = vpack.c.b16 %v5175, %v5168
          %v5946 = vpack.c.b16 %v5176, %v5169
          %v5947 = vpack.c.b16 %v5177, %v5170
          %v5948 = vpack.c.b16 %v5178, %v5171
          %v5949 = vpack.c.b16 %v5179, %v5172
          %v5950 = vpack.c.b16 %v5180, %v5173
          %v5951 = vpack.c.b16 %v5188, %v5181
          %v5952 = vpack.c.b16 %v5189, %v5182
          %v5953 = vpack.c.b16 %v5190, %v5183
          %v5954 = vpack.c.b16 %v5191, %v5184
          %v5955 = vpack.c.b16 %v5192, %v5185
          %v5956 = vpack.c.b16 %v5193, %v5186
          %v5957 = vpack.c.b16 %v5194, %v5187
          %v5958 = vpack.c.b16 %v5202, %v5195
          %v5959 = vpack.c.b16 %v5203, %v5196
          %v5960 = vpack.c.b16 %v5204, %v5197
          %v5961 = vpack.c.b16 %v5205, %v5198
          %v5962 = vpack.c.b16 %v5206, %v5199
          %v5963 = vpack.c.b16 %v5207, %v5200
          %v5964 = vpack.c.b16 %v5208, %v5201
          %v5965 = vpack.c.b16 %v5216, %v5209
          %v5966 = vpack.c.b16 %v5217, %v5210
          %v5967 = vpack.c.b16 %v5218, %v5211
          %v5968 = vpack.c.b16 %v5219, %v5212
          %v5969 = vpack.c.b16 %v5220, %v5213
          %v5970 = vpack.c.b16 %v5221, %v5214
          %v5971 = vpack.c.b16 %v5222, %v5215
          %v5972 = vpack.c.b16 %v5230, %v5223
          %v5973 = vpack.c.b16 %v5231, %v5224
          %v5974 = vpack.c.b16 %v5232, %v5225
          %v5975 = vpack.c.b16 %v5233, %v5226
          %v5976 = vpack.c.b16 %v5234, %v5227
          %v5977 = vpack.c.b16 %v5235, %v5228
          %v5978 = vpack.c.b16 %v5236, %v5229
          %v5979 = vpack.c.b16 %v5244, %v5237
          %v5980 = vpack.c.b16 %v5245, %v5238
          %v5981 = vpack.c.b16 %v5246, %v5239
          %v5982 = vpack.c.b16 %v5247, %v5240
          %v5983 = vpack.c.b16 %v5248, %v5241
          %v5984 = vpack.c.b16 %v5249, %v5242
          %v5985 = vpack.c.b16 %v5250, %v5243
          %v5986 = vpack.c.b16 %v5258, %v5251
          %v5987 = vpack.c.b16 %v5259, %v5252
          %v5988 = vpack.c.b16 %v5260, %v5253
          %v5989 = vpack.c.b16 %v5261, %v5254
          %v5990 = vpack.c.b16 %v5262, %v5255
          %v5991 = vpack.c.b16 %v5263, %v5256
          %v5992 = vpack.c.b16 %v5264, %v5257
          %v5993 = vpack.c.b16 %v5272, %v5265
          %v5994 = vpack.c.b16 %v5273, %v5266
          %v5995 = vpack.c.b16 %v5274, %v5267
          %v5996 = vpack.c.b16 %v5275, %v5268
          %v5997 = vpack.c.b16 %v5276, %v5269
          %v5998 = vpack.c.b16 %v5277, %v5270
          %v5999 = vpack.c.b16 %v5278, %v5271
          %v6000 = vpack.c.b16 %v5286, %v5279
          %v6001 = vpack.c.b16 %v5287, %v5280
          %v6002 = vpack.c.b16 %v5288, %v5281
          %v6003 = vpack.c.b16 %v5289, %v5282
          %v6004 = vpack.c.b16 %v5290, %v5283
          %v6005 = vpack.c.b16 %v5291, %v5284
          %v6006 = vpack.c.b16 %v5292, %v5285
          %v6007 = vpack.c.b16 %v5300, %v5293
          %v6008 = vpack.c.b16 %v5301, %v5294
          %v6009 = vpack.c.b16 %v5302, %v5295
          %v6010 = vpack.c.b16 %v5303, %v5296
          %v6011 = vpack.c.b16 %v5304, %v5297
          %v6012 = vpack.c.b16 %v5305, %v5298
          %v6013 = vpack.c.b16 %v5306, %v5299
          %v6014 = vpack.c.b16 %v5314, %v5307
          %v6015 = vpack.c.b16 %v5315, %v5308
          %v6016 = vpack.c.b16 %v5316, %v5309
          %v6017 = vpack.c.b16 %v5317, %v5310
          %v6018 = vpack.c.b16 %v5318, %v5311
          %v6019 = vpack.c.b16 %v5319, %v5312
          %v6020 = vpack.c.b16 %v5320, %v5313
          %v6021 = vpack.c.b16 %v5328, %v5321
          %v6022 = vpack.c.b16 %v5329, %v5322
          %v6023 = vpack.c.b16 %v5330, %v5323
          %v6024 = vpack.c.b16 %v5331, %v5324
          %v6025 = vpack.c.b16 %v5332, %v5325
          %v6026 = vpack.c.b16 %v5333, %v5326
          %v6027 = vpack.c.b16 %v5334, %v5327
          %v6028 = vpack.c.b16 %v5342, %v5335
          %v6029 = vpack.c.b16 %v5343, %v5336
          %v6030 = vpack.c.b16 %v5344, %v5337
          %v6031 = vpack.c.b16 %v5345, %v5338
          %v6032 = vpack.c.b16 %v5346, %v5339
          %v6033 = vpack.c.b16 %v5347, %v5340
          %v6034 = vpack.c.b16 %v5348, %v5341
          %v6035 = vpack.c.b16 %v5356, %v5349
          %v6036 = vpack.c.b16 %v5357, %v5350
          %v6037 = vpack.c.b16 %v5358, %v5351
          %v6038 = vpack.c.b16 %v5359, %v5352
          %v6039 = vpack.c.b16 %v5360, %v5353
          %v6040 = vpack.c.b16 %v5361, %v5354
          %v6041 = vpack.c.b16 %v5362, %v5355
          %v6042 = vpack.c.b16 %v5370, %v5363
          %v6043 = vpack.c.b16 %v5371, %v5364
          %v6044 = vpack.c.b16 %v5372, %v5365
          %v6045 = vpack.c.b16 %v5373, %v5366
          %v6046 = vpack.c.b16 %v5374, %v5367
          %v6047 = vpack.c.b16 %v5375, %v5368
          %v6048 = vpack.c.b16 %v5376, %v5369
          %v6049 = vpack.c.b16 %v5384, %v5377
          %v6050 = vpack.c.b16 %v5385, %v5378
          %v6051 = vpack.c.b16 %v5386, %v5379
          %v6052 = vpack.c.b16 %v5387, %v5380
          %v6053 = vpack.c.b16 %v5388, %v5381
          %v6054 = vpack.c.b16 %v5389, %v5382
          %v6055 = vpack.c.b16 %v5390, %v5383
          %v6056 = vpack.c.b16 %v5398, %v5391
          %v6057 = vpack.c.b16 %v5399, %v5392
          %v6058 = vpack.c.b16 %v5400, %v5393
          %v6059 = vpack.c.b16 %v5401, %v5394
          %v6060 = vpack.c.b16 %v5402, %v5395
          %v6061 = vpack.c.b16 %v5403, %v5396
          %v6062 = vpack.c.b16 %v5404, %v5397
          %v6063 = vpack.c.b16 %v5412, %v5405
          %v6064 = vpack.c.b16 %v5413, %v5406
          %v6065 = vpack.c.b16 %v5414, %v5407
          %v6066 = vpack.c.b16 %v5415, %v5408
          %v6067 = vpack.c.b16 %v5416, %v5409
          %v6068 = vpack.c.b16 %v5417, %v5410
          %v6069 = vpack.c.b16 %v5418, %v5411
          %v6070 = vpack.c.b16 %v5426, %v5419
          %v6071 = vpack.c.b16 %v5427, %v5420
          %v6072 = vpack.c.b16 %v5428, %v5421
          %v6073 = vpack.c.b16 %v5429, %v5422
          %v6074 = vpack.c.b16 %v5430, %v5423
          %v6075 = vpack.c.b16 %v5431, %v5424
          %v6076 = vpack.c.b16 %v5432, %v5425
          %v6077 = vpack.c.b16 %v5440, %v5433
          %v6078 = vpack.c.b16 %v5441, %v5434
          %v6079 = vpack.c.b16 %v5442, %v5435
          %v6080 = vpack.c.b16 %v5443, %v5436
          %v6081 = vpack.c.b16 %v5444, %v5437
          %v6082 = vpack.c.b16 %v5445, %v5438
          %v6083 = vpack.c.b16 %v5446, %v5439
          %v6084 = vpack.c.b16 %v5454, %v5447
          %v6085 = vpack.c.b16 %v5455, %v5448
          %v6086 = vpack.c.b16 %v5456, %v5449
          %v6087 = vpack.c.b16 %v5457, %v5450
          %v6088 = vpack.c.b16 %v5458, %v5451
          %v6089 = vpack.c.b16 %v5459, %v5452
          %v6090 = vpack.c.b16 %v5460, %v5453
          %v6091 = vpack.c.b16 %v5468, %v5461
          %v6092 = vpack.c.b16 %v5469, %v5462
          %v6093 = vpack.c.b16 %v5470, %v5463
          %v6094 = vpack.c.b16 %v5471, %v5464
          %v6095 = vpack.c.b16 %v5472, %v5465
          %v6096 = vpack.c.b16 %v5473, %v5466
          %v6097 = vpack.c.b16 %v5474, %v5467
          %v6098 = vpack.c.b16 %v5482, %v5475
          %v6099 = vpack.c.b16 %v5483, %v5476
          %v6100 = vpack.c.b16 %v5484, %v5477
          %v6101 = vpack.c.b16 %v5485, %v5478
          %v6102 = vpack.c.b16 %v5486, %v5479
          %v6103 = vpack.c.b16 %v5487, %v5480
          %v6104 = vpack.c.b16 %v5488, %v5481
          %v6105 = vpack.c.b16 %v5496, %v5489
          %v6106 = vpack.c.b16 %v5497, %v5490
          %v6107 = vpack.c.b16 %v5498, %v5491
          %v6108 = vpack.c.b16 %v5499, %v5492
          %v6109 = vpack.c.b16 %v5500, %v5493
          %v6110 = vpack.c.b16 %v5501, %v5494
          %v6111 = vpack.c.b16 %v5502, %v5495
          %v6112 = vpack.c.b16 %v5510, %v5503
          %v6113 = vpack.c.b16 %v5511, %v5504
          %v6114 = vpack.c.b16 %v5512, %v5505
          %v6115 = vpack.c.b16 %v5513, %v5506
          %v6116 = vpack.c.b16 %v5514, %v5507
          %v6117 = vpack.c.b16 %v5515, %v5508
          %v6118 = vpack.c.b16 %v5516, %v5509
          %v6119 = vpack.c.b16 %v5524, %v5517
          %v6120 = vpack.c.b16 %v5525, %v5518
          %v6121 = vpack.c.b16 %v5526, %v5519
          %v6122 = vpack.c.b16 %v5527, %v5520
          %v6123 = vpack.c.b16 %v5528, %v5521
          %v6124 = vpack.c.b16 %v5529, %v5522
          %v6125 = vpack.c.b16 %v5530, %v5523
          %v6126 = vpack.c.b16 %v5538, %v5531
          %v6127 = vpack.c.b16 %v5539, %v5532
          %v6128 = vpack.c.b16 %v5540, %v5533
          %v6129 = vpack.c.b16 %v5541, %v5534
          %v6130 = vpack.c.b16 %v5542, %v5535
          %v6131 = vpack.c.b16 %v5543, %v5536
          %v6132 = vpack.c.b16 %v5544, %v5537
          %v6133 = vpack.c.b16 %v5552, %v5545
          %v6134 = vpack.c.b16 %v5553, %v5546
          %v6135 = vpack.c.b16 %v5554, %v5547
          %v6136 = vpack.c.b16 %v5555, %v5548
          %v6137 = vpack.c.b16 %v5556, %v5549
          %v6138 = vpack.c.b16 %v5557, %v5550
          %v6139 = vpack.c.b16 %v5558, %v5551
          %v6140 = vpack.c.b16 %v5566, %v5559
          %v6141 = vpack.c.b16 %v5567, %v5560
          %v6142 = vpack.c.b16 %v5568, %v5561
          %v6143 = vpack.c.b16 %v5569, %v5562
          %v6144 = vpack.c.b16 %v5570, %v5563
          %v6145 = vpack.c.b16 %v5571, %v5564
          %v6146 = vpack.c.b16 %v5572, %v5565
          %v6147 = vpack.c.b16 %v5580, %v5573
          %v6148 = vpack.c.b16 %v5581, %v5574
          %v6149 = vpack.c.b16 %v5582, %v5575
          %v6150 = vpack.c.b16 %v5583, %v5576
          %v6151 = vpack.c.b16 %v5584, %v5577
          %v6152 = vpack.c.b16 %v5585, %v5578
          %v6153 = vpack.c.b16 %v5586, %v5579
          %v6154 = vpack.c.b16 %v5594, %v5587
          %v6155 = vpack.c.b16 %v5595, %v5588
          %v6156 = vpack.c.b16 %v5596, %v5589
          %v6157 = vpack.c.b16 %v5597, %v5590
          %v6158 = vpack.c.b16 %v5598, %v5591
          %v6159 = vpack.c.b16 %v5599, %v5592
          %v6160 = vpack.c.b16 %v5600, %v5593
          %v6161 = vpack.c.b16 %v5608, %v5601
          %v6162 = vpack.c.b16 %v5609, %v5602
          %v6163 = vpack.c.b16 %v5610, %v5603
          %v6164 = vpack.c.b16 %v5611, %v5604
          %v6165 = vpack.c.b16 %v5612, %v5605
          %v6166 = vpack.c.b16 %v5613, %v5606
          %v6167 = vpack.c.b16 %v5614, %v5607
          %v6168 = vpack.c.b16 %v5622, %v5615
          %v6169 = vpack.c.b16 %v5623, %v5616
          %v6170 = vpack.c.b16 %v5624, %v5617
          %v6171 = vpack.c.b16 %v5625, %v5618
          %v6172 = vpack.c.b16 %v5626, %v5619
          %v6173 = vpack.c.b16 %v5627, %v5620
          %v6174 = vpack.c.b16 %v5628, %v5621
          %v6175 = vpack.c.b16 %v5636, %v5629
          %v6176 = vpack.c.b16 %v5637, %v5630
          %v6177 = vpack.c.b16 %v5638, %v5631
          %v6178 = vpack.c.b16 %v5639, %v5632
          %v6179 = vpack.c.b16 %v5640, %v5633
          %v6180 = vpack.c.b16 %v5641, %v5634
          %v6181 = vpack.c.b16 %v5642, %v5635
          %v6182 = vpack.c.b16 %v5650, %v5643
          %v6183 = vpack.c.b16 %v5651, %v5644
          %v6184 = vpack.c.b16 %v5652, %v5645
          %v6185 = vpack.c.b16 %v5653, %v5646
          %v6186 = vpack.c.b16 %v5654, %v5647
          %v6187 = vpack.c.b16 %v5655, %v5648
          %v6188 = vpack.c.b16 %v5656, %v5649
          %v6189 = vpack.c.b16 %v5664, %v5657
          %v6190 = vpack.c.b16 %v5665, %v5658
          %v6191 = vpack.c.b16 %v5666, %v5659
          %v6192 = vpack.c.b16 %v5667, %v5660
          %v6193 = vpack.c.b16 %v5668, %v5661
          %v6194 = vpack.c.b16 %v5669, %v5662
          %v6195 = vpack.c.b16 %v5670, %v5663
          %v6196 = vpack.c.b16 %v5678, %v5671
          %v6197 = vpack.c.b16 %v5679, %v5672
          %v6198 = vpack.c.b16 %v5680, %v5673
          %v6199 = vpack.c.b16 %v5681, %v5674
          %v6200 = vpack.c.b16 %v5682, %v5675
          %v6201 = vpack.c.b16 %v5683, %v5676
          %v6202 = vpack.c.b16 %v5684, %v5677
          %v6203 = vpack.c.b16 %v5692, %v5685
          %v6204 = vpack.c.b16 %v5693, %v5686
          %v6205 = vpack.c.b16 %v5694, %v5687
          %v6206 = vpack.c.b16 %v5695, %v5688
          %v6207 = vpack.c.b16 %v5696, %v5689
          %v6208 = vpack.c.b16 %v5697, %v5690
          %v6209 = vpack.c.b16 %v5698, %v5691
          %v6210 = vpack.c.b16 %v5706, %v5699
          %v6211 = vpack.c.b16 %v5707, %v5700
          %v6212 = vpack.c.b16 %v5708, %v5701
          %v6213 = vpack.c.b16 %v5709, %v5702
          %v6214 = vpack.c.b16 %v5710, %v5703
          %v6215 = vpack.c.b16 %v5711, %v5704
          %v6216 = vpack.c.b16 %v5712, %v5705
          %v6217 = vpack.c.b16 %v5720, %v5713
          %v6218 = vpack.c.b16 %v5721, %v5714
          %v6219 = vpack.c.b16 %v5722, %v5715
          %v6220 = vpack.c.b16 %v5723, %v5716
          %v6221 = vpack.c.b16 %v5724, %v5717
          %v6222 = vpack.c.b16 %v5725, %v5718
          %v6223 = vpack.c.b16 %v5726, %v5719
          %v6224 = vpack.c.b16 %v5734, %v5727
          %v6225 = vpack.c.b16 %v5735, %v5728
          %v6226 = vpack.c.b16 %v5736, %v5729
          %v6227 = vpack.c.b16 %v5737, %v5730
          %v6228 = vpack.c.b16 %v5738, %v5731
          %v6229 = vpack.c.b16 %v5739, %v5732
          %v6230 = vpack.c.b16 %v5740, %v5733
          %v6231 = vpack.c.b16 %v5748, %v5741
          %v6232 = vpack.c.b16 %v5749, %v5742
          %v6233 = vpack.c.b16 %v5750, %v5743
          %v6234 = vpack.c.b16 %v5751, %v5744
          %v6235 = vpack.c.b16 %v5752, %v5745
          %v6236 = vpack.c.b16 %v5753, %v5746
          %v6237 = vpack.c.b16 %v5754, %v5747
          %v6238 = vpack.c.b16 %v5762, %v5755
          %v6239 = vpack.c.b16 %v5763, %v5756
          %v6240 = vpack.c.b16 %v5764, %v5757
          %v6241 = vpack.c.b16 %v5765, %v5758
          %v6242 = vpack.c.b16 %v5766, %v5759
          %v6243 = vpack.c.b16 %v5767, %v5760
          %v6244 = vpack.c.b16 %v5768, %v5761
          %v6245 = vpack.c.b16 %v5776, %v5769
          %v6246 = vpack.c.b16 %v5777, %v5770
          %v6247 = vpack.c.b16 %v5778, %v5771
          %v6248 = vpack.c.b16 %v5779, %v5772
          %v6249 = vpack.c.b16 %v5780, %v5773
          %v6250 = vpack.c.b16 %v5781, %v5774
          %v6251 = vpack.c.b16 %v5782, %v5775
          %v6252 = vpack.c.b16 %v5790, %v5783
          %v6253 = vpack.c.b16 %v5791, %v5784
          %v6254 = vpack.c.b16 %v5792, %v5785
          %v6255 = vpack.c.b16 %v5793, %v5786
          %v6256 = vpack.c.b16 %v5794, %v5787
          %v6257 = vpack.c.b16 %v5795, %v5788
          %v6258 = vpack.c.b16 %v5796, %v5789
          %v6259 = vpack.c.b16 %v5804, %v5797
          %v6260 = vpack.c.b16 %v5805, %v5798
          %v6261 = vpack.c.b16 %v5806, %v5799
          %v6262 = vpack.c.b16 %v5807, %v5800
          %v6263 = vpack.c.b16 %v5808, %v5801
          %v6264 = vpack.c.b16 %v5809, %v5802
          %v6265 = vpack.c.b16 %v5810, %v5803
          %v6266 = vpack.c.b16 %v5818, %v5811
          %v6267 = vpack.c.b16 %v5819, %v5812
          %v6268 = vpack.c.b16 %v5820, %v5813
          %v6269 = vpack.c.b16 %v5821, %v5814
          %v6270 = vpack.c.b16 %v5822, %v5815
          %v6271 = vpack.c.b16 %v5823, %v5816
          %v6272 = vpack.c.b16 %v5824, %v5817
          %6721 = vmatprep.subr.bf16.mxu0 %v5826
          %6722 = vmatpush1.bf16.msra.mxu0 %v5825
          %6723 = vmatprep.subr.bf16.mxu0 %v5833
          %6724 = vmatpush1.bf16.msra.mxu0 %v5832
          %6725 = vmatprep.subr.bf16.mxu0 %v5840
          %6726 = vmatpush1.bf16.msra.mxu0 %v5839
          %6727 = vmatprep.subr.bf16.mxu0 %v5847
          %6728 = vmatpush1.bf16.msra.mxu0 %v5846
          %6729 = vmatprep.subr.bf16.mxu0 %v5854
          %6730 = vmatpush1.bf16.msra.mxu0 %v5853
          %6731 = vmatprep.subr.bf16.mxu0 %v5861
          %6732 = vmatpush1.bf16.msra.mxu0 %v5860
          %6733 = vmatprep.subr.bf16.mxu0 %v5868
          %6734 = vmatpush1.bf16.msra.mxu0 %v5867
          %6735 = vmatprep.subr.bf16.mxu0 %v5875
          %6736 = vmatpush1.bf16.msra.mxu0 %v5874
          %6737 = vmatprep.subr.bf16.mxu0 %v5882
          %6738 = vmatpush1.bf16.msra.mxu0 %v5881
          %6739 = vmatprep.subr.bf16.mxu0 %v5889
          %6740 = vmatpush1.bf16.msra.mxu0 %v5888
          %6741 = vmatprep.subr.bf16.mxu0 %v5896
          %6742 = vmatpush1.bf16.msra.mxu0 %v5895
          %6743 = vmatprep.subr.bf16.mxu0 %v5903
          %6744 = vmatpush1.bf16.msra.mxu0 %v5902
          %6745 = vmatprep.subr.bf16.mxu0 %v5910
          %6746 = vmatpush1.bf16.msra.mxu0 %v5909
          %6747 = vmatprep.subr.bf16.mxu0 %v5917
          %6748 = vmatpush1.bf16.msra.mxu0 %v5916
          %6749 = vmatprep.subr.bf16.mxu0 %v5924
          %6750 = vmatpush1.bf16.msra.mxu0 %v5923
          %6751 = vmatprep.subr.bf16.mxu0 %v5931
          %6752 = vmatpush1.bf16.msra.mxu0 %v5930
          %6753 = vmatprep.mubr.bf16.mxu0 %v3861
          %6754 = vmatmul.mubr.bf16.gmra.mrb[0].mxu0 %v3860
          %v6755 = vpop.f32.mrb[0].mxu0
          %v6756 = vadd.f32 %v4385, %v6755
          %v6757 = vpop.f32.mrb[0].mxu0
          %v6758 = vadd.f32 %v4389, %v6757
          %v6759 = vpop.f32.mrb[0].mxu0
          %v6760 = vpop.f32.mrb[0].mxu0
          %6761 = vdwg.mxu0
          %6762 = vmatprep.subr.bf16.mxu0 %v5938
          %6763 = vmatpush1.bf16.msra.mxu0 %v5937
          %6764 = vmatprep.subr.bf16.mxu0 %v5945
          %6765 = vmatpush1.bf16.msra.mxu0 %v5944
          %6766 = vmatprep.subr.bf16.mxu0 %v5952
          %6767 = vmatpush1.bf16.msra.mxu0 %v5951
          %6768 = vmatprep.subr.bf16.mxu0 %v5959
          %6769 = vmatpush1.bf16.msra.mxu0 %v5958
          %6770 = vmatprep.subr.bf16.mxu0 %v5966
          %6771 = vmatpush1.bf16.msra.mxu0 %v5965
          %6772 = vmatprep.subr.bf16.mxu0 %v5973
          %6773 = vmatpush1.bf16.msra.mxu0 %v5972
          %6774 = vmatprep.subr.bf16.mxu0 %v5980
          %6775 = vmatpush1.bf16.msra.mxu0 %v5979
          %6776 = vmatprep.subr.bf16.mxu0 %v5987
          %6777 = vmatpush1.bf16.msra.mxu0 %v5986
          %6778 = vmatprep.subr.bf16.mxu0 %v5994
          %6779 = vmatpush1.bf16.msra.mxu0 %v5993
          %6780 = vmatprep.subr.bf16.mxu0 %v6001
          %6781 = vmatpush1.bf16.msra.mxu0 %v6000
          %6782 = vmatprep.subr.bf16.mxu0 %v6008
          %6783 = vmatpush1.bf16.msra.mxu0 %v6007
          %6784 = vmatprep.subr.bf16.mxu0 %v6015
          %6785 = vmatpush1.bf16.msra.mxu0 %v6014
          %6786 = vmatprep.subr.bf16.mxu0 %v6022
          %6787 = vmatpush1.bf16.msra.mxu0 %v6021
          %6788 = vmatprep.subr.bf16.mxu0 %v6029
          %6789 = vmatpush1.bf16.msra.mxu0 %v6028
          %6790 = vmatprep.subr.bf16.mxu0 %v6036
          %6791 = vmatpush1.bf16.msra.mxu0 %v6035
          %6792 = vmatprep.subr.bf16.mxu0 %v6043
          %6793 = vmatpush1.bf16.msra.mxu0 %v6042
          %6794 = vmatprep.mubr.bf16.mxu0 %v3863
          %6795 = vmatmul.mubr.bf16.gmra.mrb[0].mxu0 %v3862
          %v6796 = vpop.f32.mrb[0].mxu0
          %v6797 = vadd.f32 %v6756, %v6796
          %v6798 = vpop.f32.mrb[0].mxu0
          %v6799 = vadd.f32 %v6758, %v6798
          %v6800 = vpop.f32.mrb[0].mxu0
          %v6801 = vpop.f32.mrb[0].mxu0
          %6802 = vdwg.mxu0
          %6803 = vmatprep.subr.bf16.mxu0 %v6050
          %6804 = vmatpush1.bf16.msra.mxu0 %v6049
          %6805 = vmatprep.subr.bf16.mxu0 %v6057
          %6806 = vmatpush1.bf16.msra.mxu0 %v6056
          %6807 = vmatprep.subr.bf16.mxu0 %v6064
          %6808 = vmatpush1.bf16.msra.mxu0 %v6063
          %6809 = vmatprep.subr.bf16.mxu0 %v6071
          %6810 = vmatpush1.bf16.msra.mxu0 %v6070
          %6811 = vmatprep.subr.bf16.mxu0 %v6078
          %6812 = vmatpush1.bf16.msra.mxu0 %v6077
          %6813 = vmatprep.subr.bf16.mxu0 %v6085
          %6814 = vmatpush1.bf16.msra.mxu0 %v6084
          %6815 = vmatprep.subr.bf16.mxu0 %v6092
          %6816 = vmatpush1.bf16.msra.mxu0 %v6091
          %6817 = vmatprep.subr.bf16.mxu0 %v6099
          %6818 = vmatpush1.bf16.msra.mxu0 %v6098
          %6819 = vmatprep.subr.bf16.mxu0 %v6106
          %6820 = vmatpush1.bf16.msra.mxu0 %v6105
          %6821 = vmatprep.subr.bf16.mxu0 %v6113
          %6822 = vmatpush1.bf16.msra.mxu0 %v6112
          %6823 = vmatprep.subr.bf16.mxu0 %v6120
          %6824 = vmatpush1.bf16.msra.mxu0 %v6119
          %6825 = vmatprep.subr.bf16.mxu0 %v6127
          %6826 = vmatpush1.bf16.msra.mxu0 %v6126
          %6827 = vmatprep.subr.bf16.mxu0 %v6134
          %6828 = vmatpush1.bf16.msra.mxu0 %v6133
          %6829 = vmatprep.subr.bf16.mxu0 %v6141
          %6830 = vmatpush1.bf16.msra.mxu0 %v6140
          %6831 = vmatprep.subr.bf16.mxu0 %v6148
          %6832 = vmatpush1.bf16.msra.mxu0 %v6147
          %6833 = vmatprep.subr.bf16.mxu0 %v6155
          %6834 = vmatpush1.bf16.msra.mxu0 %v6154
          %6835 = vmatprep.mubr.bf16.mxu0 %v3865
          %6836 = vmatmul.mubr.bf16.gmra.mrb[0].mxu0 %v3864
          %v6837 = vpop.f32.mrb[0].mxu0
          %v6838 = vadd.f32 %v6797, %v6837
          %v6839 = vpop.f32.mrb[0].mxu0
          %v6840 = vadd.f32 %v6799, %v6839
          %v6841 = vpop.f32.mrb[0].mxu0
          %v6842 = vpop.f32.mrb[0].mxu0
          %6843 = vdwg.mxu0
          %6844 = vmatprep.subr.bf16.mxu0 %v6162
          %6845 = vmatpush1.bf16.msra.mxu0 %v6161
          %6846 = vmatprep.subr.bf16.mxu0 %v6169
          %6847 = vmatpush1.bf16.msra.mxu0 %v6168
          %6848 = vmatprep.subr.bf16.mxu0 %v6176
          %6849 = vmatpush1.bf16.msra.mxu0 %v6175
          %6850 = vmatprep.subr.bf16.mxu0 %v6183
          %6851 = vmatpush1.bf16.msra.mxu0 %v6182
          %6852 = vmatprep.subr.bf16.mxu0 %v6190
          %6853 = vmatpush1.bf16.msra.mxu0 %v6189
          %6854 = vmatprep.subr.bf16.mxu0 %v6197
          %6855 = vmatpush1.bf16.msra.mxu0 %v6196
          %6856 = vmatprep.subr.bf16.mxu0 %v6204
          %6857 = vmatpush1.bf16.msra.mxu0 %v6203
          %6858 = vmatprep.subr.bf16.mxu0 %v6211
          %6859 = vmatpush1.bf16.msra.mxu0 %v6210
          %6860 = vmatprep.subr.bf16.mxu0 %v6218
          %6861 = vmatpush1.bf16.msra.mxu0 %v6217
          %6862 = vmatprep.subr.bf16.mxu0 %v6225
          %6863 = vmatpush1.bf16.msra.mxu0 %v6224
          %6864 = vmatprep.subr.bf16.mxu0 %v6232
          %6865 = vmatpush1.bf16.msra.mxu0 %v6231
          %6866 = vmatprep.subr.bf16.mxu0 %v6239
          %6867 = vmatpush1.bf16.msra.mxu0 %v6238
          %6868 = vmatprep.subr.bf16.mxu0 %v6246
          %6869 = vmatpush1.bf16.msra.mxu0 %v6245
          %6870 = vmatprep.subr.bf16.mxu0 %v6253
          %6871 = vmatpush1.bf16.msra.mxu0 %v6252
          %6872 = vmatprep.subr.bf16.mxu0 %v6260
          %6873 = vmatpush1.bf16.msra.mxu0 %v6259
          %6874 = vmatprep.subr.bf16.mxu0 %v6267
          %6875 = vmatpush1.bf16.msra.mxu0 %v6266
          %6876 = vmatprep.mubr.bf16.mxu0 %v3867
          %6877 = vmatmul.mubr.bf16.gmra.mrb[0].mxu0 %v3866
          %v6878 = vpop.f32.mrb[0].mxu0
          %v6879 = vadd.f32 %v6838, %v6878
          %v6880 = vpop.f32.mrb[0].mxu0
          %v6881 = vadd.f32 %v6840, %v6880
          %v6882 = vpop.f32.mrb[0].mxu0
          %v6883 = vpop.f32.mrb[0].mxu0
          %6884 = vdwg.mxu0
          %6885 = vmatprep.subr.bf16.mxu0 %v5828
          %6886 = vmatpush1.bf16.msra.mxu0 %v5827
          %6887 = vmatprep.subr.bf16.mxu0 %v5835
          %6888 = vmatpush1.bf16.msra.mxu0 %v5834
          %6889 = vmatprep.subr.bf16.mxu0 %v5842
          %6890 = vmatpush1.bf16.msra.mxu0 %v5841
          %6891 = vmatprep.subr.bf16.mxu0 %v5849
          %6892 = vmatpush1.bf16.msra.mxu0 %v5848
          %6893 = vmatprep.subr.bf16.mxu0 %v5856
          %6894 = vmatpush1.bf16.msra.mxu0 %v5855
          %6895 = vmatprep.subr.bf16.mxu0 %v5863
          %6896 = vmatpush1.bf16.msra.mxu0 %v5862
          %6897 = vmatprep.subr.bf16.mxu0 %v5870
          %6898 = vmatpush1.bf16.msra.mxu0 %v5869
          %6899 = vmatprep.subr.bf16.mxu0 %v5877
          %6900 = vmatpush1.bf16.msra.mxu0 %v5876
          %6901 = vmatprep.subr.bf16.mxu0 %v5884
          %6902 = vmatpush1.bf16.msra.mxu0 %v5883
          %6903 = vmatprep.subr.bf16.mxu0 %v5891
          %6904 = vmatpush1.bf16.msra.mxu0 %v5890
          %6905 = vmatprep.subr.bf16.mxu0 %v5898
          %6906 = vmatpush1.bf16.msra.mxu0 %v5897
          %6907 = vmatprep.subr.bf16.mxu0 %v5905
          %6908 = vmatpush1.bf16.msra.mxu0 %v5904
          %6909 = vmatprep.subr.bf16.mxu0 %v5912
          %6910 = vmatpush1.bf16.msra.mxu0 %v5911
          %6911 = vmatprep.subr.bf16.mxu0 %v5919
          %6912 = vmatpush1.bf16.msra.mxu0 %v5918
          %6913 = vmatprep.subr.bf16.mxu0 %v5926
          %6914 = vmatpush1.bf16.msra.mxu0 %v5925
          %6915 = vmatprep.subr.bf16.mxu0 %v5933
          %6916 = vmatpush1.bf16.msra.mxu0 %v5932
          %6917 = vmatprep.mubr.bf16.mxu0 %v3861
          %6918 = vmatmul.mubr.bf16.gmra.mrb[0].mxu0 %v3860
          %v6919 = vpop.f32.mrb[0].mxu0
          %v6920 = vadd.f32 %v4393, %v6919
          %v6921 = vpop.f32.mrb[0].mxu0
          %v6922 = vadd.f32 %v4397, %v6921
          %v6923 = vpop.f32.mrb[0].mxu0
          %v6924 = vpop.f32.mrb[0].mxu0
          %6925 = vdwg.mxu0
          %6926 = vmatprep.subr.bf16.mxu0 %v5940
          %6927 = vmatpush1.bf16.msra.mxu0 %v5939
          %6928 = vmatprep.subr.bf16.mxu0 %v5947
          %6929 = vmatpush1.bf16.msra.mxu0 %v5946
          %6930 = vmatprep.subr.bf16.mxu0 %v5954
          %6931 = vmatpush1.bf16.msra.mxu0 %v5953
          %6932 = vmatprep.subr.bf16.mxu0 %v5961
          %6933 = vmatpush1.bf16.msra.mxu0 %v5960
          %6934 = vmatprep.subr.bf16.mxu0 %v5968
          %6935 = vmatpush1.bf16.msra.mxu0 %v5967
          %6936 = vmatprep.subr.bf16.mxu0 %v5975
          %6937 = vmatpush1.bf16.msra.mxu0 %v5974
          %6938 = vmatprep.subr.bf16.mxu0 %v5982
          %6939 = vmatpush1.bf16.msra.mxu0 %v5981
          %6940 = vmatprep.subr.bf16.mxu0 %v5989
          %6941 = vmatpush1.bf16.msra.mxu0 %v5988
          %6942 = vmatprep.subr.bf16.mxu0 %v5996
          %6943 = vmatpush1.bf16.msra.mxu0 %v5995
          %6944 = vmatprep.subr.bf16.mxu0 %v6003
          %6945 = vmatpush1.bf16.msra.mxu0 %v6002
          %6946 = vmatprep.subr.bf16.mxu0 %v6010
          %6947 = vmatpush1.bf16.msra.mxu0 %v6009
          %6948 = vmatprep.subr.bf16.mxu0 %v6017
          %6949 = vmatpush1.bf16.msra.mxu0 %v6016
          %6950 = vmatprep.subr.bf16.mxu0 %v6024
          %6951 = vmatpush1.bf16.msra.mxu0 %v6023
          %6952 = vmatprep.subr.bf16.mxu0 %v6031
          %6953 = vmatpush1.bf16.msra.mxu0 %v6030
          %6954 = vmatprep.subr.bf16.mxu0 %v6038
          %6955 = vmatpush1.bf16.msra.mxu0 %v6037
          %6956 = vmatprep.subr.bf16.mxu0 %v6045
          %6957 = vmatpush1.bf16.msra.mxu0 %v6044
          %6958 = vmatprep.mubr.bf16.mxu0 %v3863
          %6959 = vmatmul.mubr.bf16.gmra.mrb[0].mxu0 %v3862
          %v6960 = vpop.f32.mrb[0].mxu0
          %v6961 = vadd.f32 %v6920, %v6960
          %v6962 = vpop.f32.mrb[0].mxu0
          %v6963 = vadd.f32 %v6922, %v6962
          %v6964 = vpop.f32.mrb[0].mxu0
          %v6965 = vpop.f32.mrb[0].mxu0
          %6966 = vdwg.mxu0
          %6967 = vmatprep.subr.bf16.mxu0 %v6052
          %6968 = vmatpush1.bf16.msra.mxu0 %v6051
          %6969 = vmatprep.subr.bf16.mxu0 %v6059
          %6970 = vmatpush1.bf16.msra.mxu0 %v6058
          %6971 = vmatprep.subr.bf16.mxu0 %v6066
          %6972 = vmatpush1.bf16.msra.mxu0 %v6065
          %6973 = vmatprep.subr.bf16.mxu0 %v6073
          %6974 = vmatpush1.bf16.msra.mxu0 %v6072
          %6975 = vmatprep.subr.bf16.mxu0 %v6080
          %6976 = vmatpush1.bf16.msra.mxu0 %v6079
          %6977 = vmatprep.subr.bf16.mxu0 %v6087
          %6978 = vmatpush1.bf16.msra.mxu0 %v6086
          %6979 = vmatprep.subr.bf16.mxu0 %v6094
          %6980 = vmatpush1.bf16.msra.mxu0 %v6093
          %6981 = vmatprep.subr.bf16.mxu0 %v6101
          %6982 = vmatpush1.bf16.msra.mxu0 %v6100
          %6983 = vmatprep.subr.bf16.mxu0 %v6108
          %6984 = vmatpush1.bf16.msra.mxu0 %v6107
          %6985 = vmatprep.subr.bf16.mxu0 %v6115
          %6986 = vmatpush1.bf16.msra.mxu0 %v6114
          %6987 = vmatprep.subr.bf16.mxu0 %v6122
          %6988 = vmatpush1.bf16.msra.mxu0 %v6121
          %6989 = vmatprep.subr.bf16.mxu0 %v6129
          %6990 = vmatpush1.bf16.msra.mxu0 %v6128
          %6991 = vmatprep.subr.bf16.mxu0 %v6136
          %6992 = vmatpush1.bf16.msra.mxu0 %v6135
          %6993 = vmatprep.subr.bf16.mxu0 %v6143
          %6994 = vmatpush1.bf16.msra.mxu0 %v6142
          %6995 = vmatprep.subr.bf16.mxu0 %v6150
          %6996 = vmatpush1.bf16.msra.mxu0 %v6149
          %6997 = vmatprep.subr.bf16.mxu0 %v6157
          %6998 = vmatpush1.bf16.msra.mxu0 %v6156
          %6999 = vmatprep.mubr.bf16.mxu0 %v3865
          %7000 = vmatmul.mubr.bf16.gmra.mrb[0].mxu0 %v3864
          %v7001 = vpop.f32.mrb[0].mxu0
          %v7002 = vadd.f32 %v6961, %v7001
          %v7003 = vpop.f32.mrb[0].mxu0
          %v7004 = vadd.f32 %v6963, %v7003
          %v7005 = vpop.f32.mrb[0].mxu0
          %v7006 = vpop.f32.mrb[0].mxu0
          %7007 = vdwg.mxu0
          %7008 = vmatprep.subr.bf16.mxu0 %v6164
          %7009 = vmatpush1.bf16.msra.mxu0 %v6163
          %7010 = vmatprep.subr.bf16.mxu0 %v6171
          %7011 = vmatpush1.bf16.msra.mxu0 %v6170
          %7012 = vmatprep.subr.bf16.mxu0 %v6178
          %7013 = vmatpush1.bf16.msra.mxu0 %v6177
          %7014 = vmatprep.subr.bf16.mxu0 %v6185
          %7015 = vmatpush1.bf16.msra.mxu0 %v6184
          %7016 = vmatprep.subr.bf16.mxu0 %v6192
          %7017 = vmatpush1.bf16.msra.mxu0 %v6191
          %7018 = vmatprep.subr.bf16.mxu0 %v6199
          %7019 = vmatpush1.bf16.msra.mxu0 %v6198
          %7020 = vmatprep.subr.bf16.mxu0 %v6206
          %7021 = vmatpush1.bf16.msra.mxu0 %v6205
          %7022 = vmatprep.subr.bf16.mxu0 %v6213
          %7023 = vmatpush1.bf16.msra.mxu0 %v6212
          %7024 = vmatprep.subr.bf16.mxu0 %v6220
          %7025 = vmatpush1.bf16.msra.mxu0 %v6219
          %7026 = vmatprep.subr.bf16.mxu0 %v6227
          %7027 = vmatpush1.bf16.msra.mxu0 %v6226
          %7028 = vmatprep.subr.bf16.mxu0 %v6234
          %7029 = vmatpush1.bf16.msra.mxu0 %v6233
          %7030 = vmatprep.subr.bf16.mxu0 %v6241
          %7031 = vmatpush1.bf16.msra.mxu0 %v6240
          %7032 = vmatprep.subr.bf16.mxu0 %v6248
          %7033 = vmatpush1.bf16.msra.mxu0 %v6247
          %7034 = vmatprep.subr.bf16.mxu0 %v6255
          %7035 = vmatpush1.bf16.msra.mxu0 %v6254
          %7036 = vmatprep.subr.bf16.mxu0 %v6262
          %7037 = vmatpush1.bf16.msra.mxu0 %v6261
          %7038 = vmatprep.subr.bf16.mxu0 %v6269
          %7039 = vmatpush1.bf16.msra.mxu0 %v6268
          %7040 = vmatprep.mubr.bf16.mxu0 %v3867
          %7041 = vmatmul.mubr.bf16.gmra.mrb[0].mxu0 %v3866
          %v7042 = vpop.f32.mrb[0].mxu0
          %v7043 = vadd.f32 %v7002, %v7042
          %v7044 = vpop.f32.mrb[0].mxu0
          %v7045 = vadd.f32 %v7004, %v7044
          %v7046 = vpop.f32.mrb[0].mxu0
          %v7047 = vpop.f32.mrb[0].mxu0
          %7048 = vdwg.mxu0
          %7049 = vmatprep.subr.bf16.mxu0 %v5830
          %7050 = vmatpush1.bf16.msra.mxu0 %v5829
          %7051 = vmatprep.subr.bf16.mxu0 %v5837
          %7052 = vmatpush1.bf16.msra.mxu0 %v5836
          %7053 = vmatprep.subr.bf16.mxu0 %v5844
          %7054 = vmatpush1.bf16.msra.mxu0 %v5843
          %7055 = vmatprep.subr.bf16.mxu0 %v5851
          %7056 = vmatpush1.bf16.msra.mxu0 %v5850
          %7057 = vmatprep.subr.bf16.mxu0 %v5858
          %7058 = vmatpush1.bf16.msra.mxu0 %v5857
          %7059 = vmatprep.subr.bf16.mxu0 %v5865
          %7060 = vmatpush1.bf16.msra.mxu0 %v5864
          %7061 = vmatprep.subr.bf16.mxu0 %v5872
          %7062 = vmatpush1.bf16.msra.mxu0 %v5871
          %7063 = vmatprep.subr.bf16.mxu0 %v5879
          %7064 = vmatpush1.bf16.msra.mxu0 %v5878
          %7065 = vmatprep.subr.bf16.mxu0 %v5886
          %7066 = vmatpush1.bf16.msra.mxu0 %v5885
          %7067 = vmatprep.subr.bf16.mxu0 %v5893
          %7068 = vmatpush1.bf16.msra.mxu0 %v5892
          %7069 = vmatprep.subr.bf16.mxu0 %v5900
          %7070 = vmatpush1.bf16.msra.mxu0 %v5899
          %7071 = vmatprep.subr.bf16.mxu0 %v5907
          %7072 = vmatpush1.bf16.msra.mxu0 %v5906
          %7073 = vmatprep.subr.bf16.mxu0 %v5914
          %7074 = vmatpush1.bf16.msra.mxu0 %v5913
          %7075 = vmatprep.subr.bf16.mxu0 %v5921
          %7076 = vmatpush1.bf16.msra.mxu0 %v5920
          %7077 = vmatprep.subr.bf16.mxu0 %v5928
          %7078 = vmatpush1.bf16.msra.mxu0 %v5927
          %7079 = vmatprep.subr.bf16.mxu0 %v5935
          %7080 = vmatpush1.bf16.msra.mxu0 %v5934
          %7081 = vmatprep.mubr.bf16.mxu0 %v3861
          %7082 = vmatmul.mubr.bf16.gmra.mrb[0].mxu0 %v3860
          %v7083 = vpop.f32.mrb[0].mxu0
          %v7084 = vadd.f32 %v4401, %v7083
          %v7085 = vpop.f32.mrb[0].mxu0
          %v7086 = vadd.f32 %v4405, %v7085
          %v7087 = vpop.f32.mrb[0].mxu0
          %v7088 = vpop.f32.mrb[0].mxu0
          %7089 = vdwg.mxu0
          %7090 = vmatprep.subr.bf16.mxu0 %v5942
          %7091 = vmatpush1.bf16.msra.mxu0 %v5941
          %7092 = vmatprep.subr.bf16.mxu0 %v5949
          %7093 = vmatpush1.bf16.msra.mxu0 %v5948
          %7094 = vmatprep.subr.bf16.mxu0 %v5956
          %7095 = vmatpush1.bf16.msra.mxu0 %v5955
          %7096 = vmatprep.subr.bf16.mxu0 %v5963
          %7097 = vmatpush1.bf16.msra.mxu0 %v5962
          %7098 = vmatprep.subr.bf16.mxu0 %v5970
          %7099 = vmatpush1.bf16.msra.mxu0 %v5969
          %7100 = vmatprep.subr.bf16.mxu0 %v5977
          %7101 = vmatpush1.bf16.msra.mxu0 %v5976
          %7102 = vmatprep.subr.bf16.mxu0 %v5984
          %7103 = vmatpush1.bf16.msra.mxu0 %v5983
          %7104 = vmatprep.subr.bf16.mxu0 %v5991
          %7105 = vmatpush1.bf16.msra.mxu0 %v5990
          %7106 = vmatprep.subr.bf16.mxu0 %v5998
          %7107 = vmatpush1.bf16.msra.mxu0 %v5997
          %7108 = vmatprep.subr.bf16.mxu0 %v6005
          %7109 = vmatpush1.bf16.msra.mxu0 %v6004
          %7110 = vmatprep.subr.bf16.mxu0 %v6012
          %7111 = vmatpush1.bf16.msra.mxu0 %v6011
          %7112 = vmatprep.subr.bf16.mxu0 %v6019
          %7113 = vmatpush1.bf16.msra.mxu0 %v6018
          %7114 = vmatprep.subr.bf16.mxu0 %v6026
          %7115 = vmatpush1.bf16.msra.mxu0 %v6025
          %7116 = vmatprep.subr.bf16.mxu0 %v6033
          %7117 = vmatpush1.bf16.msra.mxu0 %v6032
          %7118 = vmatprep.subr.bf16.mxu0 %v6040
          %7119 = vmatpush1.bf16.msra.mxu0 %v6039
          %7120 = vmatprep.subr.bf16.mxu0 %v6047
          %7121 = vmatpush1.bf16.msra.mxu0 %v6046
          %7122 = vmatprep.mubr.bf16.mxu0 %v3863
          %7123 = vmatmul.mubr.bf16.gmra.mrb[0].mxu0 %v3862
          %v7124 = vpop.f32.mrb[0].mxu0
          %v7125 = vadd.f32 %v7084, %v7124
          %v7126 = vpop.f32.mrb[0].mxu0
          %v7127 = vadd.f32 %v7086, %v7126
          %v7128 = vpop.f32.mrb[0].mxu0
          %v7129 = vpop.f32.mrb[0].mxu0
          %7130 = vdwg.mxu0
          %7131 = vmatprep.subr.bf16.mxu0 %v6054
          %7132 = vmatpush1.bf16.msra.mxu0 %v6053
          %7133 = vmatprep.subr.bf16.mxu0 %v6061
          %7134 = vmatpush1.bf16.msra.mxu0 %v6060
          %7135 = vmatprep.subr.bf16.mxu0 %v6068
          %7136 = vmatpush1.bf16.msra.mxu0 %v6067
          %7137 = vmatprep.subr.bf16.mxu0 %v6075
          %7138 = vmatpush1.bf16.msra.mxu0 %v6074
          %7139 = vmatprep.subr.bf16.mxu0 %v6082
          %7140 = vmatpush1.bf16.msra.mxu0 %v6081
          %7141 = vmatprep.subr.bf16.mxu0 %v6089
          %7142 = vmatpush1.bf16.msra.mxu0 %v6088
          %7143 = vmatprep.subr.bf16.mxu0 %v6096
          %7144 = vmatpush1.bf16.msra.mxu0 %v6095
          %7145 = vmatprep.subr.bf16.mxu0 %v6103
          %7146 = vmatpush1.bf16.msra.mxu0 %v6102
          %7147 = vmatprep.subr.bf16.mxu0 %v6110
          %7148 = vmatpush1.bf16.msra.mxu0 %v6109
          %7149 = vmatprep.subr.bf16.mxu0 %v6117
          %7150 = vmatpush1.bf16.msra.mxu0 %v6116
          %7151 = vmatprep.subr.bf16.mxu0 %v6124
          %7152 = vmatpush1.bf16.msra.mxu0 %v6123
          %7153 = vmatprep.subr.bf16.mxu0 %v6131
          %7154 = vmatpush1.bf16.msra.mxu0 %v6130
          %7155 = vmatprep.subr.bf16.mxu0 %v6138
          %7156 = vmatpush1.bf16.msra.mxu0 %v6137
          %7157 = vmatprep.subr.bf16.mxu0 %v6145
          %7158 = vmatpush1.bf16.msra.mxu0 %v6144
          %7159 = vmatprep.subr.bf16.mxu0 %v6152
          %7160 = vmatpush1.bf16.msra.mxu0 %v6151
          %7161 = vmatprep.subr.bf16.mxu0 %v6159
          %7162 = vmatpush1.bf16.msra.mxu0 %v6158
          %7163 = vmatprep.mubr.bf16.mxu0 %v3865
          %7164 = vmatmul.mubr.bf16.gmra.mrb[0].mxu0 %v3864
          %v7165 = vpop.f32.mrb[0].mxu0
          %v7166 = vadd.f32 %v7125, %v7165
          %v7167 = vpop.f32.mrb[0].mxu0
          %v7168 = vadd.f32 %v7127, %v7167
          %v7169 = vpop.f32.mrb[0].mxu0
          %v7170 = vpop.f32.mrb[0].mxu0
          %7171 = vdwg.mxu0
          %7172 = vmatprep.subr.bf16.mxu0 %v6166
          %7173 = vmatpush1.bf16.msra.mxu0 %v6165
          %7174 = vmatprep.subr.bf16.mxu0 %v6173
          %7175 = vmatpush1.bf16.msra.mxu0 %v6172
          %7176 = vmatprep.subr.bf16.mxu0 %v6180
          %7177 = vmatpush1.bf16.msra.mxu0 %v6179
          %7178 = vmatprep.subr.bf16.mxu0 %v6187
          %7179 = vmatpush1.bf16.msra.mxu0 %v6186
          %7180 = vmatprep.subr.bf16.mxu0 %v6194
          %7181 = vmatpush1.bf16.msra.mxu0 %v6193
          %7182 = vmatprep.subr.bf16.mxu0 %v6201
          %7183 = vmatpush1.bf16.msra.mxu0 %v6200
          %7184 = vmatprep.subr.bf16.mxu0 %v6208
          %7185 = vmatpush1.bf16.msra.mxu0 %v6207
          %7186 = vmatprep.subr.bf16.mxu0 %v6215
          %7187 = vmatpush1.bf16.msra.mxu0 %v6214
          %7188 = vmatprep.subr.bf16.mxu0 %v6222
          %7189 = vmatpush1.bf16.msra.mxu0 %v6221
          %7190 = vmatprep.subr.bf16.mxu0 %v6229
          %7191 = vmatpush1.bf16.msra.mxu0 %v6228
          %7192 = vmatprep.subr.bf16.mxu0 %v6236
          %7193 = vmatpush1.bf16.msra.mxu0 %v6235
          %7194 = vmatprep.subr.bf16.mxu0 %v6243
          %7195 = vmatpush1.bf16.msra.mxu0 %v6242
          %7196 = vmatprep.subr.bf16.mxu0 %v6250
          %7197 = vmatpush1.bf16.msra.mxu0 %v6249
          %7198 = vmatprep.subr.bf16.mxu0 %v6257
          %7199 = vmatpush1.bf16.msra.mxu0 %v6256
          %7200 = vmatprep.subr.bf16.mxu0 %v6264
          %7201 = vmatpush1.bf16.msra.mxu0 %v6263
          %7202 = vmatprep.subr.bf16.mxu0 %v6271
          %7203 = vmatpush1.bf16.msra.mxu0 %v6270
          %7204 = vmatprep.mubr.bf16.mxu0 %v3867
          %7205 = vmatmul.mubr.bf16.gmra.mrb[0].mxu0 %v3866
          %v7206 = vpop.f32.mrb[0].mxu0
          %v7207 = vadd.f32 %v7166, %v7206
          %v7208 = vpop.f32.mrb[0].mxu0
          %v7209 = vadd.f32 %v7168, %v7208
          %v7210 = vpop.f32.mrb[0].mxu0
          %v7211 = vpop.f32.mrb[0].mxu0
          %7212 = vdwg.mxu0
          %7213 = vmatprep.subr.bf16.mxu0 0
          %7214 = vmatpush1.bf16.msra.mxu0 %v5831
          %7215 = vmatprep.subr.bf16.mxu0 0
          %7216 = vmatpush1.bf16.msra.mxu0 %v5838
          %7217 = vmatprep.subr.bf16.mxu0 0
          %7218 = vmatpush1.bf16.msra.mxu0 %v5845
          %7219 = vmatprep.subr.bf16.mxu0 0
          %7220 = vmatpush1.bf16.msra.mxu0 %v5852
          %7221 = vmatprep.subr.bf16.mxu0 0
          %7222 = vmatpush1.bf16.msra.mxu0 %v5859
          %7223 = vmatprep.subr.bf16.mxu0 0
          %7224 = vmatpush1.bf16.msra.mxu0 %v5866
          %7225 = vmatprep.subr.bf16.mxu0 0
          %7226 = vmatpush1.bf16.msra.mxu0 %v5873
          %7227 = vmatprep.subr.bf16.mxu0 0
          %7228 = vmatpush1.bf16.msra.mxu0 %v5880
          %7229 = vmatprep.subr.bf16.mxu0 0
          %7230 = vmatpush1.bf16.msra.mxu0 %v5887
          %7231 = vmatprep.subr.bf16.mxu0 0
          %7232 = vmatpush1.bf16.msra.mxu0 %v5894
          %7233 = vmatprep.subr.bf16.mxu0 0
          %7234 = vmatpush1.bf16.msra.mxu0 %v5901
          %7235 = vmatprep.subr.bf16.mxu0 0
          %7236 = vmatpush1.bf16.msra.mxu0 %v5908
          %7237 = vmatprep.subr.bf16.mxu0 0
          %7238 = vmatpush1.bf16.msra.mxu0 %v5915
          %7239 = vmatprep.subr.bf16.mxu0 0
          %7240 = vmatpush1.bf16.msra.mxu0 %v5922
          %7241 = vmatprep.subr.bf16.mxu0 0
          %7242 = vmatpush1.bf16.msra.mxu0 %v5929
          %7243 = vmatprep.subr.bf16.mxu0 0
          %7244 = vmatpush1.bf16.msra.mxu0 %v5936
          %7245 = vmatprep.mubr.bf16.mxu0 %v3861
          %7246 = vmatmul.mubr.bf16.gmra.mrb[0].mxu0 %v3860
          %v7247 = vpop.f32.mrb[0].mxu0
          %v7248 = vadd.f32 %v4409, %v7247
          %v7249 = vpop.f32.mrb[0].mxu0
          %v7250 = vpop.f32.mrb[0].mxu0
          %v7251 = vpop.f32.mrb[0].mxu0
          %7252 = vdwg.mxu0
          %7253 = vmatprep.subr.bf16.mxu0 0
          %7254 = vmatpush1.bf16.msra.mxu0 %v5943
          %7255 = vmatprep.subr.bf16.mxu0 0
          %7256 = vmatpush1.bf16.msra.mxu0 %v5950
          %7257 = vmatprep.subr.bf16.mxu0 0
          %7258 = vmatpush1.bf16.msra.mxu0 %v5957
          %7259 = vmatprep.subr.bf16.mxu0 0
          %7260 = vmatpush1.bf16.msra.mxu0 %v5964
          %7261 = vmatprep.subr.bf16.mxu0 0
          %7262 = vmatpush1.bf16.msra.mxu0 %v5971
          %7263 = vmatprep.subr.bf16.mxu0 0
          %7264 = vmatpush1.bf16.msra.mxu0 %v5978
          %7265 = vmatprep.subr.bf16.mxu0 0
          %7266 = vmatpush1.bf16.msra.mxu0 %v5985
          %7267 = vmatprep.subr.bf16.mxu0 0
          %7268 = vmatpush1.bf16.msra.mxu0 %v5992
          %7269 = vmatprep.subr.bf16.mxu0 0
          %7270 = vmatpush1.bf16.msra.mxu0 %v5999
          %7271 = vmatprep.subr.bf16.mxu0 0
          %7272 = vmatpush1.bf16.msra.mxu0 %v6006
          %7273 = vmatprep.subr.bf16.mxu0 0
          %7274 = vmatpush1.bf16.msra.mxu0 %v6013
          %7275 = vmatprep.subr.bf16.mxu0 0
          %7276 = vmatpush1.bf16.msra.mxu0 %v6020
          %7277 = vmatprep.subr.bf16.mxu0 0
          %7278 = vmatpush1.bf16.msra.mxu0 %v6027
          %7279 = vmatprep.subr.bf16.mxu0 0
          %7280 = vmatpush1.bf16.msra.mxu0 %v6034
          %7281 = vmatprep.subr.bf16.mxu0 0
          %7282 = vmatpush1.bf16.msra.mxu0 %v6041
          %7283 = vmatprep.subr.bf16.mxu0 0
          %7284 = vmatpush1.bf16.msra.mxu0 %v6048
          %7285 = vmatprep.mubr.bf16.mxu0 %v3863
          %7286 = vmatmul.mubr.bf16.gmra.mrb[0].mxu0 %v3862
          %v7287 = vpop.f32.mrb[0].mxu0
          %v7288 = vadd.f32 %v7248, %v7287
          %v7289 = vpop.f32.mrb[0].mxu0
          %v7290 = vpop.f32.mrb[0].mxu0
          %v7291 = vpop.f32.mrb[0].mxu0
          %7292 = vdwg.mxu0
          %7293 = vmatprep.subr.bf16.mxu0 0
          %7294 = vmatpush1.bf16.msra.mxu0 %v6055
          %7295 = vmatprep.subr.bf16.mxu0 0
          %7296 = vmatpush1.bf16.msra.mxu0 %v6062
          %7297 = vmatprep.subr.bf16.mxu0 0
          %7298 = vmatpush1.bf16.msra.mxu0 %v6069
          %7299 = vmatprep.subr.bf16.mxu0 0
          %7300 = vmatpush1.bf16.msra.mxu0 %v6076
          %7301 = vmatprep.subr.bf16.mxu0 0
          %7302 = vmatpush1.bf16.msra.mxu0 %v6083
          %7303 = vmatprep.subr.bf16.mxu0 0
          %7304 = vmatpush1.bf16.msra.mxu0 %v6090
          %7305 = vmatprep.subr.bf16.mxu0 0
          %7306 = vmatpush1.bf16.msra.mxu0 %v6097
          %7307 = vmatprep.subr.bf16.mxu0 0
          %7308 = vmatpush1.bf16.msra.mxu0 %v6104
          %7309 = vmatprep.subr.bf16.mxu0 0
          %7310 = vmatpush1.bf16.msra.mxu0 %v6111
          %7311 = vmatprep.subr.bf16.mxu0 0
          %7312 = vmatpush1.bf16.msra.mxu0 %v6118
          %7313 = vmatprep.subr.bf16.mxu0 0
          %7314 = vmatpush1.bf16.msra.mxu0 %v6125
          %7315 = vmatprep.subr.bf16.mxu0 0
          %7316 = vmatpush1.bf16.msra.mxu0 %v6132
          %7317 = vmatprep.subr.bf16.mxu0 0
          %7318 = vmatpush1.bf16.msra.mxu0 %v6139
          %7319 = vmatprep.subr.bf16.mxu0 0
          %7320 = vmatpush1.bf16.msra.mxu0 %v6146
          %7321 = vmatprep.subr.bf16.mxu0 0
          %7322 = vmatpush1.bf16.msra.mxu0 %v6153
          %7323 = vmatprep.subr.bf16.mxu0 0
          %7324 = vmatpush1.bf16.msra.mxu0 %v6160
          %7325 = vmatprep.mubr.bf16.mxu0 %v3865
          %7326 = vmatmul.mubr.bf16.gmra.mrb[0].mxu0 %v3864
          %v7327 = vpop.f32.mrb[0].mxu0
          %v7328 = vadd.f32 %v7288, %v7327
          %v7329 = vpop.f32.mrb[0].mxu0
          %v7330 = vpop.f32.mrb[0].mxu0
          %v7331 = vpop.f32.mrb[0].mxu0
          %7332 = vdwg.mxu0
          %7333 = vmatprep.subr.bf16.mxu0 0
          %7334 = vmatpush1.bf16.msra.mxu0 %v6167
          %7335 = vmatprep.subr.bf16.mxu0 0
          %7336 = vmatpush1.bf16.msra.mxu0 %v6174
          %7337 = vmatprep.subr.bf16.mxu0 0
          %7338 = vmatpush1.bf16.msra.mxu0 %v6181
          %7339 = vmatprep.subr.bf16.mxu0 0
          %7340 = vmatpush1.bf16.msra.mxu0 %v6188
          %7341 = vmatprep.subr.bf16.mxu0 0
          %7342 = vmatpush1.bf16.msra.mxu0 %v6195
          %7343 = vmatprep.subr.bf16.mxu0 0
          %7344 = vmatpush1.bf16.msra.mxu0 %v6202
          %7345 = vmatprep.subr.bf16.mxu0 0
          %7346 = vmatpush1.bf16.msra.mxu0 %v6209
          %7347 = vmatprep.subr.bf16.mxu0 0
          %7348 = vmatpush1.bf16.msra.mxu0 %v6216
          %7349 = vmatprep.subr.bf16.mxu0 0
          %7350 = vmatpush1.bf16.msra.mxu0 %v6223
          %7351 = vmatprep.subr.bf16.mxu0 0
          %7352 = vmatpush1.bf16.msra.mxu0 %v6230
          %7353 = vmatprep.subr.bf16.mxu0 0
          %7354 = vmatpush1.bf16.msra.mxu0 %v6237
          %7355 = vmatprep.subr.bf16.mxu0 0
          %7356 = vmatpush1.bf16.msra.mxu0 %v6244
          %7357 = vmatprep.subr.bf16.mxu0 0
          %7358 = vmatpush1.bf16.msra.mxu0 %v6251
          %7359 = vmatprep.subr.bf16.mxu0 0
          %7360 = vmatpush1.bf16.msra.mxu0 %v6258
          %7361 = vmatprep.subr.bf16.mxu0 0
          %7362 = vmatpush1.bf16.msra.mxu0 %v6265
          %7363 = vmatprep.subr.bf16.mxu0 0
          %7364 = vmatpush1.bf16.msra.mxu0 %v6272
          %7365 = vmatprep.mubr.bf16.mxu0 %v3867
          %7366 = vmatmul.mubr.bf16.gmra.mrb[0].mxu0 %v3866
          %v7367 = vpop.f32.mrb[0].mxu0
          %v7368 = vadd.f32 %v7328, %v7367
          %v7369 = vpop.f32.mrb[0].mxu0
          %v7370 = vpop.f32.mrb[0].mxu0
          %v7371 = vpop.f32.mrb[0].mxu0
          %7372 = vdwg.mxu0
          %v7373 = vtanh.pop %v6879
          %v7374 = vtanh.pop %v6881
          %v7375 = vtanh.pop %v7043
          %v7376 = vtanh.pop %v7045
          %v7377 = vtanh.pop %v7207
          %v7378 = vtanh.pop %v7209
          %v7379 = vtanh.pop %v7368
          %7380 = vst [vmem:[%s484] sm:$0xff] %v7373
          %7381 = vst [vmem:[%s484 + $0x8] sm:$0xff] %v7374
          %7382 = vst [vmem:[%s484 + $0x10] sm:$0xff] %v7375
          %7383 = vst [vmem:[%s484 + $0x18] sm:$0xff] %v7376
          %7384 = vst [vmem:[%s484 + $0x20] sm:$0xff] %v7377
          %7385 = vst [vmem:[%s484 + $0x28] sm:$0xff] %v7378
          %vm7386 = vcmask 130048
          %7387 = vst.msk [vmem:[%s484 + $0x30] sm:$0xff] %vm7386, %v7379
        $region108: #{generator_forward.1} parent=75 // pred_fallthru
          _
        %s7388 = sand.u32 %s355, 1
        %s7389 = scalar_lea.sflag [#allocation9], %s7388
        %s7390 = sand.u32 %s355, 1
        %s7391 = smul.addr %s7390, 56
        %s7392 = scalar_lea.vmem [#allocation8], %s7391
        // Predicated region
        $region109: #{generator_forward.1} parent=75 // pred_check
          %p7393 = pneg %p365
        $region110: #{generator_forward.1} parent=75 // pred_check_branch
          %7395 = sbr.rel (%p7393) target = $region112
        $region111: #{generator_forward.1} parent=75 // pred_region
          %p7396 = scmp.eq.s32.totalorder %s32, 3
          %s7397 = scalar_select %p7396, %s33, 0
          %s7399 = ssub.s32 896, 896
          %7400 = vsyncadd %s7389, %s7399
          %s7401 = smul.addr %s7397, 7
          %s7402 = smul.addr %s7401, 128
          %s7403 = scalar_lea.hbm %s14, %s7402
          %s7405 = sshll.u32 %s7392, 4
          %s7406 = int_to_ptr.vmem [resolvable:$true] %s7405
          %7408 = dma.vmem_to_hbm [thread:$0]  %s7406, 896, %s7403, %s7389
        $region112: #{generator_forward.1} parent=75 // pred_fallthru
          _
      $region76: #{generator_forward.1} parent=5 // pred_fallthru
        _
      %p7409 = scmp.le.s32.totalorder 2, %s23
      // Predicated region
      $region113: #{generator_forward.1} parent=5 // pred_check
        %p7410 = pneg %p7409
      $region114: #{generator_forward.1} parent=5 // pred_check_branch
        %7412 = sbr.rel (%p7410) target = $region116
      $region115: #{generator_forward.1} parent=5 // pred_region
        %s7413 = ssub.s32 %s23, 2
        // Predicated region
        $region117: #{generator_forward.1} parent=115 // pred_check
          %p7414 = pneg %p371
        $region118: #{generator_forward.1} parent=115 // pred_check_branch
          %7416 = sbr.rel (%p7414) target = $region120
        $region119: #{generator_forward.1} parent=115 // pred_region
          %s7417 = sand.u32 %s356, 1
          %s7418 = scalar_lea.sflag [#allocation9], %s7417
          %s7419 = sand.u32 %s356, 1
          %s7420 = smul.addr %s7419, 56
          %s7421 = scalar_lea.vmem [#allocation8], %s7420
          %7422 = dma.done %s7418, 896
        $region120: #{generator_forward.1} parent=115 // pred_fallthru
          _
      $region116: #{generator_forward.1} parent=5 // pred_fallthru
        _
    $region6: #{generator_forward.1} parent=1 // loop_footer
      %s27 = sadd.s32 1, %s23
    $region7: #{generator_forward.1} parent=1 // loop_footer_branch
      %22 = sbr.rel target = $region3
    $region8: #{generator_forward.1} parent=1 // loop_exit
      _
    %7423 = vsyncpa [#allocation9], 1
    %s7424 = scalar_lea.sflag [#allocation9], 1
    %7425 = vsyncpa %s7424, 1

</llo_original>
